<compile_context>
chip_gen: v6e
topology: v6e:2x2x1
jax: 0.10.0
libtpu: 0.0.40
codegen_flags: <defaults>
</compile_context>

<pallas_src>
import jax
import jax.numpy as jnp
from jax.experimental import pallas as pl
from jax.experimental.pallas import tpu as pltpu

DROP_P = 0.3
LEAK = 0.2
LANE = 128
_DROP_THRESH = int(DROP_P * (1 << 32))        # drop element iff hash_bits < threshold
_KEEP_SCALE = 1.0 / (1.0 - DROP_P)            # folded into W2..W4 at prep time


# ----------------------------------------------------------------------------- math helpers
def _leaky_relu(h):
    return jnp.where(h > 0, h, LEAK * h)


def _hash_bits(seed_u32, shape):
    """Counter-based hash -> uint32 per element (murmur3-style finalizer). Pure jnp ops."""
    r = jax.lax.broadcasted_iota(jnp.int32, shape, 0).astype(jnp.uint32)
    c = jax.lax.broadcasted_iota(jnp.int32, shape, 1).astype(jnp.uint32)
    x = seed_u32 + r * jnp.uint32(0x9E3779B9) + c * jnp.uint32(0x85EBCA6B)
    x = x ^ (x >> 16)
    x = x * jnp.uint32(0x7FEB352D)
    x = x ^ (x >> 15)
    x = x * jnp.uint32(0x846CA68B)
    x = x ^ (x >> 16)
    return x


def _dropout(h, seed_u32):
    # 1/(1-p) rescale is pre-folded into the next layer's weights, so just mask.
    keep = _hash_bits(seed_u32, h.shape) >= jnp.uint32(_DROP_THRESH)
    return jnp.where(keep, h, 0.0)


def _tile_seed(seed_i32, tile_i32):
    return (seed_i32.astype(jnp.uint32)
            + tile_i32.astype(jnp.uint32) * jnp.uint32(0x3C6EF372))


def _forward_tile(x, w1, b1, w2, b2, w3, b3, w4, b4, tile_seed):
    """Shared by the Pallas kernel and the pure-JAX reference (identical math)."""
    h = jnp.dot(x.astype(jnp.bfloat16), w1, preferred_element_type=jnp.float32) + b1
    h = _dropout(_leaky_relu(h), tile_seed + jnp.uint32(1))
    h = jnp.dot(h.astype(jnp.bfloat16), w2, preferred_element_type=jnp.float32) + b2
    h = _dropout(_leaky_relu(h), tile_seed + jnp.uint32(2))
    h = jnp.dot(h.astype(jnp.bfloat16), w3, preferred_element_type=jnp.float32) + b3
    h = _dropout(_leaky_relu(h), tile_seed + jnp.uint32(3))
    y = jnp.dot(h.astype(jnp.bfloat16), w4, preferred_element_type=jnp.float32) + b4
    return jax.nn.sigmoid(y)


# ----------------------------------------------------------------------------- kernel
def disc_kernel(seed_ref,                      # SMEM scalar prefetch: (1,) int32
                x_ref,
                w1_ref, b1_ref, w2_ref, b2_ref, w3_ref, b3_ref, w4_ref, b4_ref,
                o_ref):
    tile_seed = _tile_seed(seed_ref[0], pl.program_id(0))
    o_ref[...] = _forward_tile(
        x_ref[...],
        w1_ref[...], b1_ref[...],
        w2_ref[...], b2_ref[...],
        w3_ref[...], b3_ref[...],
        w4_ref[...], b4_ref[...],
        tile_seed,
    )


# ----------------------------------------------------------------------------- wrapper
def _pick_tile_b(B):
    for t in (128, 64, 32, 16, 8):      # 128 fills the MXU; h1 stays <= 64 vregs in f32
        if B % t == 0:
            return t
    return B                            # full-batch block (always legal)


def _prepare_params(params):
    """Cast weights to bf16, fold dropout scale into W2..W4, pad final layer to 128 lanes."""
    y_size = params["w4"].shape[1]
    n_pad = max(LANE, ((y_size + LANE - 1) // LANE) * LANE)

    w1 = params["w1"].astype(jnp.bfloat16)
    b1 = params["b1"].astype(jnp.float32).reshape(1, -1)
    w2 = (params["w2"] * _KEEP_SCALE).astype(jnp.bfloat16)
    b2 = params["b2"].astype(jnp.float32).reshape(1, -1)
    w3 = (params["w3"] * _KEEP_SCALE).astype(jnp.bfloat16)
    b3 = params["b3"].astype(jnp.float32).reshape(1, -1)
    w4 = jnp.zeros((params["w4"].shape[0], n_pad), jnp.float32)
    w4 = w4.at[:, :y_size].set(params["w4"] * _KEEP_SCALE).astype(jnp.bfloat16)
    b4 = jnp.zeros((1, n_pad), jnp.float32).at[:, :y_size].set(
        params["b4"].astype(jnp.float32).reshape(1, -1))
    return (w1, b1, w2, b2, w3, b3, w4, b4), n_pad


def base_discriminator(x, params, seed=0, tile_b=None):
    """x: (B, x_size) float32. params: dict of W_i shaped (F_in, F_out) and b_i (1, F_out)."""
    B, x_size = x.shape
    y_size = params["w4"].shape[1]
    prepped, n_pad = _prepare_params(params)
    w1, b1, w2, b2, w3, b3, w4, b4 = prepped

    tile_b = tile_b or _pick_tile_b(B)
    nb = B // tile_b
    seed_arr = jnp.asarray([seed], dtype=jnp.int32)

    def const_spec(arr):
        return pl.BlockSpec(arr.shape, lambda i, s: (0, 0))   # VMEM-resident, DMA'd once

    grid_spec = pltpu.PrefetchScalarGridSpec(
        num_scalar_prefetch=1,
        grid=(nb,),
        in_specs=[
            pl.BlockSpec((tile_b, x_size), lambda i, s: (i, 0)),
            const_spec(w1), const_spec(b1),
            const_spec(w2), const_spec(b2),
            const_spec(w3), const_spec(b3),
            const_spec(w4), const_spec(b4),
        ],
        out_specs=pl.BlockSpec((tile_b, n_pad), lambda i, s: (i, 0)),
    )

    flops = 2 * B * (x_size * 1024 + 1024 * 512 + 512 * 256 + 256 * n_pad)
    bytes_accessed = (x.size * 4 + B * n_pad * 4
                      + sum(int(w.size) * 2 for w in (w1, w2, w3, w4))
                      + sum(int(b.size) * 4 for b in (b1, b2, b3, b4)))
    cost = pl.CostEstimate(flops=flops, transcendentals=B * n_pad,
                           bytes_accessed=bytes_accessed)

    y_pad = pl.pallas_call(
        disc_kernel,
        out_shape=jax.ShapeDtypeStruct((B, n_pad), jnp.float32),
        grid_spec=grid_spec,
        compiler_params=pltpu.CompilerParams(dimension_semantics=("parallel",)),
        cost_estimate=cost,
    )(seed_arr, x.astype(jnp.float32), w1, b1, w2, b2, w3, b3, w4, b4)

    return y_pad[:, :y_size]


def init_params(key, x_size, y_size):
    """Parameter init mirroring nn.Linear shapes; weights stored transposed (F_in, F_out)."""
    sizes = [(x_size, 1024), (1024, 512), (512, 256), (256, y_size)]
    params = {}
    for i, (fin, fout) in enumerate(sizes, start=1):
        key, kw, kb = jax.random.split(key, 3)
        bound = float(fin) ** -0.5
        params[f"w{i}"] = jax.random.uniform(kw, (fin, fout), jnp.float32, -bound, bound)
        params[f"b{i}"] = jax.random.uniform(kb, (1, fout), jnp.float32, -bound, bound)
    return params


if __name__ == "__main__":
    B, X_SIZE, Y_SIZE, SEED = 256, 64, 1, 42

    key = jax.random.PRNGKey(0)
    kx, kp = jax.random.split(key)
    x = jax.random.normal(kx, (B, X_SIZE), jnp.float32)
    params = init_params(kp, X_SIZE, Y_SIZE)

    y = jax.block_until_ready(base_discriminator(x, params, seed=SEED))

    assert y.shape == (B, Y_SIZE)
    assert bool(jnp.all(jnp.isfinite(y)))
    assert bool(jnp.all((y >= 0.0) & (y <= 1.0)))

    # Pure-JAX reference using the exact same math and per-tile mask derivation.
    prepped, _ = _prepare_params(params)
    tile_b = _pick_tile_b(B)
    ref_tiles = []
    for t in range(B // tile_b):
        ts = _tile_seed(jnp.asarray(SEED, jnp.int32), jnp.asarray(t, jnp.int32))
        ref_tiles.append(_forward_tile(x[t * tile_b:(t + 1) * tile_b], *prepped, ts))
    y_ref = jnp.concatenate(ref_tiles, axis=0)[:, :Y_SIZE]
    assert bool(jnp.max(jnp.abs(y - y_ref)) < 1e-2), "mismatch vs pure-JAX reference"

    print("KERNEL_OK")
</pallas_src>

<mosaic_0001>
module attributes {stable_mosaic.version = 11 : i64} {
  func.func @disc_kernel(%arg0: i32, %arg1: memref<1xi32, #tpu.memory_space<smem>>, %arg2: memref<128x64xf32, #tpu.memory_space<vmem>>, %arg3: memref<64x1024xbf16, #tpu.memory_space<vmem>>, %arg4: memref<1x1024xf32, #tpu.memory_space<vmem>>, %arg5: memref<1024x512xbf16, #tpu.memory_space<vmem>>, %arg6: memref<1x512xf32, #tpu.memory_space<vmem>>, %arg7: memref<512x256xbf16, #tpu.memory_space<vmem>>, %arg8: memref<1x256xf32, #tpu.memory_space<vmem>>, %arg9: memref<256x128xbf16, #tpu.memory_space<vmem>>, %arg10: memref<1x128xf32, #tpu.memory_space<vmem>>, %arg11: memref<128x128xf32, #tpu.memory_space<vmem>>) attributes {dimension_semantics = [#tpu.dimension_semantics<parallel>], iteration_bounds = array<i64: 2>, scalar_prefetch = 1 : i64, scratch_operands = 0 : i64, tpu.core_type = #tpu.core_type<tc>, window_params = [{transform_indices = @transform_0, window_bounds = array<i64: 128, 64>}, {pipeline_mode = #tpu.pipeline_mode<synchronous>, transform_indices = @transform_1, window_bounds = array<i64: 64, 1024>}, {pipeline_mode = #tpu.pipeline_mode<synchronous>, transform_indices = @transform_2, window_bounds = array<i64: 1, 1024>}, {pipeline_mode = #tpu.pipeline_mode<synchronous>, transform_indices = @transform_3, window_bounds = array<i64: 1024, 512>}, {pipeline_mode = #tpu.pipeline_mode<synchronous>, transform_indices = @transform_4, window_bounds = array<i64: 1, 512>}, {pipeline_mode = #tpu.pipeline_mode<synchronous>, transform_indices = @transform_5, window_bounds = array<i64: 512, 256>}, {pipeline_mode = #tpu.pipeline_mode<synchronous>, transform_indices = @transform_6, window_bounds = array<i64: 1, 256>}, {pipeline_mode = #tpu.pipeline_mode<synchronous>, transform_indices = @transform_7, window_bounds = array<i64: 256, 128>}, {pipeline_mode = #tpu.pipeline_mode<synchronous>, transform_indices = @transform_8, window_bounds = array<i64: 1, 128>}, {transform_indices = @transform_9, window_bounds = array<i64: 128, 128>}]} {
    %c0 = arith.constant 0 : index
    %0 = memref.load %arg1[%c0] : memref<1xi32, #tpu.memory_space<smem>>
    %c1013904242_i32 = arith.constant 1013904242 : i32
    %1 = arith.muli %arg0, %c1013904242_i32 : i32
    %2 = arith.addi %0, %1 : i32
    %c0_0 = arith.constant 0 : index
    %c0_1 = arith.constant 0 : index
    %3 = vector.load %arg2[%c0_0, %c0_1] : memref<128x64xf32, #tpu.memory_space<vmem>>, vector<128x64xf32>
    %c0_2 = arith.constant 0 : index
    %c0_3 = arith.constant 0 : index
    %4 = vector.load %arg3[%c0_2, %c0_3] : memref<64x1024xbf16, #tpu.memory_space<vmem>>, vector<64x1024xbf16>
    %c0_4 = arith.constant 0 : index
    %c0_5 = arith.constant 0 : index
    %5 = vector.load %arg4[%c0_4, %c0_5] : memref<1x1024xf32, #tpu.memory_space<vmem>>, vector<1x1024xf32>
    %c0_6 = arith.constant 0 : index
    %c0_7 = arith.constant 0 : index
    %6 = vector.load %arg5[%c0_6, %c0_7] : memref<1024x512xbf16, #tpu.memory_space<vmem>>, vector<1024x512xbf16>
    %c0_8 = arith.constant 0 : index
    %c0_9 = arith.constant 0 : index
    %7 = vector.load %arg6[%c0_8, %c0_9] : memref<1x512xf32, #tpu.memory_space<vmem>>, vector<1x512xf32>
    %c0_10 = arith.constant 0 : index
    %c0_11 = arith.constant 0 : index
    %8 = vector.load %arg7[%c0_10, %c0_11] : memref<512x256xbf16, #tpu.memory_space<vmem>>, vector<512x256xbf16>
    %c0_12 = arith.constant 0 : index
    %c0_13 = arith.constant 0 : index
    %9 = vector.load %arg8[%c0_12, %c0_13] : memref<1x256xf32, #tpu.memory_space<vmem>>, vector<1x256xf32>
    %c0_14 = arith.constant 0 : index
    %c0_15 = arith.constant 0 : index
    %10 = vector.load %arg9[%c0_14, %c0_15] : memref<256x128xbf16, #tpu.memory_space<vmem>>, vector<256x128xbf16>
    %c0_16 = arith.constant 0 : index
    %c0_17 = arith.constant 0 : index
    %11 = vector.load %arg10[%c0_16, %c0_17] : memref<1x128xf32, #tpu.memory_space<vmem>>, vector<1x128xf32>
    %12 = arith.truncf %3 : vector<128x64xf32> to vector<128x64xbf16>
    %cst = arith.constant dense<0.000000e+00> : vector<128x1024xf32>
    %13 = tpu.matmul %12, %4, %cst {dimension_numbers = #tpu.dot_dimension_numbers<[1], [0], [0], [1], [0, 0, 1, 1], [], []>} : vector<128x64xbf16>, vector<64x1024xbf16>, vector<128x1024xf32> -> vector<128x1024xf32>
    %14 = vector.broadcast %5 : vector<1x1024xf32> to vector<128x1024xf32>
    %15 = arith.addf %13, %14 : vector<128x1024xf32>
    %cst_18 = arith.constant 0.000000e+00 : f32
    %16 = vector.broadcast %cst_18 : f32 to vector<128x1024xf32>
    %17 = arith.cmpf ogt, %15, %16 : vector<128x1024xf32>
    %cst_19 = arith.constant 2.000000e-01 : f32
    %18 = vector.broadcast %cst_19 : f32 to vector<128x1024xf32>
    %19 = arith.mulf %18, %15 : vector<128x1024xf32>
    %20 = arith.select %17, %15, %19 : vector<128x1024xi1>, vector<128x1024xf32>
    %c1_i32 = arith.constant 1 : i32
    %21 = arith.addi %2, %c1_i32 : i32
    %22 = tpu.iota {dimensions = array<i32: 0>} : vector<128x1024xi32>
    %23 = tpu.iota {dimensions = array<i32: 1>} : vector<128x1024xi32>
    %c-1640531527_i32 = arith.constant -1640531527 : i32
    %24 = vector.broadcast %c-1640531527_i32 : i32 to vector<128x1024xi32>
    %25 = arith.muli %22, %24 : vector<128x1024xi32>
    %26 = vector.broadcast %21 : i32 to vector<128x1024xi32>
    %27 = arith.addi %26, %25 : vector<128x1024xi32>
    %c-2048144789_i32 = arith.constant -2048144789 : i32
    %28 = vector.broadcast %c-2048144789_i32 : i32 to vector<128x1024xi32>
    %29 = arith.muli %23, %28 : vector<128x1024xi32>
    %30 = arith.addi %27, %29 : vector<128x1024xi32>
    %c16_i32 = arith.constant 16 : i32
    %31 = vector.broadcast %c16_i32 : i32 to vector<128x1024xi32>
    %32 = arith.shrui %30, %31 : vector<128x1024xi32>
    %33 = arith.xori %30, %32 : vector<128x1024xi32>
    %c2146121005_i32 = arith.constant 2146121005 : i32
    %34 = vector.broadcast %c2146121005_i32 : i32 to vector<128x1024xi32>
    %35 = arith.muli %33, %34 : vector<128x1024xi32>
    %c15_i32 = arith.constant 15 : i32
    %36 = vector.broadcast %c15_i32 : i32 to vector<128x1024xi32>
    %37 = arith.shrui %35, %36 : vector<128x1024xi32>
    %38 = arith.xori %35, %37 : vector<128x1024xi32>
    %c-2073254261_i32 = arith.constant -2073254261 : i32
    %39 = vector.broadcast %c-2073254261_i32 : i32 to vector<128x1024xi32>
    %40 = arith.muli %38, %39 : vector<128x1024xi32>
    %c16_i32_20 = arith.constant 16 : i32
    %41 = vector.broadcast %c16_i32_20 : i32 to vector<128x1024xi32>
    %42 = arith.shrui %40, %41 : vector<128x1024xi32>
    %43 = arith.xori %40, %42 : vector<128x1024xi32>
    %c1288490188_i32 = arith.constant 1288490188 : i32
    %44 = vector.broadcast %c1288490188_i32 : i32 to vector<128x1024xi32>
    %45 = arith.cmpi uge, %43, %44 : vector<128x1024xi32>
    %cst_21 = arith.constant 0.000000e+00 : f32
    %46 = vector.broadcast %cst_21 : f32 to vector<128x1024xf32>
    %47 = arith.select %45, %20, %46 : vector<128x1024xi1>, vector<128x1024xf32>
    %48 = arith.truncf %47 : vector<128x1024xf32> to vector<128x1024xbf16>
    %cst_22 = arith.constant dense<0.000000e+00> : vector<128x512xf32>
    %49 = tpu.matmul %48, %6, %cst_22 {dimension_numbers = #tpu.dot_dimension_numbers<[1], [0], [0], [1], [0, 0, 1, 1], [], []>} : vector<128x1024xbf16>, vector<1024x512xbf16>, vector<128x512xf32> -> vector<128x512xf32>
    %50 = vector.broadcast %7 : vector<1x512xf32> to vector<128x512xf32>
    %51 = arith.addf %49, %50 : vector<128x512xf32>
    %cst_23 = arith.constant 0.000000e+00 : f32
    %52 = vector.broadcast %cst_23 : f32 to vector<128x512xf32>
    %53 = arith.cmpf ogt, %51, %52 : vector<128x512xf32>
    %cst_24 = arith.constant 2.000000e-01 : f32
    %54 = vector.broadcast %cst_24 : f32 to vector<128x512xf32>
    %55 = arith.mulf %54, %51 : vector<128x512xf32>
    %56 = arith.select %53, %51, %55 : vector<128x512xi1>, vector<128x512xf32>
    %c2_i32 = arith.constant 2 : i32
    %57 = arith.addi %2, %c2_i32 : i32
    %58 = tpu.iota {dimensions = array<i32: 0>} : vector<128x512xi32>
    %59 = tpu.iota {dimensions = array<i32: 1>} : vector<128x512xi32>
    %c-1640531527_i32_25 = arith.constant -1640531527 : i32
    %60 = vector.broadcast %c-1640531527_i32_25 : i32 to vector<128x512xi32>
    %61 = arith.muli %58, %60 : vector<128x512xi32>
    %62 = vector.broadcast %57 : i32 to vector<128x512xi32>
    %63 = arith.addi %62, %61 : vector<128x512xi32>
    %c-2048144789_i32_26 = arith.constant -2048144789 : i32
    %64 = vector.broadcast %c-2048144789_i32_26 : i32 to vector<128x512xi32>
    %65 = arith.muli %59, %64 : vector<128x512xi32>
    %66 = arith.addi %63, %65 : vector<128x512xi32>
    %c16_i32_27 = arith.constant 16 : i32
    %67 = vector.broadcast %c16_i32_27 : i32 to vector<128x512xi32>
    %68 = arith.shrui %66, %67 : vector<128x512xi32>
    %69 = arith.xori %66, %68 : vector<128x512xi32>
    %c2146121005_i32_28 = arith.constant 2146121005 : i32
    %70 = vector.broadcast %c2146121005_i32_28 : i32 to vector<128x512xi32>
    %71 = arith.muli %69, %70 : vector<128x512xi32>
    %c15_i32_29 = arith.constant 15 : i32
    %72 = vector.broadcast %c15_i32_29 : i32 to vector<128x512xi32>
    %73 = arith.shrui %71, %72 : vector<128x512xi32>
    %74 = arith.xori %71, %73 : vector<128x512xi32>
    %c-2073254261_i32_30 = arith.constant -2073254261 : i32
    %75 = vector.broadcast %c-2073254261_i32_30 : i32 to vector<128x512xi32>
    %76 = arith.muli %74, %75 : vector<128x512xi32>
    %c16_i32_31 = arith.constant 16 : i32
    %77 = vector.broadcast %c16_i32_31 : i32 to vector<128x512xi32>
    %78 = arith.shrui %76, %77 : vector<128x512xi32>
    %79 = arith.xori %76, %78 : vector<128x512xi32>
    %c1288490188_i32_32 = arith.constant 1288490188 : i32
    %80 = vector.broadcast %c1288490188_i32_32 : i32 to vector<128x512xi32>
    %81 = arith.cmpi uge, %79, %80 : vector<128x512xi32>
    %cst_33 = arith.constant 0.000000e+00 : f32
    %82 = vector.broadcast %cst_33 : f32 to vector<128x512xf32>
    %83 = arith.select %81, %56, %82 : vector<128x512xi1>, vector<128x512xf32>
    %84 = arith.truncf %83 : vector<128x512xf32> to vector<128x512xbf16>
    %cst_34 = arith.constant dense<0.000000e+00> : vector<128x256xf32>
    %85 = tpu.matmul %84, %8, %cst_34 {dimension_numbers = #tpu.dot_dimension_numbers<[1], [0], [0], [1], [0, 0, 1, 1], [], []>} : vector<128x512xbf16>, vector<512x256xbf16>, vector<128x256xf32> -> vector<128x256xf32>
    %86 = vector.broadcast %9 : vector<1x256xf32> to vector<128x256xf32>
    %87 = arith.addf %85, %86 : vector<128x256xf32>
    %cst_35 = arith.constant 0.000000e+00 : f32
    %88 = vector.broadcast %cst_35 : f32 to vector<128x256xf32>
    %89 = arith.cmpf ogt, %87, %88 : vector<128x256xf32>
    %cst_36 = arith.constant 2.000000e-01 : f32
    %90 = vector.broadcast %cst_36 : f32 to vector<128x256xf32>
    %91 = arith.mulf %90, %87 : vector<128x256xf32>
    %92 = arith.select %89, %87, %91 : vector<128x256xi1>, vector<128x256xf32>
    %c3_i32 = arith.constant 3 : i32
    %93 = arith.addi %2, %c3_i32 : i32
    %94 = tpu.iota {dimensions = array<i32: 0>} : vector<128x256xi32>
    %95 = tpu.iota {dimensions = array<i32: 1>} : vector<128x256xi32>
    %c-1640531527_i32_37 = arith.constant -1640531527 : i32
    %96 = vector.broadcast %c-1640531527_i32_37 : i32 to vector<128x256xi32>
    %97 = arith.muli %94, %96 : vector<128x256xi32>
    %98 = vector.broadcast %93 : i32 to vector<128x256xi32>
    %99 = arith.addi %98, %97 : vector<128x256xi32>
    %c-2048144789_i32_38 = arith.constant -2048144789 : i32
    %100 = vector.broadcast %c-2048144789_i32_38 : i32 to vector<128x256xi32>
    %101 = arith.muli %95, %100 : vector<128x256xi32>
    %102 = arith.addi %99, %101 : vector<128x256xi32>
    %c16_i32_39 = arith.constant 16 : i32
    %103 = vector.broadcast %c16_i32_39 : i32 to vector<128x256xi32>
    %104 = arith.shrui %102, %103 : vector<128x256xi32>
    %105 = arith.xori %102, %104 : vector<128x256xi32>
    %c2146121005_i32_40 = arith.constant 2146121005 : i32
    %106 = vector.broadcast %c2146121005_i32_40 : i32 to vector<128x256xi32>
    %107 = arith.muli %105, %106 : vector<128x256xi32>
    %c15_i32_41 = arith.constant 15 : i32
    %108 = vector.broadcast %c15_i32_41 : i32 to vector<128x256xi32>
    %109 = arith.shrui %107, %108 : vector<128x256xi32>
    %110 = arith.xori %107, %109 : vector<128x256xi32>
    %c-2073254261_i32_42 = arith.constant -2073254261 : i32
    %111 = vector.broadcast %c-2073254261_i32_42 : i32 to vector<128x256xi32>
    %112 = arith.muli %110, %111 : vector<128x256xi32>
    %c16_i32_43 = arith.constant 16 : i32
    %113 = vector.broadcast %c16_i32_43 : i32 to vector<128x256xi32>
    %114 = arith.shrui %112, %113 : vector<128x256xi32>
    %115 = arith.xori %112, %114 : vector<128x256xi32>
    %c1288490188_i32_44 = arith.constant 1288490188 : i32
    %116 = vector.broadcast %c1288490188_i32_44 : i32 to vector<128x256xi32>
    %117 = arith.cmpi uge, %115, %116 : vector<128x256xi32>
    %cst_45 = arith.constant 0.000000e+00 : f32
    %118 = vector.broadcast %cst_45 : f32 to vector<128x256xf32>
    %119 = arith.select %117, %92, %118 : vector<128x256xi1>, vector<128x256xf32>
    %120 = arith.truncf %119 : vector<128x256xf32> to vector<128x256xbf16>
    %cst_46 = arith.constant dense<0.000000e+00> : vector<128x128xf32>
    %121 = tpu.matmul %120, %10, %cst_46 {dimension_numbers = #tpu.dot_dimension_numbers<[1], [0], [0], [1], [0, 0, 1, 1], [], []>} : vector<128x256xbf16>, vector<256x128xbf16>, vector<128x128xf32> -> vector<128x128xf32>
    %122 = vector.broadcast %11 : vector<1x128xf32> to vector<128x128xf32>
    %123 = arith.addf %121, %122 : vector<128x128xf32>
    %124 = arith.negf %123 : vector<128x128xf32>
    %125 = math.exp %124 : vector<128x128xf32>
    %cst_47 = arith.constant 1.000000e+00 : f32
    %126 = vector.broadcast %cst_47 : f32 to vector<128x128xf32>
    %127 = arith.addf %126, %125 : vector<128x128xf32>
    %128 = arith.divf %126, %127 : vector<128x128xf32>
    %c0_48 = arith.constant 0 : index
    %c0_49 = arith.constant 0 : index
    %129 = vector.load %arg11[%c0_48, %c0_49] : memref<128x128xf32, #tpu.memory_space<vmem>>, vector<128x128xf32>
    tpu.vector_store %arg11[%c0_48, %c0_49], %128 {strides = array<i32>} : memref<128x128xf32, #tpu.memory_space<vmem>>, vector<128x128xf32>,
    return
  }
  func.func @transform_0(%arg0: i32, %arg1: memref<1xi32, #tpu.memory_space<smem>>) -> (i32, i32) {
    %c0_i32 = arith.constant 0 : i32
    %c0_i32_0 = arith.constant 0 : i32
    return %arg0, %c0_i32 : i32, i32
  }
  func.func @transform_1(%arg0: i32, %arg1: memref<1xi32, #tpu.memory_space<smem>>) -> (i32, i32) {
    %c0_i32 = arith.constant 0 : i32
    %c0_i32_0 = arith.constant 0 : i32
    %c0_i32_1 = arith.constant 0 : i32
    return %c0_i32, %c0_i32_0 : i32, i32
  }
  func.func @transform_2(%arg0: i32, %arg1: memref<1xi32, #tpu.memory_space<smem>>) -> (i32, i32) {
    %c0_i32 = arith.constant 0 : i32
    %c0_i32_0 = arith.constant 0 : i32
    %c0_i32_1 = arith.constant 0 : i32
    return %c0_i32, %c0_i32_0 : i32, i32
  }
  func.func @transform_3(%arg0: i32, %arg1: memref<1xi32, #tpu.memory_space<smem>>) -> (i32, i32) {
    %c0_i32 = arith.constant 0 : i32
    %c0_i32_0 = arith.constant 0 : i32
    %c0_i32_1 = arith.constant 0 : i32
    return %c0_i32, %c0_i32_0 : i32, i32
  }
  func.func @transform_4(%arg0: i32, %arg1: memref<1xi32, #tpu.memory_space<smem>>) -> (i32, i32) {
    %c0_i32 = arith.constant 0 : i32
    %c0_i32_0 = arith.constant 0 : i32
    %c0_i32_1 = arith.constant 0 : i32
    return %c0_i32, %c0_i32_0 : i32, i32
  }
  func.func @transform_5(%arg0: i32, %arg1: memref<1xi32, #tpu.memory_space<smem>>) -> (i32, i32) {
    %c0_i32 = arith.constant 0 : i32
    %c0_i32_0 = arith.constant 0 : i32
    %c0_i32_1 = arith.constant 0 : i32
    return %c0_i32, %c0_i32_0 : i32, i32
  }
  func.func @transform_6(%arg0: i32, %arg1: memref<1xi32, #tpu.memory_space<smem>>) -> (i32, i32) {
    %c0_i32 = arith.constant 0 : i32
    %c0_i32_0 = arith.constant 0 : i32
    %c0_i32_1 = arith.constant 0 : i32
    return %c0_i32, %c0_i32_0 : i32, i32
  }
  func.func @transform_7(%arg0: i32, %arg1: memref<1xi32, #tpu.memory_space<smem>>) -> (i32, i32) {
    %c0_i32 = arith.constant 0 : i32
    %c0_i32_0 = arith.constant 0 : i32
    %c0_i32_1 = arith.constant 0 : i32
    return %c0_i32, %c0_i32_0 : i32, i32
  }
  func.func @transform_8(%arg0: i32, %arg1: memref<1xi32, #tpu.memory_space<smem>>) -> (i32, i32) {
    %c0_i32 = arith.constant 0 : i32
    %c0_i32_0 = arith.constant 0 : i32
    %c0_i32_1 = arith.constant 0 : i32
    return %c0_i32, %c0_i32_0 : i32, i32
  }
  func.func @transform_9(%arg0: i32, %arg1: memref<1xi32, #tpu.memory_space<smem>>) -> (i32, i32) {
    %c0_i32 = arith.constant 0 : i32
    %c0_i32_0 = arith.constant 0 : i32
    return %arg0, %c0_i32 : i32, i32
  }
}

</mosaic_0001>

<llo_original>
// kernel: tpu_custom_call.1
$region0: #{tpu_custom_call.1}
  #allocation0 [shape = 'u32[]', space=smem, size = 0x4, offset = 0x4, fixed_abs, tag = 'smem constant byte address 0x4 - core index']
  #allocation1 [shape = 'u32[144,128]{1,0:T(1,128)}', space=vmem, size = 0x12000, scoped, tag = 'internal scratch']
  #allocation2 [shape = 's32[1]{0}', space=sflag, size = 0x4, scoped, tag = 'scoped memory for tpu_custom_call.1']
  #allocation3 [shape = 's32[1]{0:T(128)S(6)}', space=smem, size = 0x200, scoped, tag = 'prefetched SMEM operand 0']
  %s0 = inlined_call_operand.<no memory space> [shape: s32[1], index: 0, kind: input, shape index: {}]
  %s1 = inlined_call_operand.vmem [shape: f32[256,64], index: 1, kind: input, shape index: {}]
  %s2 = inlined_call_operand.vmem [shape: bf16[64,1024], index: 2, kind: input, shape index: {}]
  %s3 = inlined_call_operand.hbm [shape: f32[1,1024], index: 3, kind: input, shape index: {}]
  %s4 = inlined_call_operand.hbm [shape: bf16[1024,512], index: 4, kind: input, shape index: {}]
  %s5 = inlined_call_operand.vmem [shape: f32[1,512], index: 5, kind: input, shape index: {}]
  %s6 = inlined_call_operand.hbm [shape: bf16[512,256], index: 6, kind: input, shape index: {}]
  %s7 = inlined_call_operand.vmem [shape: f32[1,256], index: 7, kind: input, shape index: {}]
  %s8 = inlined_call_operand.vmem [shape: bf16[256,128], index: 8, kind: input, shape index: {}]
  %s9 = inlined_call_operand.vmem [shape: f32[1,128], index: 9, kind: input, shape index: {}]
  %s10 = inlined_call_operand.hbm [shape: f32[256,128], index: 10, kind: output, shape index: {}]
  %s11 = sld [smem:[#allocation0]]
  $region81: #{tpu_custom_call.1} parent=0
    _
  %s13 = ssub.s32 1, %s11
  %s14 = scalar_select 0, %s13, %s11
  %15 = sst [smem:[#allocation3]] %s0
  $region1: #{tpu_custom_call.1} parent=0
    #allocation4 [shape = 'u8[4096]{0}', space=vmem, size = 0x1000, scoped, tag = 'input window, operand 3, single buffered']
    #allocation5 [shape = 's32[2]{0}', space=sflag, size = 0x8, scoped, tag = 'scoped memory for tpu_custom_call.1']
    #allocation6 [shape = 's32[2]{0}', space=sflag, size = 0x8, scoped, tag = 'scoped memory for tpu_custom_call.1']
    #allocation7 [shape = 'u8[1048576]{0}', space=vmem, size = 0x100000, scoped, tag = 'input window, operand 4, single buffered']
    #allocation8 [shape = 's32[1]{0}', space=sflag, size = 0x4, scoped, tag = 'scoped memory for tpu_custom_call.1']
    #allocation9 [shape = 'u8[262144]{0}', space=vmem, size = 0x40000, scoped, tag = 'input window, operand 6, single buffered']
    #allocation10 [shape = 'u8[131072]{0}', space=vmem, size = 0x20000, scoped, tag = 'output window, operand 0']
    %16 = vsyncpa [#allocation5], 0
    %17 = vsyncpa [#allocation8], 0
    %18 = vsyncpa [#allocation6], 0
    %s19 = scalar_lea.sflag [#allocation6], 1
    %20 = vsyncpa %s19, 0
    loop: start=0, step=1, limit=4
    $region2: #{tpu_custom_call.1} parent=1 // loop_pre_header
      _
    $region3: #{tpu_custom_call.1} parent=1 // loop_header
      %s22 = sphi 0, %s26
      %p23 = scmp.ge.s32.totalorder %s22, 4
      %s32 = sphi 0, %s34
      %s35 = sphi 0, %s32
      %s36 = sphi 0, %s35
      %s52 = sphi 0, %s36
      %s56 = sphi 0, %s56
      %s58 = sphi 0, %s56
      %s59 = sphi 0, %s58
      %s73 = sphi 0, %s59
      %s77 = sphi 0, %s77
      %s79 = sphi 0, %s77
      %s80 = sphi 0, %s79
      %s94 = sphi 0, %s80
      %s98 = sphi 0, %s98
      %s100 = sphi 0, %s98
      %s101 = sphi 0, %s100
      %s115 = sphi 0, %s101
      %s119 = sphi 0, %s119
      %s121 = sphi 0, %s119
      %s122 = sphi 0, %s121
      %s136 = sphi 0, %s122
      %s140 = sphi 0, %s140
      %s142 = sphi 0, %s140
      %s143 = sphi 0, %s142
      %s157 = sphi 0, %s143
      %s161 = sphi 0, %s161
      %s163 = sphi 0, %s161
      %s164 = sphi 0, %s163
      %s178 = sphi 0, %s164
      %s182 = sphi 0, %s182
      %s184 = sphi 0, %s182
      %s185 = sphi 0, %s184
      %s199 = sphi 0, %s185
      %s203 = sphi 0, %s203
      %s205 = sphi 0, %s203
      %s206 = sphi 0, %s205
      %s220 = sphi 0, %s206
      %s226 = sphi 0, %s228
      %s229 = sphi 0, %s226
      %s230 = sphi 0, %s229
      %s246 = sphi 0, %s230
    $region4: #{tpu_custom_call.1} parent=1 // loop_header_branch
      %25 = sbr.rel (%p23) target = $region8
    $region5: #{tpu_custom_call.1} parent=1 // loop_body
      %s27 = ssub.s32 %s22, 1
      %s28 = ssub.s32 %s22, 2
      %s29 = sadd.s32 %s22, 1
      %s30 = ssub.s32 %s22, %s29
      %p31 = scmp.eq.s32.totalorder %s30, 0
      %s33 = sadd.s32 %s32, 1
      %s34 = scalar_select %p31, %s32, %s33
      %p37 = pneg %p31
      %p38 = scmp.eq.s32.totalorder %s22, 1
      %p39 = por %p37, %p38
      %p40 = scmp.ne.s32.totalorder %s32, %s35
      %p41 = scmp.eq.s32.totalorder %s22, 0
      %p42 = por %p40, %p41
      %p43 = scmp.ne.s32.totalorder %s32, %s35
      %p44 = scmp.eq.s32.totalorder %s27, 1
      %p45 = por %p43, %p44
      %p46 = scmp.ne.s32.totalorder %s35, %s36
      %p47 = scmp.eq.s32.totalorder %s27, 0
      %p48 = por %p46, %p47
      %p49 = scmp.ne.s32.totalorder %s35, %s36
      %p50 = scmp.eq.s32.totalorder %s28, 1
      %p51 = por %p49, %p50
      %p53 = scmp.ne.s32.totalorder %s36, %s52
      %p54 = scmp.eq.s32.totalorder %s28, 0
      %p55 = por %p53, %p54
      %s57 = sadd.s32 %s56, 1
      %p60 = scmp.eq.s32.totalorder %s22, 1
      %p61 = scmp.ne.s32.totalorder %s56, %s58
      %p62 = scmp.eq.s32.totalorder %s22, 0
      %p63 = por %p61, %p62
      %p64 = scmp.ne.s32.totalorder %s56, %s58
      %p65 = scmp.eq.s32.totalorder %s27, 1
      %p66 = por %p64, %p65
      %p67 = scmp.ne.s32.totalorder %s58, %s59
      %p68 = scmp.eq.s32.totalorder %s27, 0
      %p69 = por %p67, %p68
      %p70 = scmp.ne.s32.totalorder %s58, %s59
      %p71 = scmp.eq.s32.totalorder %s28, 1
      %p72 = por %p70, %p71
      %p74 = scmp.ne.s32.totalorder %s59, %s73
      %p75 = scmp.eq.s32.totalorder %s28, 0
      %p76 = por %p74, %p75
      %s78 = sadd.s32 %s77, 1
      %p81 = scmp.eq.s32.totalorder %s22, 1
      %p82 = scmp.ne.s32.totalorder %s77, %s79
      %p83 = scmp.eq.s32.totalorder %s22, 0
      %p84 = por %p82, %p83
      %p85 = scmp.ne.s32.totalorder %s77, %s79
      %p86 = scmp.eq.s32.totalorder %s27, 1
      %p87 = por %p85, %p86
      %p88 = scmp.ne.s32.totalorder %s79, %s80
      %p89 = scmp.eq.s32.totalorder %s27, 0
      %p90 = por %p88, %p89
      %p91 = scmp.ne.s32.totalorder %s79, %s80
      %p92 = scmp.eq.s32.totalorder %s28, 1
      %p93 = por %p91, %p92
      %p95 = scmp.ne.s32.totalorder %s80, %s94
      %p96 = scmp.eq.s32.totalorder %s28, 0
      %p97 = por %p95, %p96
      %s99 = sadd.s32 %s98, 1
      %p102 = scmp.eq.s32.totalorder %s22, 1
      %p103 = scmp.ne.s32.totalorder %s98, %s100
      %p104 = scmp.eq.s32.totalorder %s22, 0
      %p105 = por %p103, %p104
      %p106 = scmp.ne.s32.totalorder %s98, %s100
      %p107 = scmp.eq.s32.totalorder %s27, 1
      %p108 = por %p106, %p107
      %p109 = scmp.ne.s32.totalorder %s100, %s101
      %p110 = scmp.eq.s32.totalorder %s27, 0
      %p111 = por %p109, %p110
      %p112 = scmp.ne.s32.totalorder %s100, %s101
      %p113 = scmp.eq.s32.totalorder %s28, 1
      %p114 = por %p112, %p113
      %p116 = scmp.ne.s32.totalorder %s101, %s115
      %p117 = scmp.eq.s32.totalorder %s28, 0
      %p118 = por %p116, %p117
      %s120 = sadd.s32 %s119, 1
      %p123 = scmp.eq.s32.totalorder %s22, 1
      %p124 = scmp.ne.s32.totalorder %s119, %s121
      %p125 = scmp.eq.s32.totalorder %s22, 0
      %p126 = por %p124, %p125
      %p127 = scmp.ne.s32.totalorder %s119, %s121
      %p128 = scmp.eq.s32.totalorder %s27, 1
      %p129 = por %p127, %p128
      %p130 = scmp.ne.s32.totalorder %s121, %s122
      %p131 = scmp.eq.s32.totalorder %s27, 0
      %p132 = por %p130, %p131
      %p133 = scmp.ne.s32.totalorder %s121, %s122
      %p134 = scmp.eq.s32.totalorder %s28, 1
      %p135 = por %p133, %p134
      %p137 = scmp.ne.s32.totalorder %s122, %s136
      %p138 = scmp.eq.s32.totalorder %s28, 0
      %p139 = por %p137, %p138
      %s141 = sadd.s32 %s140, 1
      %p144 = scmp.eq.s32.totalorder %s22, 1
      %p145 = scmp.ne.s32.totalorder %s140, %s142
      %p146 = scmp.eq.s32.totalorder %s22, 0
      %p147 = por %p145, %p146
      %p148 = scmp.ne.s32.totalorder %s140, %s142
      %p149 = scmp.eq.s32.totalorder %s27, 1
      %p150 = por %p148, %p149
      %p151 = scmp.ne.s32.totalorder %s142, %s143
      %p152 = scmp.eq.s32.totalorder %s27, 0
      %p153 = por %p151, %p152
      %p154 = scmp.ne.s32.totalorder %s142, %s143
      %p155 = scmp.eq.s32.totalorder %s28, 1
      %p156 = por %p154, %p155
      %p158 = scmp.ne.s32.totalorder %s143, %s157
      %p159 = scmp.eq.s32.totalorder %s28, 0
      %p160 = por %p158, %p159
      %s162 = sadd.s32 %s161, 1
      %p165 = scmp.eq.s32.totalorder %s22, 1
      %p166 = scmp.ne.s32.totalorder %s161, %s163
      %p167 = scmp.eq.s32.totalorder %s22, 0
      %p168 = por %p166, %p167
      %p169 = scmp.ne.s32.totalorder %s161, %s163
      %p170 = scmp.eq.s32.totalorder %s27, 1
      %p171 = por %p169, %p170
      %p172 = scmp.ne.s32.totalorder %s163, %s164
      %p173 = scmp.eq.s32.totalorder %s27, 0
      %p174 = por %p172, %p173
      %p175 = scmp.ne.s32.totalorder %s163, %s164
      %p176 = scmp.eq.s32.totalorder %s28, 1
      %p177 = por %p175, %p176
      %p179 = scmp.ne.s32.totalorder %s164, %s178
      %p180 = scmp.eq.s32.totalorder %s28, 0
      %p181 = por %p179, %p180
      %s183 = sadd.s32 %s182, 1
      %p186 = scmp.eq.s32.totalorder %s22, 1
      %p187 = scmp.ne.s32.totalorder %s182, %s184
      %p188 = scmp.eq.s32.totalorder %s22, 0
      %p189 = por %p187, %p188
      %p190 = scmp.ne.s32.totalorder %s182, %s184
      %p191 = scmp.eq.s32.totalorder %s27, 1
      %p192 = por %p190, %p191
      %p193 = scmp.ne.s32.totalorder %s184, %s185
      %p194 = scmp.eq.s32.totalorder %s27, 0
      %p195 = por %p193, %p194
      %p196 = scmp.ne.s32.totalorder %s184, %s185
      %p197 = scmp.eq.s32.totalorder %s28, 1
      %p198 = por %p196, %p197
      %p200 = scmp.ne.s32.totalorder %s185, %s199
      %p201 = scmp.eq.s32.totalorder %s28, 0
      %p202 = por %p200, %p201
      %s204 = sadd.s32 %s203, 1
      %p207 = scmp.eq.s32.totalorder %s22, 1
      %p208 = scmp.ne.s32.totalorder %s203, %s205
      %p209 = scmp.eq.s32.totalorder %s22, 0
      %p210 = por %p208, %p209
      %p211 = scmp.ne.s32.totalorder %s203, %s205
      %p212 = scmp.eq.s32.totalorder %s27, 1
      %p213 = por %p211, %p212
      %p214 = scmp.ne.s32.totalorder %s205, %s206
      %p215 = scmp.eq.s32.totalorder %s27, 0
      %p216 = por %p214, %p215
      %p217 = scmp.ne.s32.totalorder %s205, %s206
      %p218 = scmp.eq.s32.totalorder %s28, 1
      %p219 = por %p217, %p218
      %p221 = scmp.ne.s32.totalorder %s206, %s220
      %p222 = scmp.eq.s32.totalorder %s28, 0
      %p223 = por %p221, %p222
      %s224 = ssub.s32 %s22, %s29
      %p225 = scmp.eq.s32.totalorder %s224, 0
      %s227 = sadd.s32 %s226, 1
      %s228 = scalar_select %p225, %s226, %s227
      %p231 = pneg %p225
      %p232 = scmp.eq.s32.totalorder %s22, 1
      %p233 = por %p231, %p232
      %p234 = scmp.ne.s32.totalorder %s226, %s229
      %p235 = scmp.eq.s32.totalorder %s22, 0
      %p236 = por %p234, %p235
      %p237 = scmp.ne.s32.totalorder %s226, %s229
      %p238 = scmp.eq.s32.totalorder %s27, 1
      %p239 = por %p237, %p238
      %p240 = scmp.ne.s32.totalorder %s229, %s230
      %p241 = scmp.eq.s32.totalorder %s27, 0
      %p242 = por %p240, %p241
      %p243 = scmp.ne.s32.totalorder %s229, %s230
      %p244 = scmp.eq.s32.totalorder %s28, 1
      %p245 = por %p243, %p244
      %p247 = scmp.ne.s32.totalorder %s230, %s246
      %p248 = scmp.eq.s32.totalorder %s28, 0
      %p249 = por %p247, %p248
      %p250 = scmp.le.s32.totalorder 1, %s22
      %p251 = scmp.lt.s32.totalorder %s22, 3
      %p252 = pnand %p250, %p251
      %p253 = pneg %p252
      // Predicated region
      $region9: #{tpu_custom_call.1} parent=5 // pred_check
        _
      $region10: #{tpu_custom_call.1} parent=5 // pred_check_branch
        %255 = sbr.rel (%p252) target = $region12
      $region11: #{tpu_custom_call.1} parent=5 // pred_region
        %s256 = ssub.s32 %s22, 1
        // Predicated region
        $region13: #{tpu_custom_call.1} parent=11 // pred_check
          %p257 = pneg %p69
        $region14: #{tpu_custom_call.1} parent=11 // pred_check_branch
          %259 = sbr.rel (%p257) target = $region16
        $region15: #{tpu_custom_call.1} parent=11 // pred_region
          _
        $region16: #{tpu_custom_call.1} parent=11 // pred_fallthru
          _
        // Predicated region
        $region17: #{tpu_custom_call.1} parent=11 // pred_check
          %p260 = pneg %p90
        $region18: #{tpu_custom_call.1} parent=11 // pred_check_branch
          %262 = sbr.rel (%p260) target = $region20
        $region19: #{tpu_custom_call.1} parent=11 // pred_region
          %s264 = ssub.s32 128, 128
          %265 = vsyncadd [#allocation5], %s264
          %s267 = sshll.u32 [#allocation4], 4
          %s268 = int_to_ptr.vmem [resolvable:$true] %s267
          %270 = dma.hbm_to_vmem [thread:$0]  %s3, 128, %s268, [#allocation5]
        $region20: #{tpu_custom_call.1} parent=11 // pred_fallthru
          _
        // Predicated region
        $region21: #{tpu_custom_call.1} parent=11 // pred_check
          %p271 = pneg %p111
        $region22: #{tpu_custom_call.1} parent=11 // pred_check_branch
          %273 = sbr.rel (%p271) target = $region24
        $region23: #{tpu_custom_call.1} parent=11 // pred_region
          %s275 = ssub.s32 32768, 32768
          %276 = vsyncadd [#allocation8], %s275
          %s277 = sshll.u32 [#allocation7], 4
          %s278 = int_to_ptr.vmem [resolvable:$true] %s277
          %283 = dma.hbm_to_vmem [thread:$0]  %s4, 32768, %s278, [#allocation8], 256, 256, 16
        $region24: #{tpu_custom_call.1} parent=11 // pred_fallthru
          _
        // Predicated region
        $region25: #{tpu_custom_call.1} parent=11 // pred_check
          %p284 = pneg %p132
        $region26: #{tpu_custom_call.1} parent=11 // pred_check_branch
          %286 = sbr.rel (%p284) target = $region28
        $region27: #{tpu_custom_call.1} parent=11 // pred_region
          _
        $region28: #{tpu_custom_call.1} parent=11 // pred_fallthru
          _
        // Predicated region
        $region29: #{tpu_custom_call.1} parent=11 // pred_check
          %p287 = pneg %p153
        $region30: #{tpu_custom_call.1} parent=11 // pred_check_branch
          %289 = sbr.rel (%p287) target = $region32
        $region31: #{tpu_custom_call.1} parent=11 // pred_region
          %s291 = ssub.s32 8192, 8192
          %292 = vsyncadd [#allocation8], %s291
          %s293 = sshll.u32 [#allocation9], 4
          %s294 = int_to_ptr.vmem [resolvable:$true] %s293
          %299 = dma.hbm_to_vmem [thread:$0]  %s6, 8192, %s294, [#allocation8], 128, 128, 8
        $region32: #{tpu_custom_call.1} parent=11 // pred_fallthru
          _
        // Predicated region
        $region33: #{tpu_custom_call.1} parent=11 // pred_check
          %p300 = pneg %p174
        $region34: #{tpu_custom_call.1} parent=11 // pred_check_branch
          %302 = sbr.rel (%p300) target = $region36
        $region35: #{tpu_custom_call.1} parent=11 // pred_region
          _
        $region36: #{tpu_custom_call.1} parent=11 // pred_fallthru
          _
        // Predicated region
        $region37: #{tpu_custom_call.1} parent=11 // pred_check
          %p303 = pneg %p195
        $region38: #{tpu_custom_call.1} parent=11 // pred_check_branch
          %305 = sbr.rel (%p303) target = $region40
        $region39: #{tpu_custom_call.1} parent=11 // pred_region
          _
        $region40: #{tpu_custom_call.1} parent=11 // pred_fallthru
          _
        // Predicated region
        $region41: #{tpu_custom_call.1} parent=11 // pred_check
          %p306 = pneg %p216
        $region42: #{tpu_custom_call.1} parent=11 // pred_check_branch
          %308 = sbr.rel (%p306) target = $region44
        $region43: #{tpu_custom_call.1} parent=11 // pred_region
          _
        $region44: #{tpu_custom_call.1} parent=11 // pred_fallthru
          _
      $region12: #{tpu_custom_call.1} parent=5 // pred_fallthru
        _
      %p309 = scmp.lt.s32.totalorder %s22, 2
      // Predicated region
      $region45: #{tpu_custom_call.1} parent=5 // pred_check
        %p310 = pneg %p309
      $region46: #{tpu_custom_call.1} parent=5 // pred_check_branch
        %312 = sbr.rel (%p310) target = $region48
      $region47: #{tpu_custom_call.1} parent=5 // pred_region
        // Predicated region
        $region49: #{tpu_custom_call.1} parent=47 // pred_check
          %p313 = pneg %p42
        $region50: #{tpu_custom_call.1} parent=47 // pred_check_branch
          %315 = sbr.rel (%p313) target = $region52
        $region51: #{tpu_custom_call.1} parent=47 // pred_region
          %s316 = smul.u32 16, %s22
          %p317 = scmp.lt.s32.totalorder %s316, 31
          %s318 = scalar_select %p317, %s316, 31
          %s319 = smul.addr %s318, 8
          %s320 = scalar_lea.vmem %s1, %s319
          %s321 = smul.u32 16, %s22
        $region52: #{tpu_custom_call.1} parent=47 // pred_fallthru
          _
      $region48: #{tpu_custom_call.1} parent=5 // pred_fallthru
        _
      %p322 = scmp.le.s32.totalorder 1, %s22
      %p323 = scmp.lt.s32.totalorder %s22, 3
      %p324 = pnand %p322, %p323
      %p325 = pneg %p324
      // Predicated region
      $region53: #{tpu_custom_call.1} parent=5 // pred_check
        _
      $region54: #{tpu_custom_call.1} parent=5 // pred_check_branch
        %327 = sbr.rel (%p324) target = $region56
      $region55: #{tpu_custom_call.1} parent=5 // pred_region
        %s328 = ssub.s32 %s22, 1
        // Predicated region
        $region57: #{tpu_custom_call.1} parent=55 // pred_check
          %p329 = pneg %p90
        $region58: #{tpu_custom_call.1} parent=55 // pred_check_branch
          %331 = sbr.rel (%p329) target = $region60
        $region59: #{tpu_custom_call.1} parent=55 // pred_region
          %332 = dma.done [#allocation5], 128
        $region60: #{tpu_custom_call.1} parent=55 // pred_fallthru
          _
        // Predicated region
        $region61: #{tpu_custom_call.1} parent=55 // pred_check
          %p333 = pneg %p111
        $region62: #{tpu_custom_call.1} parent=55 // pred_check_branch
          %335 = sbr.rel (%p333) target = $region64
        $region63: #{tpu_custom_call.1} parent=55 // pred_region
          %336 = dma.done [#allocation8], 32768
        $region64: #{tpu_custom_call.1} parent=55 // pred_fallthru
          _
        // Predicated region
        $region65: #{tpu_custom_call.1} parent=55 // pred_check
          %p337 = pneg %p153
        $region66: #{tpu_custom_call.1} parent=55 // pred_check_branch
          %339 = sbr.rel (%p337) target = $region68
        $region67: #{tpu_custom_call.1} parent=55 // pred_region
          %340 = dma.done [#allocation8], 8192
        $region68: #{tpu_custom_call.1} parent=55 // pred_fallthru
          _
        %s341 = smul.u32 16, %s27
        %p342 = scmp.lt.s32.totalorder %s341, 31
        %s343 = scalar_select %p342, %s341, 31
        %s344 = smul.addr %s343, 8
        %s345 = scalar_lea.vmem %s1, %s344
        %p346 = pneg %p48
        %p347 = pneg %p45
        %p348 = pneg %p69
        %p349 = pneg %p66
        %p350 = pneg %p90
        %p351 = pneg %p87
        %p352 = pneg %p111
        %p353 = pneg %p108
        %p354 = pneg %p132
        %p355 = pneg %p129
        %p356 = pneg %p153
        %p357 = pneg %p150
        %p358 = pneg %p174
        %p359 = pneg %p171
        %p360 = pneg %p195
        %p361 = pneg %p192
        %p362 = pneg %p216
        %p363 = pneg %p213
        %p364 = pneg %p242
        %p365 = pneg %p239
        %s366 = sand.u32 %s229, 1
        %s367 = scalar_lea.sflag [#allocation6], %s366
        %s368 = sand.u32 %s229, 1
        %s369 = smul.addr %s368, 128
        %s370 = scalar_lea.vmem [#allocation10], %s369
        %s371 = smul.u32 16, %s27
        %p372 = scmp.lt.s32.totalorder %s371, 31
        %s373 = scalar_select %p372, %s371, 31
        %s374 = smul.addr %s373, 8
        %s375 = scalar_lea.vmem %s1, %s374
        %s376 = smul.u32 16, %s27
        %s377 = smul.u32 16, %s27
        %s379 = sld [smem:[#allocation3]]
        %s380 = smul.u32 %s27, 1013904242
        %s381 = sadd.s32 %s379, %s380
        %v382 = vld [vmem:[%s375] sm:$0xff]
        %v383 = vld [vmem:[%s375 + $0x8] sm:$0xff]
        %v384 = vld [vmem:[%s375 + $0x10] sm:$0xff]
        %v385 = vld [vmem:[%s375 + $0x18] sm:$0xff]
        %v386 = vld [vmem:[%s375 + $0x20] sm:$0xff]
        %v387 = vld [vmem:[%s375 + $0x28] sm:$0xff]
        %v388 = vld [vmem:[%s375 + $0x30] sm:$0xff]
        %v389 = vld [vmem:[%s375 + $0x38] sm:$0xff]
        %v390 = vld [vmem:[%s375 + $0x40] sm:$0xff]
        %v391 = vld [vmem:[%s375 + $0x48] sm:$0xff]
        %v392 = vld [vmem:[%s375 + $0x50] sm:$0xff]
        %v393 = vld [vmem:[%s375 + $0x58] sm:$0xff]
        %v394 = vld [vmem:[%s375 + $0x60] sm:$0xff]
        %v395 = vld [vmem:[%s375 + $0x68] sm:$0xff]
        %v396 = vld [vmem:[%s375 + $0x70] sm:$0xff]
        %v397 = vld [vmem:[%s375 + $0x78] sm:$0xff]
        %v398 = vld [vmem:[%s2] sm:$0xff]
        %v399 = vld [vmem:[%s2 + $0x8] sm:$0xff]
        %v400 = vld [vmem:[%s2 + $0x10] sm:$0xff]
        %v401 = vld [vmem:[%s2 + $0x18] sm:$0xff]
        %v402 = vld [vmem:[%s2 + $0x20] sm:$0xff]
        %v403 = vld [vmem:[%s2 + $0x28] sm:$0xff]
        %v404 = vld [vmem:[%s2 + $0x30] sm:$0xff]
        %v405 = vld [vmem:[%s2 + $0x38] sm:$0xff]
        %v406 = vld [vmem:[%s2 + $0x40] sm:$0xff]
        %v407 = vld [vmem:[%s2 + $0x48] sm:$0xff]
        %v408 = vld [vmem:[%s2 + $0x50] sm:$0xff]
        %v409 = vld [vmem:[%s2 + $0x58] sm:$0xff]
        %v410 = vld [vmem:[%s2 + $0x60] sm:$0xff]
        %v411 = vld [vmem:[%s2 + $0x68] sm:$0xff]
        %v412 = vld [vmem:[%s2 + $0x70] sm:$0xff]
        %v413 = vld [vmem:[%s2 + $0x78] sm:$0xff]
        %v414 = vld [vmem:[%s2 + $0x80] sm:$0xff]
        %v415 = vld [vmem:[%s2 + $0x88] sm:$0xff]
        %v416 = vld [vmem:[%s2 + $0x90] sm:$0xff]
        %v417 = vld [vmem:[%s2 + $0x98] sm:$0xff]
        %v418 = vld [vmem:[%s2 + $0xa0] sm:$0xff]
        %v419 = vld [vmem:[%s2 + $0xa8] sm:$0xff]
        %v420 = vld [vmem:[%s2 + $0xb0] sm:$0xff]
        %v421 = vld [vmem:[%s2 + $0xb8] sm:$0xff]
        %v422 = vld [vmem:[%s2 + $0xc0] sm:$0xff]
        %v423 = vld [vmem:[%s2 + $0xc8] sm:$0xff]
        %v424 = vld [vmem:[%s2 + $0xd0] sm:$0xff]
        %v425 = vld [vmem:[%s2 + $0xd8] sm:$0xff]
        %v426 = vld [vmem:[%s2 + $0xe0] sm:$0xff]
        %v427 = vld [vmem:[%s2 + $0xe8] sm:$0xff]
        %v428 = vld [vmem:[%s2 + $0xf0] sm:$0xff]
        %v429 = vld [vmem:[%s2 + $0xf8] sm:$0xff]
        %v430 = vld [vmem:[#allocation4] sm:$0xff]
        %v431 = vld [vmem:[#allocation7] sm:$0xff]
        %v432 = vld [vmem:[#allocation7 + $0x8] sm:$0xff]
        %v433 = vld [vmem:[#allocation7 + $0x10] sm:$0xff]
        %v434 = vld [vmem:[#allocation7 + $0x18] sm:$0xff]
        %v435 = vld [vmem:[#allocation7 + $0x20] sm:$0xff]
        %v436 = vld [vmem:[#allocation7 + $0x28] sm:$0xff]
        %v437 = vld [vmem:[#allocation7 + $0x30] sm:$0xff]
        %v438 = vld [vmem:[#allocation7 + $0x38] sm:$0xff]
        %v439 = vld [vmem:[#allocation7 + $0x40] sm:$0xff]
        %v440 = vld [vmem:[#allocation7 + $0x48] sm:$0xff]
        %v441 = vld [vmem:[#allocation7 + $0x50] sm:$0xff]
        %v442 = vld [vmem:[#allocation7 + $0x58] sm:$0xff]
        %v443 = vld [vmem:[#allocation7 + $0x60] sm:$0xff]
        %v444 = vld [vmem:[#allocation7 + $0x68] sm:$0xff]
        %v445 = vld [vmem:[#allocation7 + $0x70] sm:$0xff]
        %v446 = vld [vmem:[#allocation7 + $0x78] sm:$0xff]
        %v447 = vld [vmem:[#allocation7 + $0x80] sm:$0xff]
        %v448 = vld [vmem:[#allocation7 + $0x88] sm:$0xff]
        %v449 = vld [vmem:[#allocation7 + $0x90] sm:$0xff]
        %v450 = vld [vmem:[#allocation7 + $0x98] sm:$0xff]
        %v451 = vld [vmem:[#allocation7 + $0xa0] sm:$0xff]
        %v452 = vld [vmem:[#allocation7 + $0xa8] sm:$0xff]
        %v453 = vld [vmem:[#allocation7 + $0xb0] sm:$0xff]
        %v454 = vld [vmem:[#allocation7 + $0xb8] sm:$0xff]
        %v455 = vld [vmem:[#allocation7 + $0xc0] sm:$0xff]
        %v456 = vld [vmem:[#allocation7 + $0xc8] sm:$0xff]
        %v457 = vld [vmem:[#allocation7 + $0xd0] sm:$0xff]
        %v458 = vld [vmem:[#allocation7 + $0xd8] sm:$0xff]
        %v459 = vld [vmem:[#allocation7 + $0xe0] sm:$0xff]
        %v460 = vld [vmem:[#allocation7 + $0xe8] sm:$0xff]
        %v461 = vld [vmem:[#allocation7 + $0xf0] sm:$0xff]
        %v462 = vld [vmem:[#allocation7 + $0xf8] sm:$0xff]
        %v463 = vld [vmem:[#allocation7 + $0x100] sm:$0xff]
        %v464 = vld [vmem:[#allocation7 + $0x108] sm:$0xff]
        %v465 = vld [vmem:[#allocation7 + $0x110] sm:$0xff]
        %v466 = vld [vmem:[#allocation7 + $0x118] sm:$0xff]
        %v467 = vld [vmem:[#allocation7 + $0x120] sm:$0xff]
        %v468 = vld [vmem:[#allocation7 + $0x128] sm:$0xff]
        %v469 = vld [vmem:[#allocation7 + $0x130] sm:$0xff]
        %v470 = vld [vmem:[#allocation7 + $0x138] sm:$0xff]
        %v471 = vld [vmem:[#allocation7 + $0x140] sm:$0xff]
        %v472 = vld [vmem:[#allocation7 + $0x148] sm:$0xff]
        %v473 = vld [vmem:[#allocation7 + $0x150] sm:$0xff]
        %v474 = vld [vmem:[#allocation7 + $0x158] sm:$0xff]
        %v475 = vld [vmem:[#allocation7 + $0x160] sm:$0xff]
        %v476 = vld [vmem:[#allocation7 + $0x168] sm:$0xff]
        %v477 = vld [vmem:[#allocation7 + $0x170] sm:$0xff]
        %v478 = vld [vmem:[#allocation7 + $0x178] sm:$0xff]
        %v479 = vld [vmem:[#allocation7 + $0x180] sm:$0xff]
        %v480 = vld [vmem:[#allocation7 + $0x188] sm:$0xff]
        %v481 = vld [vmem:[#allocation7 + $0x190] sm:$0xff]
        %v482 = vld [vmem:[#allocation7 + $0x198] sm:$0xff]
        %v483 = vld [vmem:[#allocation7 + $0x1a0] sm:$0xff]
        %v484 = vld [vmem:[#allocation7 + $0x1a8] sm:$0xff]
        %v485 = vld [vmem:[#allocation7 + $0x1b0] sm:$0xff]
        %v486 = vld [vmem:[#allocation7 + $0x1b8] sm:$0xff]
        %v487 = vld [vmem:[#allocation7 + $0x1c0] sm:$0xff]
        %v488 = vld [vmem:[#allocation7 + $0x1c8] sm:$0xff]
        %v489 = vld [vmem:[#allocation7 + $0x1d0] sm:$0xff]
        %v490 = vld [vmem:[#allocation7 + $0x1d8] sm:$0xff]
        %v491 = vld [vmem:[#allocation7 + $0x1e0] sm:$0xff]
        %v492 = vld [vmem:[#allocation7 + $0x1e8] sm:$0xff]
        %v493 = vld [vmem:[#allocation7 + $0x1f0] sm:$0xff]
        %v494 = vld [vmem:[#allocation7 + $0x1f8] sm:$0xff]
        %v495 = vld [vmem:[#allocation7 + $0x200] sm:$0xff]
        %v496 = vld [vmem:[#allocation7 + $0x208] sm:$0xff]
        %v497 = vld [vmem:[#allocation7 + $0x210] sm:$0xff]
        %v498 = vld [vmem:[#allocation7 + $0x218] sm:$0xff]
        %v499 = vld [vmem:[#allocation7 + $0x220] sm:$0xff]
        %v500 = vld [vmem:[#allocation7 + $0x228] sm:$0xff]
        %v501 = vld [vmem:[#allocation7 + $0x230] sm:$0xff]
        %v502 = vld [vmem:[#allocation7 + $0x238] sm:$0xff]
        %v503 = vld [vmem:[#allocation7 + $0x240] sm:$0xff]
        %v504 = vld [vmem:[#allocation7 + $0x248] sm:$0xff]
        %v505 = vld [vmem:[#allocation7 + $0x250] sm:$0xff]
        %v506 = vld [vmem:[#allocation7 + $0x258] sm:$0xff]
        %v507 = vld [vmem:[#allocation7 + $0x260] sm:$0xff]
        %v508 = vld [vmem:[#allocation7 + $0x268] sm:$0xff]
        %v509 = vld [vmem:[#allocation7 + $0x270] sm:$0xff]
        %v510 = vld [vmem:[#allocation7 + $0x278] sm:$0xff]
        %v511 = vld [vmem:[#allocation7 + $0x280] sm:$0xff]
        %v512 = vld [vmem:[#allocation7 + $0x288] sm:$0xff]
        %v513 = vld [vmem:[#allocation7 + $0x290] sm:$0xff]
        %v514 = vld [vmem:[#allocation7 + $0x298] sm:$0xff]
        %v515 = vld [vmem:[#allocation7 + $0x2a0] sm:$0xff]
        %v516 = vld [vmem:[#allocation7 + $0x2a8] sm:$0xff]
        %v517 = vld [vmem:[#allocation7 + $0x2b0] sm:$0xff]
        %v518 = vld [vmem:[#allocation7 + $0x2b8] sm:$0xff]
        %v519 = vld [vmem:[#allocation7 + $0x2c0] sm:$0xff]
        %v520 = vld [vmem:[#allocation7 + $0x2c8] sm:$0xff]
        %v521 = vld [vmem:[#allocation7 + $0x2d0] sm:$0xff]
        %v522 = vld [vmem:[#allocation7 + $0x2d8] sm:$0xff]
        %v523 = vld [vmem:[#allocation7 + $0x2e0] sm:$0xff]
        %v524 = vld [vmem:[#allocation7 + $0x2e8] sm:$0xff]
        %v525 = vld [vmem:[#allocation7 + $0x2f0] sm:$0xff]
        %v526 = vld [vmem:[#allocation7 + $0x2f8] sm:$0xff]
        %v527 = vld [vmem:[#allocation7 + $0x300] sm:$0xff]
        %v528 = vld [vmem:[#allocation7 + $0x308] sm:$0xff]
        %v529 = vld [vmem:[#allocation7 + $0x310] sm:$0xff]
        %v530 = vld [vmem:[#allocation7 + $0x318] sm:$0xff]
        %v531 = vld [vmem:[#allocation7 + $0x320] sm:$0xff]
        %v532 = vld [vmem:[#allocation7 + $0x328] sm:$0xff]
        %v533 = vld [vmem:[#allocation7 + $0x330] sm:$0xff]
        %v534 = vld [vmem:[#allocation7 + $0x338] sm:$0xff]
        %v535 = vld [vmem:[#allocation7 + $0x340] sm:$0xff]
        %v536 = vld [vmem:[#allocation7 + $0x348] sm:$0xff]
        %v537 = vld [vmem:[#allocation7 + $0x350] sm:$0xff]
        %v538 = vld [vmem:[#allocation7 + $0x358] sm:$0xff]
        %v539 = vld [vmem:[#allocation7 + $0x360] sm:$0xff]
        %v540 = vld [vmem:[#allocation7 + $0x368] sm:$0xff]
        %v541 = vld [vmem:[#allocation7 + $0x370] sm:$0xff]
        %v542 = vld [vmem:[#allocation7 + $0x378] sm:$0xff]
        %v543 = vld [vmem:[#allocation7 + $0x380] sm:$0xff]
        %v544 = vld [vmem:[#allocation7 + $0x388] sm:$0xff]
        %v545 = vld [vmem:[#allocation7 + $0x390] sm:$0xff]
        %v546 = vld [vmem:[#allocation7 + $0x398] sm:$0xff]
        %v547 = vld [vmem:[#allocation7 + $0x3a0] sm:$0xff]
        %v548 = vld [vmem:[#allocation7 + $0x3a8] sm:$0xff]
        %v549 = vld [vmem:[#allocation7 + $0x3b0] sm:$0xff]
        %v550 = vld [vmem:[#allocation7 + $0x3b8] sm:$0xff]
        %v551 = vld [vmem:[#allocation7 + $0x3c0] sm:$0xff]
        %v552 = vld [vmem:[#allocation7 + $0x3c8] sm:$0xff]
        %v553 = vld [vmem:[#allocation7 + $0x3d0] sm:$0xff]
        %v554 = vld [vmem:[#allocation7 + $0x3d8] sm:$0xff]
        %v555 = vld [vmem:[#allocation7 + $0x3e0] sm:$0xff]
        %v556 = vld [vmem:[#allocation7 + $0x3e8] sm:$0xff]
        %v557 = vld [vmem:[#allocation7 + $0x3f0] sm:$0xff]
        %v558 = vld [vmem:[#allocation7 + $0x3f8] sm:$0xff]
        %v559 = vld [vmem:[#allocation7 + $0x400] sm:$0xff]
        %v560 = vld [vmem:[#allocation7 + $0x408] sm:$0xff]
        %v561 = vld [vmem:[#allocation7 + $0x410] sm:$0xff]
        %v562 = vld [vmem:[#allocation7 + $0x418] sm:$0xff]
        %v563 = vld [vmem:[#allocation7 + $0x420] sm:$0xff]
        %v564 = vld [vmem:[#allocation7 + $0x428] sm:$0xff]
        %v565 = vld [vmem:[#allocation7 + $0x430] sm:$0xff]
        %v566 = vld [vmem:[#allocation7 + $0x438] sm:$0xff]
        %v567 = vld [vmem:[#allocation7 + $0x440] sm:$0xff]
        %v568 = vld [vmem:[#allocation7 + $0x448] sm:$0xff]
        %v569 = vld [vmem:[#allocation7 + $0x450] sm:$0xff]
        %v570 = vld [vmem:[#allocation7 + $0x458] sm:$0xff]
        %v571 = vld [vmem:[#allocation7 + $0x460] sm:$0xff]
        %v572 = vld [vmem:[#allocation7 + $0x468] sm:$0xff]
        %v573 = vld [vmem:[#allocation7 + $0x470] sm:$0xff]
        %v574 = vld [vmem:[#allocation7 + $0x478] sm:$0xff]
        %v575 = vld [vmem:[#allocation7 + $0x480] sm:$0xff]
        %v576 = vld [vmem:[#allocation7 + $0x488] sm:$0xff]
        %v577 = vld [vmem:[#allocation7 + $0x490] sm:$0xff]
        %v578 = vld [vmem:[#allocation7 + $0x498] sm:$0xff]
        %v579 = vld [vmem:[#allocation7 + $0x4a0] sm:$0xff]
        %v580 = vld [vmem:[#allocation7 + $0x4a8] sm:$0xff]
        %v581 = vld [vmem:[#allocation7 + $0x4b0] sm:$0xff]
        %v582 = vld [vmem:[#allocation7 + $0x4b8] sm:$0xff]
        %v583 = vld [vmem:[#allocation7 + $0x4c0] sm:$0xff]
        %v584 = vld [vmem:[#allocation7 + $0x4c8] sm:$0xff]
        %v585 = vld [vmem:[#allocation7 + $0x4d0] sm:$0xff]
        %v586 = vld [vmem:[#allocation7 + $0x4d8] sm:$0xff]
        %v587 = vld [vmem:[#allocation7 + $0x4e0] sm:$0xff]
        %v588 = vld [vmem:[#allocation7 + $0x4e8] sm:$0xff]
        %v589 = vld [vmem:[#allocation7 + $0x4f0] sm:$0xff]
        %v590 = vld [vmem:[#allocation7 + $0x4f8] sm:$0xff]
        %v591 = vld [vmem:[#allocation7 + $0x500] sm:$0xff]
        %v592 = vld [vmem:[#allocation7 + $0x508] sm:$0xff]
        %v593 = vld [vmem:[#allocation7 + $0x510] sm:$0xff]
        %v594 = vld [vmem:[#allocation7 + $0x518] sm:$0xff]
        %v595 = vld [vmem:[#allocation7 + $0x520] sm:$0xff]
        %v596 = vld [vmem:[#allocation7 + $0x528] sm:$0xff]
        %v597 = vld [vmem:[#allocation7 + $0x530] sm:$0xff]
        %v598 = vld [vmem:[#allocation7 + $0x538] sm:$0xff]
        %v599 = vld [vmem:[#allocation7 + $0x540] sm:$0xff]
        %v600 = vld [vmem:[#allocation7 + $0x548] sm:$0xff]
        %v601 = vld [vmem:[#allocation7 + $0x550] sm:$0xff]
        %v602 = vld [vmem:[#allocation7 + $0x558] sm:$0xff]
        %v603 = vld [vmem:[#allocation7 + $0x560] sm:$0xff]
        %v604 = vld [vmem:[#allocation7 + $0x568] sm:$0xff]
        %v605 = vld [vmem:[#allocation7 + $0x570] sm:$0xff]
        %v606 = vld [vmem:[#allocation7 + $0x578] sm:$0xff]
        %v607 = vld [vmem:[#allocation7 + $0x580] sm:$0xff]
        %v608 = vld [vmem:[#allocation7 + $0x588] sm:$0xff]
        %v609 = vld [vmem:[#allocation7 + $0x590] sm:$0xff]
        %v610 = vld [vmem:[#allocation7 + $0x598] sm:$0xff]
        %v611 = vld [vmem:[#allocation7 + $0x5a0] sm:$0xff]
        %v612 = vld [vmem:[#allocation7 + $0x5a8] sm:$0xff]
        %v613 = vld [vmem:[#allocation7 + $0x5b0] sm:$0xff]
        %v614 = vld [vmem:[#allocation7 + $0x5b8] sm:$0xff]
        %v615 = vld [vmem:[#allocation7 + $0x5c0] sm:$0xff]
        %v616 = vld [vmem:[#allocation7 + $0x5c8] sm:$0xff]
        %v617 = vld [vmem:[#allocation7 + $0x5d0] sm:$0xff]
        %v618 = vld [vmem:[#allocation7 + $0x5d8] sm:$0xff]
        %v619 = vld [vmem:[#allocation7 + $0x5e0] sm:$0xff]
        %v620 = vld [vmem:[#allocation7 + $0x5e8] sm:$0xff]
        %v621 = vld [vmem:[#allocation7 + $0x5f0] sm:$0xff]
        %v622 = vld [vmem:[#allocation7 + $0x5f8] sm:$0xff]
        %v623 = vld [vmem:[#allocation7 + $0x600] sm:$0xff]
        %v624 = vld [vmem:[#allocation7 + $0x608] sm:$0xff]
        %v625 = vld [vmem:[#allocation7 + $0x610] sm:$0xff]
        %v626 = vld [vmem:[#allocation7 + $0x618] sm:$0xff]
        %v627 = vld [vmem:[#allocation7 + $0x620] sm:$0xff]
        %v628 = vld [vmem:[#allocation7 + $0x628] sm:$0xff]
        %v629 = vld [vmem:[#allocation7 + $0x630] sm:$0xff]
        %v630 = vld [vmem:[#allocation7 + $0x638] sm:$0xff]
        %v631 = vld [vmem:[#allocation7 + $0x640] sm:$0xff]
        %v632 = vld [vmem:[#allocation7 + $0x648] sm:$0xff]
        %v633 = vld [vmem:[#allocation7 + $0x650] sm:$0xff]
        %v634 = vld [vmem:[#allocation7 + $0x658] sm:$0xff]
        %v635 = vld [vmem:[#allocation7 + $0x660] sm:$0xff]
        %v636 = vld [vmem:[#allocation7 + $0x668] sm:$0xff]
        %v637 = vld [vmem:[#allocation7 + $0x670] sm:$0xff]
        %v638 = vld [vmem:[#allocation7 + $0x678] sm:$0xff]
        %v639 = vld [vmem:[#allocation7 + $0x680] sm:$0xff]
        %v640 = vld [vmem:[#allocation7 + $0x688] sm:$0xff]
        %v641 = vld [vmem:[#allocation7 + $0x690] sm:$0xff]
        %v642 = vld [vmem:[#allocation7 + $0x698] sm:$0xff]
        %v643 = vld [vmem:[#allocation7 + $0x6a0] sm:$0xff]
        %v644 = vld [vmem:[#allocation7 + $0x6a8] sm:$0xff]
        %v645 = vld [vmem:[#allocation7 + $0x6b0] sm:$0xff]
        %v646 = vld [vmem:[#allocation7 + $0x6b8] sm:$0xff]
        %v647 = vld [vmem:[#allocation7 + $0x6c0] sm:$0xff]
        %v648 = vld [vmem:[#allocation7 + $0x6c8] sm:$0xff]
        %v649 = vld [vmem:[#allocation7 + $0x6d0] sm:$0xff]
        %v650 = vld [vmem:[#allocation7 + $0x6d8] sm:$0xff]
        %v651 = vld [vmem:[#allocation7 + $0x6e0] sm:$0xff]
        %v652 = vld [vmem:[#allocation7 + $0x6e8] sm:$0xff]
        %v653 = vld [vmem:[#allocation7 + $0x6f0] sm:$0xff]
        %v654 = vld [vmem:[#allocation7 + $0x6f8] sm:$0xff]
        %v655 = vld [vmem:[#allocation7 + $0x700] sm:$0xff]
        %v656 = vld [vmem:[#allocation7 + $0x708] sm:$0xff]
        %v657 = vld [vmem:[#allocation7 + $0x710] sm:$0xff]
        %v658 = vld [vmem:[#allocation7 + $0x718] sm:$0xff]
        %v659 = vld [vmem:[#allocation7 + $0x720] sm:$0xff]
        %v660 = vld [vmem:[#allocation7 + $0x728] sm:$0xff]
        %v661 = vld [vmem:[#allocation7 + $0x730] sm:$0xff]
        %v662 = vld [vmem:[#allocation7 + $0x738] sm:$0xff]
        %v663 = vld [vmem:[#allocation7 + $0x740] sm:$0xff]
        %v664 = vld [vmem:[#allocation7 + $0x748] sm:$0xff]
        %v665 = vld [vmem:[#allocation7 + $0x750] sm:$0xff]
        %v666 = vld [vmem:[#allocation7 + $0x758] sm:$0xff]
        %v667 = vld [vmem:[#allocation7 + $0x760] sm:$0xff]
        %v668 = vld [vmem:[#allocation7 + $0x768] sm:$0xff]
        %v669 = vld [vmem:[#allocation7 + $0x770] sm:$0xff]
        %v670 = vld [vmem:[#allocation7 + $0x778] sm:$0xff]
        %v671 = vld [vmem:[#allocation7 + $0x780] sm:$0xff]
        %v672 = vld [vmem:[#allocation7 + $0x788] sm:$0xff]
        %v673 = vld [vmem:[#allocation7 + $0x790] sm:$0xff]
        %v674 = vld [vmem:[#allocation7 + $0x798] sm:$0xff]
        %v675 = vld [vmem:[#allocation7 + $0x7a0] sm:$0xff]
        %v676 = vld [vmem:[#allocation7 + $0x7a8] sm:$0xff]
        %v677 = vld [vmem:[#allocation7 + $0x7b0] sm:$0xff]
        %v678 = vld [vmem:[#allocation7 + $0x7b8] sm:$0xff]
        %v679 = vld [vmem:[#allocation7 + $0x7c0] sm:$0xff]
        %v680 = vld [vmem:[#allocation7 + $0x7c8] sm:$0xff]
        %v681 = vld [vmem:[#allocation7 + $0x7d0] sm:$0xff]
        %v682 = vld [vmem:[#allocation7 + $0x7d8] sm:$0xff]
        %v683 = vld [vmem:[#allocation7 + $0x7e0] sm:$0xff]
        %v684 = vld [vmem:[#allocation7 + $0x7e8] sm:$0xff]
        %v685 = vld [vmem:[#allocation7 + $0x7f0] sm:$0xff]
        %v686 = vld [vmem:[#allocation7 + $0x7f8] sm:$0xff]
        %v687 = vld [vmem:[%s5] sm:$0xf]
        %v688 = vld [vmem:[#allocation9] sm:$0xff]
        %v689 = vld [vmem:[#allocation9 + $0x8] sm:$0xff]
        %v690 = vld [vmem:[#allocation9 + $0x10] sm:$0xff]
        %v691 = vld [vmem:[#allocation9 + $0x18] sm:$0xff]
        %v692 = vld [vmem:[#allocation9 + $0x20] sm:$0xff]
        %v693 = vld [vmem:[#allocation9 + $0x28] sm:$0xff]
        %v694 = vld [vmem:[#allocation9 + $0x30] sm:$0xff]
        %v695 = vld [vmem:[#allocation9 + $0x38] sm:$0xff]
        %v696 = vld [vmem:[#allocation9 + $0x40] sm:$0xff]
        %v697 = vld [vmem:[#allocation9 + $0x48] sm:$0xff]
        %v698 = vld [vmem:[#allocation9 + $0x50] sm:$0xff]
        %v699 = vld [vmem:[#allocation9 + $0x58] sm:$0xff]
        %v700 = vld [vmem:[#allocation9 + $0x60] sm:$0xff]
        %v701 = vld [vmem:[#allocation9 + $0x68] sm:$0xff]
        %v702 = vld [vmem:[#allocation9 + $0x70] sm:$0xff]
        %v703 = vld [vmem:[#allocation9 + $0x78] sm:$0xff]
        %v704 = vld [vmem:[#allocation9 + $0x80] sm:$0xff]
        %v705 = vld [vmem:[#allocation9 + $0x88] sm:$0xff]
        %v706 = vld [vmem:[#allocation9 + $0x90] sm:$0xff]
        %v707 = vld [vmem:[#allocation9 + $0x98] sm:$0xff]
        %v708 = vld [vmem:[#allocation9 + $0xa0] sm:$0xff]
        %v709 = vld [vmem:[#allocation9 + $0xa8] sm:$0xff]
        %v710 = vld [vmem:[#allocation9 + $0xb0] sm:$0xff]
        %v711 = vld [vmem:[#allocation9 + $0xb8] sm:$0xff]
        %v712 = vld [vmem:[#allocation9 + $0xc0] sm:$0xff]
        %v713 = vld [vmem:[#allocation9 + $0xc8] sm:$0xff]
        %v714 = vld [vmem:[#allocation9 + $0xd0] sm:$0xff]
        %v715 = vld [vmem:[#allocation9 + $0xd8] sm:$0xff]
        %v716 = vld [vmem:[#allocation9 + $0xe0] sm:$0xff]
        %v717 = vld [vmem:[#allocation9 + $0xe8] sm:$0xff]
        %v718 = vld [vmem:[#allocation9 + $0xf0] sm:$0xff]
        %v719 = vld [vmem:[#allocation9 + $0xf8] sm:$0xff]
        %v720 = vld [vmem:[#allocation9 + $0x100] sm:$0xff]
        %v721 = vld [vmem:[#allocation9 + $0x108] sm:$0xff]
        %v722 = vld [vmem:[#allocation9 + $0x110] sm:$0xff]
        %v723 = vld [vmem:[#allocation9 + $0x118] sm:$0xff]
        %v724 = vld [vmem:[#allocation9 + $0x120] sm:$0xff]
        %v725 = vld [vmem:[#allocation9 + $0x128] sm:$0xff]
        %v726 = vld [vmem:[#allocation9 + $0x130] sm:$0xff]
        %v727 = vld [vmem:[#allocation9 + $0x138] sm:$0xff]
        %v728 = vld [vmem:[#allocation9 + $0x140] sm:$0xff]
        %v729 = vld [vmem:[#allocation9 + $0x148] sm:$0xff]
        %v730 = vld [vmem:[#allocation9 + $0x150] sm:$0xff]
        %v731 = vld [vmem:[#allocation9 + $0x158] sm:$0xff]
        %v732 = vld [vmem:[#allocation9 + $0x160] sm:$0xff]
        %v733 = vld [vmem:[#allocation9 + $0x168] sm:$0xff]
        %v734 = vld [vmem:[#allocation9 + $0x170] sm:$0xff]
        %v735 = vld [vmem:[#allocation9 + $0x178] sm:$0xff]
        %v736 = vld [vmem:[#allocation9 + $0x180] sm:$0xff]
        %v737 = vld [vmem:[#allocation9 + $0x188] sm:$0xff]
        %v738 = vld [vmem:[#allocation9 + $0x190] sm:$0xff]
        %v739 = vld [vmem:[#allocation9 + $0x198] sm:$0xff]
        %v740 = vld [vmem:[#allocation9 + $0x1a0] sm:$0xff]
        %v741 = vld [vmem:[#allocation9 + $0x1a8] sm:$0xff]
        %v742 = vld [vmem:[#allocation9 + $0x1b0] sm:$0xff]
        %v743 = vld [vmem:[#allocation9 + $0x1b8] sm:$0xff]
        %v744 = vld [vmem:[#allocation9 + $0x1c0] sm:$0xff]
        %v745 = vld [vmem:[#allocation9 + $0x1c8] sm:$0xff]
        %v746 = vld [vmem:[#allocation9 + $0x1d0] sm:$0xff]
        %v747 = vld [vmem:[#allocation9 + $0x1d8] sm:$0xff]
        %v748 = vld [vmem:[#allocation9 + $0x1e0] sm:$0xff]
        %v749 = vld [vmem:[#allocation9 + $0x1e8] sm:$0xff]
        %v750 = vld [vmem:[#allocation9 + $0x1f0] sm:$0xff]
        %v751 = vld [vmem:[#allocation9 + $0x1f8] sm:$0xff]
        %v752 = vld [vmem:[%s7] sm:$0x3]
        %v753 = vld [vmem:[%s8] sm:$0xf]
        %v754 = vld [vmem:[%s8 + $0x4] sm:$0xf]
        %v755 = vld [vmem:[%s8 + $0x8] sm:$0xf]
        %v756 = vld [vmem:[%s8 + $0xc] sm:$0xf]
        %v757 = vld [vmem:[%s8 + $0x10] sm:$0xf]
        %v758 = vld [vmem:[%s8 + $0x14] sm:$0xf]
        %v759 = vld [vmem:[%s8 + $0x18] sm:$0xf]
        %v760 = vld [vmem:[%s8 + $0x1c] sm:$0xf]
        %v761 = vld [vmem:[%s8 + $0x20] sm:$0xf]
        %v762 = vld [vmem:[%s8 + $0x24] sm:$0xf]
        %v763 = vld [vmem:[%s8 + $0x28] sm:$0xf]
        %v764 = vld [vmem:[%s8 + $0x2c] sm:$0xf]
        %v765 = vld [vmem:[%s8 + $0x30] sm:$0xf]
        %v766 = vld [vmem:[%s8 + $0x34] sm:$0xf]
        %v767 = vld [vmem:[%s8 + $0x38] sm:$0xf]
        %v768 = vld [vmem:[%s8 + $0x3c] sm:$0xf]
        %v769 = vld [vmem:[%s8 + $0x40] sm:$0xf]
        %v770 = vld [vmem:[%s8 + $0x44] sm:$0xf]
        %v771 = vld [vmem:[%s8 + $0x48] sm:$0xf]
        %v772 = vld [vmem:[%s8 + $0x4c] sm:$0xf]
        %v773 = vld [vmem:[%s8 + $0x50] sm:$0xf]
        %v774 = vld [vmem:[%s8 + $0x54] sm:$0xf]
        %v775 = vld [vmem:[%s8 + $0x58] sm:$0xf]
        %v776 = vld [vmem:[%s8 + $0x5c] sm:$0xf]
        %v777 = vld [vmem:[%s8 + $0x60] sm:$0xf]
        %v778 = vld [vmem:[%s8 + $0x64] sm:$0xf]
        %v779 = vld [vmem:[%s8 + $0x68] sm:$0xf]
        %v780 = vld [vmem:[%s8 + $0x6c] sm:$0xf]
        %v781 = vld [vmem:[%s8 + $0x70] sm:$0xf]
        %v782 = vld [vmem:[%s8 + $0x74] sm:$0xf]
        %v783 = vld [vmem:[%s8 + $0x78] sm:$0xf]
        %v784 = vld [vmem:[%s8 + $0x7c] sm:$0xf]
        %v785 = vld [vmem:[%s9] sm:$0x1]
        %v786 = vpack.c.bf16 %v383, %v382
        %v787 = vpack.c.bf16 %v385, %v384
        %v788 = vpack.c.bf16 %v387, %v386
        %v789 = vpack.c.bf16 %v389, %v388
        %v790 = vpack.c.bf16 %v391, %v390
        %v791 = vpack.c.bf16 %v393, %v392
        %v792 = vpack.c.bf16 %v395, %v394
        %v793 = vpack.c.bf16 %v397, %v396
        %v795 = vlaneseq
        %v796 = vshrl.u32 %v795, 7
        %v797 = vsub.s32 0, %v796
        %v798 = vrot.slane %v430, %v797
        %v799 = vlaneseq
        %v800 = vshrl.u32 %v799, 7
        %v801 = vsub.s32 1, %v800
        %v802 = vrot.slane %v430, %v801
        %v803 = vlaneseq
        %v804 = vshrl.u32 %v803, 7
        %v805 = vsub.s32 2, %v804
        %v806 = vrot.slane %v430, %v805
        %v807 = vlaneseq
        %v808 = vshrl.u32 %v807, 7
        %v809 = vsub.s32 3, %v808
        %v810 = vrot.slane %v430, %v809
        %v811 = vlaneseq
        %v812 = vshrl.u32 %v811, 7
        %v813 = vsub.s32 4, %v812
        %v814 = vrot.slane %v430, %v813
        %v815 = vlaneseq
        %v816 = vshrl.u32 %v815, 7
        %v817 = vsub.s32 5, %v816
        %v818 = vrot.slane %v430, %v817
        %v819 = vlaneseq
        %v820 = vshrl.u32 %v819, 7
        %v821 = vsub.s32 6, %v820
        %v822 = vrot.slane %v430, %v821
        %v823 = vlaneseq
        %v824 = vshrl.u32 %v823, 7
        %v825 = vsub.s32 7, %v824
        %v826 = vrot.slane %v430, %v825
        %v867 = vunpack.c.l.b16 %v398
        %v868 = vunpack.c.h.b16 %v398
        %v869 = vunpack.c.l.b16 %v399
        %v870 = vunpack.c.h.b16 %v399
        %v871 = vunpack.c.l.b16 %v400
        %v872 = vunpack.c.h.b16 %v400
        %v873 = vunpack.c.l.b16 %v401
        %v874 = vunpack.c.h.b16 %v401
        %v875 = vunpack.c.l.b16 %v402
        %v876 = vunpack.c.h.b16 %v402
        %v877 = vunpack.c.l.b16 %v403
        %v878 = vunpack.c.h.b16 %v403
        %v879 = vunpack.c.l.b16 %v404
        %v880 = vunpack.c.h.b16 %v404
        %v881 = vunpack.c.l.b16 %v405
        %v882 = vunpack.c.h.b16 %v405
        %v883 = vunpack.c.l.b16 %v406
        %v884 = vunpack.c.h.b16 %v406
        %v885 = vunpack.c.l.b16 %v407
        %v886 = vunpack.c.h.b16 %v407
        %v887 = vunpack.c.l.b16 %v408
        %v888 = vunpack.c.h.b16 %v408
        %v889 = vunpack.c.l.b16 %v409
        %v890 = vunpack.c.h.b16 %v409
        %v891 = vunpack.c.l.b16 %v410
        %v892 = vunpack.c.h.b16 %v410
        %v893 = vunpack.c.l.b16 %v411
        %v894 = vunpack.c.h.b16 %v411
        %v895 = vunpack.c.l.b16 %v412
        %v896 = vunpack.c.h.b16 %v412
        %v897 = vunpack.c.l.b16 %v413
        %v898 = vunpack.c.h.b16 %v413
        %v899 = vunpack.c.l.b16 %v414
        %v900 = vunpack.c.h.b16 %v414
        %v901 = vunpack.c.l.b16 %v415
        %v902 = vunpack.c.h.b16 %v415
        %v903 = vunpack.c.l.b16 %v416
        %v904 = vunpack.c.h.b16 %v416
        %v905 = vunpack.c.l.b16 %v417
        %v906 = vunpack.c.h.b16 %v417
        %v907 = vunpack.c.l.b16 %v418
        %v908 = vunpack.c.h.b16 %v418
        %v909 = vunpack.c.l.b16 %v419
        %v910 = vunpack.c.h.b16 %v419
        %v911 = vunpack.c.l.b16 %v420
        %v912 = vunpack.c.h.b16 %v420
        %v913 = vunpack.c.l.b16 %v421
        %v914 = vunpack.c.h.b16 %v421
        %v915 = vunpack.c.l.b16 %v422
        %v916 = vunpack.c.h.b16 %v422
        %v917 = vunpack.c.l.b16 %v423
        %v918 = vunpack.c.h.b16 %v423
        %v919 = vunpack.c.l.b16 %v424
        %v920 = vunpack.c.h.b16 %v424
        %v921 = vunpack.c.l.b16 %v425
        %v922 = vunpack.c.h.b16 %v425
        %v923 = vunpack.c.l.b16 %v426
        %v924 = vunpack.c.h.b16 %v426
        %v925 = vunpack.c.l.b16 %v427
        %v926 = vunpack.c.h.b16 %v427
        %v927 = vunpack.c.l.b16 %v428
        %v928 = vunpack.c.h.b16 %v428
        %v929 = vunpack.c.l.b16 %v429
        %v930 = vunpack.c.h.b16 %v429
        %v931 = vpack.c.b16 %v875, %v867
        %v932 = vpack.c.b16 %v876, %v868
        %v933 = vpack.c.b16 %v877, %v869
        %v934 = vpack.c.b16 %v878, %v870
        %v935 = vpack.c.b16 %v879, %v871
        %v936 = vpack.c.b16 %v880, %v872
        %v937 = vpack.c.b16 %v881, %v873
        %v938 = vpack.c.b16 %v882, %v874
        %v939 = vpack.c.b16 %v891, %v883
        %v940 = vpack.c.b16 %v892, %v884
        %v941 = vpack.c.b16 %v893, %v885
        %v942 = vpack.c.b16 %v894, %v886
        %v943 = vpack.c.b16 %v895, %v887
        %v944 = vpack.c.b16 %v896, %v888
        %v945 = vpack.c.b16 %v897, %v889
        %v946 = vpack.c.b16 %v898, %v890
        %v947 = vpack.c.b16 %v907, %v899
        %v948 = vpack.c.b16 %v908, %v900
        %v949 = vpack.c.b16 %v909, %v901
        %v950 = vpack.c.b16 %v910, %v902
        %v951 = vpack.c.b16 %v911, %v903
        %v952 = vpack.c.b16 %v912, %v904
        %v953 = vpack.c.b16 %v913, %v905
        %v954 = vpack.c.b16 %v914, %v906
        %v955 = vpack.c.b16 %v923, %v915
        %v956 = vpack.c.b16 %v924, %v916
        %v957 = vpack.c.b16 %v925, %v917
        %v958 = vpack.c.b16 %v926, %v918
        %v959 = vpack.c.b16 %v927, %v919
        %v960 = vpack.c.b16 %v928, %v920
        %v961 = vpack.c.b16 %v929, %v921
        %v962 = vpack.c.b16 %v930, %v922
        %vm995 = vcmask 523264
        %v997 = vsel %vm995, %v786, 0
        %v1000 = vsel %vm995, %v787, 0
        %v1003 = vsel %vm995, %v788, 0
        %v1006 = vsel %vm995, %v789, 0
        %v1009 = vsel %vm995, %v790, 0
        %v1012 = vsel %vm995, %v791, 0
        %v1015 = vsel %vm995, %v792, 0
        %v1018 = vsel %vm995, %v793, 0
        %1020 = vmatprep.subr.bf16.mxu0 0
        %1021 = vmatpush1.bf16.msra.mxu0 0
        %1022 = vmatprep.subr.bf16.mxu0 0
        %1023 = vmatpush1.bf16.msra.mxu0 0
        %1024 = vmatprep.subr.bf16.mxu0 0
        %1025 = vmatpush1.bf16.msra.mxu0 0
        %1026 = vmatprep.subr.bf16.mxu0 0
        %1027 = vmatpush1.bf16.msra.mxu0 0
        %1028 = vmatprep.subr.bf16.mxu0 %v956
        %1029 = vmatpush1.bf16.msra.mxu0 %v955
        %1030 = vmatprep.subr.bf16.mxu0 %v948
        %1031 = vmatpush1.bf16.msra.mxu0 %v947
        %1032 = vmatprep.subr.bf16.mxu0 %v940
        %1033 = vmatpush1.bf16.msra.mxu0 %v939
        %1034 = vmatprep.subr.bf16.mxu0 %v932
        %1035 = vmatpush1.bf16.msra.mxu0 %v931
        %1036 = vmatprep.subr.bf16.mxu0 0
        %1037 = vmatpush2.bf16.msra.mxu0 0
        %1038 = vmatprep.subr.bf16.mxu0 0
        %1039 = vmatpush2.bf16.msra.mxu0 0
        %1040 = vmatprep.subr.bf16.mxu0 0
        %1041 = vmatpush2.bf16.msra.mxu0 0
        %1042 = vmatprep.subr.bf16.mxu0 0
        %1043 = vmatpush2.bf16.msra.mxu0 0
        %1044 = vmatprep.subr.bf16.mxu0 0
        %1045 = vmatpush2.bf16.msra.mxu0 0
        %1046 = vmatprep.subr.bf16.mxu0 0
        %1047 = vmatpush2.bf16.msra.mxu0 0
        %1048 = vmatprep.subr.bf16.mxu0 0
        %1049 = vmatpush2.bf16.msra.mxu0 0
        %1050 = vmatprep.subr.bf16.mxu0 0
        %1051 = vmatpush2.bf16.msra.mxu0 0
        %1052 = vmatprep.mubr.bf16.mxu0 0
        %1053 = vmatmul.mubr.bf16.gmra.mxu0 %v997
        %v1054 = vpop.f32.mrf.mxu0
        %v1055 = vadd.f32 %v798, %v1054
        %v1056 = vpop.f32.mrf.mxu0
        %v1057 = vadd.f32 %v802, %v1056
        %v1058 = vpop.f32.mrf.mxu0
        %v1059 = vadd.f32 %v798, %v1058
        %v1060 = vpop.f32.mrf.mxu0
        %v1061 = vadd.f32 %v802, %v1060
        %1062 = vmatprep.mubr.bf16.mxu0 0
        %1063 = vmatmul.mubr.bf16.gmra.mxu0 %v1000
        %v1064 = vpop.f32.mrf.mxu0
        %v1065 = vadd.f32 %v798, %v1064
        %v1066 = vpop.f32.mrf.mxu0
        %v1067 = vadd.f32 %v802, %v1066
        %v1068 = vpop.f32.mrf.mxu0
        %v1069 = vadd.f32 %v798, %v1068
        %v1070 = vpop.f32.mrf.mxu0
        %v1071 = vadd.f32 %v802, %v1070
        %1072 = vmatprep.mubr.bf16.mxu0 0
        %1073 = vmatmul.mubr.bf16.gmra.mxu0 %v1003
        %v1074 = vpop.f32.mrf.mxu0
        %v1075 = vadd.f32 %v798, %v1074
        %v1076 = vpop.f32.mrf.mxu0
        %v1077 = vadd.f32 %v802, %v1076
        %v1078 = vpop.f32.mrf.mxu0
        %v1079 = vadd.f32 %v798, %v1078
        %v1080 = vpop.f32.mrf.mxu0
        %v1081 = vadd.f32 %v802, %v1080
        %1082 = vmatprep.mubr.bf16.mxu0 0
        %1083 = vmatmul.mubr.bf16.gmra.mxu0 %v1006
        %v1084 = vpop.f32.mrf.mxu0
        %v1085 = vadd.f32 %v798, %v1084
        %v1086 = vpop.f32.mrf.mxu0
        %v1087 = vadd.f32 %v802, %v1086
        %v1088 = vpop.f32.mrf.mxu0
        %v1089 = vadd.f32 %v798, %v1088
        %v1090 = vpop.f32.mrf.mxu0
        %v1091 = vadd.f32 %v802, %v1090
        %1092 = vmatprep.mubr.bf16.mxu0 0
        %1093 = vmatmul.mubr.bf16.gmra.mxu0 %v1009
        %v1094 = vpop.f32.mrf.mxu0
        %v1095 = vadd.f32 %v798, %v1094
        %v1096 = vpop.f32.mrf.mxu0
        %v1097 = vadd.f32 %v802, %v1096
        %v1098 = vpop.f32.mrf.mxu0
        %v1099 = vadd.f32 %v798, %v1098
        %v1100 = vpop.f32.mrf.mxu0
        %v1101 = vadd.f32 %v802, %v1100
        %1102 = vmatprep.mubr.bf16.mxu0 0
        %1103 = vmatmul.mubr.bf16.gmra.mxu0 %v1012
        %v1104 = vpop.f32.mrf.mxu0
        %v1105 = vadd.f32 %v798, %v1104
        %v1106 = vpop.f32.mrf.mxu0
        %v1107 = vadd.f32 %v802, %v1106
        %v1108 = vpop.f32.mrf.mxu0
        %v1109 = vadd.f32 %v798, %v1108
        %v1110 = vpop.f32.mrf.mxu0
        %v1111 = vadd.f32 %v802, %v1110
        %1112 = vmatprep.mubr.bf16.mxu0 0
        %1113 = vmatmul.mubr.bf16.gmra.mxu0 %v1015
        %v1114 = vpop.f32.mrf.mxu0
        %v1115 = vadd.f32 %v798, %v1114
        %v1116 = vpop.f32.mrf.mxu0
        %v1117 = vadd.f32 %v802, %v1116
        %v1118 = vpop.f32.mrf.mxu0
        %v1119 = vadd.f32 %v798, %v1118
        %v1120 = vpop.f32.mrf.mxu0
        %v1121 = vadd.f32 %v802, %v1120
        %1122 = vmatprep.mubr.bf16.mxu0 0
        %1123 = vmatmul.mubr.bf16.gmra.mxu0 %v1018
        %v1124 = vpop.f32.mrf.mxu0
        %v1125 = vadd.f32 %v798, %v1124
        %v1126 = vpop.f32.mrf.mxu0
        %v1127 = vadd.f32 %v802, %v1126
        %v1128 = vpop.f32.mrf.mxu0
        %v1129 = vadd.f32 %v798, %v1128
        %v1130 = vpop.f32.mrf.mxu0
        %v1131 = vadd.f32 %v802, %v1130
        %1132 = vdwg.mxu0
        %1133 = vmatprep.subr.bf16.mxu0 0
        %1134 = vmatpush1.bf16.msra.mxu0 0
        %1135 = vmatprep.subr.bf16.mxu0 0
        %1136 = vmatpush1.bf16.msra.mxu0 0
        %1137 = vmatprep.subr.bf16.mxu0 0
        %1138 = vmatpush1.bf16.msra.mxu0 0
        %1139 = vmatprep.subr.bf16.mxu0 0
        %1140 = vmatpush1.bf16.msra.mxu0 0
        %1141 = vmatprep.subr.bf16.mxu0 %v958
        %1142 = vmatpush1.bf16.msra.mxu0 %v957
        %1143 = vmatprep.subr.bf16.mxu0 %v950
        %1144 = vmatpush1.bf16.msra.mxu0 %v949
        %1145 = vmatprep.subr.bf16.mxu0 %v942
        %1146 = vmatpush1.bf16.msra.mxu0 %v941
        %1147 = vmatprep.subr.bf16.mxu0 %v934
        %1148 = vmatpush1.bf16.msra.mxu0 %v933
        %1149 = vmatprep.subr.bf16.mxu0 0
        %1150 = vmatpush2.bf16.msra.mxu0 0
        %1151 = vmatprep.subr.bf16.mxu0 0
        %1152 = vmatpush2.bf16.msra.mxu0 0
        %1153 = vmatprep.subr.bf16.mxu0 0
        %1154 = vmatpush2.bf16.msra.mxu0 0
        %1155 = vmatprep.subr.bf16.mxu0 0
        %1156 = vmatpush2.bf16.msra.mxu0 0
        %1157 = vmatprep.subr.bf16.mxu0 0
        %1158 = vmatpush2.bf16.msra.mxu0 0
        %1159 = vmatprep.subr.bf16.mxu0 0
        %1160 = vmatpush2.bf16.msra.mxu0 0
        %1161 = vmatprep.subr.bf16.mxu0 0
        %1162 = vmatpush2.bf16.msra.mxu0 0
        %1163 = vmatprep.subr.bf16.mxu0 0
        %1164 = vmatpush2.bf16.msra.mxu0 0
        %1165 = vmatprep.mubr.bf16.mxu0 0
        %1166 = vmatmul.mubr.bf16.gmra.mxu0 %v997
        %v1167 = vpop.f32.mrf.mxu0
        %v1168 = vadd.f32 %v806, %v1167
        %v1169 = vpop.f32.mrf.mxu0
        %v1170 = vadd.f32 %v810, %v1169
        %v1171 = vpop.f32.mrf.mxu0
        %v1172 = vadd.f32 %v806, %v1171
        %v1173 = vpop.f32.mrf.mxu0
        %v1174 = vadd.f32 %v810, %v1173
        %1175 = vmatprep.mubr.bf16.mxu0 0
        %1176 = vmatmul.mubr.bf16.gmra.mxu0 %v1000
        %v1177 = vpop.f32.mrf.mxu0
        %v1178 = vadd.f32 %v806, %v1177
        %v1179 = vpop.f32.mrf.mxu0
        %v1180 = vadd.f32 %v810, %v1179
        %v1181 = vpop.f32.mrf.mxu0
        %v1182 = vadd.f32 %v806, %v1181
        %v1183 = vpop.f32.mrf.mxu0
        %v1184 = vadd.f32 %v810, %v1183
        %1185 = vmatprep.mubr.bf16.mxu0 0
        %1186 = vmatmul.mubr.bf16.gmra.mxu0 %v1003
        %v1187 = vpop.f32.mrf.mxu0
        %v1188 = vadd.f32 %v806, %v1187
        %v1189 = vpop.f32.mrf.mxu0
        %v1190 = vadd.f32 %v810, %v1189
        %v1191 = vpop.f32.mrf.mxu0
        %v1192 = vadd.f32 %v806, %v1191
        %v1193 = vpop.f32.mrf.mxu0
        %v1194 = vadd.f32 %v810, %v1193
        %1195 = vmatprep.mubr.bf16.mxu0 0
        %1196 = vmatmul.mubr.bf16.gmra.mxu0 %v1006
        %v1197 = vpop.f32.mrf.mxu0
        %v1198 = vadd.f32 %v806, %v1197
        %v1199 = vpop.f32.mrf.mxu0
        %v1200 = vadd.f32 %v810, %v1199
        %v1201 = vpop.f32.mrf.mxu0
        %v1202 = vadd.f32 %v806, %v1201
        %v1203 = vpop.f32.mrf.mxu0
        %v1204 = vadd.f32 %v810, %v1203
        %1205 = vmatprep.mubr.bf16.mxu0 0
        %1206 = vmatmul.mubr.bf16.gmra.mxu0 %v1009
        %v1207 = vpop.f32.mrf.mxu0
        %v1208 = vadd.f32 %v806, %v1207
        %v1209 = vpop.f32.mrf.mxu0
        %v1210 = vadd.f32 %v810, %v1209
        %v1211 = vpop.f32.mrf.mxu0
        %v1212 = vadd.f32 %v806, %v1211
        %v1213 = vpop.f32.mrf.mxu0
        %v1214 = vadd.f32 %v810, %v1213
        %1215 = vmatprep.mubr.bf16.mxu0 0
        %1216 = vmatmul.mubr.bf16.gmra.mxu0 %v1012
        %v1217 = vpop.f32.mrf.mxu0
        %v1218 = vadd.f32 %v806, %v1217
        %v1219 = vpop.f32.mrf.mxu0
        %v1220 = vadd.f32 %v810, %v1219
        %v1221 = vpop.f32.mrf.mxu0
        %v1222 = vadd.f32 %v806, %v1221
        %v1223 = vpop.f32.mrf.mxu0
        %v1224 = vadd.f32 %v810, %v1223
        %1225 = vmatprep.mubr.bf16.mxu0 0
        %1226 = vmatmul.mubr.bf16.gmra.mxu0 %v1015
        %v1227 = vpop.f32.mrf.mxu0
        %v1228 = vadd.f32 %v806, %v1227
        %v1229 = vpop.f32.mrf.mxu0
        %v1230 = vadd.f32 %v810, %v1229
        %v1231 = vpop.f32.mrf.mxu0
        %v1232 = vadd.f32 %v806, %v1231
        %v1233 = vpop.f32.mrf.mxu0
        %v1234 = vadd.f32 %v810, %v1233
        %1235 = vmatprep.mubr.bf16.mxu0 0
        %1236 = vmatmul.mubr.bf16.gmra.mxu0 %v1018
        %v1237 = vpop.f32.mrf.mxu0
        %v1238 = vadd.f32 %v806, %v1237
        %v1239 = vpop.f32.mrf.mxu0
        %v1240 = vadd.f32 %v810, %v1239
        %v1241 = vpop.f32.mrf.mxu0
        %v1242 = vadd.f32 %v806, %v1241
        %v1243 = vpop.f32.mrf.mxu0
        %v1244 = vadd.f32 %v810, %v1243
        %1245 = vdwg.mxu0
        %1246 = vmatprep.subr.bf16.mxu0 0
        %1247 = vmatpush1.bf16.msra.mxu0 0
        %1248 = vmatprep.subr.bf16.mxu0 0
        %1249 = vmatpush1.bf16.msra.mxu0 0
        %1250 = vmatprep.subr.bf16.mxu0 0
        %1251 = vmatpush1.bf16.msra.mxu0 0
        %1252 = vmatprep.subr.bf16.mxu0 0
        %1253 = vmatpush1.bf16.msra.mxu0 0
        %1254 = vmatprep.subr.bf16.mxu0 %v960
        %1255 = vmatpush1.bf16.msra.mxu0 %v959
        %1256 = vmatprep.subr.bf16.mxu0 %v952
        %1257 = vmatpush1.bf16.msra.mxu0 %v951
        %1258 = vmatprep.subr.bf16.mxu0 %v944
        %1259 = vmatpush1.bf16.msra.mxu0 %v943
        %1260 = vmatprep.subr.bf16.mxu0 %v936
        %1261 = vmatpush1.bf16.msra.mxu0 %v935
        %1262 = vmatprep.subr.bf16.mxu0 0
        %1263 = vmatpush2.bf16.msra.mxu0 0
        %1264 = vmatprep.subr.bf16.mxu0 0
        %1265 = vmatpush2.bf16.msra.mxu0 0
        %1266 = vmatprep.subr.bf16.mxu0 0
        %1267 = vmatpush2.bf16.msra.mxu0 0
        %1268 = vmatprep.subr.bf16.mxu0 0
        %1269 = vmatpush2.bf16.msra.mxu0 0
        %1270 = vmatprep.subr.bf16.mxu0 0
        %1271 = vmatpush2.bf16.msra.mxu0 0
        %1272 = vmatprep.subr.bf16.mxu0 0
        %1273 = vmatpush2.bf16.msra.mxu0 0
        %1274 = vmatprep.subr.bf16.mxu0 0
        %1275 = vmatpush2.bf16.msra.mxu0 0
        %1276 = vmatprep.subr.bf16.mxu0 0
        %1277 = vmatpush2.bf16.msra.mxu0 0
        %1278 = vmatprep.mubr.bf16.mxu0 0
        %1279 = vmatmul.mubr.bf16.gmra.mxu0 %v997
        %v1280 = vpop.f32.mrf.mxu0
        %v1281 = vadd.f32 %v814, %v1280
        %v1282 = vpop.f32.mrf.mxu0
        %v1283 = vadd.f32 %v818, %v1282
        %v1284 = vpop.f32.mrf.mxu0
        %v1285 = vadd.f32 %v814, %v1284
        %v1286 = vpop.f32.mrf.mxu0
        %v1287 = vadd.f32 %v818, %v1286
        %1288 = vmatprep.mubr.bf16.mxu0 0
        %1289 = vmatmul.mubr.bf16.gmra.mxu0 %v1000
        %v1290 = vpop.f32.mrf.mxu0
        %v1291 = vadd.f32 %v814, %v1290
        %v1292 = vpop.f32.mrf.mxu0
        %v1293 = vadd.f32 %v818, %v1292
        %v1294 = vpop.f32.mrf.mxu0
        %v1295 = vadd.f32 %v814, %v1294
        %v1296 = vpop.f32.mrf.mxu0
        %v1297 = vadd.f32 %v818, %v1296
        %1298 = vmatprep.mubr.bf16.mxu0 0
        %1299 = vmatmul.mubr.bf16.gmra.mxu0 %v1003
        %v1300 = vpop.f32.mrf.mxu0
        %v1301 = vadd.f32 %v814, %v1300
        %v1302 = vpop.f32.mrf.mxu0
        %v1303 = vadd.f32 %v818, %v1302
        %v1304 = vpop.f32.mrf.mxu0
        %v1305 = vadd.f32 %v814, %v1304
        %v1306 = vpop.f32.mrf.mxu0
        %v1307 = vadd.f32 %v818, %v1306
        %1308 = vmatprep.mubr.bf16.mxu0 0
        %1309 = vmatmul.mubr.bf16.gmra.mxu0 %v1006
        %v1310 = vpop.f32.mrf.mxu0
        %v1311 = vadd.f32 %v814, %v1310
        %v1312 = vpop.f32.mrf.mxu0
        %v1313 = vadd.f32 %v818, %v1312
        %v1314 = vpop.f32.mrf.mxu0
        %v1315 = vadd.f32 %v814, %v1314
        %v1316 = vpop.f32.mrf.mxu0
        %v1317 = vadd.f32 %v818, %v1316
        %1318 = vmatprep.mubr.bf16.mxu0 0
        %1319 = vmatmul.mubr.bf16.gmra.mxu0 %v1009
        %v1320 = vpop.f32.mrf.mxu0
        %v1321 = vadd.f32 %v814, %v1320
        %v1322 = vpop.f32.mrf.mxu0
        %v1323 = vadd.f32 %v818, %v1322
        %v1324 = vpop.f32.mrf.mxu0
        %v1325 = vadd.f32 %v814, %v1324
        %v1326 = vpop.f32.mrf.mxu0
        %v1327 = vadd.f32 %v818, %v1326
        %1328 = vmatprep.mubr.bf16.mxu0 0
        %1329 = vmatmul.mubr.bf16.gmra.mxu0 %v1012
        %v1330 = vpop.f32.mrf.mxu0
        %v1331 = vadd.f32 %v814, %v1330
        %v1332 = vpop.f32.mrf.mxu0
        %v1333 = vadd.f32 %v818, %v1332
        %v1334 = vpop.f32.mrf.mxu0
        %v1335 = vadd.f32 %v814, %v1334
        %v1336 = vpop.f32.mrf.mxu0
        %v1337 = vadd.f32 %v818, %v1336
        %1338 = vmatprep.mubr.bf16.mxu0 0
        %1339 = vmatmul.mubr.bf16.gmra.mxu0 %v1015
        %v1340 = vpop.f32.mrf.mxu0
        %v1341 = vadd.f32 %v814, %v1340
        %v1342 = vpop.f32.mrf.mxu0
        %v1343 = vadd.f32 %v818, %v1342
        %v1344 = vpop.f32.mrf.mxu0
        %v1345 = vadd.f32 %v814, %v1344
        %v1346 = vpop.f32.mrf.mxu0
        %v1347 = vadd.f32 %v818, %v1346
        %1348 = vmatprep.mubr.bf16.mxu0 0
        %1349 = vmatmul.mubr.bf16.gmra.mxu0 %v1018
        %v1350 = vpop.f32.mrf.mxu0
        %v1351 = vadd.f32 %v814, %v1350
        %v1352 = vpop.f32.mrf.mxu0
        %v1353 = vadd.f32 %v818, %v1352
        %v1354 = vpop.f32.mrf.mxu0
        %v1355 = vadd.f32 %v814, %v1354
        %v1356 = vpop.f32.mrf.mxu0
        %v1357 = vadd.f32 %v818, %v1356
        %1358 = vdwg.mxu0
        %1359 = vmatprep.subr.bf16.mxu0 0
        %1360 = vmatpush1.bf16.msra.mxu0 0
        %1361 = vmatprep.subr.bf16.mxu0 0
        %1362 = vmatpush1.bf16.msra.mxu0 0
        %1363 = vmatprep.subr.bf16.mxu0 0
        %1364 = vmatpush1.bf16.msra.mxu0 0
        %1365 = vmatprep.subr.bf16.mxu0 0
        %1366 = vmatpush1.bf16.msra.mxu0 0
        %1367 = vmatprep.subr.bf16.mxu0 %v962
        %1368 = vmatpush1.bf16.msra.mxu0 %v961
        %1369 = vmatprep.subr.bf16.mxu0 %v954
        %1370 = vmatpush1.bf16.msra.mxu0 %v953
        %1371 = vmatprep.subr.bf16.mxu0 %v946
        %1372 = vmatpush1.bf16.msra.mxu0 %v945
        %1373 = vmatprep.subr.bf16.mxu0 %v938
        %1374 = vmatpush1.bf16.msra.mxu0 %v937
        %1375 = vmatprep.subr.bf16.mxu0 0
        %1376 = vmatpush2.bf16.msra.mxu0 0
        %1377 = vmatprep.subr.bf16.mxu0 0
        %1378 = vmatpush2.bf16.msra.mxu0 0
        %1379 = vmatprep.subr.bf16.mxu0 0
        %1380 = vmatpush2.bf16.msra.mxu0 0
        %1381 = vmatprep.subr.bf16.mxu0 0
        %1382 = vmatpush2.bf16.msra.mxu0 0
        %1383 = vmatprep.subr.bf16.mxu0 0
        %1384 = vmatpush2.bf16.msra.mxu0 0
        %1385 = vmatprep.subr.bf16.mxu0 0
        %1386 = vmatpush2.bf16.msra.mxu0 0
        %1387 = vmatprep.subr.bf16.mxu0 0
        %1388 = vmatpush2.bf16.msra.mxu0 0
        %1389 = vmatprep.subr.bf16.mxu0 0
        %1390 = vmatpush2.bf16.msra.mxu0 0
        %1391 = vmatprep.mubr.bf16.mxu0 0
        %1392 = vmatmul.mubr.bf16.gmra.mxu0 %v997
        %v1393 = vpop.f32.mrf.mxu0
        %v1394 = vadd.f32 %v822, %v1393
        %v1395 = vpop.f32.mrf.mxu0
        %v1396 = vadd.f32 %v826, %v1395
        %v1397 = vpop.f32.mrf.mxu0
        %v1398 = vadd.f32 %v822, %v1397
        %v1399 = vpop.f32.mrf.mxu0
        %v1400 = vadd.f32 %v826, %v1399
        %1401 = vmatprep.mubr.bf16.mxu0 0
        %1402 = vmatmul.mubr.bf16.gmra.mxu0 %v1000
        %v1403 = vpop.f32.mrf.mxu0
        %v1404 = vadd.f32 %v822, %v1403
        %v1405 = vpop.f32.mrf.mxu0
        %v1406 = vadd.f32 %v826, %v1405
        %v1407 = vpop.f32.mrf.mxu0
        %v1408 = vadd.f32 %v822, %v1407
        %v1409 = vpop.f32.mrf.mxu0
        %v1410 = vadd.f32 %v826, %v1409
        %1411 = vmatprep.mubr.bf16.mxu0 0
        %1412 = vmatmul.mubr.bf16.gmra.mxu0 %v1003
        %v1413 = vpop.f32.mrf.mxu0
        %v1414 = vadd.f32 %v822, %v1413
        %v1415 = vpop.f32.mrf.mxu0
        %v1416 = vadd.f32 %v826, %v1415
        %v1417 = vpop.f32.mrf.mxu0
        %v1418 = vadd.f32 %v822, %v1417
        %v1419 = vpop.f32.mrf.mxu0
        %v1420 = vadd.f32 %v826, %v1419
        %1421 = vmatprep.mubr.bf16.mxu0 0
        %1422 = vmatmul.mubr.bf16.gmra.mxu0 %v1006
        %v1423 = vpop.f32.mrf.mxu0
        %v1424 = vadd.f32 %v822, %v1423
        %v1425 = vpop.f32.mrf.mxu0
        %v1426 = vadd.f32 %v826, %v1425
        %v1427 = vpop.f32.mrf.mxu0
        %v1428 = vadd.f32 %v822, %v1427
        %v1429 = vpop.f32.mrf.mxu0
        %v1430 = vadd.f32 %v826, %v1429
        %1431 = vmatprep.mubr.bf16.mxu0 0
        %1432 = vmatmul.mubr.bf16.gmra.mxu0 %v1009
        %v1433 = vpop.f32.mrf.mxu0
        %v1434 = vadd.f32 %v822, %v1433
        %v1435 = vpop.f32.mrf.mxu0
        %v1436 = vadd.f32 %v826, %v1435
        %v1437 = vpop.f32.mrf.mxu0
        %v1438 = vadd.f32 %v822, %v1437
        %v1439 = vpop.f32.mrf.mxu0
        %v1440 = vadd.f32 %v826, %v1439
        %1441 = vmatprep.mubr.bf16.mxu0 0
        %1442 = vmatmul.mubr.bf16.gmra.mxu0 %v1012
        %v1443 = vpop.f32.mrf.mxu0
        %v1444 = vadd.f32 %v822, %v1443
        %v1445 = vpop.f32.mrf.mxu0
        %v1446 = vadd.f32 %v826, %v1445
        %v1447 = vpop.f32.mrf.mxu0
        %v1448 = vadd.f32 %v822, %v1447
        %v1449 = vpop.f32.mrf.mxu0
        %v1450 = vadd.f32 %v826, %v1449
        %1451 = vmatprep.mubr.bf16.mxu0 0
        %1452 = vmatmul.mubr.bf16.gmra.mxu0 %v1015
        %v1453 = vpop.f32.mrf.mxu0
        %v1454 = vadd.f32 %v822, %v1453
        %v1455 = vpop.f32.mrf.mxu0
        %v1456 = vadd.f32 %v826, %v1455
        %v1457 = vpop.f32.mrf.mxu0
        %v1458 = vadd.f32 %v822, %v1457
        %v1459 = vpop.f32.mrf.mxu0
        %v1460 = vadd.f32 %v826, %v1459
        %1461 = vmatprep.mubr.bf16.mxu0 0
        %1462 = vmatmul.mubr.bf16.gmra.mxu0 %v1018
        %v1463 = vpop.f32.mrf.mxu0
        %v1464 = vadd.f32 %v822, %v1463
        %v1465 = vpop.f32.mrf.mxu0
        %v1466 = vadd.f32 %v826, %v1465
        %v1467 = vpop.f32.mrf.mxu0
        %v1468 = vadd.f32 %v822, %v1467
        %v1469 = vpop.f32.mrf.mxu0
        %v1470 = vadd.f32 %v826, %v1469
        %1471 = vdwg.mxu0
        %vm1472 = vcmp.gt.f32.partialorder %v1055, 0.0
        %vm1473 = vcmp.gt.f32.partialorder %v1057, 0.0
        %vm1474 = vcmp.gt.f32.partialorder %v1168, 0.0
        %vm1475 = vcmp.gt.f32.partialorder %v1170, 0.0
        %vm1476 = vcmp.gt.f32.partialorder %v1281, 0.0
        %vm1477 = vcmp.gt.f32.partialorder %v1283, 0.0
        %vm1478 = vcmp.gt.f32.partialorder %v1394, 0.0
        %vm1479 = vcmp.gt.f32.partialorder %v1396, 0.0
        %vm1480 = vcmp.gt.f32.partialorder %v1059, 0.0
        %vm1481 = vcmp.gt.f32.partialorder %v1061, 0.0
        %vm1482 = vcmp.gt.f32.partialorder %v1172, 0.0
        %vm1483 = vcmp.gt.f32.partialorder %v1174, 0.0
        %vm1484 = vcmp.gt.f32.partialorder %v1285, 0.0
        %vm1485 = vcmp.gt.f32.partialorder %v1287, 0.0
        %vm1486 = vcmp.gt.f32.partialorder %v1398, 0.0
        %vm1487 = vcmp.gt.f32.partialorder %v1400, 0.0
        %vm1488 = vcmp.gt.f32.partialorder %v1065, 0.0
        %vm1489 = vcmp.gt.f32.partialorder %v1067, 0.0
        %vm1490 = vcmp.gt.f32.partialorder %v1178, 0.0
        %vm1491 = vcmp.gt.f32.partialorder %v1180, 0.0
        %vm1492 = vcmp.gt.f32.partialorder %v1291, 0.0
        %vm1493 = vcmp.gt.f32.partialorder %v1293, 0.0
        %vm1494 = vcmp.gt.f32.partialorder %v1404, 0.0
        %vm1495 = vcmp.gt.f32.partialorder %v1406, 0.0
        %vm1496 = vcmp.gt.f32.partialorder %v1069, 0.0
        %vm1497 = vcmp.gt.f32.partialorder %v1071, 0.0
        %vm1498 = vcmp.gt.f32.partialorder %v1182, 0.0
        %vm1499 = vcmp.gt.f32.partialorder %v1184, 0.0
        %vm1500 = vcmp.gt.f32.partialorder %v1295, 0.0
        %vm1501 = vcmp.gt.f32.partialorder %v1297, 0.0
        %vm1502 = vcmp.gt.f32.partialorder %v1408, 0.0
        %vm1503 = vcmp.gt.f32.partialorder %v1410, 0.0
        %vm1504 = vcmp.gt.f32.partialorder %v1075, 0.0
        %vm1505 = vcmp.gt.f32.partialorder %v1077, 0.0
        %vm1506 = vcmp.gt.f32.partialorder %v1188, 0.0
        %vm1507 = vcmp.gt.f32.partialorder %v1190, 0.0
        %vm1508 = vcmp.gt.f32.partialorder %v1301, 0.0
        %vm1509 = vcmp.gt.f32.partialorder %v1303, 0.0
        %vm1510 = vcmp.gt.f32.partialorder %v1414, 0.0
        %vm1511 = vcmp.gt.f32.partialorder %v1416, 0.0
        %vm1512 = vcmp.gt.f32.partialorder %v1079, 0.0
        %vm1513 = vcmp.gt.f32.partialorder %v1081, 0.0
        %vm1514 = vcmp.gt.f32.partialorder %v1192, 0.0
        %vm1515 = vcmp.gt.f32.partialorder %v1194, 0.0
        %vm1516 = vcmp.gt.f32.partialorder %v1305, 0.0
        %vm1517 = vcmp.gt.f32.partialorder %v1307, 0.0
        %vm1518 = vcmp.gt.f32.partialorder %v1418, 0.0
        %vm1519 = vcmp.gt.f32.partialorder %v1420, 0.0
        %vm1520 = vcmp.gt.f32.partialorder %v1085, 0.0
        %vm1521 = vcmp.gt.f32.partialorder %v1087, 0.0
        %vm1522 = vcmp.gt.f32.partialorder %v1198, 0.0
        %vm1523 = vcmp.gt.f32.partialorder %v1200, 0.0
        %vm1524 = vcmp.gt.f32.partialorder %v1311, 0.0
        %vm1525 = vcmp.gt.f32.partialorder %v1313, 0.0
        %vm1526 = vcmp.gt.f32.partialorder %v1424, 0.0
        %vm1527 = vcmp.gt.f32.partialorder %v1426, 0.0
        %vm1528 = vcmp.gt.f32.partialorder %v1089, 0.0
        %vm1529 = vcmp.gt.f32.partialorder %v1091, 0.0
        %vm1530 = vcmp.gt.f32.partialorder %v1202, 0.0
        %vm1531 = vcmp.gt.f32.partialorder %v1204, 0.0
        %vm1532 = vcmp.gt.f32.partialorder %v1315, 0.0
        %vm1533 = vcmp.gt.f32.partialorder %v1317, 0.0
        %vm1534 = vcmp.gt.f32.partialorder %v1428, 0.0
        %vm1535 = vcmp.gt.f32.partialorder %v1430, 0.0
        %vm1536 = vcmp.gt.f32.partialorder %v1095, 0.0
        %vm1537 = vcmp.gt.f32.partialorder %v1097, 0.0
        %vm1538 = vcmp.gt.f32.partialorder %v1208, 0.0
        %vm1539 = vcmp.gt.f32.partialorder %v1210, 0.0
        %vm1540 = vcmp.gt.f32.partialorder %v1321, 0.0
        %vm1541 = vcmp.gt.f32.partialorder %v1323, 0.0
        %vm1542 = vcmp.gt.f32.partialorder %v1434, 0.0
        %vm1543 = vcmp.gt.f32.partialorder %v1436, 0.0
        %vm1544 = vcmp.gt.f32.partialorder %v1099, 0.0
        %vm1545 = vcmp.gt.f32.partialorder %v1101, 0.0
        %vm1546 = vcmp.gt.f32.partialorder %v1212, 0.0
        %vm1547 = vcmp.gt.f32.partialorder %v1214, 0.0
        %vm1548 = vcmp.gt.f32.partialorder %v1325, 0.0
        %vm1549 = vcmp.gt.f32.partialorder %v1327, 0.0
        %vm1550 = vcmp.gt.f32.partialorder %v1438, 0.0
        %vm1551 = vcmp.gt.f32.partialorder %v1440, 0.0
        %vm1552 = vcmp.gt.f32.partialorder %v1105, 0.0
        %vm1553 = vcmp.gt.f32.partialorder %v1107, 0.0
        %vm1554 = vcmp.gt.f32.partialorder %v1218, 0.0
        %vm1555 = vcmp.gt.f32.partialorder %v1220, 0.0
        %vm1556 = vcmp.gt.f32.partialorder %v1331, 0.0
        %vm1557 = vcmp.gt.f32.partialorder %v1333, 0.0
        %vm1558 = vcmp.gt.f32.partialorder %v1444, 0.0
        %vm1559 = vcmp.gt.f32.partialorder %v1446, 0.0
        %vm1560 = vcmp.gt.f32.partialorder %v1109, 0.0
        %vm1561 = vcmp.gt.f32.partialorder %v1111, 0.0
        %vm1562 = vcmp.gt.f32.partialorder %v1222, 0.0
        %vm1563 = vcmp.gt.f32.partialorder %v1224, 0.0
        %vm1564 = vcmp.gt.f32.partialorder %v1335, 0.0
        %vm1565 = vcmp.gt.f32.partialorder %v1337, 0.0
        %vm1566 = vcmp.gt.f32.partialorder %v1448, 0.0
        %vm1567 = vcmp.gt.f32.partialorder %v1450, 0.0
        %vm1568 = vcmp.gt.f32.partialorder %v1115, 0.0
        %vm1569 = vcmp.gt.f32.partialorder %v1117, 0.0
        %vm1570 = vcmp.gt.f32.partialorder %v1228, 0.0
        %vm1571 = vcmp.gt.f32.partialorder %v1230, 0.0
        %vm1572 = vcmp.gt.f32.partialorder %v1341, 0.0
        %vm1573 = vcmp.gt.f32.partialorder %v1343, 0.0
        %vm1574 = vcmp.gt.f32.partialorder %v1454, 0.0
        %vm1575 = vcmp.gt.f32.partialorder %v1456, 0.0
        %vm1576 = vcmp.gt.f32.partialorder %v1119, 0.0
        %vm1577 = vcmp.gt.f32.partialorder %v1121, 0.0
        %vm1578 = vcmp.gt.f32.partialorder %v1232, 0.0
        %vm1579 = vcmp.gt.f32.partialorder %v1234, 0.0
        %vm1580 = vcmp.gt.f32.partialorder %v1345, 0.0
        %vm1581 = vcmp.gt.f32.partialorder %v1347, 0.0
        %vm1582 = vcmp.gt.f32.partialorder %v1458, 0.0
        %vm1583 = vcmp.gt.f32.partialorder %v1460, 0.0
        %vm1584 = vcmp.gt.f32.partialorder %v1125, 0.0
        %vm1585 = vcmp.gt.f32.partialorder %v1127, 0.0
        %vm1586 = vcmp.gt.f32.partialorder %v1238, 0.0
        %vm1587 = vcmp.gt.f32.partialorder %v1240, 0.0
        %vm1588 = vcmp.gt.f32.partialorder %v1351, 0.0
        %vm1589 = vcmp.gt.f32.partialorder %v1353, 0.0
        %vm1590 = vcmp.gt.f32.partialorder %v1464, 0.0
        %vm1591 = vcmp.gt.f32.partialorder %v1466, 0.0
        %vm1592 = vcmp.gt.f32.partialorder %v1129, 0.0
        %vm1593 = vcmp.gt.f32.partialorder %v1131, 0.0
        %vm1594 = vcmp.gt.f32.partialorder %v1242, 0.0
        %vm1595 = vcmp.gt.f32.partialorder %v1244, 0.0
        %vm1596 = vcmp.gt.f32.partialorder %v1355, 0.0
        %vm1597 = vcmp.gt.f32.partialorder %v1357, 0.0
        %vm1598 = vcmp.gt.f32.partialorder %v1468, 0.0
        %vm1599 = vcmp.gt.f32.partialorder %v1470, 0.0
        %v1600 = vmul.f32 %v1055, 0.2
        %v1601 = vmul.f32 %v1057, 0.2
        %v1602 = vmul.f32 %v1168, 0.2
        %v1603 = vmul.f32 %v1170, 0.2
        %v1604 = vmul.f32 %v1281, 0.2
        %v1605 = vmul.f32 %v1283, 0.2
        %v1606 = vmul.f32 %v1394, 0.2
        %v1607 = vmul.f32 %v1396, 0.2
        %v1608 = vmul.f32 %v1059, 0.2
        %v1609 = vmul.f32 %v1061, 0.2
        %v1610 = vmul.f32 %v1172, 0.2
        %v1611 = vmul.f32 %v1174, 0.2
        %v1612 = vmul.f32 %v1285, 0.2
        %v1613 = vmul.f32 %v1287, 0.2
        %v1614 = vmul.f32 %v1398, 0.2
        %v1615 = vmul.f32 %v1400, 0.2
        %v1616 = vmul.f32 %v1065, 0.2
        %v1617 = vmul.f32 %v1067, 0.2
        %v1618 = vmul.f32 %v1178, 0.2
        %v1619 = vmul.f32 %v1180, 0.2
        %v1620 = vmul.f32 %v1291, 0.2
        %v1621 = vmul.f32 %v1293, 0.2
        %v1622 = vmul.f32 %v1404, 0.2
        %v1623 = vmul.f32 %v1406, 0.2
        %v1624 = vmul.f32 %v1069, 0.2
        %v1625 = vmul.f32 %v1071, 0.2
        %v1626 = vmul.f32 %v1182, 0.2
        %v1627 = vmul.f32 %v1184, 0.2
        %v1628 = vmul.f32 %v1295, 0.2
        %v1629 = vmul.f32 %v1297, 0.2
        %v1630 = vmul.f32 %v1408, 0.2
        %v1631 = vmul.f32 %v1410, 0.2
        %v1632 = vmul.f32 %v1075, 0.2
        %v1633 = vmul.f32 %v1077, 0.2
        %v1634 = vmul.f32 %v1188, 0.2
        %v1635 = vmul.f32 %v1190, 0.2
        %v1636 = vmul.f32 %v1301, 0.2
        %v1637 = vmul.f32 %v1303, 0.2
        %v1638 = vmul.f32 %v1414, 0.2
        %v1639 = vmul.f32 %v1416, 0.2
        %v1640 = vmul.f32 %v1079, 0.2
        %v1641 = vmul.f32 %v1081, 0.2
        %v1642 = vmul.f32 %v1192, 0.2
        %v1643 = vmul.f32 %v1194, 0.2
        %v1644 = vmul.f32 %v1305, 0.2
        %v1645 = vmul.f32 %v1307, 0.2
        %v1646 = vmul.f32 %v1418, 0.2
        %v1647 = vmul.f32 %v1420, 0.2
        %v1648 = vmul.f32 %v1085, 0.2
        %v1649 = vmul.f32 %v1087, 0.2
        %v1650 = vmul.f32 %v1198, 0.2
        %v1651 = vmul.f32 %v1200, 0.2
        %v1652 = vmul.f32 %v1311, 0.2
        %v1653 = vmul.f32 %v1313, 0.2
        %v1654 = vmul.f32 %v1424, 0.2
        %v1655 = vmul.f32 %v1426, 0.2
        %v1656 = vmul.f32 %v1089, 0.2
        %v1657 = vmul.f32 %v1091, 0.2
        %v1658 = vmul.f32 %v1202, 0.2
        %v1659 = vmul.f32 %v1204, 0.2
        %v1660 = vmul.f32 %v1315, 0.2
        %v1661 = vmul.f32 %v1317, 0.2
        %v1662 = vmul.f32 %v1428, 0.2
        %v1663 = vmul.f32 %v1430, 0.2
        %v1664 = vmul.f32 %v1095, 0.2
        %v1665 = vmul.f32 %v1097, 0.2
        %v1666 = vmul.f32 %v1208, 0.2
        %v1667 = vmul.f32 %v1210, 0.2
        %v1668 = vmul.f32 %v1321, 0.2
        %v1669 = vmul.f32 %v1323, 0.2
        %v1670 = vmul.f32 %v1434, 0.2
        %v1671 = vmul.f32 %v1436, 0.2
        %v1672 = vmul.f32 %v1099, 0.2
        %v1673 = vmul.f32 %v1101, 0.2
        %v1674 = vmul.f32 %v1212, 0.2
        %v1675 = vmul.f32 %v1214, 0.2
        %v1676 = vmul.f32 %v1325, 0.2
        %v1677 = vmul.f32 %v1327, 0.2
        %v1678 = vmul.f32 %v1438, 0.2
        %v1679 = vmul.f32 %v1440, 0.2
        %v1680 = vmul.f32 %v1105, 0.2
        %v1681 = vmul.f32 %v1107, 0.2
        %v1682 = vmul.f32 %v1218, 0.2
        %v1683 = vmul.f32 %v1220, 0.2
        %v1684 = vmul.f32 %v1331, 0.2
        %v1685 = vmul.f32 %v1333, 0.2
        %v1686 = vmul.f32 %v1444, 0.2
        %v1687 = vmul.f32 %v1446, 0.2
        %v1688 = vmul.f32 %v1109, 0.2
        %v1689 = vmul.f32 %v1111, 0.2
        %v1690 = vmul.f32 %v1222, 0.2
        %v1691 = vmul.f32 %v1224, 0.2
        %v1692 = vmul.f32 %v1335, 0.2
        %v1693 = vmul.f32 %v1337, 0.2
        %v1694 = vmul.f32 %v1448, 0.2
        %v1695 = vmul.f32 %v1450, 0.2
        %v1696 = vmul.f32 %v1115, 0.2
        %v1697 = vmul.f32 %v1117, 0.2
        %v1698 = vmul.f32 %v1228, 0.2
        %v1699 = vmul.f32 %v1230, 0.2
        %v1700 = vmul.f32 %v1341, 0.2
        %v1701 = vmul.f32 %v1343, 0.2
        %v1702 = vmul.f32 %v1454, 0.2
        %v1703 = vmul.f32 %v1456, 0.2
        %v1704 = vmul.f32 %v1119, 0.2
        %v1705 = vmul.f32 %v1121, 0.2
        %v1706 = vmul.f32 %v1232, 0.2
        %v1707 = vmul.f32 %v1234, 0.2
        %v1708 = vmul.f32 %v1345, 0.2
        %v1709 = vmul.f32 %v1347, 0.2
        %v1710 = vmul.f32 %v1458, 0.2
        %v1711 = vmul.f32 %v1460, 0.2
        %v1712 = vmul.f32 %v1125, 0.2
        %v1713 = vmul.f32 %v1127, 0.2
        %v1714 = vmul.f32 %v1238, 0.2
        %v1715 = vmul.f32 %v1240, 0.2
        %v1716 = vmul.f32 %v1351, 0.2
        %v1717 = vmul.f32 %v1353, 0.2
        %v1718 = vmul.f32 %v1464, 0.2
        %v1719 = vmul.f32 %v1466, 0.2
        %v1720 = vmul.f32 %v1129, 0.2
        %v1721 = vmul.f32 %v1131, 0.2
        %v1722 = vmul.f32 %v1242, 0.2
        %v1723 = vmul.f32 %v1244, 0.2
        %v1724 = vmul.f32 %v1355, 0.2
        %v1725 = vmul.f32 %v1357, 0.2
        %v1726 = vmul.f32 %v1468, 0.2
        %v1727 = vmul.f32 %v1470, 0.2
        %v1728 = vsel %vm1472, %v1055, %v1600
        %v1729 = vsel %vm1473, %v1057, %v1601
        %v1730 = vsel %vm1474, %v1168, %v1602
        %v1731 = vsel %vm1475, %v1170, %v1603
        %v1732 = vsel %vm1476, %v1281, %v1604
        %v1733 = vsel %vm1477, %v1283, %v1605
        %v1734 = vsel %vm1478, %v1394, %v1606
        %v1735 = vsel %vm1479, %v1396, %v1607
        %v1736 = vsel %vm1480, %v1059, %v1608
        %v1737 = vsel %vm1481, %v1061, %v1609
        %v1738 = vsel %vm1482, %v1172, %v1610
        %v1739 = vsel %vm1483, %v1174, %v1611
        %v1740 = vsel %vm1484, %v1285, %v1612
        %v1741 = vsel %vm1485, %v1287, %v1613
        %v1742 = vsel %vm1486, %v1398, %v1614
        %v1743 = vsel %vm1487, %v1400, %v1615
        %v1744 = vsel %vm1488, %v1065, %v1616
        %v1745 = vsel %vm1489, %v1067, %v1617
        %v1746 = vsel %vm1490, %v1178, %v1618
        %v1747 = vsel %vm1491, %v1180, %v1619
        %v1748 = vsel %vm1492, %v1291, %v1620
        %v1749 = vsel %vm1493, %v1293, %v1621
        %v1750 = vsel %vm1494, %v1404, %v1622
        %v1751 = vsel %vm1495, %v1406, %v1623
        %v1752 = vsel %vm1496, %v1069, %v1624
        %v1753 = vsel %vm1497, %v1071, %v1625
        %v1754 = vsel %vm1498, %v1182, %v1626
        %v1755 = vsel %vm1499, %v1184, %v1627
        %v1756 = vsel %vm1500, %v1295, %v1628
        %v1757 = vsel %vm1501, %v1297, %v1629
        %v1758 = vsel %vm1502, %v1408, %v1630
        %v1759 = vsel %vm1503, %v1410, %v1631
        %v1760 = vsel %vm1504, %v1075, %v1632
        %v1761 = vsel %vm1505, %v1077, %v1633
        %v1762 = vsel %vm1506, %v1188, %v1634
        %v1763 = vsel %vm1507, %v1190, %v1635
        %v1764 = vsel %vm1508, %v1301, %v1636
        %v1765 = vsel %vm1509, %v1303, %v1637
        %v1766 = vsel %vm1510, %v1414, %v1638
        %v1767 = vsel %vm1511, %v1416, %v1639
        %v1768 = vsel %vm1512, %v1079, %v1640
        %v1769 = vsel %vm1513, %v1081, %v1641
        %v1770 = vsel %vm1514, %v1192, %v1642
        %v1771 = vsel %vm1515, %v1194, %v1643
        %v1772 = vsel %vm1516, %v1305, %v1644
        %v1773 = vsel %vm1517, %v1307, %v1645
        %v1774 = vsel %vm1518, %v1418, %v1646
        %v1775 = vsel %vm1519, %v1420, %v1647
        %v1776 = vsel %vm1520, %v1085, %v1648
        %v1777 = vsel %vm1521, %v1087, %v1649
        %v1778 = vsel %vm1522, %v1198, %v1650
        %v1779 = vsel %vm1523, %v1200, %v1651
        %v1780 = vsel %vm1524, %v1311, %v1652
        %v1781 = vsel %vm1525, %v1313, %v1653
        %v1782 = vsel %vm1526, %v1424, %v1654
        %v1783 = vsel %vm1527, %v1426, %v1655
        %v1784 = vsel %vm1528, %v1089, %v1656
        %v1785 = vsel %vm1529, %v1091, %v1657
        %v1786 = vsel %vm1530, %v1202, %v1658
        %v1787 = vsel %vm1531, %v1204, %v1659
        %v1788 = vsel %vm1532, %v1315, %v1660
        %v1789 = vsel %vm1533, %v1317, %v1661
        %v1790 = vsel %vm1534, %v1428, %v1662
        %v1791 = vsel %vm1535, %v1430, %v1663
        %v1792 = vsel %vm1536, %v1095, %v1664
        %v1793 = vsel %vm1537, %v1097, %v1665
        %v1794 = vsel %vm1538, %v1208, %v1666
        %v1795 = vsel %vm1539, %v1210, %v1667
        %v1796 = vsel %vm1540, %v1321, %v1668
        %v1797 = vsel %vm1541, %v1323, %v1669
        %v1798 = vsel %vm1542, %v1434, %v1670
        %v1799 = vsel %vm1543, %v1436, %v1671
        %v1800 = vsel %vm1544, %v1099, %v1672
        %v1801 = vsel %vm1545, %v1101, %v1673
        %v1802 = vsel %vm1546, %v1212, %v1674
        %v1803 = vsel %vm1547, %v1214, %v1675
        %v1804 = vsel %vm1548, %v1325, %v1676
        %v1805 = vsel %vm1549, %v1327, %v1677
        %v1806 = vsel %vm1550, %v1438, %v1678
        %v1807 = vsel %vm1551, %v1440, %v1679
        %v1808 = vsel %vm1552, %v1105, %v1680
        %v1809 = vsel %vm1553, %v1107, %v1681
        %v1810 = vsel %vm1554, %v1218, %v1682
        %v1811 = vsel %vm1555, %v1220, %v1683
        %v1812 = vsel %vm1556, %v1331, %v1684
        %v1813 = vsel %vm1557, %v1333, %v1685
        %v1814 = vsel %vm1558, %v1444, %v1686
        %v1815 = vsel %vm1559, %v1446, %v1687
        %v1816 = vsel %vm1560, %v1109, %v1688
        %v1817 = vsel %vm1561, %v1111, %v1689
        %v1818 = vsel %vm1562, %v1222, %v1690
        %v1819 = vsel %vm1563, %v1224, %v1691
        %v1820 = vsel %vm1564, %v1335, %v1692
        %v1821 = vsel %vm1565, %v1337, %v1693
        %v1822 = vsel %vm1566, %v1448, %v1694
        %v1823 = vsel %vm1567, %v1450, %v1695
        %v1824 = vsel %vm1568, %v1115, %v1696
        %v1825 = vsel %vm1569, %v1117, %v1697
        %v1826 = vsel %vm1570, %v1228, %v1698
        %v1827 = vsel %vm1571, %v1230, %v1699
        %v1828 = vsel %vm1572, %v1341, %v1700
        %v1829 = vsel %vm1573, %v1343, %v1701
        %v1830 = vsel %vm1574, %v1454, %v1702
        %v1831 = vsel %vm1575, %v1456, %v1703
        %v1832 = vsel %vm1576, %v1119, %v1704
        %v1833 = vsel %vm1577, %v1121, %v1705
        %v1834 = vsel %vm1578, %v1232, %v1706
        %v1835 = vsel %vm1579, %v1234, %v1707
        %v1836 = vsel %vm1580, %v1345, %v1708
        %v1837 = vsel %vm1581, %v1347, %v1709
        %v1838 = vsel %vm1582, %v1458, %v1710
        %v1839 = vsel %vm1583, %v1460, %v1711
        %v1840 = vsel %vm1584, %v1125, %v1712
        %v1841 = vsel %vm1585, %v1127, %v1713
        %v1842 = vsel %vm1586, %v1238, %v1714
        %v1843 = vsel %vm1587, %v1240, %v1715
        %v1844 = vsel %vm1588, %v1351, %v1716
        %v1845 = vsel %vm1589, %v1353, %v1717
        %v1846 = vsel %vm1590, %v1464, %v1718
        %v1847 = vsel %vm1591, %v1466, %v1719
        %v1848 = vsel %vm1592, %v1129, %v1720
        %v1849 = vsel %vm1593, %v1131, %v1721
        %v1850 = vsel %vm1594, %v1242, %v1722
        %v1851 = vsel %vm1595, %v1244, %v1723
        %v1852 = vsel %vm1596, %v1355, %v1724
        %v1853 = vsel %vm1597, %v1357, %v1725
        %v1854 = vsel %vm1598, %v1468, %v1726
        %v1855 = vsel %vm1599, %v1470, %v1727
        %s1856 = sadd.s32 %s381, 1
        %v1857 = vlaneseq
        %v1858 = vshrl.u32 %v1857, 7
        %v1859 = vadd.s32 %v1858, 8
        %v1860 = vadd.s32 %v1858, 16
        %v1861 = vadd.s32 %v1858, 24
        %v1862 = vadd.s32 %v1858, 32
        %v1863 = vadd.s32 %v1858, 40
        %v1864 = vadd.s32 %v1858, 48
        %v1865 = vadd.s32 %v1858, 56
        %v1866 = vadd.s32 %v1858, 64
        %v1867 = vadd.s32 %v1858, 72
        %v1868 = vadd.s32 %v1858, 80
        %v1869 = vadd.s32 %v1858, 88
        %v1870 = vadd.s32 %v1858, 96
        %v1871 = vadd.s32 %v1858, 104
        %v1872 = vadd.s32 %v1858, 112
        %v1873 = vadd.s32 %v1858, 120
        %v1874 = vlaneseq
        %v1875 = vand.u32 %v1874, 127
        %v1876 = vadd.s32 %v1875, 128
        %v1877 = vadd.s32 %v1875, 256
        %v1878 = vadd.s32 %v1875, 384
        %v1879 = vadd.s32 %v1875, 512
        %v1880 = vadd.s32 %v1875, 640
        %v1881 = vadd.s32 %v1875, 768
        %v1882 = vadd.s32 %v1875, 896
        %v1883 = vmul.u32 %v1858, 2654435769
        %v1884 = vmul.u32 %v1859, 2654435769
        %v1885 = vmul.u32 %v1860, 2654435769
        %v1886 = vmul.u32 %v1861, 2654435769
        %v1887 = vmul.u32 %v1862, 2654435769
        %v1888 = vmul.u32 %v1863, 2654435769
        %v1889 = vmul.u32 %v1864, 2654435769
        %v1890 = vmul.u32 %v1865, 2654435769
        %v1891 = vmul.u32 %v1866, 2654435769
        %v1892 = vmul.u32 %v1867, 2654435769
        %v1893 = vmul.u32 %v1868, 2654435769
        %v1894 = vmul.u32 %v1869, 2654435769
        %v1895 = vmul.u32 %v1870, 2654435769
        %v1896 = vmul.u32 %v1871, 2654435769
        %v1897 = vmul.u32 %v1872, 2654435769
        %v1898 = vmul.u32 %v1873, 2654435769
        %v1899 = vstv %s1856
        %v1900 = vadd.s32 %v1899, %v1883
        %v1901 = vadd.s32 %v1899, %v1884
        %v1902 = vadd.s32 %v1899, %v1885
        %v1903 = vadd.s32 %v1899, %v1886
        %v1904 = vadd.s32 %v1899, %v1887
        %v1905 = vadd.s32 %v1899, %v1888
        %v1906 = vadd.s32 %v1899, %v1889
        %v1907 = vadd.s32 %v1899, %v1890
        %v1908 = vadd.s32 %v1899, %v1891
        %v1909 = vadd.s32 %v1899, %v1892
        %v1910 = vadd.s32 %v1899, %v1893
        %v1911 = vadd.s32 %v1899, %v1894
        %v1912 = vadd.s32 %v1899, %v1895
        %v1913 = vadd.s32 %v1899, %v1896
        %v1914 = vadd.s32 %v1899, %v1897
        %v1915 = vadd.s32 %v1899, %v1898
        %v1916 = vmul.u32 %v1875, 2246822507
        %v1917 = vmul.u32 %v1876, 2246822507
        %v1918 = vmul.u32 %v1877, 2246822507
        %v1919 = vmul.u32 %v1878, 2246822507
        %v1920 = vmul.u32 %v1879, 2246822507
        %v1921 = vmul.u32 %v1880, 2246822507
        %v1922 = vmul.u32 %v1881, 2246822507
        %v1923 = vmul.u32 %v1882, 2246822507
        %v1924 = vadd.s32 %v1900, %v1916
        %v1925 = vadd.s32 %v1900, %v1917
        %v1926 = vadd.s32 %v1900, %v1918
        %v1927 = vadd.s32 %v1900, %v1919
        %v1928 = vadd.s32 %v1900, %v1920
        %v1929 = vadd.s32 %v1900, %v1921
        %v1930 = vadd.s32 %v1900, %v1922
        %v1931 = vadd.s32 %v1900, %v1923
        %v1932 = vadd.s32 %v1901, %v1916
        %v1933 = vadd.s32 %v1901, %v1917
        %v1934 = vadd.s32 %v1901, %v1918
        %v1935 = vadd.s32 %v1901, %v1919
        %v1936 = vadd.s32 %v1901, %v1920
        %v1937 = vadd.s32 %v1901, %v1921
        %v1938 = vadd.s32 %v1901, %v1922
        %v1939 = vadd.s32 %v1901, %v1923
        %v1940 = vadd.s32 %v1902, %v1916
        %v1941 = vadd.s32 %v1902, %v1917
        %v1942 = vadd.s32 %v1902, %v1918
        %v1943 = vadd.s32 %v1902, %v1919
        %v1944 = vadd.s32 %v1902, %v1920
        %v1945 = vadd.s32 %v1902, %v1921
        %v1946 = vadd.s32 %v1902, %v1922
        %v1947 = vadd.s32 %v1902, %v1923
        %v1948 = vadd.s32 %v1903, %v1916
        %v1949 = vadd.s32 %v1903, %v1917
        %v1950 = vadd.s32 %v1903, %v1918
        %v1951 = vadd.s32 %v1903, %v1919
        %v1952 = vadd.s32 %v1903, %v1920
        %v1953 = vadd.s32 %v1903, %v1921
        %v1954 = vadd.s32 %v1903, %v1922
        %v1955 = vadd.s32 %v1903, %v1923
        %v1956 = vadd.s32 %v1904, %v1916
        %v1957 = vadd.s32 %v1904, %v1917
        %v1958 = vadd.s32 %v1904, %v1918
        %v1959 = vadd.s32 %v1904, %v1919
        %v1960 = vadd.s32 %v1904, %v1920
        %v1961 = vadd.s32 %v1904, %v1921
        %v1962 = vadd.s32 %v1904, %v1922
        %v1963 = vadd.s32 %v1904, %v1923
        %v1964 = vadd.s32 %v1905, %v1916
        %v1965 = vadd.s32 %v1905, %v1917
        %v1966 = vadd.s32 %v1905, %v1918
        %v1967 = vadd.s32 %v1905, %v1919
        %v1968 = vadd.s32 %v1905, %v1920
        %v1969 = vadd.s32 %v1905, %v1921
        %v1970 = vadd.s32 %v1905, %v1922
        %v1971 = vadd.s32 %v1905, %v1923
        %v1972 = vadd.s32 %v1906, %v1916
        %v1973 = vadd.s32 %v1906, %v1917
        %v1974 = vadd.s32 %v1906, %v1918
        %v1975 = vadd.s32 %v1906, %v1919
        %v1976 = vadd.s32 %v1906, %v1920
        %v1977 = vadd.s32 %v1906, %v1921
        %v1978 = vadd.s32 %v1906, %v1922
        %v1979 = vadd.s32 %v1906, %v1923
        %v1980 = vadd.s32 %v1907, %v1916
        %v1981 = vadd.s32 %v1907, %v1917
        %v1982 = vadd.s32 %v1907, %v1918
        %v1983 = vadd.s32 %v1907, %v1919
        %v1984 = vadd.s32 %v1907, %v1920
        %v1985 = vadd.s32 %v1907, %v1921
        %v1986 = vadd.s32 %v1907, %v1922
        %v1987 = vadd.s32 %v1907, %v1923
        %v1988 = vadd.s32 %v1908, %v1916
        %v1989 = vadd.s32 %v1908, %v1917
        %v1990 = vadd.s32 %v1908, %v1918
        %v1991 = vadd.s32 %v1908, %v1919
        %v1992 = vadd.s32 %v1908, %v1920
        %v1993 = vadd.s32 %v1908, %v1921
        %v1994 = vadd.s32 %v1908, %v1922
        %v1995 = vadd.s32 %v1908, %v1923
        %v1996 = vadd.s32 %v1909, %v1916
        %v1997 = vadd.s32 %v1909, %v1917
        %v1998 = vadd.s32 %v1909, %v1918
        %v1999 = vadd.s32 %v1909, %v1919
        %v2000 = vadd.s32 %v1909, %v1920
        %v2001 = vadd.s32 %v1909, %v1921
        %v2002 = vadd.s32 %v1909, %v1922
        %v2003 = vadd.s32 %v1909, %v1923
        %v2004 = vadd.s32 %v1910, %v1916
        %v2005 = vadd.s32 %v1910, %v1917
        %v2006 = vadd.s32 %v1910, %v1918
        %v2007 = vadd.s32 %v1910, %v1919
        %v2008 = vadd.s32 %v1910, %v1920
        %v2009 = vadd.s32 %v1910, %v1921
        %v2010 = vadd.s32 %v1910, %v1922
        %v2011 = vadd.s32 %v1910, %v1923
        %v2012 = vadd.s32 %v1911, %v1916
        %v2013 = vadd.s32 %v1911, %v1917
        %v2014 = vadd.s32 %v1911, %v1918
        %v2015 = vadd.s32 %v1911, %v1919
        %v2016 = vadd.s32 %v1911, %v1920
        %v2017 = vadd.s32 %v1911, %v1921
        %v2018 = vadd.s32 %v1911, %v1922
        %v2019 = vadd.s32 %v1911, %v1923
        %v2020 = vadd.s32 %v1912, %v1916
        %v2021 = vadd.s32 %v1912, %v1917
        %v2022 = vadd.s32 %v1912, %v1918
        %v2023 = vadd.s32 %v1912, %v1919
        %v2024 = vadd.s32 %v1912, %v1920
        %v2025 = vadd.s32 %v1912, %v1921
        %v2026 = vadd.s32 %v1912, %v1922
        %v2027 = vadd.s32 %v1912, %v1923
        %v2028 = vadd.s32 %v1913, %v1916
        %v2029 = vadd.s32 %v1913, %v1917
        %v2030 = vadd.s32 %v1913, %v1918
        %v2031 = vadd.s32 %v1913, %v1919
        %v2032 = vadd.s32 %v1913, %v1920
        %v2033 = vadd.s32 %v1913, %v1921
        %v2034 = vadd.s32 %v1913, %v1922
        %v2035 = vadd.s32 %v1913, %v1923
        %v2036 = vadd.s32 %v1914, %v1916
        %v2037 = vadd.s32 %v1914, %v1917
        %v2038 = vadd.s32 %v1914, %v1918
        %v2039 = vadd.s32 %v1914, %v1919
        %v2040 = vadd.s32 %v1914, %v1920
        %v2041 = vadd.s32 %v1914, %v1921
        %v2042 = vadd.s32 %v1914, %v1922
        %v2043 = vadd.s32 %v1914, %v1923
        %v2044 = vadd.s32 %v1915, %v1916
        %v2045 = vadd.s32 %v1915, %v1917
        %v2046 = vadd.s32 %v1915, %v1918
        %v2047 = vadd.s32 %v1915, %v1919
        %v2048 = vadd.s32 %v1915, %v1920
        %v2049 = vadd.s32 %v1915, %v1921
        %v2050 = vadd.s32 %v1915, %v1922
        %v2051 = vadd.s32 %v1915, %v1923
        %v2052 = vshrl.u32 %v1924, 16
        %v2053 = vshrl.u32 %v1925, 16
        %v2054 = vshrl.u32 %v1926, 16
        %v2055 = vshrl.u32 %v1927, 16
        %v2056 = vshrl.u32 %v1928, 16
        %v2057 = vshrl.u32 %v1929, 16
        %v2058 = vshrl.u32 %v1930, 16
        %v2059 = vshrl.u32 %v1931, 16
        %v2060 = vshrl.u32 %v1932, 16
        %v2061 = vshrl.u32 %v1933, 16
        %v2062 = vshrl.u32 %v1934, 16
        %v2063 = vshrl.u32 %v1935, 16
        %v2064 = vshrl.u32 %v1936, 16
        %v2065 = vshrl.u32 %v1937, 16
        %v2066 = vshrl.u32 %v1938, 16
        %v2067 = vshrl.u32 %v1939, 16
        %v2068 = vshrl.u32 %v1940, 16
        %v2069 = vshrl.u32 %v1941, 16
        %v2070 = vshrl.u32 %v1942, 16
        %v2071 = vshrl.u32 %v1943, 16
        %v2072 = vshrl.u32 %v1944, 16
        %v2073 = vshrl.u32 %v1945, 16
        %v2074 = vshrl.u32 %v1946, 16
        %v2075 = vshrl.u32 %v1947, 16
        %v2076 = vshrl.u32 %v1948, 16
        %v2077 = vshrl.u32 %v1949, 16
        %v2078 = vshrl.u32 %v1950, 16
        %v2079 = vshrl.u32 %v1951, 16
        %v2080 = vshrl.u32 %v1952, 16
        %v2081 = vshrl.u32 %v1953, 16
        %v2082 = vshrl.u32 %v1954, 16
        %v2083 = vshrl.u32 %v1955, 16
        %v2084 = vshrl.u32 %v1956, 16
        %v2085 = vshrl.u32 %v1957, 16
        %v2086 = vshrl.u32 %v1958, 16
        %v2087 = vshrl.u32 %v1959, 16
        %v2088 = vshrl.u32 %v1960, 16
        %v2089 = vshrl.u32 %v1961, 16
        %v2090 = vshrl.u32 %v1962, 16
        %v2091 = vshrl.u32 %v1963, 16
        %v2092 = vshrl.u32 %v1964, 16
        %v2093 = vshrl.u32 %v1965, 16
        %v2094 = vshrl.u32 %v1966, 16
        %v2095 = vshrl.u32 %v1967, 16
        %v2096 = vshrl.u32 %v1968, 16
        %v2097 = vshrl.u32 %v1969, 16
        %v2098 = vshrl.u32 %v1970, 16
        %v2099 = vshrl.u32 %v1971, 16
        %v2100 = vshrl.u32 %v1972, 16
        %v2101 = vshrl.u32 %v1973, 16
        %v2102 = vshrl.u32 %v1974, 16
        %v2103 = vshrl.u32 %v1975, 16
        %v2104 = vshrl.u32 %v1976, 16
        %v2105 = vshrl.u32 %v1977, 16
        %v2106 = vshrl.u32 %v1978, 16
        %v2107 = vshrl.u32 %v1979, 16
        %v2108 = vshrl.u32 %v1980, 16
        %v2109 = vshrl.u32 %v1981, 16
        %v2110 = vshrl.u32 %v1982, 16
        %v2111 = vshrl.u32 %v1983, 16
        %v2112 = vshrl.u32 %v1984, 16
        %v2113 = vshrl.u32 %v1985, 16
        %v2114 = vshrl.u32 %v1986, 16
        %v2115 = vshrl.u32 %v1987, 16
        %v2116 = vshrl.u32 %v1988, 16
        %v2117 = vshrl.u32 %v1989, 16
        %v2118 = vshrl.u32 %v1990, 16
        %v2119 = vshrl.u32 %v1991, 16
        %v2120 = vshrl.u32 %v1992, 16
        %v2121 = vshrl.u32 %v1993, 16
        %v2122 = vshrl.u32 %v1994, 16
        %v2123 = vshrl.u32 %v1995, 16
        %v2124 = vshrl.u32 %v1996, 16
        %v2125 = vshrl.u32 %v1997, 16
        %v2126 = vshrl.u32 %v1998, 16
        %v2127 = vshrl.u32 %v1999, 16
        %v2128 = vshrl.u32 %v2000, 16
        %v2129 = vshrl.u32 %v2001, 16
        %v2130 = vshrl.u32 %v2002, 16
        %v2131 = vshrl.u32 %v2003, 16
        %v2132 = vshrl.u32 %v2004, 16
        %v2133 = vshrl.u32 %v2005, 16
        %v2134 = vshrl.u32 %v2006, 16
        %v2135 = vshrl.u32 %v2007, 16
        %v2136 = vshrl.u32 %v2008, 16
        %v2137 = vshrl.u32 %v2009, 16
        %v2138 = vshrl.u32 %v2010, 16
        %v2139 = vshrl.u32 %v2011, 16
        %v2140 = vshrl.u32 %v2012, 16
        %v2141 = vshrl.u32 %v2013, 16
        %v2142 = vshrl.u32 %v2014, 16
        %v2143 = vshrl.u32 %v2015, 16
        %v2144 = vshrl.u32 %v2016, 16
        %v2145 = vshrl.u32 %v2017, 16
        %v2146 = vshrl.u32 %v2018, 16
        %v2147 = vshrl.u32 %v2019, 16
        %v2148 = vshrl.u32 %v2020, 16
        %v2149 = vshrl.u32 %v2021, 16
        %v2150 = vshrl.u32 %v2022, 16
        %v2151 = vshrl.u32 %v2023, 16
        %v2152 = vshrl.u32 %v2024, 16
        %v2153 = vshrl.u32 %v2025, 16
        %v2154 = vshrl.u32 %v2026, 16
        %v2155 = vshrl.u32 %v2027, 16
        %v2156 = vshrl.u32 %v2028, 16
        %v2157 = vshrl.u32 %v2029, 16
        %v2158 = vshrl.u32 %v2030, 16
        %v2159 = vshrl.u32 %v2031, 16
        %v2160 = vshrl.u32 %v2032, 16
        %v2161 = vshrl.u32 %v2033, 16
        %v2162 = vshrl.u32 %v2034, 16
        %v2163 = vshrl.u32 %v2035, 16
        %v2164 = vshrl.u32 %v2036, 16
        %v2165 = vshrl.u32 %v2037, 16
        %v2166 = vshrl.u32 %v2038, 16
        %v2167 = vshrl.u32 %v2039, 16
        %v2168 = vshrl.u32 %v2040, 16
        %v2169 = vshrl.u32 %v2041, 16
        %v2170 = vshrl.u32 %v2042, 16
        %v2171 = vshrl.u32 %v2043, 16
        %v2172 = vshrl.u32 %v2044, 16
        %v2173 = vshrl.u32 %v2045, 16
        %v2174 = vshrl.u32 %v2046, 16
        %v2175 = vshrl.u32 %v2047, 16
        %v2176 = vshrl.u32 %v2048, 16
        %v2177 = vshrl.u32 %v2049, 16
        %v2178 = vshrl.u32 %v2050, 16
        %v2179 = vshrl.u32 %v2051, 16
        %v2180 = vxor.u32 %v1924, %v2052
        %v2181 = vxor.u32 %v1925, %v2053
        %v2182 = vxor.u32 %v1926, %v2054
        %v2183 = vxor.u32 %v1927, %v2055
        %v2184 = vxor.u32 %v1928, %v2056
        %v2185 = vxor.u32 %v1929, %v2057
        %v2186 = vxor.u32 %v1930, %v2058
        %v2187 = vxor.u32 %v1931, %v2059
        %v2188 = vxor.u32 %v1932, %v2060
        %v2189 = vxor.u32 %v1933, %v2061
        %v2190 = vxor.u32 %v1934, %v2062
        %v2191 = vxor.u32 %v1935, %v2063
        %v2192 = vxor.u32 %v1936, %v2064
        %v2193 = vxor.u32 %v1937, %v2065
        %v2194 = vxor.u32 %v1938, %v2066
        %v2195 = vxor.u32 %v1939, %v2067
        %v2196 = vxor.u32 %v1940, %v2068
        %v2197 = vxor.u32 %v1941, %v2069
        %v2198 = vxor.u32 %v1942, %v2070
        %v2199 = vxor.u32 %v1943, %v2071
        %v2200 = vxor.u32 %v1944, %v2072
        %v2201 = vxor.u32 %v1945, %v2073
        %v2202 = vxor.u32 %v1946, %v2074
        %v2203 = vxor.u32 %v1947, %v2075
        %v2204 = vxor.u32 %v1948, %v2076
        %v2205 = vxor.u32 %v1949, %v2077
        %v2206 = vxor.u32 %v1950, %v2078
        %v2207 = vxor.u32 %v1951, %v2079
        %v2208 = vxor.u32 %v1952, %v2080
        %v2209 = vxor.u32 %v1953, %v2081
        %v2210 = vxor.u32 %v1954, %v2082
        %v2211 = vxor.u32 %v1955, %v2083
        %v2212 = vxor.u32 %v1956, %v2084
        %v2213 = vxor.u32 %v1957, %v2085
        %v2214 = vxor.u32 %v1958, %v2086
        %v2215 = vxor.u32 %v1959, %v2087
        %v2216 = vxor.u32 %v1960, %v2088
        %v2217 = vxor.u32 %v1961, %v2089
        %v2218 = vxor.u32 %v1962, %v2090
        %v2219 = vxor.u32 %v1963, %v2091
        %v2220 = vxor.u32 %v1964, %v2092
        %v2221 = vxor.u32 %v1965, %v2093
        %v2222 = vxor.u32 %v1966, %v2094
        %v2223 = vxor.u32 %v1967, %v2095
        %v2224 = vxor.u32 %v1968, %v2096
        %v2225 = vxor.u32 %v1969, %v2097
        %v2226 = vxor.u32 %v1970, %v2098
        %v2227 = vxor.u32 %v1971, %v2099
        %v2228 = vxor.u32 %v1972, %v2100
        %v2229 = vxor.u32 %v1973, %v2101
        %v2230 = vxor.u32 %v1974, %v2102
        %v2231 = vxor.u32 %v1975, %v2103
        %v2232 = vxor.u32 %v1976, %v2104
        %v2233 = vxor.u32 %v1977, %v2105
        %v2234 = vxor.u32 %v1978, %v2106
        %v2235 = vxor.u32 %v1979, %v2107
        %v2236 = vxor.u32 %v1980, %v2108
        %v2237 = vxor.u32 %v1981, %v2109
        %v2238 = vxor.u32 %v1982, %v2110
        %v2239 = vxor.u32 %v1983, %v2111
        %v2240 = vxor.u32 %v1984, %v2112
        %v2241 = vxor.u32 %v1985, %v2113
        %v2242 = vxor.u32 %v1986, %v2114
        %v2243 = vxor.u32 %v1987, %v2115
        %v2244 = vxor.u32 %v1988, %v2116
        %v2245 = vxor.u32 %v1989, %v2117
        %v2246 = vxor.u32 %v1990, %v2118
        %v2247 = vxor.u32 %v1991, %v2119
        %v2248 = vxor.u32 %v1992, %v2120
        %v2249 = vxor.u32 %v1993, %v2121
        %v2250 = vxor.u32 %v1994, %v2122
        %v2251 = vxor.u32 %v1995, %v2123
        %v2252 = vxor.u32 %v1996, %v2124
        %v2253 = vxor.u32 %v1997, %v2125
        %v2254 = vxor.u32 %v1998, %v2126
        %v2255 = vxor.u32 %v1999, %v2127
        %v2256 = vxor.u32 %v2000, %v2128
        %v2257 = vxor.u32 %v2001, %v2129
        %v2258 = vxor.u32 %v2002, %v2130
        %v2259 = vxor.u32 %v2003, %v2131
        %v2260 = vxor.u32 %v2004, %v2132
        %v2261 = vxor.u32 %v2005, %v2133
        %v2262 = vxor.u32 %v2006, %v2134
        %v2263 = vxor.u32 %v2007, %v2135
        %v2264 = vxor.u32 %v2008, %v2136
        %v2265 = vxor.u32 %v2009, %v2137
        %v2266 = vxor.u32 %v2010, %v2138
        %v2267 = vxor.u32 %v2011, %v2139
        %v2268 = vxor.u32 %v2012, %v2140
        %v2269 = vxor.u32 %v2013, %v2141
        %v2270 = vxor.u32 %v2014, %v2142
        %v2271 = vxor.u32 %v2015, %v2143
        %v2272 = vxor.u32 %v2016, %v2144
        %v2273 = vxor.u32 %v2017, %v2145
        %v2274 = vxor.u32 %v2018, %v2146
        %v2275 = vxor.u32 %v2019, %v2147
        %v2276 = vxor.u32 %v2020, %v2148
        %v2277 = vxor.u32 %v2021, %v2149
        %v2278 = vxor.u32 %v2022, %v2150
        %v2279 = vxor.u32 %v2023, %v2151
        %v2280 = vxor.u32 %v2024, %v2152
        %v2281 = vxor.u32 %v2025, %v2153
        %v2282 = vxor.u32 %v2026, %v2154
        %v2283 = vxor.u32 %v2027, %v2155
        %v2284 = vxor.u32 %v2028, %v2156
        %v2285 = vxor.u32 %v2029, %v2157
        %v2286 = vxor.u32 %v2030, %v2158
        %v2287 = vxor.u32 %v2031, %v2159
        %v2288 = vxor.u32 %v2032, %v2160
        %v2289 = vxor.u32 %v2033, %v2161
        %v2290 = vxor.u32 %v2034, %v2162
        %v2291 = vxor.u32 %v2035, %v2163
        %v2292 = vxor.u32 %v2036, %v2164
        %v2293 = vxor.u32 %v2037, %v2165
        %v2294 = vxor.u32 %v2038, %v2166
        %v2295 = vxor.u32 %v2039, %v2167
        %v2296 = vxor.u32 %v2040, %v2168
        %v2297 = vxor.u32 %v2041, %v2169
        %v2298 = vxor.u32 %v2042, %v2170
        %v2299 = vxor.u32 %v2043, %v2171
        %v2300 = vxor.u32 %v2044, %v2172
        %v2301 = vxor.u32 %v2045, %v2173
        %v2302 = vxor.u32 %v2046, %v2174
        %v2303 = vxor.u32 %v2047, %v2175
        %v2304 = vxor.u32 %v2048, %v2176
        %v2305 = vxor.u32 %v2049, %v2177
        %v2306 = vxor.u32 %v2050, %v2178
        %v2307 = vxor.u32 %v2051, %v2179
        %v2308 = vmul.u32 %v2180, 2146121005
        %v2309 = vmul.u32 %v2181, 2146121005
        %v2310 = vmul.u32 %v2182, 2146121005
        %v2311 = vmul.u32 %v2183, 2146121005
        %v2312 = vmul.u32 %v2184, 2146121005
        %v2313 = vmul.u32 %v2185, 2146121005
        %v2314 = vmul.u32 %v2186, 2146121005
        %v2315 = vmul.u32 %v2187, 2146121005
        %v2316 = vmul.u32 %v2188, 2146121005
        %v2317 = vmul.u32 %v2189, 2146121005
        %v2318 = vmul.u32 %v2190, 2146121005
        %v2319 = vmul.u32 %v2191, 2146121005
        %v2320 = vmul.u32 %v2192, 2146121005
        %v2321 = vmul.u32 %v2193, 2146121005
        %v2322 = vmul.u32 %v2194, 2146121005
        %v2323 = vmul.u32 %v2195, 2146121005
        %v2324 = vmul.u32 %v2196, 2146121005
        %v2325 = vmul.u32 %v2197, 2146121005
        %v2326 = vmul.u32 %v2198, 2146121005
        %v2327 = vmul.u32 %v2199, 2146121005
        %v2328 = vmul.u32 %v2200, 2146121005
        %v2329 = vmul.u32 %v2201, 2146121005
        %v2330 = vmul.u32 %v2202, 2146121005
        %v2331 = vmul.u32 %v2203, 2146121005
        %v2332 = vmul.u32 %v2204, 2146121005
        %v2333 = vmul.u32 %v2205, 2146121005
        %v2334 = vmul.u32 %v2206, 2146121005
        %v2335 = vmul.u32 %v2207, 2146121005
        %v2336 = vmul.u32 %v2208, 2146121005
        %v2337 = vmul.u32 %v2209, 2146121005
        %v2338 = vmul.u32 %v2210, 2146121005
        %v2339 = vmul.u32 %v2211, 2146121005
        %v2340 = vmul.u32 %v2212, 2146121005
        %v2341 = vmul.u32 %v2213, 2146121005
        %v2342 = vmul.u32 %v2214, 2146121005
        %v2343 = vmul.u32 %v2215, 2146121005
        %v2344 = vmul.u32 %v2216, 2146121005
        %v2345 = vmul.u32 %v2217, 2146121005
        %v2346 = vmul.u32 %v2218, 2146121005
        %v2347 = vmul.u32 %v2219, 2146121005
        %v2348 = vmul.u32 %v2220, 2146121005
        %v2349 = vmul.u32 %v2221, 2146121005
        %v2350 = vmul.u32 %v2222, 2146121005
        %v2351 = vmul.u32 %v2223, 2146121005
        %v2352 = vmul.u32 %v2224, 2146121005
        %v2353 = vmul.u32 %v2225, 2146121005
        %v2354 = vmul.u32 %v2226, 2146121005
        %v2355 = vmul.u32 %v2227, 2146121005
        %v2356 = vmul.u32 %v2228, 2146121005
        %v2357 = vmul.u32 %v2229, 2146121005
        %v2358 = vmul.u32 %v2230, 2146121005
        %v2359 = vmul.u32 %v2231, 2146121005
        %v2360 = vmul.u32 %v2232, 2146121005
        %v2361 = vmul.u32 %v2233, 2146121005
        %v2362 = vmul.u32 %v2234, 2146121005
        %v2363 = vmul.u32 %v2235, 2146121005
        %v2364 = vmul.u32 %v2236, 2146121005
        %v2365 = vmul.u32 %v2237, 2146121005
        %v2366 = vmul.u32 %v2238, 2146121005
        %v2367 = vmul.u32 %v2239, 2146121005
        %v2368 = vmul.u32 %v2240, 2146121005
        %v2369 = vmul.u32 %v2241, 2146121005
        %v2370 = vmul.u32 %v2242, 2146121005
        %v2371 = vmul.u32 %v2243, 2146121005
        %v2372 = vmul.u32 %v2244, 2146121005
        %v2373 = vmul.u32 %v2245, 2146121005
        %v2374 = vmul.u32 %v2246, 2146121005
        %v2375 = vmul.u32 %v2247, 2146121005
        %v2376 = vmul.u32 %v2248, 2146121005
        %v2377 = vmul.u32 %v2249, 2146121005
        %v2378 = vmul.u32 %v2250, 2146121005
        %v2379 = vmul.u32 %v2251, 2146121005
        %v2380 = vmul.u32 %v2252, 2146121005
        %v2381 = vmul.u32 %v2253, 2146121005
        %v2382 = vmul.u32 %v2254, 2146121005
        %v2383 = vmul.u32 %v2255, 2146121005
        %v2384 = vmul.u32 %v2256, 2146121005
        %v2385 = vmul.u32 %v2257, 2146121005
        %v2386 = vmul.u32 %v2258, 2146121005
        %v2387 = vmul.u32 %v2259, 2146121005
        %v2388 = vmul.u32 %v2260, 2146121005
        %v2389 = vmul.u32 %v2261, 2146121005
        %v2390 = vmul.u32 %v2262, 2146121005
        %v2391 = vmul.u32 %v2263, 2146121005
        %v2392 = vmul.u32 %v2264, 2146121005
        %v2393 = vmul.u32 %v2265, 2146121005
        %v2394 = vmul.u32 %v2266, 2146121005
        %v2395 = vmul.u32 %v2267, 2146121005
        %v2396 = vmul.u32 %v2268, 2146121005
        %v2397 = vmul.u32 %v2269, 2146121005
        %v2398 = vmul.u32 %v2270, 2146121005
        %v2399 = vmul.u32 %v2271, 2146121005
        %v2400 = vmul.u32 %v2272, 2146121005
        %v2401 = vmul.u32 %v2273, 2146121005
        %v2402 = vmul.u32 %v2274, 2146121005
        %v2403 = vmul.u32 %v2275, 2146121005
        %v2404 = vmul.u32 %v2276, 2146121005
        %v2405 = vmul.u32 %v2277, 2146121005
        %v2406 = vmul.u32 %v2278, 2146121005
        %v2407 = vmul.u32 %v2279, 2146121005
        %v2408 = vmul.u32 %v2280, 2146121005
        %v2409 = vmul.u32 %v2281, 2146121005
        %v2410 = vmul.u32 %v2282, 2146121005
        %v2411 = vmul.u32 %v2283, 2146121005
        %v2412 = vmul.u32 %v2284, 2146121005
        %v2413 = vmul.u32 %v2285, 2146121005
        %v2414 = vmul.u32 %v2286, 2146121005
        %v2415 = vmul.u32 %v2287, 2146121005
        %v2416 = vmul.u32 %v2288, 2146121005
        %v2417 = vmul.u32 %v2289, 2146121005
        %v2418 = vmul.u32 %v2290, 2146121005
        %v2419 = vmul.u32 %v2291, 2146121005
        %v2420 = vmul.u32 %v2292, 2146121005
        %v2421 = vmul.u32 %v2293, 2146121005
        %v2422 = vmul.u32 %v2294, 2146121005
        %v2423 = vmul.u32 %v2295, 2146121005
        %v2424 = vmul.u32 %v2296, 2146121005
        %v2425 = vmul.u32 %v2297, 2146121005
        %v2426 = vmul.u32 %v2298, 2146121005
        %v2427 = vmul.u32 %v2299, 2146121005
        %v2428 = vmul.u32 %v2300, 2146121005
        %v2429 = vmul.u32 %v2301, 2146121005
        %v2430 = vmul.u32 %v2302, 2146121005
        %v2431 = vmul.u32 %v2303, 2146121005
        %v2432 = vmul.u32 %v2304, 2146121005
        %v2433 = vmul.u32 %v2305, 2146121005
        %v2434 = vmul.u32 %v2306, 2146121005
        %v2435 = vmul.u32 %v2307, 2146121005
        %v2436 = vshrl.u32 %v2308, 15
        %v2437 = vshrl.u32 %v2309, 15
        %v2438 = vshrl.u32 %v2310, 15
        %v2439 = vshrl.u32 %v2311, 15
        %v2440 = vshrl.u32 %v2312, 15
        %v2441 = vshrl.u32 %v2313, 15
        %v2442 = vshrl.u32 %v2314, 15
        %v2443 = vshrl.u32 %v2315, 15
        %v2444 = vshrl.u32 %v2316, 15
        %v2445 = vshrl.u32 %v2317, 15
        %v2446 = vshrl.u32 %v2318, 15
        %v2447 = vshrl.u32 %v2319, 15
        %v2448 = vshrl.u32 %v2320, 15
        %v2449 = vshrl.u32 %v2321, 15
        %v2450 = vshrl.u32 %v2322, 15
        %v2451 = vshrl.u32 %v2323, 15
        %v2452 = vshrl.u32 %v2324, 15
        %v2453 = vshrl.u32 %v2325, 15
        %v2454 = vshrl.u32 %v2326, 15
        %v2455 = vshrl.u32 %v2327, 15
        %v2456 = vshrl.u32 %v2328, 15
        %v2457 = vshrl.u32 %v2329, 15
        %v2458 = vshrl.u32 %v2330, 15
        %v2459 = vshrl.u32 %v2331, 15
        %v2460 = vshrl.u32 %v2332, 15
        %v2461 = vshrl.u32 %v2333, 15
        %v2462 = vshrl.u32 %v2334, 15
        %v2463 = vshrl.u32 %v2335, 15
        %v2464 = vshrl.u32 %v2336, 15
        %v2465 = vshrl.u32 %v2337, 15
        %v2466 = vshrl.u32 %v2338, 15
        %v2467 = vshrl.u32 %v2339, 15
        %v2468 = vshrl.u32 %v2340, 15
        %v2469 = vshrl.u32 %v2341, 15
        %v2470 = vshrl.u32 %v2342, 15
        %v2471 = vshrl.u32 %v2343, 15
        %v2472 = vshrl.u32 %v2344, 15
        %v2473 = vshrl.u32 %v2345, 15
        %v2474 = vshrl.u32 %v2346, 15
        %v2475 = vshrl.u32 %v2347, 15
        %v2476 = vshrl.u32 %v2348, 15
        %v2477 = vshrl.u32 %v2349, 15
        %v2478 = vshrl.u32 %v2350, 15
        %v2479 = vshrl.u32 %v2351, 15
        %v2480 = vshrl.u32 %v2352, 15
        %v2481 = vshrl.u32 %v2353, 15
        %v2482 = vshrl.u32 %v2354, 15
        %v2483 = vshrl.u32 %v2355, 15
        %v2484 = vshrl.u32 %v2356, 15
        %v2485 = vshrl.u32 %v2357, 15
        %v2486 = vshrl.u32 %v2358, 15
        %v2487 = vshrl.u32 %v2359, 15
        %v2488 = vshrl.u32 %v2360, 15
        %v2489 = vshrl.u32 %v2361, 15
        %v2490 = vshrl.u32 %v2362, 15
        %v2491 = vshrl.u32 %v2363, 15
        %v2492 = vshrl.u32 %v2364, 15
        %v2493 = vshrl.u32 %v2365, 15
        %v2494 = vshrl.u32 %v2366, 15
        %v2495 = vshrl.u32 %v2367, 15
        %v2496 = vshrl.u32 %v2368, 15
        %v2497 = vshrl.u32 %v2369, 15
        %v2498 = vshrl.u32 %v2370, 15
        %v2499 = vshrl.u32 %v2371, 15
        %v2500 = vshrl.u32 %v2372, 15
        %v2501 = vshrl.u32 %v2373, 15
        %v2502 = vshrl.u32 %v2374, 15
        %v2503 = vshrl.u32 %v2375, 15
        %v2504 = vshrl.u32 %v2376, 15
        %v2505 = vshrl.u32 %v2377, 15
        %v2506 = vshrl.u32 %v2378, 15
        %v2507 = vshrl.u32 %v2379, 15
        %v2508 = vshrl.u32 %v2380, 15
        %v2509 = vshrl.u32 %v2381, 15
        %v2510 = vshrl.u32 %v2382, 15
        %v2511 = vshrl.u32 %v2383, 15
        %v2512 = vshrl.u32 %v2384, 15
        %v2513 = vshrl.u32 %v2385, 15
        %v2514 = vshrl.u32 %v2386, 15
        %v2515 = vshrl.u32 %v2387, 15
        %v2516 = vshrl.u32 %v2388, 15
        %v2517 = vshrl.u32 %v2389, 15
        %v2518 = vshrl.u32 %v2390, 15
        %v2519 = vshrl.u32 %v2391, 15
        %v2520 = vshrl.u32 %v2392, 15
        %v2521 = vshrl.u32 %v2393, 15
        %v2522 = vshrl.u32 %v2394, 15
        %v2523 = vshrl.u32 %v2395, 15
        %v2524 = vshrl.u32 %v2396, 15
        %v2525 = vshrl.u32 %v2397, 15
        %v2526 = vshrl.u32 %v2398, 15
        %v2527 = vshrl.u32 %v2399, 15
        %v2528 = vshrl.u32 %v2400, 15
        %v2529 = vshrl.u32 %v2401, 15
        %v2530 = vshrl.u32 %v2402, 15
        %v2531 = vshrl.u32 %v2403, 15
        %v2532 = vshrl.u32 %v2404, 15
        %v2533 = vshrl.u32 %v2405, 15
        %v2534 = vshrl.u32 %v2406, 15
        %v2535 = vshrl.u32 %v2407, 15
        %v2536 = vshrl.u32 %v2408, 15
        %v2537 = vshrl.u32 %v2409, 15
        %v2538 = vshrl.u32 %v2410, 15
        %v2539 = vshrl.u32 %v2411, 15
        %v2540 = vshrl.u32 %v2412, 15
        %v2541 = vshrl.u32 %v2413, 15
        %v2542 = vshrl.u32 %v2414, 15
        %v2543 = vshrl.u32 %v2415, 15
        %v2544 = vshrl.u32 %v2416, 15
        %v2545 = vshrl.u32 %v2417, 15
        %v2546 = vshrl.u32 %v2418, 15
        %v2547 = vshrl.u32 %v2419, 15
        %v2548 = vshrl.u32 %v2420, 15
        %v2549 = vshrl.u32 %v2421, 15
        %v2550 = vshrl.u32 %v2422, 15
        %v2551 = vshrl.u32 %v2423, 15
        %v2552 = vshrl.u32 %v2424, 15
        %v2553 = vshrl.u32 %v2425, 15
        %v2554 = vshrl.u32 %v2426, 15
        %v2555 = vshrl.u32 %v2427, 15
        %v2556 = vshrl.u32 %v2428, 15
        %v2557 = vshrl.u32 %v2429, 15
        %v2558 = vshrl.u32 %v2430, 15
        %v2559 = vshrl.u32 %v2431, 15
        %v2560 = vshrl.u32 %v2432, 15
        %v2561 = vshrl.u32 %v2433, 15
        %v2562 = vshrl.u32 %v2434, 15
        %v2563 = vshrl.u32 %v2435, 15
        %v2564 = vxor.u32 %v2308, %v2436
        %v2565 = vxor.u32 %v2309, %v2437
        %v2566 = vxor.u32 %v2310, %v2438
        %v2567 = vxor.u32 %v2311, %v2439
        %v2568 = vxor.u32 %v2312, %v2440
        %v2569 = vxor.u32 %v2313, %v2441
        %v2570 = vxor.u32 %v2314, %v2442
        %v2571 = vxor.u32 %v2315, %v2443
        %v2572 = vxor.u32 %v2316, %v2444
        %v2573 = vxor.u32 %v2317, %v2445
        %v2574 = vxor.u32 %v2318, %v2446
        %v2575 = vxor.u32 %v2319, %v2447
        %v2576 = vxor.u32 %v2320, %v2448
        %v2577 = vxor.u32 %v2321, %v2449
        %v2578 = vxor.u32 %v2322, %v2450
        %v2579 = vxor.u32 %v2323, %v2451
        %v2580 = vxor.u32 %v2324, %v2452
        %v2581 = vxor.u32 %v2325, %v2453
        %v2582 = vxor.u32 %v2326, %v2454
        %v2583 = vxor.u32 %v2327, %v2455
        %v2584 = vxor.u32 %v2328, %v2456
        %v2585 = vxor.u32 %v2329, %v2457
        %v2586 = vxor.u32 %v2330, %v2458
        %v2587 = vxor.u32 %v2331, %v2459
        %v2588 = vxor.u32 %v2332, %v2460
        %v2589 = vxor.u32 %v2333, %v2461
        %v2590 = vxor.u32 %v2334, %v2462
        %v2591 = vxor.u32 %v2335, %v2463
        %v2592 = vxor.u32 %v2336, %v2464
        %v2593 = vxor.u32 %v2337, %v2465
        %v2594 = vxor.u32 %v2338, %v2466
        %v2595 = vxor.u32 %v2339, %v2467
        %v2596 = vxor.u32 %v2340, %v2468
        %v2597 = vxor.u32 %v2341, %v2469
        %v2598 = vxor.u32 %v2342, %v2470
        %v2599 = vxor.u32 %v2343, %v2471
        %v2600 = vxor.u32 %v2344, %v2472
        %v2601 = vxor.u32 %v2345, %v2473
        %v2602 = vxor.u32 %v2346, %v2474
        %v2603 = vxor.u32 %v2347, %v2475
        %v2604 = vxor.u32 %v2348, %v2476
        %v2605 = vxor.u32 %v2349, %v2477
        %v2606 = vxor.u32 %v2350, %v2478
        %v2607 = vxor.u32 %v2351, %v2479
        %v2608 = vxor.u32 %v2352, %v2480
        %v2609 = vxor.u32 %v2353, %v2481
        %v2610 = vxor.u32 %v2354, %v2482
        %v2611 = vxor.u32 %v2355, %v2483
        %v2612 = vxor.u32 %v2356, %v2484
        %v2613 = vxor.u32 %v2357, %v2485
        %v2614 = vxor.u32 %v2358, %v2486
        %v2615 = vxor.u32 %v2359, %v2487
        %v2616 = vxor.u32 %v2360, %v2488
        %v2617 = vxor.u32 %v2361, %v2489
        %v2618 = vxor.u32 %v2362, %v2490
        %v2619 = vxor.u32 %v2363, %v2491
        %v2620 = vxor.u32 %v2364, %v2492
        %v2621 = vxor.u32 %v2365, %v2493
        %v2622 = vxor.u32 %v2366, %v2494
        %v2623 = vxor.u32 %v2367, %v2495
        %v2624 = vxor.u32 %v2368, %v2496
        %v2625 = vxor.u32 %v2369, %v2497
        %v2626 = vxor.u32 %v2370, %v2498
        %v2627 = vxor.u32 %v2371, %v2499
        %v2628 = vxor.u32 %v2372, %v2500
        %v2629 = vxor.u32 %v2373, %v2501
        %v2630 = vxor.u32 %v2374, %v2502
        %v2631 = vxor.u32 %v2375, %v2503
        %v2632 = vxor.u32 %v2376, %v2504
        %v2633 = vxor.u32 %v2377, %v2505
        %v2634 = vxor.u32 %v2378, %v2506
        %v2635 = vxor.u32 %v2379, %v2507
        %v2636 = vxor.u32 %v2380, %v2508
        %v2637 = vxor.u32 %v2381, %v2509
        %v2638 = vxor.u32 %v2382, %v2510
        %v2639 = vxor.u32 %v2383, %v2511
        %v2640 = vxor.u32 %v2384, %v2512
        %v2641 = vxor.u32 %v2385, %v2513
        %v2642 = vxor.u32 %v2386, %v2514
        %v2643 = vxor.u32 %v2387, %v2515
        %v2644 = vxor.u32 %v2388, %v2516
        %v2645 = vxor.u32 %v2389, %v2517
        %v2646 = vxor.u32 %v2390, %v2518
        %v2647 = vxor.u32 %v2391, %v2519
        %v2648 = vxor.u32 %v2392, %v2520
        %v2649 = vxor.u32 %v2393, %v2521
        %v2650 = vxor.u32 %v2394, %v2522
        %v2651 = vxor.u32 %v2395, %v2523
        %v2652 = vxor.u32 %v2396, %v2524
        %v2653 = vxor.u32 %v2397, %v2525
        %v2654 = vxor.u32 %v2398, %v2526
        %v2655 = vxor.u32 %v2399, %v2527
        %v2656 = vxor.u32 %v2400, %v2528
        %v2657 = vxor.u32 %v2401, %v2529
        %v2658 = vxor.u32 %v2402, %v2530
        %v2659 = vxor.u32 %v2403, %v2531
        %v2660 = vxor.u32 %v2404, %v2532
        %v2661 = vxor.u32 %v2405, %v2533
        %v2662 = vxor.u32 %v2406, %v2534
        %v2663 = vxor.u32 %v2407, %v2535
        %v2664 = vxor.u32 %v2408, %v2536
        %v2665 = vxor.u32 %v2409, %v2537
        %v2666 = vxor.u32 %v2410, %v2538
        %v2667 = vxor.u32 %v2411, %v2539
        %v2668 = vxor.u32 %v2412, %v2540
        %v2669 = vxor.u32 %v2413, %v2541
        %v2670 = vxor.u32 %v2414, %v2542
        %v2671 = vxor.u32 %v2415, %v2543
        %v2672 = vxor.u32 %v2416, %v2544
        %v2673 = vxor.u32 %v2417, %v2545
        %v2674 = vxor.u32 %v2418, %v2546
        %v2675 = vxor.u32 %v2419, %v2547
        %v2676 = vxor.u32 %v2420, %v2548
        %v2677 = vxor.u32 %v2421, %v2549
        %v2678 = vxor.u32 %v2422, %v2550
        %v2679 = vxor.u32 %v2423, %v2551
        %v2680 = vxor.u32 %v2424, %v2552
        %v2681 = vxor.u32 %v2425, %v2553
        %v2682 = vxor.u32 %v2426, %v2554
        %v2683 = vxor.u32 %v2427, %v2555
        %v2684 = vxor.u32 %v2428, %v2556
        %v2685 = vxor.u32 %v2429, %v2557
        %v2686 = vxor.u32 %v2430, %v2558
        %v2687 = vxor.u32 %v2431, %v2559
        %v2688 = vxor.u32 %v2432, %v2560
        %v2689 = vxor.u32 %v2433, %v2561
        %v2690 = vxor.u32 %v2434, %v2562
        %v2691 = vxor.u32 %v2435, %v2563
        %v2692 = vmul.u32 %v2564, 2221713035
        %v2693 = vmul.u32 %v2565, 2221713035
        %v2694 = vmul.u32 %v2566, 2221713035
        %v2695 = vmul.u32 %v2567, 2221713035
        %v2696 = vmul.u32 %v2568, 2221713035
        %v2697 = vmul.u32 %v2569, 2221713035
        %v2698 = vmul.u32 %v2570, 2221713035
        %v2699 = vmul.u32 %v2571, 2221713035
        %v2700 = vmul.u32 %v2572, 2221713035
        %v2701 = vmul.u32 %v2573, 2221713035
        %v2702 = vmul.u32 %v2574, 2221713035
        %v2703 = vmul.u32 %v2575, 2221713035
        %v2704 = vmul.u32 %v2576, 2221713035
        %v2705 = vmul.u32 %v2577, 2221713035
        %v2706 = vmul.u32 %v2578, 2221713035
        %v2707 = vmul.u32 %v2579, 2221713035
        %v2708 = vmul.u32 %v2580, 2221713035
        %v2709 = vmul.u32 %v2581, 2221713035
        %v2710 = vmul.u32 %v2582, 2221713035
        %v2711 = vmul.u32 %v2583, 2221713035
        %v2712 = vmul.u32 %v2584, 2221713035
        %v2713 = vmul.u32 %v2585, 2221713035
        %v2714 = vmul.u32 %v2586, 2221713035
        %v2715 = vmul.u32 %v2587, 2221713035
        %v2716 = vmul.u32 %v2588, 2221713035
        %v2717 = vmul.u32 %v2589, 2221713035
        %v2718 = vmul.u32 %v2590, 2221713035
        %v2719 = vmul.u32 %v2591, 2221713035
        %v2720 = vmul.u32 %v2592, 2221713035
        %v2721 = vmul.u32 %v2593, 2221713035
        %v2722 = vmul.u32 %v2594, 2221713035
        %v2723 = vmul.u32 %v2595, 2221713035
        %v2724 = vmul.u32 %v2596, 2221713035
        %v2725 = vmul.u32 %v2597, 2221713035
        %v2726 = vmul.u32 %v2598, 2221713035
        %v2727 = vmul.u32 %v2599, 2221713035
        %v2728 = vmul.u32 %v2600, 2221713035
        %v2729 = vmul.u32 %v2601, 2221713035
        %v2730 = vmul.u32 %v2602, 2221713035
        %v2731 = vmul.u32 %v2603, 2221713035
        %v2732 = vmul.u32 %v2604, 2221713035
        %v2733 = vmul.u32 %v2605, 2221713035
        %v2734 = vmul.u32 %v2606, 2221713035
        %v2735 = vmul.u32 %v2607, 2221713035
        %v2736 = vmul.u32 %v2608, 2221713035
        %v2737 = vmul.u32 %v2609, 2221713035
        %v2738 = vmul.u32 %v2610, 2221713035
        %v2739 = vmul.u32 %v2611, 2221713035
        %v2740 = vmul.u32 %v2612, 2221713035
        %v2741 = vmul.u32 %v2613, 2221713035
        %v2742 = vmul.u32 %v2614, 2221713035
        %v2743 = vmul.u32 %v2615, 2221713035
        %v2744 = vmul.u32 %v2616, 2221713035
        %v2745 = vmul.u32 %v2617, 2221713035
        %v2746 = vmul.u32 %v2618, 2221713035
        %v2747 = vmul.u32 %v2619, 2221713035
        %v2748 = vmul.u32 %v2620, 2221713035
        %v2749 = vmul.u32 %v2621, 2221713035
        %v2750 = vmul.u32 %v2622, 2221713035
        %v2751 = vmul.u32 %v2623, 2221713035
        %v2752 = vmul.u32 %v2624, 2221713035
        %v2753 = vmul.u32 %v2625, 2221713035
        %v2754 = vmul.u32 %v2626, 2221713035
        %v2755 = vmul.u32 %v2627, 2221713035
        %v2756 = vmul.u32 %v2628, 2221713035
        %v2757 = vmul.u32 %v2629, 2221713035
        %v2758 = vmul.u32 %v2630, 2221713035
        %v2759 = vmul.u32 %v2631, 2221713035
        %v2760 = vmul.u32 %v2632, 2221713035
        %v2761 = vmul.u32 %v2633, 2221713035
        %v2762 = vmul.u32 %v2634, 2221713035
        %v2763 = vmul.u32 %v2635, 2221713035
        %v2764 = vmul.u32 %v2636, 2221713035
        %v2765 = vmul.u32 %v2637, 2221713035
        %v2766 = vmul.u32 %v2638, 2221713035
        %v2767 = vmul.u32 %v2639, 2221713035
        %v2768 = vmul.u32 %v2640, 2221713035
        %v2769 = vmul.u32 %v2641, 2221713035
        %v2770 = vmul.u32 %v2642, 2221713035
        %v2771 = vmul.u32 %v2643, 2221713035
        %v2772 = vmul.u32 %v2644, 2221713035
        %v2773 = vmul.u32 %v2645, 2221713035
        %v2774 = vmul.u32 %v2646, 2221713035
        %v2775 = vmul.u32 %v2647, 2221713035
        %v2776 = vmul.u32 %v2648, 2221713035
        %v2777 = vmul.u32 %v2649, 2221713035
        %v2778 = vmul.u32 %v2650, 2221713035
        %v2779 = vmul.u32 %v2651, 2221713035
        %v2780 = vmul.u32 %v2652, 2221713035
        %v2781 = vmul.u32 %v2653, 2221713035
        %v2782 = vmul.u32 %v2654, 2221713035
        %v2783 = vmul.u32 %v2655, 2221713035
        %v2784 = vmul.u32 %v2656, 2221713035
        %v2785 = vmul.u32 %v2657, 2221713035
        %v2786 = vmul.u32 %v2658, 2221713035
        %v2787 = vmul.u32 %v2659, 2221713035
        %v2788 = vmul.u32 %v2660, 2221713035
        %v2789 = vmul.u32 %v2661, 2221713035
        %v2790 = vmul.u32 %v2662, 2221713035
        %v2791 = vmul.u32 %v2663, 2221713035
        %v2792 = vmul.u32 %v2664, 2221713035
        %v2793 = vmul.u32 %v2665, 2221713035
        %v2794 = vmul.u32 %v2666, 2221713035
        %v2795 = vmul.u32 %v2667, 2221713035
        %v2796 = vmul.u32 %v2668, 2221713035
        %v2797 = vmul.u32 %v2669, 2221713035
        %v2798 = vmul.u32 %v2670, 2221713035
        %v2799 = vmul.u32 %v2671, 2221713035
        %v2800 = vmul.u32 %v2672, 2221713035
        %v2801 = vmul.u32 %v2673, 2221713035
        %v2802 = vmul.u32 %v2674, 2221713035
        %v2803 = vmul.u32 %v2675, 2221713035
        %v2804 = vmul.u32 %v2676, 2221713035
        %v2805 = vmul.u32 %v2677, 2221713035
        %v2806 = vmul.u32 %v2678, 2221713035
        %v2807 = vmul.u32 %v2679, 2221713035
        %v2808 = vmul.u32 %v2680, 2221713035
        %v2809 = vmul.u32 %v2681, 2221713035
        %v2810 = vmul.u32 %v2682, 2221713035
        %v2811 = vmul.u32 %v2683, 2221713035
        %v2812 = vmul.u32 %v2684, 2221713035
        %v2813 = vmul.u32 %v2685, 2221713035
        %v2814 = vmul.u32 %v2686, 2221713035
        %v2815 = vmul.u32 %v2687, 2221713035
        %v2816 = vmul.u32 %v2688, 2221713035
        %v2817 = vmul.u32 %v2689, 2221713035
        %v2818 = vmul.u32 %v2690, 2221713035
        %v2819 = vmul.u32 %v2691, 2221713035
        %v2820 = vshrl.u32 %v2692, 16
        %v2821 = vshrl.u32 %v2693, 16
        %v2822 = vshrl.u32 %v2694, 16
        %v2823 = vshrl.u32 %v2695, 16
        %v2824 = vshrl.u32 %v2696, 16
        %v2825 = vshrl.u32 %v2697, 16
        %v2826 = vshrl.u32 %v2698, 16
        %v2827 = vshrl.u32 %v2699, 16
        %v2828 = vshrl.u32 %v2700, 16
        %v2829 = vshrl.u32 %v2701, 16
        %v2830 = vshrl.u32 %v2702, 16
        %v2831 = vshrl.u32 %v2703, 16
        %v2832 = vshrl.u32 %v2704, 16
        %v2833 = vshrl.u32 %v2705, 16
        %v2834 = vshrl.u32 %v2706, 16
        %v2835 = vshrl.u32 %v2707, 16
        %v2836 = vshrl.u32 %v2708, 16
        %v2837 = vshrl.u32 %v2709, 16
        %v2838 = vshrl.u32 %v2710, 16
        %v2839 = vshrl.u32 %v2711, 16
        %v2840 = vshrl.u32 %v2712, 16
        %v2841 = vshrl.u32 %v2713, 16
        %v2842 = vshrl.u32 %v2714, 16
        %v2843 = vshrl.u32 %v2715, 16
        %v2844 = vshrl.u32 %v2716, 16
        %v2845 = vshrl.u32 %v2717, 16
        %v2846 = vshrl.u32 %v2718, 16
        %v2847 = vshrl.u32 %v2719, 16
        %v2848 = vshrl.u32 %v2720, 16
        %v2849 = vshrl.u32 %v2721, 16
        %v2850 = vshrl.u32 %v2722, 16
        %v2851 = vshrl.u32 %v2723, 16
        %v2852 = vshrl.u32 %v2724, 16
        %v2853 = vshrl.u32 %v2725, 16
        %v2854 = vshrl.u32 %v2726, 16
        %v2855 = vshrl.u32 %v2727, 16
        %v2856 = vshrl.u32 %v2728, 16
        %v2857 = vshrl.u32 %v2729, 16
        %v2858 = vshrl.u32 %v2730, 16
        %v2859 = vshrl.u32 %v2731, 16
        %v2860 = vshrl.u32 %v2732, 16
        %v2861 = vshrl.u32 %v2733, 16
        %v2862 = vshrl.u32 %v2734, 16
        %v2863 = vshrl.u32 %v2735, 16
        %v2864 = vshrl.u32 %v2736, 16
        %v2865 = vshrl.u32 %v2737, 16
        %v2866 = vshrl.u32 %v2738, 16
        %v2867 = vshrl.u32 %v2739, 16
        %v2868 = vshrl.u32 %v2740, 16
        %v2869 = vshrl.u32 %v2741, 16
        %v2870 = vshrl.u32 %v2742, 16
        %v2871 = vshrl.u32 %v2743, 16
        %v2872 = vshrl.u32 %v2744, 16
        %v2873 = vshrl.u32 %v2745, 16
        %v2874 = vshrl.u32 %v2746, 16
        %v2875 = vshrl.u32 %v2747, 16
        %v2876 = vshrl.u32 %v2748, 16
        %v2877 = vshrl.u32 %v2749, 16
        %v2878 = vshrl.u32 %v2750, 16
        %v2879 = vshrl.u32 %v2751, 16
        %v2880 = vshrl.u32 %v2752, 16
        %v2881 = vshrl.u32 %v2753, 16
        %v2882 = vshrl.u32 %v2754, 16
        %v2883 = vshrl.u32 %v2755, 16
        %v2884 = vshrl.u32 %v2756, 16
        %v2885 = vshrl.u32 %v2757, 16
        %v2886 = vshrl.u32 %v2758, 16
        %v2887 = vshrl.u32 %v2759, 16
        %v2888 = vshrl.u32 %v2760, 16
        %v2889 = vshrl.u32 %v2761, 16
        %v2890 = vshrl.u32 %v2762, 16
        %v2891 = vshrl.u32 %v2763, 16
        %v2892 = vshrl.u32 %v2764, 16
        %v2893 = vshrl.u32 %v2765, 16
        %v2894 = vshrl.u32 %v2766, 16
        %v2895 = vshrl.u32 %v2767, 16
        %v2896 = vshrl.u32 %v2768, 16
        %v2897 = vshrl.u32 %v2769, 16
        %v2898 = vshrl.u32 %v2770, 16
        %v2899 = vshrl.u32 %v2771, 16
        %v2900 = vshrl.u32 %v2772, 16
        %v2901 = vshrl.u32 %v2773, 16
        %v2902 = vshrl.u32 %v2774, 16
        %v2903 = vshrl.u32 %v2775, 16
        %v2904 = vshrl.u32 %v2776, 16
        %v2905 = vshrl.u32 %v2777, 16
        %v2906 = vshrl.u32 %v2778, 16
        %v2907 = vshrl.u32 %v2779, 16
        %v2908 = vshrl.u32 %v2780, 16
        %v2909 = vshrl.u32 %v2781, 16
        %v2910 = vshrl.u32 %v2782, 16
        %v2911 = vshrl.u32 %v2783, 16
        %v2912 = vshrl.u32 %v2784, 16
        %v2913 = vshrl.u32 %v2785, 16
        %v2914 = vshrl.u32 %v2786, 16
        %v2915 = vshrl.u32 %v2787, 16
        %v2916 = vshrl.u32 %v2788, 16
        %v2917 = vshrl.u32 %v2789, 16
        %v2918 = vshrl.u32 %v2790, 16
        %v2919 = vshrl.u32 %v2791, 16
        %v2920 = vshrl.u32 %v2792, 16
        %v2921 = vshrl.u32 %v2793, 16
        %v2922 = vshrl.u32 %v2794, 16
        %v2923 = vshrl.u32 %v2795, 16
        %v2924 = vshrl.u32 %v2796, 16
        %v2925 = vshrl.u32 %v2797, 16
        %v2926 = vshrl.u32 %v2798, 16
        %v2927 = vshrl.u32 %v2799, 16
        %v2928 = vshrl.u32 %v2800, 16
        %v2929 = vshrl.u32 %v2801, 16
        %v2930 = vshrl.u32 %v2802, 16
        %v2931 = vshrl.u32 %v2803, 16
        %v2932 = vshrl.u32 %v2804, 16
        %v2933 = vshrl.u32 %v2805, 16
        %v2934 = vshrl.u32 %v2806, 16
        %v2935 = vshrl.u32 %v2807, 16
        %v2936 = vshrl.u32 %v2808, 16
        %v2937 = vshrl.u32 %v2809, 16
        %v2938 = vshrl.u32 %v2810, 16
        %v2939 = vshrl.u32 %v2811, 16
        %v2940 = vshrl.u32 %v2812, 16
        %v2941 = vshrl.u32 %v2813, 16
        %v2942 = vshrl.u32 %v2814, 16
        %v2943 = vshrl.u32 %v2815, 16
        %v2944 = vshrl.u32 %v2816, 16
        %v2945 = vshrl.u32 %v2817, 16
        %v2946 = vshrl.u32 %v2818, 16
        %v2947 = vshrl.u32 %v2819, 16
        %v2948 = vxor.u32 %v2692, %v2820
        %v2949 = vxor.u32 %v2693, %v2821
        %v2950 = vxor.u32 %v2694, %v2822
        %v2951 = vxor.u32 %v2695, %v2823
        %v2952 = vxor.u32 %v2696, %v2824
        %v2953 = vxor.u32 %v2697, %v2825
        %v2954 = vxor.u32 %v2698, %v2826
        %v2955 = vxor.u32 %v2699, %v2827
        %v2956 = vxor.u32 %v2700, %v2828
        %v2957 = vxor.u32 %v2701, %v2829
        %v2958 = vxor.u32 %v2702, %v2830
        %v2959 = vxor.u32 %v2703, %v2831
        %v2960 = vxor.u32 %v2704, %v2832
        %v2961 = vxor.u32 %v2705, %v2833
        %v2962 = vxor.u32 %v2706, %v2834
        %v2963 = vxor.u32 %v2707, %v2835
        %v2964 = vxor.u32 %v2708, %v2836
        %v2965 = vxor.u32 %v2709, %v2837
        %v2966 = vxor.u32 %v2710, %v2838
        %v2967 = vxor.u32 %v2711, %v2839
        %v2968 = vxor.u32 %v2712, %v2840
        %v2969 = vxor.u32 %v2713, %v2841
        %v2970 = vxor.u32 %v2714, %v2842
        %v2971 = vxor.u32 %v2715, %v2843
        %v2972 = vxor.u32 %v2716, %v2844
        %v2973 = vxor.u32 %v2717, %v2845
        %v2974 = vxor.u32 %v2718, %v2846
        %v2975 = vxor.u32 %v2719, %v2847
        %v2976 = vxor.u32 %v2720, %v2848
        %v2977 = vxor.u32 %v2721, %v2849
        %v2978 = vxor.u32 %v2722, %v2850
        %v2979 = vxor.u32 %v2723, %v2851
        %v2980 = vxor.u32 %v2724, %v2852
        %v2981 = vxor.u32 %v2725, %v2853
        %v2982 = vxor.u32 %v2726, %v2854
        %v2983 = vxor.u32 %v2727, %v2855
        %v2984 = vxor.u32 %v2728, %v2856
        %v2985 = vxor.u32 %v2729, %v2857
        %v2986 = vxor.u32 %v2730, %v2858
        %v2987 = vxor.u32 %v2731, %v2859
        %v2988 = vxor.u32 %v2732, %v2860
        %v2989 = vxor.u32 %v2733, %v2861
        %v2990 = vxor.u32 %v2734, %v2862
        %v2991 = vxor.u32 %v2735, %v2863
        %v2992 = vxor.u32 %v2736, %v2864
        %v2993 = vxor.u32 %v2737, %v2865
        %v2994 = vxor.u32 %v2738, %v2866
        %v2995 = vxor.u32 %v2739, %v2867
        %v2996 = vxor.u32 %v2740, %v2868
        %v2997 = vxor.u32 %v2741, %v2869
        %v2998 = vxor.u32 %v2742, %v2870
        %v2999 = vxor.u32 %v2743, %v2871
        %v3000 = vxor.u32 %v2744, %v2872
        %v3001 = vxor.u32 %v2745, %v2873
        %v3002 = vxor.u32 %v2746, %v2874
        %v3003 = vxor.u32 %v2747, %v2875
        %v3004 = vxor.u32 %v2748, %v2876
        %v3005 = vxor.u32 %v2749, %v2877
        %v3006 = vxor.u32 %v2750, %v2878
        %v3007 = vxor.u32 %v2751, %v2879
        %v3008 = vxor.u32 %v2752, %v2880
        %v3009 = vxor.u32 %v2753, %v2881
        %v3010 = vxor.u32 %v2754, %v2882
        %v3011 = vxor.u32 %v2755, %v2883
        %v3012 = vxor.u32 %v2756, %v2884
        %v3013 = vxor.u32 %v2757, %v2885
        %v3014 = vxor.u32 %v2758, %v2886
        %v3015 = vxor.u32 %v2759, %v2887
        %v3016 = vxor.u32 %v2760, %v2888
        %v3017 = vxor.u32 %v2761, %v2889
        %v3018 = vxor.u32 %v2762, %v2890
        %v3019 = vxor.u32 %v2763, %v2891
        %v3020 = vxor.u32 %v2764, %v2892
        %v3021 = vxor.u32 %v2765, %v2893
        %v3022 = vxor.u32 %v2766, %v2894
        %v3023 = vxor.u32 %v2767, %v2895
        %v3024 = vxor.u32 %v2768, %v2896
        %v3025 = vxor.u32 %v2769, %v2897
        %v3026 = vxor.u32 %v2770, %v2898
        %v3027 = vxor.u32 %v2771, %v2899
        %v3028 = vxor.u32 %v2772, %v2900
        %v3029 = vxor.u32 %v2773, %v2901
        %v3030 = vxor.u32 %v2774, %v2902
        %v3031 = vxor.u32 %v2775, %v2903
        %v3032 = vxor.u32 %v2776, %v2904
        %v3033 = vxor.u32 %v2777, %v2905
        %v3034 = vxor.u32 %v2778, %v2906
        %v3035 = vxor.u32 %v2779, %v2907
        %v3036 = vxor.u32 %v2780, %v2908
        %v3037 = vxor.u32 %v2781, %v2909
        %v3038 = vxor.u32 %v2782, %v2910
        %v3039 = vxor.u32 %v2783, %v2911
        %v3040 = vxor.u32 %v2784, %v2912
        %v3041 = vxor.u32 %v2785, %v2913
        %v3042 = vxor.u32 %v2786, %v2914
        %v3043 = vxor.u32 %v2787, %v2915
        %v3044 = vxor.u32 %v2788, %v2916
        %v3045 = vxor.u32 %v2789, %v2917
        %v3046 = vxor.u32 %v2790, %v2918
        %v3047 = vxor.u32 %v2791, %v2919
        %v3048 = vxor.u32 %v2792, %v2920
        %v3049 = vxor.u32 %v2793, %v2921
        %v3050 = vxor.u32 %v2794, %v2922
        %v3051 = vxor.u32 %v2795, %v2923
        %v3052 = vxor.u32 %v2796, %v2924
        %v3053 = vxor.u32 %v2797, %v2925
        %v3054 = vxor.u32 %v2798, %v2926
        %v3055 = vxor.u32 %v2799, %v2927
        %v3056 = vxor.u32 %v2800, %v2928
        %v3057 = vxor.u32 %v2801, %v2929
        %v3058 = vxor.u32 %v2802, %v2930
        %v3059 = vxor.u32 %v2803, %v2931
        %v3060 = vxor.u32 %v2804, %v2932
        %v3061 = vxor.u32 %v2805, %v2933
        %v3062 = vxor.u32 %v2806, %v2934
        %v3063 = vxor.u32 %v2807, %v2935
        %v3064 = vxor.u32 %v2808, %v2936
        %v3065 = vxor.u32 %v2809, %v2937
        %v3066 = vxor.u32 %v2810, %v2938
        %v3067 = vxor.u32 %v2811, %v2939
        %v3068 = vxor.u32 %v2812, %v2940
        %v3069 = vxor.u32 %v2813, %v2941
        %v3070 = vxor.u32 %v2814, %v2942
        %v3071 = vxor.u32 %v2815, %v2943
        %v3072 = vxor.u32 %v2816, %v2944
        %v3073 = vxor.u32 %v2817, %v2945
        %v3074 = vxor.u32 %v2818, %v2946
        %v3075 = vxor.u32 %v2819, %v2947
        %vm3076 = vcmp.ge.u32.totalorder %v2948, 1288490188
        %vm3077 = vcmp.ge.u32.totalorder %v2949, 1288490188
        %vm3078 = vcmp.ge.u32.totalorder %v2950, 1288490188
        %vm3079 = vcmp.ge.u32.totalorder %v2951, 1288490188
        %vm3080 = vcmp.ge.u32.totalorder %v2952, 1288490188
        %vm3081 = vcmp.ge.u32.totalorder %v2953, 1288490188
        %vm3082 = vcmp.ge.u32.totalorder %v2954, 1288490188
        %vm3083 = vcmp.ge.u32.totalorder %v2955, 1288490188
        %vm3084 = vcmp.ge.u32.totalorder %v2956, 1288490188
        %vm3085 = vcmp.ge.u32.totalorder %v2957, 1288490188
        %vm3086 = vcmp.ge.u32.totalorder %v2958, 1288490188
        %vm3087 = vcmp.ge.u32.totalorder %v2959, 1288490188
        %vm3088 = vcmp.ge.u32.totalorder %v2960, 1288490188
        %vm3089 = vcmp.ge.u32.totalorder %v2961, 1288490188
        %vm3090 = vcmp.ge.u32.totalorder %v2962, 1288490188
        %vm3091 = vcmp.ge.u32.totalorder %v2963, 1288490188
        %vm3092 = vcmp.ge.u32.totalorder %v2964, 1288490188
        %vm3093 = vcmp.ge.u32.totalorder %v2965, 1288490188
        %vm3094 = vcmp.ge.u32.totalorder %v2966, 1288490188
        %vm3095 = vcmp.ge.u32.totalorder %v2967, 1288490188
        %vm3096 = vcmp.ge.u32.totalorder %v2968, 1288490188
        %vm3097 = vcmp.ge.u32.totalorder %v2969, 1288490188
        %vm3098 = vcmp.ge.u32.totalorder %v2970, 1288490188
        %vm3099 = vcmp.ge.u32.totalorder %v2971, 1288490188
        %vm3100 = vcmp.ge.u32.totalorder %v2972, 1288490188
        %vm3101 = vcmp.ge.u32.totalorder %v2973, 1288490188
        %vm3102 = vcmp.ge.u32.totalorder %v2974, 1288490188
        %vm3103 = vcmp.ge.u32.totalorder %v2975, 1288490188
        %vm3104 = vcmp.ge.u32.totalorder %v2976, 1288490188
        %vm3105 = vcmp.ge.u32.totalorder %v2977, 1288490188
        %vm3106 = vcmp.ge.u32.totalorder %v2978, 1288490188
        %vm3107 = vcmp.ge.u32.totalorder %v2979, 1288490188
        %vm3108 = vcmp.ge.u32.totalorder %v2980, 1288490188
        %vm3109 = vcmp.ge.u32.totalorder %v2981, 1288490188
        %vm3110 = vcmp.ge.u32.totalorder %v2982, 1288490188
        %vm3111 = vcmp.ge.u32.totalorder %v2983, 1288490188
        %vm3112 = vcmp.ge.u32.totalorder %v2984, 1288490188
        %vm3113 = vcmp.ge.u32.totalorder %v2985, 1288490188
        %vm3114 = vcmp.ge.u32.totalorder %v2986, 1288490188
        %vm3115 = vcmp.ge.u32.totalorder %v2987, 1288490188
        %vm3116 = vcmp.ge.u32.totalorder %v2988, 1288490188
        %vm3117 = vcmp.ge.u32.totalorder %v2989, 1288490188
        %vm3118 = vcmp.ge.u32.totalorder %v2990, 1288490188
        %vm3119 = vcmp.ge.u32.totalorder %v2991, 1288490188
        %vm3120 = vcmp.ge.u32.totalorder %v2992, 1288490188
        %vm3121 = vcmp.ge.u32.totalorder %v2993, 1288490188
        %vm3122 = vcmp.ge.u32.totalorder %v2994, 1288490188
        %vm3123 = vcmp.ge.u32.totalorder %v2995, 1288490188
        %vm3124 = vcmp.ge.u32.totalorder %v2996, 1288490188
        %vm3125 = vcmp.ge.u32.totalorder %v2997, 1288490188
        %vm3126 = vcmp.ge.u32.totalorder %v2998, 1288490188
        %vm3127 = vcmp.ge.u32.totalorder %v2999, 1288490188
        %vm3128 = vcmp.ge.u32.totalorder %v3000, 1288490188
        %vm3129 = vcmp.ge.u32.totalorder %v3001, 1288490188
        %vm3130 = vcmp.ge.u32.totalorder %v3002, 1288490188
        %vm3131 = vcmp.ge.u32.totalorder %v3003, 1288490188
        %vm3132 = vcmp.ge.u32.totalorder %v3004, 1288490188
        %vm3133 = vcmp.ge.u32.totalorder %v3005, 1288490188
        %vm3134 = vcmp.ge.u32.totalorder %v3006, 1288490188
        %vm3135 = vcmp.ge.u32.totalorder %v3007, 1288490188
        %vm3136 = vcmp.ge.u32.totalorder %v3008, 1288490188
        %vm3137 = vcmp.ge.u32.totalorder %v3009, 1288490188
        %vm3138 = vcmp.ge.u32.totalorder %v3010, 1288490188
        %vm3139 = vcmp.ge.u32.totalorder %v3011, 1288490188
        %vm3140 = vcmp.ge.u32.totalorder %v3012, 1288490188
        %vm3141 = vcmp.ge.u32.totalorder %v3013, 1288490188
        %vm3142 = vcmp.ge.u32.totalorder %v3014, 1288490188
        %vm3143 = vcmp.ge.u32.totalorder %v3015, 1288490188
        %vm3144 = vcmp.ge.u32.totalorder %v3016, 1288490188
        %vm3145 = vcmp.ge.u32.totalorder %v3017, 1288490188
        %vm3146 = vcmp.ge.u32.totalorder %v3018, 1288490188
        %vm3147 = vcmp.ge.u32.totalorder %v3019, 1288490188
        %vm3148 = vcmp.ge.u32.totalorder %v3020, 1288490188
        %vm3149 = vcmp.ge.u32.totalorder %v3021, 1288490188
        %vm3150 = vcmp.ge.u32.totalorder %v3022, 1288490188
        %vm3151 = vcmp.ge.u32.totalorder %v3023, 1288490188
        %vm3152 = vcmp.ge.u32.totalorder %v3024, 1288490188
        %vm3153 = vcmp.ge.u32.totalorder %v3025, 1288490188
        %vm3154 = vcmp.ge.u32.totalorder %v3026, 1288490188
        %vm3155 = vcmp.ge.u32.totalorder %v3027, 1288490188
        %vm3156 = vcmp.ge.u32.totalorder %v3028, 1288490188
        %vm3157 = vcmp.ge.u32.totalorder %v3029, 1288490188
        %vm3158 = vcmp.ge.u32.totalorder %v3030, 1288490188
        %vm3159 = vcmp.ge.u32.totalorder %v3031, 1288490188
        %vm3160 = vcmp.ge.u32.totalorder %v3032, 1288490188
        %vm3161 = vcmp.ge.u32.totalorder %v3033, 1288490188
        %vm3162 = vcmp.ge.u32.totalorder %v3034, 1288490188
        %vm3163 = vcmp.ge.u32.totalorder %v3035, 1288490188
        %vm3164 = vcmp.ge.u32.totalorder %v3036, 1288490188
        %vm3165 = vcmp.ge.u32.totalorder %v3037, 1288490188
        %vm3166 = vcmp.ge.u32.totalorder %v3038, 1288490188
        %vm3167 = vcmp.ge.u32.totalorder %v3039, 1288490188
        %vm3168 = vcmp.ge.u32.totalorder %v3040, 1288490188
        %vm3169 = vcmp.ge.u32.totalorder %v3041, 1288490188
        %vm3170 = vcmp.ge.u32.totalorder %v3042, 1288490188
        %vm3171 = vcmp.ge.u32.totalorder %v3043, 1288490188
        %vm3172 = vcmp.ge.u32.totalorder %v3044, 1288490188
        %vm3173 = vcmp.ge.u32.totalorder %v3045, 1288490188
        %vm3174 = vcmp.ge.u32.totalorder %v3046, 1288490188
        %vm3175 = vcmp.ge.u32.totalorder %v3047, 1288490188
        %vm3176 = vcmp.ge.u32.totalorder %v3048, 1288490188
        %vm3177 = vcmp.ge.u32.totalorder %v3049, 1288490188
        %vm3178 = vcmp.ge.u32.totalorder %v3050, 1288490188
        %vm3179 = vcmp.ge.u32.totalorder %v3051, 1288490188
        %vm3180 = vcmp.ge.u32.totalorder %v3052, 1288490188
        %vm3181 = vcmp.ge.u32.totalorder %v3053, 1288490188
        %vm3182 = vcmp.ge.u32.totalorder %v3054, 1288490188
        %vm3183 = vcmp.ge.u32.totalorder %v3055, 1288490188
        %vm3184 = vcmp.ge.u32.totalorder %v3056, 1288490188
        %vm3185 = vcmp.ge.u32.totalorder %v3057, 1288490188
        %vm3186 = vcmp.ge.u32.totalorder %v3058, 1288490188
        %vm3187 = vcmp.ge.u32.totalorder %v3059, 1288490188
        %vm3188 = vcmp.ge.u32.totalorder %v3060, 1288490188
        %vm3189 = vcmp.ge.u32.totalorder %v3061, 1288490188
        %vm3190 = vcmp.ge.u32.totalorder %v3062, 1288490188
        %vm3191 = vcmp.ge.u32.totalorder %v3063, 1288490188
        %vm3192 = vcmp.ge.u32.totalorder %v3064, 1288490188
        %vm3193 = vcmp.ge.u32.totalorder %v3065, 1288490188
        %vm3194 = vcmp.ge.u32.totalorder %v3066, 1288490188
        %vm3195 = vcmp.ge.u32.totalorder %v3067, 1288490188
        %vm3196 = vcmp.ge.u32.totalorder %v3068, 1288490188
        %vm3197 = vcmp.ge.u32.totalorder %v3069, 1288490188
        %vm3198 = vcmp.ge.u32.totalorder %v3070, 1288490188
        %vm3199 = vcmp.ge.u32.totalorder %v3071, 1288490188
        %vm3200 = vcmp.ge.u32.totalorder %v3072, 1288490188
        %vm3201 = vcmp.ge.u32.totalorder %v3073, 1288490188
        %vm3202 = vcmp.ge.u32.totalorder %v3074, 1288490188
        %vm3203 = vcmp.ge.u32.totalorder %v3075, 1288490188
        %v3204 = vsel %vm3076, %v1728, 0.0
        %v3205 = vsel %vm3077, %v1729, 0.0
        %v3206 = vsel %vm3078, %v1730, 0.0
        %v3207 = vsel %vm3079, %v1731, 0.0
        %v3208 = vsel %vm3080, %v1732, 0.0
        %v3209 = vsel %vm3081, %v1733, 0.0
        %v3210 = vsel %vm3082, %v1734, 0.0
        %v3211 = vsel %vm3083, %v1735, 0.0
        %v3212 = vsel %vm3084, %v1736, 0.0
        %v3213 = vsel %vm3085, %v1737, 0.0
        %v3214 = vsel %vm3086, %v1738, 0.0
        %v3215 = vsel %vm3087, %v1739, 0.0
        %v3216 = vsel %vm3088, %v1740, 0.0
        %v3217 = vsel %vm3089, %v1741, 0.0
        %v3218 = vsel %vm3090, %v1742, 0.0
        %v3219 = vsel %vm3091, %v1743, 0.0
        %v3220 = vsel %vm3092, %v1744, 0.0
        %v3221 = vsel %vm3093, %v1745, 0.0
        %v3222 = vsel %vm3094, %v1746, 0.0
        %v3223 = vsel %vm3095, %v1747, 0.0
        %v3224 = vsel %vm3096, %v1748, 0.0
        %v3225 = vsel %vm3097, %v1749, 0.0
        %v3226 = vsel %vm3098, %v1750, 0.0
        %v3227 = vsel %vm3099, %v1751, 0.0
        %v3228 = vsel %vm3100, %v1752, 0.0
        %v3229 = vsel %vm3101, %v1753, 0.0
        %v3230 = vsel %vm3102, %v1754, 0.0
        %v3231 = vsel %vm3103, %v1755, 0.0
        %v3232 = vsel %vm3104, %v1756, 0.0
        %v3233 = vsel %vm3105, %v1757, 0.0
        %v3234 = vsel %vm3106, %v1758, 0.0
        %v3235 = vsel %vm3107, %v1759, 0.0
        %v3236 = vsel %vm3108, %v1760, 0.0
        %v3237 = vsel %vm3109, %v1761, 0.0
        %v3238 = vsel %vm3110, %v1762, 0.0
        %v3239 = vsel %vm3111, %v1763, 0.0
        %v3240 = vsel %vm3112, %v1764, 0.0
        %v3241 = vsel %vm3113, %v1765, 0.0
        %v3242 = vsel %vm3114, %v1766, 0.0
        %v3243 = vsel %vm3115, %v1767, 0.0
        %v3244 = vsel %vm3116, %v1768, 0.0
        %v3245 = vsel %vm3117, %v1769, 0.0
        %v3246 = vsel %vm3118, %v1770, 0.0
        %v3247 = vsel %vm3119, %v1771, 0.0
        %v3248 = vsel %vm3120, %v1772, 0.0
        %v3249 = vsel %vm3121, %v1773, 0.0
        %v3250 = vsel %vm3122, %v1774, 0.0
        %v3251 = vsel %vm3123, %v1775, 0.0
        %v3252 = vsel %vm3124, %v1776, 0.0
        %v3253 = vsel %vm3125, %v1777, 0.0
        %v3254 = vsel %vm3126, %v1778, 0.0
        %v3255 = vsel %vm3127, %v1779, 0.0
        %v3256 = vsel %vm3128, %v1780, 0.0
        %v3257 = vsel %vm3129, %v1781, 0.0
        %v3258 = vsel %vm3130, %v1782, 0.0
        %v3259 = vsel %vm3131, %v1783, 0.0
        %v3260 = vsel %vm3132, %v1784, 0.0
        %v3261 = vsel %vm3133, %v1785, 0.0
        %v3262 = vsel %vm3134, %v1786, 0.0
        %v3263 = vsel %vm3135, %v1787, 0.0
        %v3264 = vsel %vm3136, %v1788, 0.0
        %v3265 = vsel %vm3137, %v1789, 0.0
        %v3266 = vsel %vm3138, %v1790, 0.0
        %v3267 = vsel %vm3139, %v1791, 0.0
        %v3268 = vsel %vm3140, %v1792, 0.0
        %v3269 = vsel %vm3141, %v1793, 0.0
        %v3270 = vsel %vm3142, %v1794, 0.0
        %v3271 = vsel %vm3143, %v1795, 0.0
        %v3272 = vsel %vm3144, %v1796, 0.0
        %v3273 = vsel %vm3145, %v1797, 0.0
        %v3274 = vsel %vm3146, %v1798, 0.0
        %v3275 = vsel %vm3147, %v1799, 0.0
        %v3276 = vsel %vm3148, %v1800, 0.0
        %v3277 = vsel %vm3149, %v1801, 0.0
        %v3278 = vsel %vm3150, %v1802, 0.0
        %v3279 = vsel %vm3151, %v1803, 0.0
        %v3280 = vsel %vm3152, %v1804, 0.0
        %v3281 = vsel %vm3153, %v1805, 0.0
        %v3282 = vsel %vm3154, %v1806, 0.0
        %v3283 = vsel %vm3155, %v1807, 0.0
        %v3284 = vsel %vm3156, %v1808, 0.0
        %v3285 = vsel %vm3157, %v1809, 0.0
        %v3286 = vsel %vm3158, %v1810, 0.0
        %v3287 = vsel %vm3159, %v1811, 0.0
        %v3288 = vsel %vm3160, %v1812, 0.0
        %v3289 = vsel %vm3161, %v1813, 0.0
        %v3290 = vsel %vm3162, %v1814, 0.0
        %v3291 = vsel %vm3163, %v1815, 0.0
        %v3292 = vsel %vm3164, %v1816, 0.0
        %v3293 = vsel %vm3165, %v1817, 0.0
        %v3294 = vsel %vm3166, %v1818, 0.0
        %v3295 = vsel %vm3167, %v1819, 0.0
        %v3296 = vsel %vm3168, %v1820, 0.0
        %v3297 = vsel %vm3169, %v1821, 0.0
        %v3298 = vsel %vm3170, %v1822, 0.0
        %v3299 = vsel %vm3171, %v1823, 0.0
        %v3300 = vsel %vm3172, %v1824, 0.0
        %v3301 = vsel %vm3173, %v1825, 0.0
        %v3302 = vsel %vm3174, %v1826, 0.0
        %v3303 = vsel %vm3175, %v1827, 0.0
        %v3304 = vsel %vm3176, %v1828, 0.0
        %v3305 = vsel %vm3177, %v1829, 0.0
        %v3306 = vsel %vm3178, %v1830, 0.0
        %v3307 = vsel %vm3179, %v1831, 0.0
        %v3308 = vsel %vm3180, %v1832, 0.0
        %v3309 = vsel %vm3181, %v1833, 0.0
        %v3310 = vsel %vm3182, %v1834, 0.0
        %v3311 = vsel %vm3183, %v1835, 0.0
        %v3312 = vsel %vm3184, %v1836, 0.0
        %v3313 = vsel %vm3185, %v1837, 0.0
        %v3314 = vsel %vm3186, %v1838, 0.0
        %v3315 = vsel %vm3187, %v1839, 0.0
        %v3316 = vsel %vm3188, %v1840, 0.0
        %v3317 = vsel %vm3189, %v1841, 0.0
        %v3318 = vsel %vm3190, %v1842, 0.0
        %v3319 = vsel %vm3191, %v1843, 0.0
        %v3320 = vsel %vm3192, %v1844, 0.0
        %v3321 = vsel %vm3193, %v1845, 0.0
        %v3322 = vsel %vm3194, %v1846, 0.0
        %v3323 = vsel %vm3195, %v1847, 0.0
        %v3324 = vsel %vm3196, %v1848, 0.0
        %v3325 = vsel %vm3197, %v1849, 0.0
        %v3326 = vsel %vm3198, %v1850, 0.0
        %v3327 = vsel %vm3199, %v1851, 0.0
        %v3328 = vsel %vm3200, %v1852, 0.0
        %v3329 = vsel %vm3201, %v1853, 0.0
        %v3330 = vsel %vm3202, %v1854, 0.0
        %v3331 = vsel %vm3203, %v1855, 0.0
        %v3332 = vpack.c.bf16 %v3212, %v3204
        %v3333 = vpack.c.bf16 %v3213, %v3205
        %v3334 = vpack.c.bf16 %v3214, %v3206
        %v3335 = vpack.c.bf16 %v3215, %v3207
        %v3336 = vpack.c.bf16 %v3216, %v3208
        %v3337 = vpack.c.bf16 %v3217, %v3209
        %v3338 = vpack.c.bf16 %v3218, %v3210
        %v3339 = vpack.c.bf16 %v3219, %v3211
        %v3340 = vpack.c.bf16 %v3228, %v3220
        %v3341 = vpack.c.bf16 %v3229, %v3221
        %v3342 = vpack.c.bf16 %v3230, %v3222
        %v3343 = vpack.c.bf16 %v3231, %v3223
        %v3344 = vpack.c.bf16 %v3232, %v3224
        %v3345 = vpack.c.bf16 %v3233, %v3225
        %v3346 = vpack.c.bf16 %v3234, %v3226
        %v3347 = vpack.c.bf16 %v3235, %v3227
        %v3348 = vpack.c.bf16 %v3244, %v3236
        %v3349 = vpack.c.bf16 %v3245, %v3237
        %v3350 = vpack.c.bf16 %v3246, %v3238
        %v3351 = vpack.c.bf16 %v3247, %v3239
        %v3352 = vpack.c.bf16 %v3248, %v3240
        %v3353 = vpack.c.bf16 %v3249, %v3241
        %v3354 = vpack.c.bf16 %v3250, %v3242
        %v3355 = vpack.c.bf16 %v3251, %v3243
        %v3356 = vpack.c.bf16 %v3260, %v3252
        %v3357 = vpack.c.bf16 %v3261, %v3253
        %v3358 = vpack.c.bf16 %v3262, %v3254
        %v3359 = vpack.c.bf16 %v3263, %v3255
        %v3360 = vpack.c.bf16 %v3264, %v3256
        %v3361 = vpack.c.bf16 %v3265, %v3257
        %v3362 = vpack.c.bf16 %v3266, %v3258
        %v3363 = vpack.c.bf16 %v3267, %v3259
        %v3364 = vpack.c.bf16 %v3276, %v3268
        %v3365 = vpack.c.bf16 %v3277, %v3269
        %v3366 = vpack.c.bf16 %v3278, %v3270
        %v3367 = vpack.c.bf16 %v3279, %v3271
        %v3368 = vpack.c.bf16 %v3280, %v3272
        %v3369 = vpack.c.bf16 %v3281, %v3273
        %v3370 = vpack.c.bf16 %v3282, %v3274
        %v3371 = vpack.c.bf16 %v3283, %v3275
        %v3372 = vpack.c.bf16 %v3292, %v3284
        %v3373 = vpack.c.bf16 %v3293, %v3285
        %v3374 = vpack.c.bf16 %v3294, %v3286
        %v3375 = vpack.c.bf16 %v3295, %v3287
        %v3376 = vpack.c.bf16 %v3296, %v3288
        %v3377 = vpack.c.bf16 %v3297, %v3289
        %v3378 = vpack.c.bf16 %v3298, %v3290
        %v3379 = vpack.c.bf16 %v3299, %v3291
        %v3380 = vpack.c.bf16 %v3308, %v3300
        %v3381 = vpack.c.bf16 %v3309, %v3301
        %v3382 = vpack.c.bf16 %v3310, %v3302
        %v3383 = vpack.c.bf16 %v3311, %v3303
        %v3384 = vpack.c.bf16 %v3312, %v3304
        %v3385 = vpack.c.bf16 %v3313, %v3305
        %v3386 = vpack.c.bf16 %v3314, %v3306
        %v3387 = vpack.c.bf16 %v3315, %v3307
        %v3388 = vpack.c.bf16 %v3324, %v3316
        %v3389 = vpack.c.bf16 %v3325, %v3317
        %v3390 = vpack.c.bf16 %v3326, %v3318
        %v3391 = vpack.c.bf16 %v3327, %v3319
        %v3392 = vpack.c.bf16 %v3328, %v3320
        %v3393 = vpack.c.bf16 %v3329, %v3321
        %v3394 = vpack.c.bf16 %v3330, %v3322
        %v3395 = vpack.c.bf16 %v3331, %v3323
        %v3397 = vlaneseq
        %v3398 = vshrl.u32 %v3397, 7
        %v3399 = vsub.s32 0, %v3398
        %v3400 = vrot.slane %v687, %v3399
        %v3401 = vlaneseq
        %v3402 = vshrl.u32 %v3401, 7
        %v3403 = vsub.s32 1, %v3402
        %v3404 = vrot.slane %v687, %v3403
        %v3405 = vlaneseq
        %v3406 = vshrl.u32 %v3405, 7
        %v3407 = vsub.s32 2, %v3406
        %v3408 = vrot.slane %v687, %v3407
        %v3409 = vlaneseq
        %v3410 = vshrl.u32 %v3409, 7
        %v3411 = vsub.s32 3, %v3410
        %v3412 = vrot.slane %v687, %v3411
        %v3673 = vunpack.c.l.b16 %v431
        %v3674 = vunpack.c.h.b16 %v431
        %v3675 = vunpack.c.l.b16 %v432
        %v3676 = vunpack.c.h.b16 %v432
        %v3677 = vunpack.c.l.b16 %v433
        %v3678 = vunpack.c.h.b16 %v433
        %v3679 = vunpack.c.l.b16 %v434
        %v3680 = vunpack.c.h.b16 %v434
        %v3681 = vunpack.c.l.b16 %v435
        %v3682 = vunpack.c.h.b16 %v435
        %v3683 = vunpack.c.l.b16 %v436
        %v3684 = vunpack.c.h.b16 %v436
        %v3685 = vunpack.c.l.b16 %v437
        %v3686 = vunpack.c.h.b16 %v437
        %v3687 = vunpack.c.l.b16 %v438
        %v3688 = vunpack.c.h.b16 %v438
        %v3689 = vunpack.c.l.b16 %v439
        %v3690 = vunpack.c.h.b16 %v439
        %v3691 = vunpack.c.l.b16 %v440
        %v3692 = vunpack.c.h.b16 %v440
        %v3693 = vunpack.c.l.b16 %v441
        %v3694 = vunpack.c.h.b16 %v441
        %v3695 = vunpack.c.l.b16 %v442
        %v3696 = vunpack.c.h.b16 %v442
        %v3697 = vunpack.c.l.b16 %v443
        %v3698 = vunpack.c.h.b16 %v443
        %v3699 = vunpack.c.l.b16 %v444
        %v3700 = vunpack.c.h.b16 %v444
        %v3701 = vunpack.c.l.b16 %v445
        %v3702 = vunpack.c.h.b16 %v445
        %v3703 = vunpack.c.l.b16 %v446
        %v3704 = vunpack.c.h.b16 %v446
        %v3705 = vunpack.c.l.b16 %v447
        %v3706 = vunpack.c.h.b16 %v447
        %v3707 = vunpack.c.l.b16 %v448
        %v3708 = vunpack.c.h.b16 %v448
        %v3709 = vunpack.c.l.b16 %v449
        %v3710 = vunpack.c.h.b16 %v449
        %v3711 = vunpack.c.l.b16 %v450
        %v3712 = vunpack.c.h.b16 %v450
        %v3713 = vunpack.c.l.b16 %v451
        %v3714 = vunpack.c.h.b16 %v451
        %v3715 = vunpack.c.l.b16 %v452
        %v3716 = vunpack.c.h.b16 %v452
        %v3717 = vunpack.c.l.b16 %v453
        %v3718 = vunpack.c.h.b16 %v453
        %v3719 = vunpack.c.l.b16 %v454
        %v3720 = vunpack.c.h.b16 %v454
        %v3721 = vunpack.c.l.b16 %v455
        %v3722 = vunpack.c.h.b16 %v455
        %v3723 = vunpack.c.l.b16 %v456
        %v3724 = vunpack.c.h.b16 %v456
        %v3725 = vunpack.c.l.b16 %v457
        %v3726 = vunpack.c.h.b16 %v457
        %v3727 = vunpack.c.l.b16 %v458
        %v3728 = vunpack.c.h.b16 %v458
        %v3729 = vunpack.c.l.b16 %v459
        %v3730 = vunpack.c.h.b16 %v459
        %v3731 = vunpack.c.l.b16 %v460
        %v3732 = vunpack.c.h.b16 %v460
        %v3733 = vunpack.c.l.b16 %v461
        %v3734 = vunpack.c.h.b16 %v461
        %v3735 = vunpack.c.l.b16 %v462
        %v3736 = vunpack.c.h.b16 %v462
        %v3737 = vunpack.c.l.b16 %v463
        %v3738 = vunpack.c.h.b16 %v463
        %v3739 = vunpack.c.l.b16 %v464
        %v3740 = vunpack.c.h.b16 %v464
        %v3741 = vunpack.c.l.b16 %v465
        %v3742 = vunpack.c.h.b16 %v465
        %v3743 = vunpack.c.l.b16 %v466
        %v3744 = vunpack.c.h.b16 %v466
        %v3745 = vunpack.c.l.b16 %v467
        %v3746 = vunpack.c.h.b16 %v467
        %v3747 = vunpack.c.l.b16 %v468
        %v3748 = vunpack.c.h.b16 %v468
        %v3749 = vunpack.c.l.b16 %v469
        %v3750 = vunpack.c.h.b16 %v469
        %v3751 = vunpack.c.l.b16 %v470
        %v3752 = vunpack.c.h.b16 %v470
        %v3753 = vunpack.c.l.b16 %v471
        %v3754 = vunpack.c.h.b16 %v471
        %v3755 = vunpack.c.l.b16 %v472
        %v3756 = vunpack.c.h.b16 %v472
        %v3757 = vunpack.c.l.b16 %v473
        %v3758 = vunpack.c.h.b16 %v473
        %v3759 = vunpack.c.l.b16 %v474
        %v3760 = vunpack.c.h.b16 %v474
        %v3761 = vunpack.c.l.b16 %v475
        %v3762 = vunpack.c.h.b16 %v475
        %v3763 = vunpack.c.l.b16 %v476
        %v3764 = vunpack.c.h.b16 %v476
        %v3765 = vunpack.c.l.b16 %v477
        %v3766 = vunpack.c.h.b16 %v477
        %v3767 = vunpack.c.l.b16 %v478
        %v3768 = vunpack.c.h.b16 %v478
        %v3769 = vunpack.c.l.b16 %v479
        %v3770 = vunpack.c.h.b16 %v479
        %v3771 = vunpack.c.l.b16 %v480
        %v3772 = vunpack.c.h.b16 %v480
        %v3773 = vunpack.c.l.b16 %v481
        %v3774 = vunpack.c.h.b16 %v481
        %v3775 = vunpack.c.l.b16 %v482
        %v3776 = vunpack.c.h.b16 %v482
        %v3777 = vunpack.c.l.b16 %v483
        %v3778 = vunpack.c.h.b16 %v483
        %v3779 = vunpack.c.l.b16 %v484
        %v3780 = vunpack.c.h.b16 %v484
        %v3781 = vunpack.c.l.b16 %v485
        %v3782 = vunpack.c.h.b16 %v485
        %v3783 = vunpack.c.l.b16 %v486
        %v3784 = vunpack.c.h.b16 %v486
        %v3785 = vunpack.c.l.b16 %v487
        %v3786 = vunpack.c.h.b16 %v487
        %v3787 = vunpack.c.l.b16 %v488
        %v3788 = vunpack.c.h.b16 %v488
        %v3789 = vunpack.c.l.b16 %v489
        %v3790 = vunpack.c.h.b16 %v489
        %v3791 = vunpack.c.l.b16 %v490
        %v3792 = vunpack.c.h.b16 %v490
        %v3793 = vunpack.c.l.b16 %v491
        %v3794 = vunpack.c.h.b16 %v491
        %v3795 = vunpack.c.l.b16 %v492
        %v3796 = vunpack.c.h.b16 %v492
        %v3797 = vunpack.c.l.b16 %v493
        %v3798 = vunpack.c.h.b16 %v493
        %v3799 = vunpack.c.l.b16 %v494
        %v3800 = vunpack.c.h.b16 %v494
        %v3801 = vunpack.c.l.b16 %v495
        %v3802 = vunpack.c.h.b16 %v495
        %v3803 = vunpack.c.l.b16 %v496
        %v3804 = vunpack.c.h.b16 %v496
        %v3805 = vunpack.c.l.b16 %v497
        %v3806 = vunpack.c.h.b16 %v497
        %v3807 = vunpack.c.l.b16 %v498
        %v3808 = vunpack.c.h.b16 %v498
        %v3809 = vunpack.c.l.b16 %v499
        %v3810 = vunpack.c.h.b16 %v499
        %v3811 = vunpack.c.l.b16 %v500
        %v3812 = vunpack.c.h.b16 %v500
        %v3813 = vunpack.c.l.b16 %v501
        %v3814 = vunpack.c.h.b16 %v501
        %v3815 = vunpack.c.l.b16 %v502
        %v3816 = vunpack.c.h.b16 %v502
        %v3817 = vunpack.c.l.b16 %v503
        %v3818 = vunpack.c.h.b16 %v503
        %v3819 = vunpack.c.l.b16 %v504
        %v3820 = vunpack.c.h.b16 %v504
        %v3821 = vunpack.c.l.b16 %v505
        %v3822 = vunpack.c.h.b16 %v505
        %v3823 = vunpack.c.l.b16 %v506
        %v3824 = vunpack.c.h.b16 %v506
        %v3825 = vunpack.c.l.b16 %v507
        %v3826 = vunpack.c.h.b16 %v507
        %v3827 = vunpack.c.l.b16 %v508
        %v3828 = vunpack.c.h.b16 %v508
        %v3829 = vunpack.c.l.b16 %v509
        %v3830 = vunpack.c.h.b16 %v509
        %v3831 = vunpack.c.l.b16 %v510
        %v3832 = vunpack.c.h.b16 %v510
        %v3833 = vunpack.c.l.b16 %v511
        %v3834 = vunpack.c.h.b16 %v511
        %v3835 = vunpack.c.l.b16 %v512
        %v3836 = vunpack.c.h.b16 %v512
        %v3837 = vunpack.c.l.b16 %v513
        %v3838 = vunpack.c.h.b16 %v513
        %v3839 = vunpack.c.l.b16 %v514
        %v3840 = vunpack.c.h.b16 %v514
        %v3841 = vunpack.c.l.b16 %v515
        %v3842 = vunpack.c.h.b16 %v515
        %v3843 = vunpack.c.l.b16 %v516
        %v3844 = vunpack.c.h.b16 %v516
        %v3845 = vunpack.c.l.b16 %v517
        %v3846 = vunpack.c.h.b16 %v517
        %v3847 = vunpack.c.l.b16 %v518
        %v3848 = vunpack.c.h.b16 %v518
        %v3849 = vunpack.c.l.b16 %v519
        %v3850 = vunpack.c.h.b16 %v519
        %v3851 = vunpack.c.l.b16 %v520
        %v3852 = vunpack.c.h.b16 %v520
        %v3853 = vunpack.c.l.b16 %v521
        %v3854 = vunpack.c.h.b16 %v521
        %v3855 = vunpack.c.l.b16 %v522
        %v3856 = vunpack.c.h.b16 %v522
        %v3857 = vunpack.c.l.b16 %v523
        %v3858 = vunpack.c.h.b16 %v523
        %v3859 = vunpack.c.l.b16 %v524
        %v3860 = vunpack.c.h.b16 %v524
        %v3861 = vunpack.c.l.b16 %v525
        %v3862 = vunpack.c.h.b16 %v525
        %v3863 = vunpack.c.l.b16 %v526
        %v3864 = vunpack.c.h.b16 %v526
        %v3865 = vunpack.c.l.b16 %v527
        %v3866 = vunpack.c.h.b16 %v527
        %v3867 = vunpack.c.l.b16 %v528
        %v3868 = vunpack.c.h.b16 %v528
        %v3869 = vunpack.c.l.b16 %v529
        %v3870 = vunpack.c.h.b16 %v529
        %v3871 = vunpack.c.l.b16 %v530
        %v3872 = vunpack.c.h.b16 %v530
        %v3873 = vunpack.c.l.b16 %v531
        %v3874 = vunpack.c.h.b16 %v531
        %v3875 = vunpack.c.l.b16 %v532
        %v3876 = vunpack.c.h.b16 %v532
        %v3877 = vunpack.c.l.b16 %v533
        %v3878 = vunpack.c.h.b16 %v533
        %v3879 = vunpack.c.l.b16 %v534
        %v3880 = vunpack.c.h.b16 %v534
        %v3881 = vunpack.c.l.b16 %v535
        %v3882 = vunpack.c.h.b16 %v535
        %v3883 = vunpack.c.l.b16 %v536
        %v3884 = vunpack.c.h.b16 %v536
        %v3885 = vunpack.c.l.b16 %v537
        %v3886 = vunpack.c.h.b16 %v537
        %v3887 = vunpack.c.l.b16 %v538
        %v3888 = vunpack.c.h.b16 %v538
        %v3889 = vunpack.c.l.b16 %v539
        %v3890 = vunpack.c.h.b16 %v539
        %v3891 = vunpack.c.l.b16 %v540
        %v3892 = vunpack.c.h.b16 %v540
        %v3893 = vunpack.c.l.b16 %v541
        %v3894 = vunpack.c.h.b16 %v541
        %v3895 = vunpack.c.l.b16 %v542
        %v3896 = vunpack.c.h.b16 %v542
        %v3897 = vunpack.c.l.b16 %v543
        %v3898 = vunpack.c.h.b16 %v543
        %v3899 = vunpack.c.l.b16 %v544
        %v3900 = vunpack.c.h.b16 %v544
        %v3901 = vunpack.c.l.b16 %v545
        %v3902 = vunpack.c.h.b16 %v545
        %v3903 = vunpack.c.l.b16 %v546
        %v3904 = vunpack.c.h.b16 %v546
        %v3905 = vunpack.c.l.b16 %v547
        %v3906 = vunpack.c.h.b16 %v547
        %v3907 = vunpack.c.l.b16 %v548
        %v3908 = vunpack.c.h.b16 %v548
        %v3909 = vunpack.c.l.b16 %v549
        %v3910 = vunpack.c.h.b16 %v549
        %v3911 = vunpack.c.l.b16 %v550
        %v3912 = vunpack.c.h.b16 %v550
        %v3913 = vunpack.c.l.b16 %v551
        %v3914 = vunpack.c.h.b16 %v551
        %v3915 = vunpack.c.l.b16 %v552
        %v3916 = vunpack.c.h.b16 %v552
        %v3917 = vunpack.c.l.b16 %v553
        %v3918 = vunpack.c.h.b16 %v553
        %v3919 = vunpack.c.l.b16 %v554
        %v3920 = vunpack.c.h.b16 %v554
        %v3921 = vunpack.c.l.b16 %v555
        %v3922 = vunpack.c.h.b16 %v555
        %v3923 = vunpack.c.l.b16 %v556
        %v3924 = vunpack.c.h.b16 %v556
        %v3925 = vunpack.c.l.b16 %v557
        %v3926 = vunpack.c.h.b16 %v557
        %v3927 = vunpack.c.l.b16 %v558
        %v3928 = vunpack.c.h.b16 %v558
        %v3929 = vunpack.c.l.b16 %v559
        %v3930 = vunpack.c.h.b16 %v559
        %v3931 = vunpack.c.l.b16 %v560
        %v3932 = vunpack.c.h.b16 %v560
        %v3933 = vunpack.c.l.b16 %v561
        %v3934 = vunpack.c.h.b16 %v561
        %v3935 = vunpack.c.l.b16 %v562
        %v3936 = vunpack.c.h.b16 %v562
        %v3937 = vunpack.c.l.b16 %v563
        %v3938 = vunpack.c.h.b16 %v563
        %v3939 = vunpack.c.l.b16 %v564
        %v3940 = vunpack.c.h.b16 %v564
        %v3941 = vunpack.c.l.b16 %v565
        %v3942 = vunpack.c.h.b16 %v565
        %v3943 = vunpack.c.l.b16 %v566
        %v3944 = vunpack.c.h.b16 %v566
        %v3945 = vunpack.c.l.b16 %v567
        %v3946 = vunpack.c.h.b16 %v567
        %v3947 = vunpack.c.l.b16 %v568
        %v3948 = vunpack.c.h.b16 %v568
        %v3949 = vunpack.c.l.b16 %v569
        %v3950 = vunpack.c.h.b16 %v569
        %v3951 = vunpack.c.l.b16 %v570
        %v3952 = vunpack.c.h.b16 %v570
        %v3953 = vunpack.c.l.b16 %v571
        %v3954 = vunpack.c.h.b16 %v571
        %v3955 = vunpack.c.l.b16 %v572
        %v3956 = vunpack.c.h.b16 %v572
        %v3957 = vunpack.c.l.b16 %v573
        %v3958 = vunpack.c.h.b16 %v573
        %v3959 = vunpack.c.l.b16 %v574
        %v3960 = vunpack.c.h.b16 %v574
        %v3961 = vunpack.c.l.b16 %v575
        %v3962 = vunpack.c.h.b16 %v575
        %v3963 = vunpack.c.l.b16 %v576
        %v3964 = vunpack.c.h.b16 %v576
        %v3965 = vunpack.c.l.b16 %v577
        %v3966 = vunpack.c.h.b16 %v577
        %v3967 = vunpack.c.l.b16 %v578
        %v3968 = vunpack.c.h.b16 %v578
        %v3969 = vunpack.c.l.b16 %v579
        %v3970 = vunpack.c.h.b16 %v579
        %v3971 = vunpack.c.l.b16 %v580
        %v3972 = vunpack.c.h.b16 %v580
        %v3973 = vunpack.c.l.b16 %v581
        %v3974 = vunpack.c.h.b16 %v581
        %v3975 = vunpack.c.l.b16 %v582
        %v3976 = vunpack.c.h.b16 %v582
        %v3977 = vunpack.c.l.b16 %v583
        %v3978 = vunpack.c.h.b16 %v583
        %v3979 = vunpack.c.l.b16 %v584
        %v3980 = vunpack.c.h.b16 %v584
        %v3981 = vunpack.c.l.b16 %v585
        %v3982 = vunpack.c.h.b16 %v585
        %v3983 = vunpack.c.l.b16 %v586
        %v3984 = vunpack.c.h.b16 %v586
        %v3985 = vunpack.c.l.b16 %v587
        %v3986 = vunpack.c.h.b16 %v587
        %v3987 = vunpack.c.l.b16 %v588
        %v3988 = vunpack.c.h.b16 %v588
        %v3989 = vunpack.c.l.b16 %v589
        %v3990 = vunpack.c.h.b16 %v589
        %v3991 = vunpack.c.l.b16 %v590
        %v3992 = vunpack.c.h.b16 %v590
        %v3993 = vunpack.c.l.b16 %v591
        %v3994 = vunpack.c.h.b16 %v591
        %v3995 = vunpack.c.l.b16 %v592
        %v3996 = vunpack.c.h.b16 %v592
        %v3997 = vunpack.c.l.b16 %v593
        %v3998 = vunpack.c.h.b16 %v593
        %v3999 = vunpack.c.l.b16 %v594
        %v4000 = vunpack.c.h.b16 %v594
        %v4001 = vunpack.c.l.b16 %v595
        %v4002 = vunpack.c.h.b16 %v595
        %v4003 = vunpack.c.l.b16 %v596
        %v4004 = vunpack.c.h.b16 %v596
        %v4005 = vunpack.c.l.b16 %v597
        %v4006 = vunpack.c.h.b16 %v597
        %v4007 = vunpack.c.l.b16 %v598
        %v4008 = vunpack.c.h.b16 %v598
        %v4009 = vunpack.c.l.b16 %v599
        %v4010 = vunpack.c.h.b16 %v599
        %v4011 = vunpack.c.l.b16 %v600
        %v4012 = vunpack.c.h.b16 %v600
        %v4013 = vunpack.c.l.b16 %v601
        %v4014 = vunpack.c.h.b16 %v601
        %v4015 = vunpack.c.l.b16 %v602
        %v4016 = vunpack.c.h.b16 %v602
        %v4017 = vunpack.c.l.b16 %v603
        %v4018 = vunpack.c.h.b16 %v603
        %v4019 = vunpack.c.l.b16 %v604
        %v4020 = vunpack.c.h.b16 %v604
        %v4021 = vunpack.c.l.b16 %v605
        %v4022 = vunpack.c.h.b16 %v605
        %v4023 = vunpack.c.l.b16 %v606
        %v4024 = vunpack.c.h.b16 %v606
        %v4025 = vunpack.c.l.b16 %v607
        %v4026 = vunpack.c.h.b16 %v607
        %v4027 = vunpack.c.l.b16 %v608
        %v4028 = vunpack.c.h.b16 %v608
        %v4029 = vunpack.c.l.b16 %v609
        %v4030 = vunpack.c.h.b16 %v609
        %v4031 = vunpack.c.l.b16 %v610
        %v4032 = vunpack.c.h.b16 %v610
        %v4033 = vunpack.c.l.b16 %v611
        %v4034 = vunpack.c.h.b16 %v611
        %v4035 = vunpack.c.l.b16 %v612
        %v4036 = vunpack.c.h.b16 %v612
        %v4037 = vunpack.c.l.b16 %v613
        %v4038 = vunpack.c.h.b16 %v613
        %v4039 = vunpack.c.l.b16 %v614
        %v4040 = vunpack.c.h.b16 %v614
        %v4041 = vunpack.c.l.b16 %v615
        %v4042 = vunpack.c.h.b16 %v615
        %v4043 = vunpack.c.l.b16 %v616
        %v4044 = vunpack.c.h.b16 %v616
        %v4045 = vunpack.c.l.b16 %v617
        %v4046 = vunpack.c.h.b16 %v617
        %v4047 = vunpack.c.l.b16 %v618
        %v4048 = vunpack.c.h.b16 %v618
        %v4049 = vunpack.c.l.b16 %v619
        %v4050 = vunpack.c.h.b16 %v619
        %v4051 = vunpack.c.l.b16 %v620
        %v4052 = vunpack.c.h.b16 %v620
        %v4053 = vunpack.c.l.b16 %v621
        %v4054 = vunpack.c.h.b16 %v621
        %v4055 = vunpack.c.l.b16 %v622
        %v4056 = vunpack.c.h.b16 %v622
        %v4057 = vunpack.c.l.b16 %v623
        %v4058 = vunpack.c.h.b16 %v623
        %v4059 = vunpack.c.l.b16 %v624
        %v4060 = vunpack.c.h.b16 %v624
        %v4061 = vunpack.c.l.b16 %v625
        %v4062 = vunpack.c.h.b16 %v625
        %v4063 = vunpack.c.l.b16 %v626
        %v4064 = vunpack.c.h.b16 %v626
        %v4065 = vunpack.c.l.b16 %v627
        %v4066 = vunpack.c.h.b16 %v627
        %v4067 = vunpack.c.l.b16 %v628
        %v4068 = vunpack.c.h.b16 %v628
        %v4069 = vunpack.c.l.b16 %v629
        %v4070 = vunpack.c.h.b16 %v629
        %v4071 = vunpack.c.l.b16 %v630
        %v4072 = vunpack.c.h.b16 %v630
        %v4073 = vunpack.c.l.b16 %v631
        %v4074 = vunpack.c.h.b16 %v631
        %v4075 = vunpack.c.l.b16 %v632
        %v4076 = vunpack.c.h.b16 %v632
        %v4077 = vunpack.c.l.b16 %v633
        %v4078 = vunpack.c.h.b16 %v633
        %v4079 = vunpack.c.l.b16 %v634
        %v4080 = vunpack.c.h.b16 %v634
        %v4081 = vunpack.c.l.b16 %v635
        %v4082 = vunpack.c.h.b16 %v635
        %v4083 = vunpack.c.l.b16 %v636
        %v4084 = vunpack.c.h.b16 %v636
        %v4085 = vunpack.c.l.b16 %v637
        %v4086 = vunpack.c.h.b16 %v637
        %v4087 = vunpack.c.l.b16 %v638
        %v4088 = vunpack.c.h.b16 %v638
        %v4089 = vunpack.c.l.b16 %v639
        %v4090 = vunpack.c.h.b16 %v639
        %v4091 = vunpack.c.l.b16 %v640
        %v4092 = vunpack.c.h.b16 %v640
        %v4093 = vunpack.c.l.b16 %v641
        %v4094 = vunpack.c.h.b16 %v641
        %v4095 = vunpack.c.l.b16 %v642
        %v4096 = vunpack.c.h.b16 %v642
        %v4097 = vunpack.c.l.b16 %v643
        %v4098 = vunpack.c.h.b16 %v643
        %v4099 = vunpack.c.l.b16 %v644
        %v4100 = vunpack.c.h.b16 %v644
        %v4101 = vunpack.c.l.b16 %v645
        %v4102 = vunpack.c.h.b16 %v645
        %v4103 = vunpack.c.l.b16 %v646
        %v4104 = vunpack.c.h.b16 %v646
        %v4105 = vunpack.c.l.b16 %v647
        %v4106 = vunpack.c.h.b16 %v647
        %v4107 = vunpack.c.l.b16 %v648
        %v4108 = vunpack.c.h.b16 %v648
        %v4109 = vunpack.c.l.b16 %v649
        %v4110 = vunpack.c.h.b16 %v649
        %v4111 = vunpack.c.l.b16 %v650
        %v4112 = vunpack.c.h.b16 %v650
        %v4113 = vunpack.c.l.b16 %v651
        %v4114 = vunpack.c.h.b16 %v651
        %v4115 = vunpack.c.l.b16 %v652
        %v4116 = vunpack.c.h.b16 %v652
        %v4117 = vunpack.c.l.b16 %v653
        %v4118 = vunpack.c.h.b16 %v653
        %v4119 = vunpack.c.l.b16 %v654
        %v4120 = vunpack.c.h.b16 %v654
        %v4121 = vunpack.c.l.b16 %v655
        %v4122 = vunpack.c.h.b16 %v655
        %v4123 = vunpack.c.l.b16 %v656
        %v4124 = vunpack.c.h.b16 %v656
        %v4125 = vunpack.c.l.b16 %v657
        %v4126 = vunpack.c.h.b16 %v657
        %v4127 = vunpack.c.l.b16 %v658
        %v4128 = vunpack.c.h.b16 %v658
        %v4129 = vunpack.c.l.b16 %v659
        %v4130 = vunpack.c.h.b16 %v659
        %v4131 = vunpack.c.l.b16 %v660
        %v4132 = vunpack.c.h.b16 %v660
        %v4133 = vunpack.c.l.b16 %v661
        %v4134 = vunpack.c.h.b16 %v661
        %v4135 = vunpack.c.l.b16 %v662
        %v4136 = vunpack.c.h.b16 %v662
        %v4137 = vunpack.c.l.b16 %v663
        %v4138 = vunpack.c.h.b16 %v663
        %v4139 = vunpack.c.l.b16 %v664
        %v4140 = vunpack.c.h.b16 %v664
        %v4141 = vunpack.c.l.b16 %v665
        %v4142 = vunpack.c.h.b16 %v665
        %v4143 = vunpack.c.l.b16 %v666
        %v4144 = vunpack.c.h.b16 %v666
        %v4145 = vunpack.c.l.b16 %v667
        %v4146 = vunpack.c.h.b16 %v667
        %v4147 = vunpack.c.l.b16 %v668
        %v4148 = vunpack.c.h.b16 %v668
        %v4149 = vunpack.c.l.b16 %v669
        %v4150 = vunpack.c.h.b16 %v669
        %v4151 = vunpack.c.l.b16 %v670
        %v4152 = vunpack.c.h.b16 %v670
        %v4153 = vunpack.c.l.b16 %v671
        %v4154 = vunpack.c.h.b16 %v671
        %v4155 = vunpack.c.l.b16 %v672
        %v4156 = vunpack.c.h.b16 %v672
        %v4157 = vunpack.c.l.b16 %v673
        %v4158 = vunpack.c.h.b16 %v673
        %v4159 = vunpack.c.l.b16 %v674
        %v4160 = vunpack.c.h.b16 %v674
        %v4161 = vunpack.c.l.b16 %v675
        %v4162 = vunpack.c.h.b16 %v675
        %v4163 = vunpack.c.l.b16 %v676
        %v4164 = vunpack.c.h.b16 %v676
        %v4165 = vunpack.c.l.b16 %v677
        %v4166 = vunpack.c.h.b16 %v677
        %v4167 = vunpack.c.l.b16 %v678
        %v4168 = vunpack.c.h.b16 %v678
        %v4169 = vunpack.c.l.b16 %v679
        %v4170 = vunpack.c.h.b16 %v679
        %v4171 = vunpack.c.l.b16 %v680
        %v4172 = vunpack.c.h.b16 %v680
        %v4173 = vunpack.c.l.b16 %v681
        %v4174 = vunpack.c.h.b16 %v681
        %v4175 = vunpack.c.l.b16 %v682
        %v4176 = vunpack.c.h.b16 %v682
        %v4177 = vunpack.c.l.b16 %v683
        %v4178 = vunpack.c.h.b16 %v683
        %v4179 = vunpack.c.l.b16 %v684
        %v4180 = vunpack.c.h.b16 %v684
        %v4181 = vunpack.c.l.b16 %v685
        %v4182 = vunpack.c.h.b16 %v685
        %v4183 = vunpack.c.l.b16 %v686
        %v4184 = vunpack.c.h.b16 %v686
        %v4185 = vpack.c.b16 %v3677, %v3673
        %v4186 = vpack.c.b16 %v3678, %v3674
        %v4187 = vpack.c.b16 %v3679, %v3675
        %v4188 = vpack.c.b16 %v3680, %v3676
        %v4189 = vpack.c.b16 %v3685, %v3681
        %v4190 = vpack.c.b16 %v3686, %v3682
        %v4191 = vpack.c.b16 %v3687, %v3683
        %v4192 = vpack.c.b16 %v3688, %v3684
        %v4193 = vpack.c.b16 %v3693, %v3689
        %v4194 = vpack.c.b16 %v3694, %v3690
        %v4195 = vpack.c.b16 %v3695, %v3691
        %v4196 = vpack.c.b16 %v3696, %v3692
        %v4197 = vpack.c.b16 %v3701, %v3697
        %v4198 = vpack.c.b16 %v3702, %v3698
        %v4199 = vpack.c.b16 %v3703, %v3699
        %v4200 = vpack.c.b16 %v3704, %v3700
        %v4201 = vpack.c.b16 %v3709, %v3705
        %v4202 = vpack.c.b16 %v3710, %v3706
        %v4203 = vpack.c.b16 %v3711, %v3707
        %v4204 = vpack.c.b16 %v3712, %v3708
        %v4205 = vpack.c.b16 %v3717, %v3713
        %v4206 = vpack.c.b16 %v3718, %v3714
        %v4207 = vpack.c.b16 %v3719, %v3715
        %v4208 = vpack.c.b16 %v3720, %v3716
        %v4209 = vpack.c.b16 %v3725, %v3721
        %v4210 = vpack.c.b16 %v3726, %v3722
        %v4211 = vpack.c.b16 %v3727, %v3723
        %v4212 = vpack.c.b16 %v3728, %v3724
        %v4213 = vpack.c.b16 %v3733, %v3729
        %v4214 = vpack.c.b16 %v3734, %v3730
        %v4215 = vpack.c.b16 %v3735, %v3731
        %v4216 = vpack.c.b16 %v3736, %v3732
        %v4217 = vpack.c.b16 %v3741, %v3737
        %v4218 = vpack.c.b16 %v3742, %v3738
        %v4219 = vpack.c.b16 %v3743, %v3739
        %v4220 = vpack.c.b16 %v3744, %v3740
        %v4221 = vpack.c.b16 %v3749, %v3745
        %v4222 = vpack.c.b16 %v3750, %v3746
        %v4223 = vpack.c.b16 %v3751, %v3747
        %v4224 = vpack.c.b16 %v3752, %v3748
        %v4225 = vpack.c.b16 %v3757, %v3753
        %v4226 = vpack.c.b16 %v3758, %v3754
        %v4227 = vpack.c.b16 %v3759, %v3755
        %v4228 = vpack.c.b16 %v3760, %v3756
        %v4229 = vpack.c.b16 %v3765, %v3761
        %v4230 = vpack.c.b16 %v3766, %v3762
        %v4231 = vpack.c.b16 %v3767, %v3763
        %v4232 = vpack.c.b16 %v3768, %v3764
        %v4233 = vpack.c.b16 %v3773, %v3769
        %v4234 = vpack.c.b16 %v3774, %v3770
        %v4235 = vpack.c.b16 %v3775, %v3771
        %v4236 = vpack.c.b16 %v3776, %v3772
        %v4237 = vpack.c.b16 %v3781, %v3777
        %v4238 = vpack.c.b16 %v3782, %v3778
        %v4239 = vpack.c.b16 %v3783, %v3779
        %v4240 = vpack.c.b16 %v3784, %v3780
        %v4241 = vpack.c.b16 %v3789, %v3785
        %v4242 = vpack.c.b16 %v3790, %v3786
        %v4243 = vpack.c.b16 %v3791, %v3787
        %v4244 = vpack.c.b16 %v3792, %v3788
        %v4245 = vpack.c.b16 %v3797, %v3793
        %v4246 = vpack.c.b16 %v3798, %v3794
        %v4247 = vpack.c.b16 %v3799, %v3795
        %v4248 = vpack.c.b16 %v3800, %v3796
        %v4249 = vpack.c.b16 %v3805, %v3801
        %v4250 = vpack.c.b16 %v3806, %v3802
        %v4251 = vpack.c.b16 %v3807, %v3803
        %v4252 = vpack.c.b16 %v3808, %v3804
        %v4253 = vpack.c.b16 %v3813, %v3809
        %v4254 = vpack.c.b16 %v3814, %v3810
        %v4255 = vpack.c.b16 %v3815, %v3811
        %v4256 = vpack.c.b16 %v3816, %v3812
        %v4257 = vpack.c.b16 %v3821, %v3817
        %v4258 = vpack.c.b16 %v3822, %v3818
        %v4259 = vpack.c.b16 %v3823, %v3819
        %v4260 = vpack.c.b16 %v3824, %v3820
        %v4261 = vpack.c.b16 %v3829, %v3825
        %v4262 = vpack.c.b16 %v3830, %v3826
        %v4263 = vpack.c.b16 %v3831, %v3827
        %v4264 = vpack.c.b16 %v3832, %v3828
        %v4265 = vpack.c.b16 %v3837, %v3833
        %v4266 = vpack.c.b16 %v3838, %v3834
        %v4267 = vpack.c.b16 %v3839, %v3835
        %v4268 = vpack.c.b16 %v3840, %v3836
        %v4269 = vpack.c.b16 %v3845, %v3841
        %v4270 = vpack.c.b16 %v3846, %v3842
        %v4271 = vpack.c.b16 %v3847, %v3843
        %v4272 = vpack.c.b16 %v3848, %v3844
        %v4273 = vpack.c.b16 %v3853, %v3849
        %v4274 = vpack.c.b16 %v3854, %v3850
        %v4275 = vpack.c.b16 %v3855, %v3851
        %v4276 = vpack.c.b16 %v3856, %v3852
        %v4277 = vpack.c.b16 %v3861, %v3857
        %v4278 = vpack.c.b16 %v3862, %v3858
        %v4279 = vpack.c.b16 %v3863, %v3859
        %v4280 = vpack.c.b16 %v3864, %v3860
        %v4281 = vpack.c.b16 %v3869, %v3865
        %v4282 = vpack.c.b16 %v3870, %v3866
        %v4283 = vpack.c.b16 %v3871, %v3867
        %v4284 = vpack.c.b16 %v3872, %v3868
        %v4285 = vpack.c.b16 %v3877, %v3873
        %v4286 = vpack.c.b16 %v3878, %v3874
        %v4287 = vpack.c.b16 %v3879, %v3875
        %v4288 = vpack.c.b16 %v3880, %v3876
        %v4289 = vpack.c.b16 %v3885, %v3881
        %v4290 = vpack.c.b16 %v3886, %v3882
        %v4291 = vpack.c.b16 %v3887, %v3883
        %v4292 = vpack.c.b16 %v3888, %v3884
        %v4293 = vpack.c.b16 %v3893, %v3889
        %v4294 = vpack.c.b16 %v3894, %v3890
        %v4295 = vpack.c.b16 %v3895, %v3891
        %v4296 = vpack.c.b16 %v3896, %v3892
        %v4297 = vpack.c.b16 %v3901, %v3897
        %v4298 = vpack.c.b16 %v3902, %v3898
        %v4299 = vpack.c.b16 %v3903, %v3899
        %v4300 = vpack.c.b16 %v3904, %v3900
        %v4301 = vpack.c.b16 %v3909, %v3905
        %v4302 = vpack.c.b16 %v3910, %v3906
        %v4303 = vpack.c.b16 %v3911, %v3907
        %v4304 = vpack.c.b16 %v3912, %v3908
        %v4305 = vpack.c.b16 %v3917, %v3913
        %v4306 = vpack.c.b16 %v3918, %v3914
        %v4307 = vpack.c.b16 %v3919, %v3915
        %v4308 = vpack.c.b16 %v3920, %v3916
        %v4309 = vpack.c.b16 %v3925, %v3921
        %v4310 = vpack.c.b16 %v3926, %v3922
        %v4311 = vpack.c.b16 %v3927, %v3923
        %v4312 = vpack.c.b16 %v3928, %v3924
        %v4313 = vpack.c.b16 %v3933, %v3929
        %v4314 = vpack.c.b16 %v3934, %v3930
        %v4315 = vpack.c.b16 %v3935, %v3931
        %v4316 = vpack.c.b16 %v3936, %v3932
        %v4317 = vpack.c.b16 %v3941, %v3937
        %v4318 = vpack.c.b16 %v3942, %v3938
        %v4319 = vpack.c.b16 %v3943, %v3939
        %v4320 = vpack.c.b16 %v3944, %v3940
        %v4321 = vpack.c.b16 %v3949, %v3945
        %v4322 = vpack.c.b16 %v3950, %v3946
        %v4323 = vpack.c.b16 %v3951, %v3947
        %v4324 = vpack.c.b16 %v3952, %v3948
        %v4325 = vpack.c.b16 %v3957, %v3953
        %v4326 = vpack.c.b16 %v3958, %v3954
        %v4327 = vpack.c.b16 %v3959, %v3955
        %v4328 = vpack.c.b16 %v3960, %v3956
        %v4329 = vpack.c.b16 %v3965, %v3961
        %v4330 = vpack.c.b16 %v3966, %v3962
        %v4331 = vpack.c.b16 %v3967, %v3963
        %v4332 = vpack.c.b16 %v3968, %v3964
        %v4333 = vpack.c.b16 %v3973, %v3969
        %v4334 = vpack.c.b16 %v3974, %v3970
        %v4335 = vpack.c.b16 %v3975, %v3971
        %v4336 = vpack.c.b16 %v3976, %v3972
        %v4337 = vpack.c.b16 %v3981, %v3977
        %v4338 = vpack.c.b16 %v3982, %v3978
        %v4339 = vpack.c.b16 %v3983, %v3979
        %v4340 = vpack.c.b16 %v3984, %v3980
        %v4341 = vpack.c.b16 %v3989, %v3985
        %v4342 = vpack.c.b16 %v3990, %v3986
        %v4343 = vpack.c.b16 %v3991, %v3987
        %v4344 = vpack.c.b16 %v3992, %v3988
        %v4345 = vpack.c.b16 %v3997, %v3993
        %v4346 = vpack.c.b16 %v3998, %v3994
        %v4347 = vpack.c.b16 %v3999, %v3995
        %v4348 = vpack.c.b16 %v4000, %v3996
        %v4349 = vpack.c.b16 %v4005, %v4001
        %v4350 = vpack.c.b16 %v4006, %v4002
        %v4351 = vpack.c.b16 %v4007, %v4003
        %v4352 = vpack.c.b16 %v4008, %v4004
        %v4353 = vpack.c.b16 %v4013, %v4009
        %v4354 = vpack.c.b16 %v4014, %v4010
        %v4355 = vpack.c.b16 %v4015, %v4011
        %v4356 = vpack.c.b16 %v4016, %v4012
        %v4357 = vpack.c.b16 %v4021, %v4017
        %v4358 = vpack.c.b16 %v4022, %v4018
        %v4359 = vpack.c.b16 %v4023, %v4019
        %v4360 = vpack.c.b16 %v4024, %v4020
        %v4361 = vpack.c.b16 %v4029, %v4025
        %v4362 = vpack.c.b16 %v4030, %v4026
        %v4363 = vpack.c.b16 %v4031, %v4027
        %v4364 = vpack.c.b16 %v4032, %v4028
        %v4365 = vpack.c.b16 %v4037, %v4033
        %v4366 = vpack.c.b16 %v4038, %v4034
        %v4367 = vpack.c.b16 %v4039, %v4035
        %v4368 = vpack.c.b16 %v4040, %v4036
        %v4369 = vpack.c.b16 %v4045, %v4041
        %v4370 = vpack.c.b16 %v4046, %v4042
        %v4371 = vpack.c.b16 %v4047, %v4043
        %v4372 = vpack.c.b16 %v4048, %v4044
        %v4373 = vpack.c.b16 %v4053, %v4049
        %v4374 = vpack.c.b16 %v4054, %v4050
        %v4375 = vpack.c.b16 %v4055, %v4051
        %v4376 = vpack.c.b16 %v4056, %v4052
        %v4377 = vpack.c.b16 %v4061, %v4057
        %v4378 = vpack.c.b16 %v4062, %v4058
        %v4379 = vpack.c.b16 %v4063, %v4059
        %v4380 = vpack.c.b16 %v4064, %v4060
        %v4381 = vpack.c.b16 %v4069, %v4065
        %v4382 = vpack.c.b16 %v4070, %v4066
        %v4383 = vpack.c.b16 %v4071, %v4067
        %v4384 = vpack.c.b16 %v4072, %v4068
        %v4385 = vpack.c.b16 %v4077, %v4073
        %v4386 = vpack.c.b16 %v4078, %v4074
        %v4387 = vpack.c.b16 %v4079, %v4075
        %v4388 = vpack.c.b16 %v4080, %v4076
        %v4389 = vpack.c.b16 %v4085, %v4081
        %v4390 = vpack.c.b16 %v4086, %v4082
        %v4391 = vpack.c.b16 %v4087, %v4083
        %v4392 = vpack.c.b16 %v4088, %v4084
        %v4393 = vpack.c.b16 %v4093, %v4089
        %v4394 = vpack.c.b16 %v4094, %v4090
        %v4395 = vpack.c.b16 %v4095, %v4091
        %v4396 = vpack.c.b16 %v4096, %v4092
        %v4397 = vpack.c.b16 %v4101, %v4097
        %v4398 = vpack.c.b16 %v4102, %v4098
        %v4399 = vpack.c.b16 %v4103, %v4099
        %v4400 = vpack.c.b16 %v4104, %v4100
        %v4401 = vpack.c.b16 %v4109, %v4105
        %v4402 = vpack.c.b16 %v4110, %v4106
        %v4403 = vpack.c.b16 %v4111, %v4107
        %v4404 = vpack.c.b16 %v4112, %v4108
        %v4405 = vpack.c.b16 %v4117, %v4113
        %v4406 = vpack.c.b16 %v4118, %v4114
        %v4407 = vpack.c.b16 %v4119, %v4115
        %v4408 = vpack.c.b16 %v4120, %v4116
        %v4409 = vpack.c.b16 %v4125, %v4121
        %v4410 = vpack.c.b16 %v4126, %v4122
        %v4411 = vpack.c.b16 %v4127, %v4123
        %v4412 = vpack.c.b16 %v4128, %v4124
        %v4413 = vpack.c.b16 %v4133, %v4129
        %v4414 = vpack.c.b16 %v4134, %v4130
        %v4415 = vpack.c.b16 %v4135, %v4131
        %v4416 = vpack.c.b16 %v4136, %v4132
        %v4417 = vpack.c.b16 %v4141, %v4137
        %v4418 = vpack.c.b16 %v4142, %v4138
        %v4419 = vpack.c.b16 %v4143, %v4139
        %v4420 = vpack.c.b16 %v4144, %v4140
        %v4421 = vpack.c.b16 %v4149, %v4145
        %v4422 = vpack.c.b16 %v4150, %v4146
        %v4423 = vpack.c.b16 %v4151, %v4147
        %v4424 = vpack.c.b16 %v4152, %v4148
        %v4425 = vpack.c.b16 %v4157, %v4153
        %v4426 = vpack.c.b16 %v4158, %v4154
        %v4427 = vpack.c.b16 %v4159, %v4155
        %v4428 = vpack.c.b16 %v4160, %v4156
        %v4429 = vpack.c.b16 %v4165, %v4161
        %v4430 = vpack.c.b16 %v4166, %v4162
        %v4431 = vpack.c.b16 %v4167, %v4163
        %v4432 = vpack.c.b16 %v4168, %v4164
        %v4433 = vpack.c.b16 %v4173, %v4169
        %v4434 = vpack.c.b16 %v4174, %v4170
        %v4435 = vpack.c.b16 %v4175, %v4171
        %v4436 = vpack.c.b16 %v4176, %v4172
        %v4437 = vpack.c.b16 %v4181, %v4177
        %v4438 = vpack.c.b16 %v4182, %v4178
        %v4439 = vpack.c.b16 %v4183, %v4179
        %v4440 = vpack.c.b16 %v4184, %v4180
        %4697 = vmatprep.subr.bf16.mxu0 %v4214
        %4698 = vmatpush1.bf16.msra.mxu0 %v4213
        %4699 = vmatprep.subr.bf16.mxu0 %v4210
        %4700 = vmatpush1.bf16.msra.mxu0 %v4209
        %4701 = vmatprep.subr.bf16.mxu0 %v4206
        %4702 = vmatpush1.bf16.msra.mxu0 %v4205
        %4703 = vmatprep.subr.bf16.mxu0 %v4202
        %4704 = vmatpush1.bf16.msra.mxu0 %v4201
        %4705 = vmatprep.subr.bf16.mxu0 %v4198
        %4706 = vmatpush1.bf16.msra.mxu0 %v4197
        %4707 = vmatprep.subr.bf16.mxu0 %v4194
        %4708 = vmatpush1.bf16.msra.mxu0 %v4193
        %4709 = vmatprep.subr.bf16.mxu0 %v4190
        %4710 = vmatpush1.bf16.msra.mxu0 %v4189
        %4711 = vmatprep.subr.bf16.mxu0 %v4186
        %4712 = vmatpush1.bf16.msra.mxu0 %v4185
        %4713 = vmatprep.subr.bf16.mxu0 %v4246
        %4714 = vmatpush2.bf16.msra.mxu0 %v4245
        %4715 = vmatprep.subr.bf16.mxu0 %v4242
        %4716 = vmatpush2.bf16.msra.mxu0 %v4241
        %4717 = vmatprep.subr.bf16.mxu0 %v4238
        %4718 = vmatpush2.bf16.msra.mxu0 %v4237
        %4719 = vmatprep.subr.bf16.mxu0 %v4234
        %4720 = vmatpush2.bf16.msra.mxu0 %v4233
        %4721 = vmatprep.subr.bf16.mxu0 %v4230
        %4722 = vmatpush2.bf16.msra.mxu0 %v4229
        %4723 = vmatprep.subr.bf16.mxu0 %v4226
        %4724 = vmatpush2.bf16.msra.mxu0 %v4225
        %4725 = vmatprep.subr.bf16.mxu0 %v4222
        %4726 = vmatpush2.bf16.msra.mxu0 %v4221
        %4727 = vmatprep.subr.bf16.mxu0 %v4218
        %4728 = vmatpush2.bf16.msra.mxu0 %v4217
        %4729 = vmatprep.mubr.bf16.mxu0 %v3333
        %4730 = vmatmul.mubr.bf16.gmra.mxu0 %v3332
        %v4731 = vpop.f32.mrf.mxu0
        %v4732 = vadd.f32 %v3400, %v4731
        %v4733 = vpop.f32.mrf.mxu0
        %v4734 = vadd.f32 %v3404, %v4733
        %v4735 = vpop.f32.mrf.mxu0
        %v4736 = vadd.f32 %v3400, %v4735
        %v4737 = vpop.f32.mrf.mxu0
        %v4738 = vadd.f32 %v3404, %v4737
        %4739 = vmatprep.mubr.bf16.mxu0 %v3341
        %4740 = vmatmul.mubr.bf16.gmra.mxu0 %v3340
        %v4741 = vpop.f32.mrf.mxu0
        %v4742 = vadd.f32 %v3400, %v4741
        %v4743 = vpop.f32.mrf.mxu0
        %v4744 = vadd.f32 %v3404, %v4743
        %v4745 = vpop.f32.mrf.mxu0
        %v4746 = vadd.f32 %v3400, %v4745
        %v4747 = vpop.f32.mrf.mxu0
        %v4748 = vadd.f32 %v3404, %v4747
        %4749 = vmatprep.mubr.bf16.mxu0 %v3349
        %4750 = vmatmul.mubr.bf16.gmra.mxu0 %v3348
        %v4751 = vpop.f32.mrf.mxu0
        %v4752 = vadd.f32 %v3400, %v4751
        %v4753 = vpop.f32.mrf.mxu0
        %v4754 = vadd.f32 %v3404, %v4753
        %v4755 = vpop.f32.mrf.mxu0
        %v4756 = vadd.f32 %v3400, %v4755
        %v4757 = vpop.f32.mrf.mxu0
        %v4758 = vadd.f32 %v3404, %v4757
        %4759 = vmatprep.mubr.bf16.mxu0 %v3357
        %4760 = vmatmul.mubr.bf16.gmra.mxu0 %v3356
        %v4761 = vpop.f32.mrf.mxu0
        %v4762 = vadd.f32 %v3400, %v4761
        %v4763 = vpop.f32.mrf.mxu0
        %v4764 = vadd.f32 %v3404, %v4763
        %v4765 = vpop.f32.mrf.mxu0
        %v4766 = vadd.f32 %v3400, %v4765
        %v4767 = vpop.f32.mrf.mxu0
        %v4768 = vadd.f32 %v3404, %v4767
        %4769 = vmatprep.mubr.bf16.mxu0 %v3365
        %4770 = vmatmul.mubr.bf16.gmra.mxu0 %v3364
        %v4771 = vpop.f32.mrf.mxu0
        %v4772 = vadd.f32 %v3400, %v4771
        %v4773 = vpop.f32.mrf.mxu0
        %v4774 = vadd.f32 %v3404, %v4773
        %v4775 = vpop.f32.mrf.mxu0
        %v4776 = vadd.f32 %v3400, %v4775
        %v4777 = vpop.f32.mrf.mxu0
        %v4778 = vadd.f32 %v3404, %v4777
        %4779 = vmatprep.mubr.bf16.mxu0 %v3373
        %4780 = vmatmul.mubr.bf16.gmra.mxu0 %v3372
        %v4781 = vpop.f32.mrf.mxu0
        %v4782 = vadd.f32 %v3400, %v4781
        %v4783 = vpop.f32.mrf.mxu0
        %v4784 = vadd.f32 %v3404, %v4783
        %v4785 = vpop.f32.mrf.mxu0
        %v4786 = vadd.f32 %v3400, %v4785
        %v4787 = vpop.f32.mrf.mxu0
        %v4788 = vadd.f32 %v3404, %v4787
        %4789 = vmatprep.mubr.bf16.mxu0 %v3381
        %4790 = vmatmul.mubr.bf16.gmra.mxu0 %v3380
        %v4791 = vpop.f32.mrf.mxu0
        %v4792 = vadd.f32 %v3400, %v4791
        %v4793 = vpop.f32.mrf.mxu0
        %v4794 = vadd.f32 %v3404, %v4793
        %v4795 = vpop.f32.mrf.mxu0
        %v4796 = vadd.f32 %v3400, %v4795
        %v4797 = vpop.f32.mrf.mxu0
        %v4798 = vadd.f32 %v3404, %v4797
        %4799 = vmatprep.mubr.bf16.mxu0 %v3389
        %4800 = vmatmul.mubr.bf16.gmra.mxu0 %v3388
        %v4801 = vpop.f32.mrf.mxu0
        %v4802 = vadd.f32 %v3400, %v4801
        %v4803 = vpop.f32.mrf.mxu0
        %v4804 = vadd.f32 %v3404, %v4803
        %v4805 = vpop.f32.mrf.mxu0
        %v4806 = vadd.f32 %v3400, %v4805
        %v4807 = vpop.f32.mrf.mxu0
        %v4808 = vadd.f32 %v3404, %v4807
        %4809 = vdwg.mxu0
        %4810 = vmatprep.subr.bf16.mxu0 %v4278
        %4811 = vmatpush1.bf16.msra.mxu0 %v4277
        %4812 = vmatprep.subr.bf16.mxu0 %v4274
        %4813 = vmatpush1.bf16.msra.mxu0 %v4273
        %4814 = vmatprep.subr.bf16.mxu0 %v4270
        %4815 = vmatpush1.bf16.msra.mxu0 %v4269
        %4816 = vmatprep.subr.bf16.mxu0 %v4266
        %4817 = vmatpush1.bf16.msra.mxu0 %v4265
        %4818 = vmatprep.subr.bf16.mxu0 %v4262
        %4819 = vmatpush1.bf16.msra.mxu0 %v4261
        %4820 = vmatprep.subr.bf16.mxu0 %v4258
        %4821 = vmatpush1.bf16.msra.mxu0 %v4257
        %4822 = vmatprep.subr.bf16.mxu0 %v4254
        %4823 = vmatpush1.bf16.msra.mxu0 %v4253
        %4824 = vmatprep.subr.bf16.mxu0 %v4250
        %4825 = vmatpush1.bf16.msra.mxu0 %v4249
        %4826 = vmatprep.subr.bf16.mxu0 %v4310
        %4827 = vmatpush2.bf16.msra.mxu0 %v4309
        %4828 = vmatprep.subr.bf16.mxu0 %v4306
        %4829 = vmatpush2.bf16.msra.mxu0 %v4305
        %4830 = vmatprep.subr.bf16.mxu0 %v4302
        %4831 = vmatpush2.bf16.msra.mxu0 %v4301
        %4832 = vmatprep.subr.bf16.mxu0 %v4298
        %4833 = vmatpush2.bf16.msra.mxu0 %v4297
        %4834 = vmatprep.subr.bf16.mxu0 %v4294
        %4835 = vmatpush2.bf16.msra.mxu0 %v4293
        %4836 = vmatprep.subr.bf16.mxu0 %v4290
        %4837 = vmatpush2.bf16.msra.mxu0 %v4289
        %4838 = vmatprep.subr.bf16.mxu0 %v4286
        %4839 = vmatpush2.bf16.msra.mxu0 %v4285
        %4840 = vmatprep.subr.bf16.mxu0 %v4282
        %4841 = vmatpush2.bf16.msra.mxu0 %v4281
        %4842 = vmatprep.mubr.bf16.mxu0 %v3335
        %4843 = vmatmul.mubr.bf16.gmra.mxu0 %v3334
        %v4844 = vpop.f32.mrf.mxu0
        %v4845 = vadd.f32 %v4732, %v4844
        %v4846 = vpop.f32.mrf.mxu0
        %v4847 = vadd.f32 %v4734, %v4846
        %v4848 = vpop.f32.mrf.mxu0
        %v4849 = vadd.f32 %v4736, %v4848
        %v4850 = vpop.f32.mrf.mxu0
        %v4851 = vadd.f32 %v4738, %v4850
        %4852 = vmatprep.mubr.bf16.mxu0 %v3343
        %4853 = vmatmul.mubr.bf16.gmra.mxu0 %v3342
        %v4854 = vpop.f32.mrf.mxu0
        %v4855 = vadd.f32 %v4742, %v4854
        %v4856 = vpop.f32.mrf.mxu0
        %v4857 = vadd.f32 %v4744, %v4856
        %v4858 = vpop.f32.mrf.mxu0
        %v4859 = vadd.f32 %v4746, %v4858
        %v4860 = vpop.f32.mrf.mxu0
        %v4861 = vadd.f32 %v4748, %v4860
        %4862 = vmatprep.mubr.bf16.mxu0 %v3351
        %4863 = vmatmul.mubr.bf16.gmra.mxu0 %v3350
        %v4864 = vpop.f32.mrf.mxu0
        %v4865 = vadd.f32 %v4752, %v4864
        %v4866 = vpop.f32.mrf.mxu0
        %v4867 = vadd.f32 %v4754, %v4866
        %v4868 = vpop.f32.mrf.mxu0
        %v4869 = vadd.f32 %v4756, %v4868
        %v4870 = vpop.f32.mrf.mxu0
        %v4871 = vadd.f32 %v4758, %v4870
        %4872 = vmatprep.mubr.bf16.mxu0 %v3359
        %4873 = vmatmul.mubr.bf16.gmra.mxu0 %v3358
        %v4874 = vpop.f32.mrf.mxu0
        %v4875 = vadd.f32 %v4762, %v4874
        %v4876 = vpop.f32.mrf.mxu0
        %v4877 = vadd.f32 %v4764, %v4876
        %v4878 = vpop.f32.mrf.mxu0
        %v4879 = vadd.f32 %v4766, %v4878
        %v4880 = vpop.f32.mrf.mxu0
        %v4881 = vadd.f32 %v4768, %v4880
        %4882 = vmatprep.mubr.bf16.mxu0 %v3367
        %4883 = vmatmul.mubr.bf16.gmra.mxu0 %v3366
        %v4884 = vpop.f32.mrf.mxu0
        %v4885 = vadd.f32 %v4772, %v4884
        %v4886 = vpop.f32.mrf.mxu0
        %v4887 = vadd.f32 %v4774, %v4886
        %v4888 = vpop.f32.mrf.mxu0
        %v4889 = vadd.f32 %v4776, %v4888
        %v4890 = vpop.f32.mrf.mxu0
        %v4891 = vadd.f32 %v4778, %v4890
        %4892 = vmatprep.mubr.bf16.mxu0 %v3375
        %4893 = vmatmul.mubr.bf16.gmra.mxu0 %v3374
        %v4894 = vpop.f32.mrf.mxu0
        %v4895 = vadd.f32 %v4782, %v4894
        %v4896 = vpop.f32.mrf.mxu0
        %v4897 = vadd.f32 %v4784, %v4896
        %v4898 = vpop.f32.mrf.mxu0
        %v4899 = vadd.f32 %v4786, %v4898
        %v4900 = vpop.f32.mrf.mxu0
        %v4901 = vadd.f32 %v4788, %v4900
        %4902 = vmatprep.mubr.bf16.mxu0 %v3383
        %4903 = vmatmul.mubr.bf16.gmra.mxu0 %v3382
        %v4904 = vpop.f32.mrf.mxu0
        %v4905 = vadd.f32 %v4792, %v4904
        %v4906 = vpop.f32.mrf.mxu0
        %v4907 = vadd.f32 %v4794, %v4906
        %v4908 = vpop.f32.mrf.mxu0
        %v4909 = vadd.f32 %v4796, %v4908
        %v4910 = vpop.f32.mrf.mxu0
        %v4911 = vadd.f32 %v4798, %v4910
        %4912 = vmatprep.mubr.bf16.mxu0 %v3391
        %4913 = vmatmul.mubr.bf16.gmra.mxu0 %v3390
        %v4914 = vpop.f32.mrf.mxu0
        %v4915 = vadd.f32 %v4802, %v4914
        %v4916 = vpop.f32.mrf.mxu0
        %v4917 = vadd.f32 %v4804, %v4916
        %v4918 = vpop.f32.mrf.mxu0
        %v4919 = vadd.f32 %v4806, %v4918
        %v4920 = vpop.f32.mrf.mxu0
        %v4921 = vadd.f32 %v4808, %v4920
        %4922 = vdwg.mxu0
        %4923 = vmatprep.subr.bf16.mxu0 %v4342
        %4924 = vmatpush1.bf16.msra.mxu0 %v4341
        %4925 = vmatprep.subr.bf16.mxu0 %v4338
        %4926 = vmatpush1.bf16.msra.mxu0 %v4337
        %4927 = vmatprep.subr.bf16.mxu0 %v4334
        %4928 = vmatpush1.bf16.msra.mxu0 %v4333
        %4929 = vmatprep.subr.bf16.mxu0 %v4330
        %4930 = vmatpush1.bf16.msra.mxu0 %v4329
        %4931 = vmatprep.subr.bf16.mxu0 %v4326
        %4932 = vmatpush1.bf16.msra.mxu0 %v4325
        %4933 = vmatprep.subr.bf16.mxu0 %v4322
        %4934 = vmatpush1.bf16.msra.mxu0 %v4321
        %4935 = vmatprep.subr.bf16.mxu0 %v4318
        %4936 = vmatpush1.bf16.msra.mxu0 %v4317
        %4937 = vmatprep.subr.bf16.mxu0 %v4314
        %4938 = vmatpush1.bf16.msra.mxu0 %v4313
        %4939 = vmatprep.subr.bf16.mxu0 %v4374
        %4940 = vmatpush2.bf16.msra.mxu0 %v4373
        %4941 = vmatprep.subr.bf16.mxu0 %v4370
        %4942 = vmatpush2.bf16.msra.mxu0 %v4369
        %4943 = vmatprep.subr.bf16.mxu0 %v4366
        %4944 = vmatpush2.bf16.msra.mxu0 %v4365
        %4945 = vmatprep.subr.bf16.mxu0 %v4362
        %4946 = vmatpush2.bf16.msra.mxu0 %v4361
        %4947 = vmatprep.subr.bf16.mxu0 %v4358
        %4948 = vmatpush2.bf16.msra.mxu0 %v4357
        %4949 = vmatprep.subr.bf16.mxu0 %v4354
        %4950 = vmatpush2.bf16.msra.mxu0 %v4353
        %4951 = vmatprep.subr.bf16.mxu0 %v4350
        %4952 = vmatpush2.bf16.msra.mxu0 %v4349
        %4953 = vmatprep.subr.bf16.mxu0 %v4346
        %4954 = vmatpush2.bf16.msra.mxu0 %v4345
        %4955 = vmatprep.mubr.bf16.mxu0 %v3337
        %4956 = vmatmul.mubr.bf16.gmra.mxu0 %v3336
        %v4957 = vpop.f32.mrf.mxu0
        %v4958 = vadd.f32 %v4845, %v4957
        %v4959 = vpop.f32.mrf.mxu0
        %v4960 = vadd.f32 %v4847, %v4959
        %v4961 = vpop.f32.mrf.mxu0
        %v4962 = vadd.f32 %v4849, %v4961
        %v4963 = vpop.f32.mrf.mxu0
        %v4964 = vadd.f32 %v4851, %v4963
        %4965 = vmatprep.mubr.bf16.mxu0 %v3345
        %4966 = vmatmul.mubr.bf16.gmra.mxu0 %v3344
        %v4967 = vpop.f32.mrf.mxu0
        %v4968 = vadd.f32 %v4855, %v4967
        %v4969 = vpop.f32.mrf.mxu0
        %v4970 = vadd.f32 %v4857, %v4969
        %v4971 = vpop.f32.mrf.mxu0
        %v4972 = vadd.f32 %v4859, %v4971
        %v4973 = vpop.f32.mrf.mxu0
        %v4974 = vadd.f32 %v4861, %v4973
        %4975 = vmatprep.mubr.bf16.mxu0 %v3353
        %4976 = vmatmul.mubr.bf16.gmra.mxu0 %v3352
        %v4977 = vpop.f32.mrf.mxu0
        %v4978 = vadd.f32 %v4865, %v4977
        %v4979 = vpop.f32.mrf.mxu0
        %v4980 = vadd.f32 %v4867, %v4979
        %v4981 = vpop.f32.mrf.mxu0
        %v4982 = vadd.f32 %v4869, %v4981
        %v4983 = vpop.f32.mrf.mxu0
        %v4984 = vadd.f32 %v4871, %v4983
        %4985 = vmatprep.mubr.bf16.mxu0 %v3361
        %4986 = vmatmul.mubr.bf16.gmra.mxu0 %v3360
        %v4987 = vpop.f32.mrf.mxu0
        %v4988 = vadd.f32 %v4875, %v4987
        %v4989 = vpop.f32.mrf.mxu0
        %v4990 = vadd.f32 %v4877, %v4989
        %v4991 = vpop.f32.mrf.mxu0
        %v4992 = vadd.f32 %v4879, %v4991
        %v4993 = vpop.f32.mrf.mxu0
        %v4994 = vadd.f32 %v4881, %v4993
        %4995 = vmatprep.mubr.bf16.mxu0 %v3369
        %4996 = vmatmul.mubr.bf16.gmra.mxu0 %v3368
        %v4997 = vpop.f32.mrf.mxu0
        %v4998 = vadd.f32 %v4885, %v4997
        %v4999 = vpop.f32.mrf.mxu0
        %v5000 = vadd.f32 %v4887, %v4999
        %v5001 = vpop.f32.mrf.mxu0
        %v5002 = vadd.f32 %v4889, %v5001
        %v5003 = vpop.f32.mrf.mxu0
        %v5004 = vadd.f32 %v4891, %v5003
        %5005 = vmatprep.mubr.bf16.mxu0 %v3377
        %5006 = vmatmul.mubr.bf16.gmra.mxu0 %v3376
        %v5007 = vpop.f32.mrf.mxu0
        %v5008 = vadd.f32 %v4895, %v5007
        %v5009 = vpop.f32.mrf.mxu0
        %v5010 = vadd.f32 %v4897, %v5009
        %v5011 = vpop.f32.mrf.mxu0
        %v5012 = vadd.f32 %v4899, %v5011
        %v5013 = vpop.f32.mrf.mxu0
        %v5014 = vadd.f32 %v4901, %v5013
        %5015 = vmatprep.mubr.bf16.mxu0 %v3385
        %5016 = vmatmul.mubr.bf16.gmra.mxu0 %v3384
        %v5017 = vpop.f32.mrf.mxu0
        %v5018 = vadd.f32 %v4905, %v5017
        %v5019 = vpop.f32.mrf.mxu0
        %v5020 = vadd.f32 %v4907, %v5019
        %v5021 = vpop.f32.mrf.mxu0
        %v5022 = vadd.f32 %v4909, %v5021
        %v5023 = vpop.f32.mrf.mxu0
        %v5024 = vadd.f32 %v4911, %v5023
        %5025 = vmatprep.mubr.bf16.mxu0 %v3393
        %5026 = vmatmul.mubr.bf16.gmra.mxu0 %v3392
        %v5027 = vpop.f32.mrf.mxu0
        %v5028 = vadd.f32 %v4915, %v5027
        %v5029 = vpop.f32.mrf.mxu0
        %v5030 = vadd.f32 %v4917, %v5029
        %v5031 = vpop.f32.mrf.mxu0
        %v5032 = vadd.f32 %v4919, %v5031
        %v5033 = vpop.f32.mrf.mxu0
        %v5034 = vadd.f32 %v4921, %v5033
        %5035 = vdwg.mxu0
        %5036 = vmatprep.subr.bf16.mxu0 %v4406
        %5037 = vmatpush1.bf16.msra.mxu0 %v4405
        %5038 = vmatprep.subr.bf16.mxu0 %v4402
        %5039 = vmatpush1.bf16.msra.mxu0 %v4401
        %5040 = vmatprep.subr.bf16.mxu0 %v4398
        %5041 = vmatpush1.bf16.msra.mxu0 %v4397
        %5042 = vmatprep.subr.bf16.mxu0 %v4394
        %5043 = vmatpush1.bf16.msra.mxu0 %v4393
        %5044 = vmatprep.subr.bf16.mxu0 %v4390
        %5045 = vmatpush1.bf16.msra.mxu0 %v4389
        %5046 = vmatprep.subr.bf16.mxu0 %v4386
        %5047 = vmatpush1.bf16.msra.mxu0 %v4385
        %5048 = vmatprep.subr.bf16.mxu0 %v4382
        %5049 = vmatpush1.bf16.msra.mxu0 %v4381
        %5050 = vmatprep.subr.bf16.mxu0 %v4378
        %5051 = vmatpush1.bf16.msra.mxu0 %v4377
        %5052 = vmatprep.subr.bf16.mxu0 %v4438
        %5053 = vmatpush2.bf16.msra.mxu0 %v4437
        %5054 = vmatprep.subr.bf16.mxu0 %v4434
        %5055 = vmatpush2.bf16.msra.mxu0 %v4433
        %5056 = vmatprep.subr.bf16.mxu0 %v4430
        %5057 = vmatpush2.bf16.msra.mxu0 %v4429
        %5058 = vmatprep.subr.bf16.mxu0 %v4426
        %5059 = vmatpush2.bf16.msra.mxu0 %v4425
        %5060 = vmatprep.subr.bf16.mxu0 %v4422
        %5061 = vmatpush2.bf16.msra.mxu0 %v4421
        %5062 = vmatprep.subr.bf16.mxu0 %v4418
        %5063 = vmatpush2.bf16.msra.mxu0 %v4417
        %5064 = vmatprep.subr.bf16.mxu0 %v4414
        %5065 = vmatpush2.bf16.msra.mxu0 %v4413
        %5066 = vmatprep.subr.bf16.mxu0 %v4410
        %5067 = vmatpush2.bf16.msra.mxu0 %v4409
        %5068 = vmatprep.mubr.bf16.mxu0 %v3339
        %5069 = vmatmul.mubr.bf16.gmra.mxu0 %v3338
        %v5070 = vpop.f32.mrf.mxu0
        %v5071 = vadd.f32 %v4958, %v5070
        %v5072 = vpop.f32.mrf.mxu0
        %v5073 = vadd.f32 %v4960, %v5072
        %v5074 = vpop.f32.mrf.mxu0
        %v5075 = vadd.f32 %v4962, %v5074
        %v5076 = vpop.f32.mrf.mxu0
        %v5077 = vadd.f32 %v4964, %v5076
        %5078 = vmatprep.mubr.bf16.mxu0 %v3347
        %5079 = vmatmul.mubr.bf16.gmra.mxu0 %v3346
        %v5080 = vpop.f32.mrf.mxu0
        %v5081 = vadd.f32 %v4968, %v5080
        %v5082 = vpop.f32.mrf.mxu0
        %v5083 = vadd.f32 %v4970, %v5082
        %v5084 = vpop.f32.mrf.mxu0
        %v5085 = vadd.f32 %v4972, %v5084
        %v5086 = vpop.f32.mrf.mxu0
        %v5087 = vadd.f32 %v4974, %v5086
        %5088 = vmatprep.mubr.bf16.mxu0 %v3355
        %5089 = vmatmul.mubr.bf16.gmra.mxu0 %v3354
        %v5090 = vpop.f32.mrf.mxu0
        %v5091 = vadd.f32 %v4978, %v5090
        %v5092 = vpop.f32.mrf.mxu0
        %v5093 = vadd.f32 %v4980, %v5092
        %v5094 = vpop.f32.mrf.mxu0
        %v5095 = vadd.f32 %v4982, %v5094
        %v5096 = vpop.f32.mrf.mxu0
        %v5097 = vadd.f32 %v4984, %v5096
        %5098 = vmatprep.mubr.bf16.mxu0 %v3363
        %5099 = vmatmul.mubr.bf16.gmra.mxu0 %v3362
        %v5100 = vpop.f32.mrf.mxu0
        %v5101 = vadd.f32 %v4988, %v5100
        %v5102 = vpop.f32.mrf.mxu0
        %v5103 = vadd.f32 %v4990, %v5102
        %v5104 = vpop.f32.mrf.mxu0
        %v5105 = vadd.f32 %v4992, %v5104
        %v5106 = vpop.f32.mrf.mxu0
        %v5107 = vadd.f32 %v4994, %v5106
        %5108 = vmatprep.mubr.bf16.mxu0 %v3371
        %5109 = vmatmul.mubr.bf16.gmra.mxu0 %v3370
        %v5110 = vpop.f32.mrf.mxu0
        %v5111 = vadd.f32 %v4998, %v5110
        %v5112 = vpop.f32.mrf.mxu0
        %v5113 = vadd.f32 %v5000, %v5112
        %v5114 = vpop.f32.mrf.mxu0
        %v5115 = vadd.f32 %v5002, %v5114
        %v5116 = vpop.f32.mrf.mxu0
        %v5117 = vadd.f32 %v5004, %v5116
        %5118 = vmatprep.mubr.bf16.mxu0 %v3379
        %5119 = vmatmul.mubr.bf16.gmra.mxu0 %v3378
        %v5120 = vpop.f32.mrf.mxu0
        %v5121 = vadd.f32 %v5008, %v5120
        %v5122 = vpop.f32.mrf.mxu0
        %v5123 = vadd.f32 %v5010, %v5122
        %v5124 = vpop.f32.mrf.mxu0
        %v5125 = vadd.f32 %v5012, %v5124
        %v5126 = vpop.f32.mrf.mxu0
        %v5127 = vadd.f32 %v5014, %v5126
        %5128 = vmatprep.mubr.bf16.mxu0 %v3387
        %5129 = vmatmul.mubr.bf16.gmra.mxu0 %v3386
        %v5130 = vpop.f32.mrf.mxu0
        %v5131 = vadd.f32 %v5018, %v5130
        %v5132 = vpop.f32.mrf.mxu0
        %v5133 = vadd.f32 %v5020, %v5132
        %v5134 = vpop.f32.mrf.mxu0
        %v5135 = vadd.f32 %v5022, %v5134
        %v5136 = vpop.f32.mrf.mxu0
        %v5137 = vadd.f32 %v5024, %v5136
        %5138 = vmatprep.mubr.bf16.mxu0 %v3395
        %5139 = vmatmul.mubr.bf16.gmra.mxu0 %v3394
        %v5140 = vpop.f32.mrf.mxu0
        %v5141 = vadd.f32 %v5028, %v5140
        %v5142 = vpop.f32.mrf.mxu0
        %v5143 = vadd.f32 %v5030, %v5142
        %v5144 = vpop.f32.mrf.mxu0
        %v5145 = vadd.f32 %v5032, %v5144
        %v5146 = vpop.f32.mrf.mxu0
        %v5147 = vadd.f32 %v5034, %v5146
        %5148 = vdwg.mxu0
        %5149 = vmatprep.subr.bf16.mxu0 %v4216
        %5150 = vmatpush1.bf16.msra.mxu0 %v4215
        %5151 = vmatprep.subr.bf16.mxu0 %v4212
        %5152 = vmatpush1.bf16.msra.mxu0 %v4211
        %5153 = vmatprep.subr.bf16.mxu0 %v4208
        %5154 = vmatpush1.bf16.msra.mxu0 %v4207
        %5155 = vmatprep.subr.bf16.mxu0 %v4204
        %5156 = vmatpush1.bf16.msra.mxu0 %v4203
        %5157 = vmatprep.subr.bf16.mxu0 %v4200
        %5158 = vmatpush1.bf16.msra.mxu0 %v4199
        %5159 = vmatprep.subr.bf16.mxu0 %v4196
        %5160 = vmatpush1.bf16.msra.mxu0 %v4195
        %5161 = vmatprep.subr.bf16.mxu0 %v4192
        %5162 = vmatpush1.bf16.msra.mxu0 %v4191
        %5163 = vmatprep.subr.bf16.mxu0 %v4188
        %5164 = vmatpush1.bf16.msra.mxu0 %v4187
        %5165 = vmatprep.subr.bf16.mxu0 %v4248
        %5166 = vmatpush2.bf16.msra.mxu0 %v4247
        %5167 = vmatprep.subr.bf16.mxu0 %v4244
        %5168 = vmatpush2.bf16.msra.mxu0 %v4243
        %5169 = vmatprep.subr.bf16.mxu0 %v4240
        %5170 = vmatpush2.bf16.msra.mxu0 %v4239
        %5171 = vmatprep.subr.bf16.mxu0 %v4236
        %5172 = vmatpush2.bf16.msra.mxu0 %v4235
        %5173 = vmatprep.subr.bf16.mxu0 %v4232
        %5174 = vmatpush2.bf16.msra.mxu0 %v4231
        %5175 = vmatprep.subr.bf16.mxu0 %v4228
        %5176 = vmatpush2.bf16.msra.mxu0 %v4227
        %5177 = vmatprep.subr.bf16.mxu0 %v4224
        %5178 = vmatpush2.bf16.msra.mxu0 %v4223
        %5179 = vmatprep.subr.bf16.mxu0 %v4220
        %5180 = vmatpush2.bf16.msra.mxu0 %v4219
        %5181 = vmatprep.mubr.bf16.mxu0 %v3333
        %5182 = vmatmul.mubr.bf16.gmra.mxu0 %v3332
        %v5183 = vpop.f32.mrf.mxu0
        %v5184 = vadd.f32 %v3408, %v5183
        %v5185 = vpop.f32.mrf.mxu0
        %v5186 = vadd.f32 %v3412, %v5185
        %v5187 = vpop.f32.mrf.mxu0
        %v5188 = vadd.f32 %v3408, %v5187
        %v5189 = vpop.f32.mrf.mxu0
        %v5190 = vadd.f32 %v3412, %v5189
        %5191 = vmatprep.mubr.bf16.mxu0 %v3341
        %5192 = vmatmul.mubr.bf16.gmra.mxu0 %v3340
        %v5193 = vpop.f32.mrf.mxu0
        %v5194 = vadd.f32 %v3408, %v5193
        %v5195 = vpop.f32.mrf.mxu0
        %v5196 = vadd.f32 %v3412, %v5195
        %v5197 = vpop.f32.mrf.mxu0
        %v5198 = vadd.f32 %v3408, %v5197
        %v5199 = vpop.f32.mrf.mxu0
        %v5200 = vadd.f32 %v3412, %v5199
        %5201 = vmatprep.mubr.bf16.mxu0 %v3349
        %5202 = vmatmul.mubr.bf16.gmra.mxu0 %v3348
        %v5203 = vpop.f32.mrf.mxu0
        %v5204 = vadd.f32 %v3408, %v5203
        %v5205 = vpop.f32.mrf.mxu0
        %v5206 = vadd.f32 %v3412, %v5205
        %v5207 = vpop.f32.mrf.mxu0
        %v5208 = vadd.f32 %v3408, %v5207
        %v5209 = vpop.f32.mrf.mxu0
        %v5210 = vadd.f32 %v3412, %v5209
        %5211 = vmatprep.mubr.bf16.mxu0 %v3357
        %5212 = vmatmul.mubr.bf16.gmra.mxu0 %v3356
        %v5213 = vpop.f32.mrf.mxu0
        %v5214 = vadd.f32 %v3408, %v5213
        %v5215 = vpop.f32.mrf.mxu0
        %v5216 = vadd.f32 %v3412, %v5215
        %v5217 = vpop.f32.mrf.mxu0
        %v5218 = vadd.f32 %v3408, %v5217
        %v5219 = vpop.f32.mrf.mxu0
        %v5220 = vadd.f32 %v3412, %v5219
        %5221 = vmatprep.mubr.bf16.mxu0 %v3365
        %5222 = vmatmul.mubr.bf16.gmra.mxu0 %v3364
        %v5223 = vpop.f32.mrf.mxu0
        %v5224 = vadd.f32 %v3408, %v5223
        %v5225 = vpop.f32.mrf.mxu0
        %v5226 = vadd.f32 %v3412, %v5225
        %v5227 = vpop.f32.mrf.mxu0
        %v5228 = vadd.f32 %v3408, %v5227
        %v5229 = vpop.f32.mrf.mxu0
        %v5230 = vadd.f32 %v3412, %v5229
        %5231 = vmatprep.mubr.bf16.mxu0 %v3373
        %5232 = vmatmul.mubr.bf16.gmra.mxu0 %v3372
        %v5233 = vpop.f32.mrf.mxu0
        %v5234 = vadd.f32 %v3408, %v5233
        %v5235 = vpop.f32.mrf.mxu0
        %v5236 = vadd.f32 %v3412, %v5235
        %v5237 = vpop.f32.mrf.mxu0
        %v5238 = vadd.f32 %v3408, %v5237
        %v5239 = vpop.f32.mrf.mxu0
        %v5240 = vadd.f32 %v3412, %v5239
        %5241 = vmatprep.mubr.bf16.mxu0 %v3381
        %5242 = vmatmul.mubr.bf16.gmra.mxu0 %v3380
        %v5243 = vpop.f32.mrf.mxu0
        %v5244 = vadd.f32 %v3408, %v5243
        %v5245 = vpop.f32.mrf.mxu0
        %v5246 = vadd.f32 %v3412, %v5245
        %v5247 = vpop.f32.mrf.mxu0
        %v5248 = vadd.f32 %v3408, %v5247
        %v5249 = vpop.f32.mrf.mxu0
        %v5250 = vadd.f32 %v3412, %v5249
        %5251 = vmatprep.mubr.bf16.mxu0 %v3389
        %5252 = vmatmul.mubr.bf16.gmra.mxu0 %v3388
        %v5253 = vpop.f32.mrf.mxu0
        %v5254 = vadd.f32 %v3408, %v5253
        %v5255 = vpop.f32.mrf.mxu0
        %v5256 = vadd.f32 %v3412, %v5255
        %v5257 = vpop.f32.mrf.mxu0
        %v5258 = vadd.f32 %v3408, %v5257
        %v5259 = vpop.f32.mrf.mxu0
        %v5260 = vadd.f32 %v3412, %v5259
        %5261 = vdwg.mxu0
        %5262 = vmatprep.subr.bf16.mxu0 %v4280
        %5263 = vmatpush1.bf16.msra.mxu0 %v4279
        %5264 = vmatprep.subr.bf16.mxu0 %v4276
        %5265 = vmatpush1.bf16.msra.mxu0 %v4275
        %5266 = vmatprep.subr.bf16.mxu0 %v4272
        %5267 = vmatpush1.bf16.msra.mxu0 %v4271
        %5268 = vmatprep.subr.bf16.mxu0 %v4268
        %5269 = vmatpush1.bf16.msra.mxu0 %v4267
        %5270 = vmatprep.subr.bf16.mxu0 %v4264
        %5271 = vmatpush1.bf16.msra.mxu0 %v4263
        %5272 = vmatprep.subr.bf16.mxu0 %v4260
        %5273 = vmatpush1.bf16.msra.mxu0 %v4259
        %5274 = vmatprep.subr.bf16.mxu0 %v4256
        %5275 = vmatpush1.bf16.msra.mxu0 %v4255
        %5276 = vmatprep.subr.bf16.mxu0 %v4252
        %5277 = vmatpush1.bf16.msra.mxu0 %v4251
        %5278 = vmatprep.subr.bf16.mxu0 %v4312
        %5279 = vmatpush2.bf16.msra.mxu0 %v4311
        %5280 = vmatprep.subr.bf16.mxu0 %v4308
        %5281 = vmatpush2.bf16.msra.mxu0 %v4307
        %5282 = vmatprep.subr.bf16.mxu0 %v4304
        %5283 = vmatpush2.bf16.msra.mxu0 %v4303
        %5284 = vmatprep.subr.bf16.mxu0 %v4300
        %5285 = vmatpush2.bf16.msra.mxu0 %v4299
        %5286 = vmatprep.subr.bf16.mxu0 %v4296
        %5287 = vmatpush2.bf16.msra.mxu0 %v4295
        %5288 = vmatprep.subr.bf16.mxu0 %v4292
        %5289 = vmatpush2.bf16.msra.mxu0 %v4291
        %5290 = vmatprep.subr.bf16.mxu0 %v4288
        %5291 = vmatpush2.bf16.msra.mxu0 %v4287
        %5292 = vmatprep.subr.bf16.mxu0 %v4284
        %5293 = vmatpush2.bf16.msra.mxu0 %v4283
        %5294 = vmatprep.mubr.bf16.mxu0 %v3335
        %5295 = vmatmul.mubr.bf16.gmra.mxu0 %v3334
        %v5296 = vpop.f32.mrf.mxu0
        %v5297 = vadd.f32 %v5184, %v5296
        %v5298 = vpop.f32.mrf.mxu0
        %v5299 = vadd.f32 %v5186, %v5298
        %v5300 = vpop.f32.mrf.mxu0
        %v5301 = vadd.f32 %v5188, %v5300
        %v5302 = vpop.f32.mrf.mxu0
        %v5303 = vadd.f32 %v5190, %v5302
        %5304 = vmatprep.mubr.bf16.mxu0 %v3343
        %5305 = vmatmul.mubr.bf16.gmra.mxu0 %v3342
        %v5306 = vpop.f32.mrf.mxu0
        %v5307 = vadd.f32 %v5194, %v5306
        %v5308 = vpop.f32.mrf.mxu0
        %v5309 = vadd.f32 %v5196, %v5308
        %v5310 = vpop.f32.mrf.mxu0
        %v5311 = vadd.f32 %v5198, %v5310
        %v5312 = vpop.f32.mrf.mxu0
        %v5313 = vadd.f32 %v5200, %v5312
        %5314 = vmatprep.mubr.bf16.mxu0 %v3351
        %5315 = vmatmul.mubr.bf16.gmra.mxu0 %v3350
        %v5316 = vpop.f32.mrf.mxu0
        %v5317 = vadd.f32 %v5204, %v5316
        %v5318 = vpop.f32.mrf.mxu0
        %v5319 = vadd.f32 %v5206, %v5318
        %v5320 = vpop.f32.mrf.mxu0
        %v5321 = vadd.f32 %v5208, %v5320
        %v5322 = vpop.f32.mrf.mxu0
        %v5323 = vadd.f32 %v5210, %v5322
        %5324 = vmatprep.mubr.bf16.mxu0 %v3359
        %5325 = vmatmul.mubr.bf16.gmra.mxu0 %v3358
        %v5326 = vpop.f32.mrf.mxu0
        %v5327 = vadd.f32 %v5214, %v5326
        %v5328 = vpop.f32.mrf.mxu0
        %v5329 = vadd.f32 %v5216, %v5328
        %v5330 = vpop.f32.mrf.mxu0
        %v5331 = vadd.f32 %v5218, %v5330
        %v5332 = vpop.f32.mrf.mxu0
        %v5333 = vadd.f32 %v5220, %v5332
        %5334 = vmatprep.mubr.bf16.mxu0 %v3367
        %5335 = vmatmul.mubr.bf16.gmra.mxu0 %v3366
        %v5336 = vpop.f32.mrf.mxu0
        %v5337 = vadd.f32 %v5224, %v5336
        %v5338 = vpop.f32.mrf.mxu0
        %v5339 = vadd.f32 %v5226, %v5338
        %v5340 = vpop.f32.mrf.mxu0
        %v5341 = vadd.f32 %v5228, %v5340
        %v5342 = vpop.f32.mrf.mxu0
        %v5343 = vadd.f32 %v5230, %v5342
        %5344 = vmatprep.mubr.bf16.mxu0 %v3375
        %5345 = vmatmul.mubr.bf16.gmra.mxu0 %v3374
        %v5346 = vpop.f32.mrf.mxu0
        %v5347 = vadd.f32 %v5234, %v5346
        %v5348 = vpop.f32.mrf.mxu0
        %v5349 = vadd.f32 %v5236, %v5348
        %v5350 = vpop.f32.mrf.mxu0
        %v5351 = vadd.f32 %v5238, %v5350
        %v5352 = vpop.f32.mrf.mxu0
        %v5353 = vadd.f32 %v5240, %v5352
        %5354 = vmatprep.mubr.bf16.mxu0 %v3383
        %5355 = vmatmul.mubr.bf16.gmra.mxu0 %v3382
        %v5356 = vpop.f32.mrf.mxu0
        %v5357 = vadd.f32 %v5244, %v5356
        %v5358 = vpop.f32.mrf.mxu0
        %v5359 = vadd.f32 %v5246, %v5358
        %v5360 = vpop.f32.mrf.mxu0
        %v5361 = vadd.f32 %v5248, %v5360
        %v5362 = vpop.f32.mrf.mxu0
        %v5363 = vadd.f32 %v5250, %v5362
        %5364 = vmatprep.mubr.bf16.mxu0 %v3391
        %5365 = vmatmul.mubr.bf16.gmra.mxu0 %v3390
        %v5366 = vpop.f32.mrf.mxu0
        %v5367 = vadd.f32 %v5254, %v5366
        %v5368 = vpop.f32.mrf.mxu0
        %v5369 = vadd.f32 %v5256, %v5368
        %v5370 = vpop.f32.mrf.mxu0
        %v5371 = vadd.f32 %v5258, %v5370
        %v5372 = vpop.f32.mrf.mxu0
        %v5373 = vadd.f32 %v5260, %v5372
        %5374 = vdwg.mxu0
        %5375 = vmatprep.subr.bf16.mxu0 %v4344
        %5376 = vmatpush1.bf16.msra.mxu0 %v4343
        %5377 = vmatprep.subr.bf16.mxu0 %v4340
        %5378 = vmatpush1.bf16.msra.mxu0 %v4339
        %5379 = vmatprep.subr.bf16.mxu0 %v4336
        %5380 = vmatpush1.bf16.msra.mxu0 %v4335
        %5381 = vmatprep.subr.bf16.mxu0 %v4332
        %5382 = vmatpush1.bf16.msra.mxu0 %v4331
        %5383 = vmatprep.subr.bf16.mxu0 %v4328
        %5384 = vmatpush1.bf16.msra.mxu0 %v4327
        %5385 = vmatprep.subr.bf16.mxu0 %v4324
        %5386 = vmatpush1.bf16.msra.mxu0 %v4323
        %5387 = vmatprep.subr.bf16.mxu0 %v4320
        %5388 = vmatpush1.bf16.msra.mxu0 %v4319
        %5389 = vmatprep.subr.bf16.mxu0 %v4316
        %5390 = vmatpush1.bf16.msra.mxu0 %v4315
        %5391 = vmatprep.subr.bf16.mxu0 %v4376
        %5392 = vmatpush2.bf16.msra.mxu0 %v4375
        %5393 = vmatprep.subr.bf16.mxu0 %v4372
        %5394 = vmatpush2.bf16.msra.mxu0 %v4371
        %5395 = vmatprep.subr.bf16.mxu0 %v4368
        %5396 = vmatpush2.bf16.msra.mxu0 %v4367
        %5397 = vmatprep.subr.bf16.mxu0 %v4364
        %5398 = vmatpush2.bf16.msra.mxu0 %v4363
        %5399 = vmatprep.subr.bf16.mxu0 %v4360
        %5400 = vmatpush2.bf16.msra.mxu0 %v4359
        %5401 = vmatprep.subr.bf16.mxu0 %v4356
        %5402 = vmatpush2.bf16.msra.mxu0 %v4355
        %5403 = vmatprep.subr.bf16.mxu0 %v4352
        %5404 = vmatpush2.bf16.msra.mxu0 %v4351
        %5405 = vmatprep.subr.bf16.mxu0 %v4348
        %5406 = vmatpush2.bf16.msra.mxu0 %v4347
        %5407 = vmatprep.mubr.bf16.mxu0 %v3337
        %5408 = vmatmul.mubr.bf16.gmra.mxu0 %v3336
        %v5409 = vpop.f32.mrf.mxu0
        %v5410 = vadd.f32 %v5297, %v5409
        %v5411 = vpop.f32.mrf.mxu0
        %v5412 = vadd.f32 %v5299, %v5411
        %v5413 = vpop.f32.mrf.mxu0
        %v5414 = vadd.f32 %v5301, %v5413
        %v5415 = vpop.f32.mrf.mxu0
        %v5416 = vadd.f32 %v5303, %v5415
        %5417 = vmatprep.mubr.bf16.mxu0 %v3345
        %5418 = vmatmul.mubr.bf16.gmra.mxu0 %v3344
        %v5419 = vpop.f32.mrf.mxu0
        %v5420 = vadd.f32 %v5307, %v5419
        %v5421 = vpop.f32.mrf.mxu0
        %v5422 = vadd.f32 %v5309, %v5421
        %v5423 = vpop.f32.mrf.mxu0
        %v5424 = vadd.f32 %v5311, %v5423
        %v5425 = vpop.f32.mrf.mxu0
        %v5426 = vadd.f32 %v5313, %v5425
        %5427 = vmatprep.mubr.bf16.mxu0 %v3353
        %5428 = vmatmul.mubr.bf16.gmra.mxu0 %v3352
        %v5429 = vpop.f32.mrf.mxu0
        %v5430 = vadd.f32 %v5317, %v5429
        %v5431 = vpop.f32.mrf.mxu0
        %v5432 = vadd.f32 %v5319, %v5431
        %v5433 = vpop.f32.mrf.mxu0
        %v5434 = vadd.f32 %v5321, %v5433
        %v5435 = vpop.f32.mrf.mxu0
        %v5436 = vadd.f32 %v5323, %v5435
        %5437 = vmatprep.mubr.bf16.mxu0 %v3361
        %5438 = vmatmul.mubr.bf16.gmra.mxu0 %v3360
        %v5439 = vpop.f32.mrf.mxu0
        %v5440 = vadd.f32 %v5327, %v5439
        %v5441 = vpop.f32.mrf.mxu0
        %v5442 = vadd.f32 %v5329, %v5441
        %v5443 = vpop.f32.mrf.mxu0
        %v5444 = vadd.f32 %v5331, %v5443
        %v5445 = vpop.f32.mrf.mxu0
        %v5446 = vadd.f32 %v5333, %v5445
        %5447 = vmatprep.mubr.bf16.mxu0 %v3369
        %5448 = vmatmul.mubr.bf16.gmra.mxu0 %v3368
        %v5449 = vpop.f32.mrf.mxu0
        %v5450 = vadd.f32 %v5337, %v5449
        %v5451 = vpop.f32.mrf.mxu0
        %v5452 = vadd.f32 %v5339, %v5451
        %v5453 = vpop.f32.mrf.mxu0
        %v5454 = vadd.f32 %v5341, %v5453
        %v5455 = vpop.f32.mrf.mxu0
        %v5456 = vadd.f32 %v5343, %v5455
        %5457 = vmatprep.mubr.bf16.mxu0 %v3377
        %5458 = vmatmul.mubr.bf16.gmra.mxu0 %v3376
        %v5459 = vpop.f32.mrf.mxu0
        %v5460 = vadd.f32 %v5347, %v5459
        %v5461 = vpop.f32.mrf.mxu0
        %v5462 = vadd.f32 %v5349, %v5461
        %v5463 = vpop.f32.mrf.mxu0
        %v5464 = vadd.f32 %v5351, %v5463
        %v5465 = vpop.f32.mrf.mxu0
        %v5466 = vadd.f32 %v5353, %v5465
        %5467 = vmatprep.mubr.bf16.mxu0 %v3385
        %5468 = vmatmul.mubr.bf16.gmra.mxu0 %v3384
        %v5469 = vpop.f32.mrf.mxu0
        %v5470 = vadd.f32 %v5357, %v5469
        %v5471 = vpop.f32.mrf.mxu0
        %v5472 = vadd.f32 %v5359, %v5471
        %v5473 = vpop.f32.mrf.mxu0
        %v5474 = vadd.f32 %v5361, %v5473
        %v5475 = vpop.f32.mrf.mxu0
        %v5476 = vadd.f32 %v5363, %v5475
        %5477 = vmatprep.mubr.bf16.mxu0 %v3393
        %5478 = vmatmul.mubr.bf16.gmra.mxu0 %v3392
        %v5479 = vpop.f32.mrf.mxu0
        %v5480 = vadd.f32 %v5367, %v5479
        %v5481 = vpop.f32.mrf.mxu0
        %v5482 = vadd.f32 %v5369, %v5481
        %v5483 = vpop.f32.mrf.mxu0
        %v5484 = vadd.f32 %v5371, %v5483
        %v5485 = vpop.f32.mrf.mxu0
        %v5486 = vadd.f32 %v5373, %v5485
        %5487 = vdwg.mxu0
        %5488 = vmatprep.subr.bf16.mxu0 %v4408
        %5489 = vmatpush1.bf16.msra.mxu0 %v4407
        %5490 = vmatprep.subr.bf16.mxu0 %v4404
        %5491 = vmatpush1.bf16.msra.mxu0 %v4403
        %5492 = vmatprep.subr.bf16.mxu0 %v4400
        %5493 = vmatpush1.bf16.msra.mxu0 %v4399
        %5494 = vmatprep.subr.bf16.mxu0 %v4396
        %5495 = vmatpush1.bf16.msra.mxu0 %v4395
        %5496 = vmatprep.subr.bf16.mxu0 %v4392
        %5497 = vmatpush1.bf16.msra.mxu0 %v4391
        %5498 = vmatprep.subr.bf16.mxu0 %v4388
        %5499 = vmatpush1.bf16.msra.mxu0 %v4387
        %5500 = vmatprep.subr.bf16.mxu0 %v4384
        %5501 = vmatpush1.bf16.msra.mxu0 %v4383
        %5502 = vmatprep.subr.bf16.mxu0 %v4380
        %5503 = vmatpush1.bf16.msra.mxu0 %v4379
        %5504 = vmatprep.subr.bf16.mxu0 %v4440
        %5505 = vmatpush2.bf16.msra.mxu0 %v4439
        %5506 = vmatprep.subr.bf16.mxu0 %v4436
        %5507 = vmatpush2.bf16.msra.mxu0 %v4435
        %5508 = vmatprep.subr.bf16.mxu0 %v4432
        %5509 = vmatpush2.bf16.msra.mxu0 %v4431
        %5510 = vmatprep.subr.bf16.mxu0 %v4428
        %5511 = vmatpush2.bf16.msra.mxu0 %v4427
        %5512 = vmatprep.subr.bf16.mxu0 %v4424
        %5513 = vmatpush2.bf16.msra.mxu0 %v4423
        %5514 = vmatprep.subr.bf16.mxu0 %v4420
        %5515 = vmatpush2.bf16.msra.mxu0 %v4419
        %5516 = vmatprep.subr.bf16.mxu0 %v4416
        %5517 = vmatpush2.bf16.msra.mxu0 %v4415
        %5518 = vmatprep.subr.bf16.mxu0 %v4412
        %5519 = vmatpush2.bf16.msra.mxu0 %v4411
        %5520 = vmatprep.mubr.bf16.mxu0 %v3339
        %5521 = vmatmul.mubr.bf16.gmra.mxu0 %v3338
        %v5522 = vpop.f32.mrf.mxu0
        %v5523 = vadd.f32 %v5410, %v5522
        %v5524 = vpop.f32.mrf.mxu0
        %v5525 = vadd.f32 %v5412, %v5524
        %v5526 = vpop.f32.mrf.mxu0
        %v5527 = vadd.f32 %v5414, %v5526
        %v5528 = vpop.f32.mrf.mxu0
        %v5529 = vadd.f32 %v5416, %v5528
        %5530 = vmatprep.mubr.bf16.mxu0 %v3347
        %5531 = vmatmul.mubr.bf16.gmra.mxu0 %v3346
        %v5532 = vpop.f32.mrf.mxu0
        %v5533 = vadd.f32 %v5420, %v5532
        %v5534 = vpop.f32.mrf.mxu0
        %v5535 = vadd.f32 %v5422, %v5534
        %v5536 = vpop.f32.mrf.mxu0
        %v5537 = vadd.f32 %v5424, %v5536
        %v5538 = vpop.f32.mrf.mxu0
        %v5539 = vadd.f32 %v5426, %v5538
        %5540 = vmatprep.mubr.bf16.mxu0 %v3355
        %5541 = vmatmul.mubr.bf16.gmra.mxu0 %v3354
        %v5542 = vpop.f32.mrf.mxu0
        %v5543 = vadd.f32 %v5430, %v5542
        %v5544 = vpop.f32.mrf.mxu0
        %v5545 = vadd.f32 %v5432, %v5544
        %v5546 = vpop.f32.mrf.mxu0
        %v5547 = vadd.f32 %v5434, %v5546
        %v5548 = vpop.f32.mrf.mxu0
        %v5549 = vadd.f32 %v5436, %v5548
        %5550 = vmatprep.mubr.bf16.mxu0 %v3363
        %5551 = vmatmul.mubr.bf16.gmra.mxu0 %v3362
        %v5552 = vpop.f32.mrf.mxu0
        %v5553 = vadd.f32 %v5440, %v5552
        %v5554 = vpop.f32.mrf.mxu0
        %v5555 = vadd.f32 %v5442, %v5554
        %v5556 = vpop.f32.mrf.mxu0
        %v5557 = vadd.f32 %v5444, %v5556
        %v5558 = vpop.f32.mrf.mxu0
        %v5559 = vadd.f32 %v5446, %v5558
        %5560 = vmatprep.mubr.bf16.mxu0 %v3371
        %5561 = vmatmul.mubr.bf16.gmra.mxu0 %v3370
        %v5562 = vpop.f32.mrf.mxu0
        %v5563 = vadd.f32 %v5450, %v5562
        %v5564 = vpop.f32.mrf.mxu0
        %v5565 = vadd.f32 %v5452, %v5564
        %v5566 = vpop.f32.mrf.mxu0
        %v5567 = vadd.f32 %v5454, %v5566
        %v5568 = vpop.f32.mrf.mxu0
        %v5569 = vadd.f32 %v5456, %v5568
        %5570 = vmatprep.mubr.bf16.mxu0 %v3379
        %5571 = vmatmul.mubr.bf16.gmra.mxu0 %v3378
        %v5572 = vpop.f32.mrf.mxu0
        %v5573 = vadd.f32 %v5460, %v5572
        %v5574 = vpop.f32.mrf.mxu0
        %v5575 = vadd.f32 %v5462, %v5574
        %v5576 = vpop.f32.mrf.mxu0
        %v5577 = vadd.f32 %v5464, %v5576
        %v5578 = vpop.f32.mrf.mxu0
        %v5579 = vadd.f32 %v5466, %v5578
        %5580 = vmatprep.mubr.bf16.mxu0 %v3387
        %5581 = vmatmul.mubr.bf16.gmra.mxu0 %v3386
        %v5582 = vpop.f32.mrf.mxu0
        %v5583 = vadd.f32 %v5470, %v5582
        %v5584 = vpop.f32.mrf.mxu0
        %v5585 = vadd.f32 %v5472, %v5584
        %v5586 = vpop.f32.mrf.mxu0
        %v5587 = vadd.f32 %v5474, %v5586
        %v5588 = vpop.f32.mrf.mxu0
        %v5589 = vadd.f32 %v5476, %v5588
        %5590 = vmatprep.mubr.bf16.mxu0 %v3395
        %5591 = vmatmul.mubr.bf16.gmra.mxu0 %v3394
        %v5592 = vpop.f32.mrf.mxu0
        %v5593 = vadd.f32 %v5480, %v5592
        %v5594 = vpop.f32.mrf.mxu0
        %v5595 = vadd.f32 %v5482, %v5594
        %v5596 = vpop.f32.mrf.mxu0
        %v5597 = vadd.f32 %v5484, %v5596
        %v5598 = vpop.f32.mrf.mxu0
        %v5599 = vadd.f32 %v5486, %v5598
        %5600 = vdwg.mxu0
        %vm5601 = vcmp.gt.f32.partialorder %v5071, 0.0
        %vm5602 = vcmp.gt.f32.partialorder %v5073, 0.0
        %vm5603 = vcmp.gt.f32.partialorder %v5523, 0.0
        %vm5604 = vcmp.gt.f32.partialorder %v5525, 0.0
        %vm5605 = vcmp.gt.f32.partialorder %v5075, 0.0
        %vm5606 = vcmp.gt.f32.partialorder %v5077, 0.0
        %vm5607 = vcmp.gt.f32.partialorder %v5527, 0.0
        %vm5608 = vcmp.gt.f32.partialorder %v5529, 0.0
        %vm5609 = vcmp.gt.f32.partialorder %v5081, 0.0
        %vm5610 = vcmp.gt.f32.partialorder %v5083, 0.0
        %vm5611 = vcmp.gt.f32.partialorder %v5533, 0.0
        %vm5612 = vcmp.gt.f32.partialorder %v5535, 0.0
        %vm5613 = vcmp.gt.f32.partialorder %v5085, 0.0
        %vm5614 = vcmp.gt.f32.partialorder %v5087, 0.0
        %vm5615 = vcmp.gt.f32.partialorder %v5537, 0.0
        %vm5616 = vcmp.gt.f32.partialorder %v5539, 0.0
        %vm5617 = vcmp.gt.f32.partialorder %v5091, 0.0
        %vm5618 = vcmp.gt.f32.partialorder %v5093, 0.0
        %vm5619 = vcmp.gt.f32.partialorder %v5543, 0.0
        %vm5620 = vcmp.gt.f32.partialorder %v5545, 0.0
        %vm5621 = vcmp.gt.f32.partialorder %v5095, 0.0
        %vm5622 = vcmp.gt.f32.partialorder %v5097, 0.0
        %vm5623 = vcmp.gt.f32.partialorder %v5547, 0.0
        %vm5624 = vcmp.gt.f32.partialorder %v5549, 0.0
        %vm5625 = vcmp.gt.f32.partialorder %v5101, 0.0
        %vm5626 = vcmp.gt.f32.partialorder %v5103, 0.0
        %vm5627 = vcmp.gt.f32.partialorder %v5553, 0.0
        %vm5628 = vcmp.gt.f32.partialorder %v5555, 0.0
        %vm5629 = vcmp.gt.f32.partialorder %v5105, 0.0
        %vm5630 = vcmp.gt.f32.partialorder %v5107, 0.0
        %vm5631 = vcmp.gt.f32.partialorder %v5557, 0.0
        %vm5632 = vcmp.gt.f32.partialorder %v5559, 0.0
        %vm5633 = vcmp.gt.f32.partialorder %v5111, 0.0
        %vm5634 = vcmp.gt.f32.partialorder %v5113, 0.0
        %vm5635 = vcmp.gt.f32.partialorder %v5563, 0.0
        %vm5636 = vcmp.gt.f32.partialorder %v5565, 0.0
        %vm5637 = vcmp.gt.f32.partialorder %v5115, 0.0
        %vm5638 = vcmp.gt.f32.partialorder %v5117, 0.0
        %vm5639 = vcmp.gt.f32.partialorder %v5567, 0.0
        %vm5640 = vcmp.gt.f32.partialorder %v5569, 0.0
        %vm5641 = vcmp.gt.f32.partialorder %v5121, 0.0
        %vm5642 = vcmp.gt.f32.partialorder %v5123, 0.0
        %vm5643 = vcmp.gt.f32.partialorder %v5573, 0.0
        %vm5644 = vcmp.gt.f32.partialorder %v5575, 0.0
        %vm5645 = vcmp.gt.f32.partialorder %v5125, 0.0
        %vm5646 = vcmp.gt.f32.partialorder %v5127, 0.0
        %vm5647 = vcmp.gt.f32.partialorder %v5577, 0.0
        %vm5648 = vcmp.gt.f32.partialorder %v5579, 0.0
        %vm5649 = vcmp.gt.f32.partialorder %v5131, 0.0
        %vm5650 = vcmp.gt.f32.partialorder %v5133, 0.0
        %vm5651 = vcmp.gt.f32.partialorder %v5583, 0.0
        %vm5652 = vcmp.gt.f32.partialorder %v5585, 0.0
        %vm5653 = vcmp.gt.f32.partialorder %v5135, 0.0
        %vm5654 = vcmp.gt.f32.partialorder %v5137, 0.0
        %vm5655 = vcmp.gt.f32.partialorder %v5587, 0.0
        %vm5656 = vcmp.gt.f32.partialorder %v5589, 0.0
        %vm5657 = vcmp.gt.f32.partialorder %v5141, 0.0
        %vm5658 = vcmp.gt.f32.partialorder %v5143, 0.0
        %vm5659 = vcmp.gt.f32.partialorder %v5593, 0.0
        %vm5660 = vcmp.gt.f32.partialorder %v5595, 0.0
        %vm5661 = vcmp.gt.f32.partialorder %v5145, 0.0
        %vm5662 = vcmp.gt.f32.partialorder %v5147, 0.0
        %vm5663 = vcmp.gt.f32.partialorder %v5597, 0.0
        %vm5664 = vcmp.gt.f32.partialorder %v5599, 0.0
        %v5665 = vmul.f32 %v5071, 0.2
        %v5666 = vmul.f32 %v5073, 0.2
        %v5667 = vmul.f32 %v5523, 0.2
        %v5668 = vmul.f32 %v5525, 0.2
        %v5669 = vmul.f32 %v5075, 0.2
        %v5670 = vmul.f32 %v5077, 0.2
        %v5671 = vmul.f32 %v5527, 0.2
        %v5672 = vmul.f32 %v5529, 0.2
        %v5673 = vmul.f32 %v5081, 0.2
        %v5674 = vmul.f32 %v5083, 0.2
        %v5675 = vmul.f32 %v5533, 0.2
        %v5676 = vmul.f32 %v5535, 0.2
        %v5677 = vmul.f32 %v5085, 0.2
        %v5678 = vmul.f32 %v5087, 0.2
        %v5679 = vmul.f32 %v5537, 0.2
        %v5680 = vmul.f32 %v5539, 0.2
        %v5681 = vmul.f32 %v5091, 0.2
        %v5682 = vmul.f32 %v5093, 0.2
        %v5683 = vmul.f32 %v5543, 0.2
        %v5684 = vmul.f32 %v5545, 0.2
        %v5685 = vmul.f32 %v5095, 0.2
        %v5686 = vmul.f32 %v5097, 0.2
        %v5687 = vmul.f32 %v5547, 0.2
        %v5688 = vmul.f32 %v5549, 0.2
        %v5689 = vmul.f32 %v5101, 0.2
        %v5690 = vmul.f32 %v5103, 0.2
        %v5691 = vmul.f32 %v5553, 0.2
        %v5692 = vmul.f32 %v5555, 0.2
        %v5693 = vmul.f32 %v5105, 0.2
        %v5694 = vmul.f32 %v5107, 0.2
        %v5695 = vmul.f32 %v5557, 0.2
        %v5696 = vmul.f32 %v5559, 0.2
        %v5697 = vmul.f32 %v5111, 0.2
        %v5698 = vmul.f32 %v5113, 0.2
        %v5699 = vmul.f32 %v5563, 0.2
        %v5700 = vmul.f32 %v5565, 0.2
        %v5701 = vmul.f32 %v5115, 0.2
        %v5702 = vmul.f32 %v5117, 0.2
        %v5703 = vmul.f32 %v5567, 0.2
        %v5704 = vmul.f32 %v5569, 0.2
        %v5705 = vmul.f32 %v5121, 0.2
        %v5706 = vmul.f32 %v5123, 0.2
        %v5707 = vmul.f32 %v5573, 0.2
        %v5708 = vmul.f32 %v5575, 0.2
        %v5709 = vmul.f32 %v5125, 0.2
        %v5710 = vmul.f32 %v5127, 0.2
        %v5711 = vmul.f32 %v5577, 0.2
        %v5712 = vmul.f32 %v5579, 0.2
        %v5713 = vmul.f32 %v5131, 0.2
        %v5714 = vmul.f32 %v5133, 0.2
        %v5715 = vmul.f32 %v5583, 0.2
        %v5716 = vmul.f32 %v5585, 0.2
        %v5717 = vmul.f32 %v5135, 0.2
        %v5718 = vmul.f32 %v5137, 0.2
        %v5719 = vmul.f32 %v5587, 0.2
        %v5720 = vmul.f32 %v5589, 0.2
        %v5721 = vmul.f32 %v5141, 0.2
        %v5722 = vmul.f32 %v5143, 0.2
        %v5723 = vmul.f32 %v5593, 0.2
        %v5724 = vmul.f32 %v5595, 0.2
        %v5725 = vmul.f32 %v5145, 0.2
        %v5726 = vmul.f32 %v5147, 0.2
        %v5727 = vmul.f32 %v5597, 0.2
        %v5728 = vmul.f32 %v5599, 0.2
        %v5729 = vsel %vm5601, %v5071, %v5665
        %v5730 = vsel %vm5602, %v5073, %v5666
        %v5731 = vsel %vm5603, %v5523, %v5667
        %v5732 = vsel %vm5604, %v5525, %v5668
        %v5733 = vsel %vm5605, %v5075, %v5669
        %v5734 = vsel %vm5606, %v5077, %v5670
        %v5735 = vsel %vm5607, %v5527, %v5671
        %v5736 = vsel %vm5608, %v5529, %v5672
        %v5737 = vsel %vm5609, %v5081, %v5673
        %v5738 = vsel %vm5610, %v5083, %v5674
        %v5739 = vsel %vm5611, %v5533, %v5675
        %v5740 = vsel %vm5612, %v5535, %v5676
        %v5741 = vsel %vm5613, %v5085, %v5677
        %v5742 = vsel %vm5614, %v5087, %v5678
        %v5743 = vsel %vm5615, %v5537, %v5679
        %v5744 = vsel %vm5616, %v5539, %v5680
        %v5745 = vsel %vm5617, %v5091, %v5681
        %v5746 = vsel %vm5618, %v5093, %v5682
        %v5747 = vsel %vm5619, %v5543, %v5683
        %v5748 = vsel %vm5620, %v5545, %v5684
        %v5749 = vsel %vm5621, %v5095, %v5685
        %v5750 = vsel %vm5622, %v5097, %v5686
        %v5751 = vsel %vm5623, %v5547, %v5687
        %v5752 = vsel %vm5624, %v5549, %v5688
        %v5753 = vsel %vm5625, %v5101, %v5689
        %v5754 = vsel %vm5626, %v5103, %v5690
        %v5755 = vsel %vm5627, %v5553, %v5691
        %v5756 = vsel %vm5628, %v5555, %v5692
        %v5757 = vsel %vm5629, %v5105, %v5693
        %v5758 = vsel %vm5630, %v5107, %v5694
        %v5759 = vsel %vm5631, %v5557, %v5695
        %v5760 = vsel %vm5632, %v5559, %v5696
        %v5761 = vsel %vm5633, %v5111, %v5697
        %v5762 = vsel %vm5634, %v5113, %v5698
        %v5763 = vsel %vm5635, %v5563, %v5699
        %v5764 = vsel %vm5636, %v5565, %v5700
        %v5765 = vsel %vm5637, %v5115, %v5701
        %v5766 = vsel %vm5638, %v5117, %v5702
        %v5767 = vsel %vm5639, %v5567, %v5703
        %v5768 = vsel %vm5640, %v5569, %v5704
        %v5769 = vsel %vm5641, %v5121, %v5705
        %v5770 = vsel %vm5642, %v5123, %v5706
        %v5771 = vsel %vm5643, %v5573, %v5707
        %v5772 = vsel %vm5644, %v5575, %v5708
        %v5773 = vsel %vm5645, %v5125, %v5709
        %v5774 = vsel %vm5646, %v5127, %v5710
        %v5775 = vsel %vm5647, %v5577, %v5711
        %v5776 = vsel %vm5648, %v5579, %v5712
        %v5777 = vsel %vm5649, %v5131, %v5713
        %v5778 = vsel %vm5650, %v5133, %v5714
        %v5779 = vsel %vm5651, %v5583, %v5715
        %v5780 = vsel %vm5652, %v5585, %v5716
        %v5781 = vsel %vm5653, %v5135, %v5717
        %v5782 = vsel %vm5654, %v5137, %v5718
        %v5783 = vsel %vm5655, %v5587, %v5719
        %v5784 = vsel %vm5656, %v5589, %v5720
        %v5785 = vsel %vm5657, %v5141, %v5721
        %v5786 = vsel %vm5658, %v5143, %v5722
        %v5787 = vsel %vm5659, %v5593, %v5723
        %v5788 = vsel %vm5660, %v5595, %v5724
        %v5789 = vsel %vm5661, %v5145, %v5725
        %v5790 = vsel %vm5662, %v5147, %v5726
        %v5791 = vsel %vm5663, %v5597, %v5727
        %v5792 = vsel %vm5664, %v5599, %v5728
        %s5793 = sadd.s32 %s381, 2
        %v5794 = vstv %s5793
        %v5795 = vadd.s32 %v5794, %v1883
        %v5796 = vadd.s32 %v5794, %v1884
        %v5797 = vadd.s32 %v5794, %v1885
        %v5798 = vadd.s32 %v5794, %v1886
        %v5799 = vadd.s32 %v5794, %v1887
        %v5800 = vadd.s32 %v5794, %v1888
        %v5801 = vadd.s32 %v5794, %v1889
        %v5802 = vadd.s32 %v5794, %v1890
        %v5803 = vadd.s32 %v5794, %v1891
        %v5804 = vadd.s32 %v5794, %v1892
        %v5805 = vadd.s32 %v5794, %v1893
        %v5806 = vadd.s32 %v5794, %v1894
        %v5807 = vadd.s32 %v5794, %v1895
        %v5808 = vadd.s32 %v5794, %v1896
        %v5809 = vadd.s32 %v5794, %v1897
        %v5810 = vadd.s32 %v5794, %v1898
        %v5811 = vadd.s32 %v5795, %v1916
        %v5812 = vadd.s32 %v5795, %v1917
        %v5813 = vadd.s32 %v5795, %v1918
        %v5814 = vadd.s32 %v5795, %v1919
        %v5815 = vadd.s32 %v5796, %v1916
        %v5816 = vadd.s32 %v5796, %v1917
        %v5817 = vadd.s32 %v5796, %v1918
        %v5818 = vadd.s32 %v5796, %v1919
        %v5819 = vadd.s32 %v5797, %v1916
        %v5820 = vadd.s32 %v5797, %v1917
        %v5821 = vadd.s32 %v5797, %v1918
        %v5822 = vadd.s32 %v5797, %v1919
        %v5823 = vadd.s32 %v5798, %v1916
        %v5824 = vadd.s32 %v5798, %v1917
        %v5825 = vadd.s32 %v5798, %v1918
        %v5826 = vadd.s32 %v5798, %v1919
        %v5827 = vadd.s32 %v5799, %v1916
        %v5828 = vadd.s32 %v5799, %v1917
        %v5829 = vadd.s32 %v5799, %v1918
        %v5830 = vadd.s32 %v5799, %v1919
        %v5831 = vadd.s32 %v5800, %v1916
        %v5832 = vadd.s32 %v5800, %v1917
        %v5833 = vadd.s32 %v5800, %v1918
        %v5834 = vadd.s32 %v5800, %v1919
        %v5835 = vadd.s32 %v5801, %v1916
        %v5836 = vadd.s32 %v5801, %v1917
        %v5837 = vadd.s32 %v5801, %v1918
        %v5838 = vadd.s32 %v5801, %v1919
        %v5839 = vadd.s32 %v5802, %v1916
        %v5840 = vadd.s32 %v5802, %v1917
        %v5841 = vadd.s32 %v5802, %v1918
        %v5842 = vadd.s32 %v5802, %v1919
        %v5843 = vadd.s32 %v5803, %v1916
        %v5844 = vadd.s32 %v5803, %v1917
        %v5845 = vadd.s32 %v5803, %v1918
        %v5846 = vadd.s32 %v5803, %v1919
        %v5847 = vadd.s32 %v5804, %v1916
        %v5848 = vadd.s32 %v5804, %v1917
        %v5849 = vadd.s32 %v5804, %v1918
        %v5850 = vadd.s32 %v5804, %v1919
        %v5851 = vadd.s32 %v5805, %v1916
        %v5852 = vadd.s32 %v5805, %v1917
        %v5853 = vadd.s32 %v5805, %v1918
        %v5854 = vadd.s32 %v5805, %v1919
        %v5855 = vadd.s32 %v5806, %v1916
        %v5856 = vadd.s32 %v5806, %v1917
        %v5857 = vadd.s32 %v5806, %v1918
        %v5858 = vadd.s32 %v5806, %v1919
        %v5859 = vadd.s32 %v5807, %v1916
        %v5860 = vadd.s32 %v5807, %v1917
        %v5861 = vadd.s32 %v5807, %v1918
        %v5862 = vadd.s32 %v5807, %v1919
        %v5863 = vadd.s32 %v5808, %v1916
        %v5864 = vadd.s32 %v5808, %v1917
        %v5865 = vadd.s32 %v5808, %v1918
        %v5866 = vadd.s32 %v5808, %v1919
        %v5867 = vadd.s32 %v5809, %v1916
        %v5868 = vadd.s32 %v5809, %v1917
        %v5869 = vadd.s32 %v5809, %v1918
        %v5870 = vadd.s32 %v5809, %v1919
        %v5871 = vadd.s32 %v5810, %v1916
        %v5872 = vadd.s32 %v5810, %v1917
        %v5873 = vadd.s32 %v5810, %v1918
        %v5874 = vadd.s32 %v5810, %v1919
        %v5875 = vshrl.u32 %v5811, 16
        %v5876 = vshrl.u32 %v5812, 16
        %v5877 = vshrl.u32 %v5813, 16
        %v5878 = vshrl.u32 %v5814, 16
        %v5879 = vshrl.u32 %v5815, 16
        %v5880 = vshrl.u32 %v5816, 16
        %v5881 = vshrl.u32 %v5817, 16
        %v5882 = vshrl.u32 %v5818, 16
        %v5883 = vshrl.u32 %v5819, 16
        %v5884 = vshrl.u32 %v5820, 16
        %v5885 = vshrl.u32 %v5821, 16
        %v5886 = vshrl.u32 %v5822, 16
        %v5887 = vshrl.u32 %v5823, 16
        %v5888 = vshrl.u32 %v5824, 16
        %v5889 = vshrl.u32 %v5825, 16
        %v5890 = vshrl.u32 %v5826, 16
        %v5891 = vshrl.u32 %v5827, 16
        %v5892 = vshrl.u32 %v5828, 16
        %v5893 = vshrl.u32 %v5829, 16
        %v5894 = vshrl.u32 %v5830, 16
        %v5895 = vshrl.u32 %v5831, 16
        %v5896 = vshrl.u32 %v5832, 16
        %v5897 = vshrl.u32 %v5833, 16
        %v5898 = vshrl.u32 %v5834, 16
        %v5899 = vshrl.u32 %v5835, 16
        %v5900 = vshrl.u32 %v5836, 16
        %v5901 = vshrl.u32 %v5837, 16
        %v5902 = vshrl.u32 %v5838, 16
        %v5903 = vshrl.u32 %v5839, 16
        %v5904 = vshrl.u32 %v5840, 16
        %v5905 = vshrl.u32 %v5841, 16
        %v5906 = vshrl.u32 %v5842, 16
        %v5907 = vshrl.u32 %v5843, 16
        %v5908 = vshrl.u32 %v5844, 16
        %v5909 = vshrl.u32 %v5845, 16
        %v5910 = vshrl.u32 %v5846, 16
        %v5911 = vshrl.u32 %v5847, 16
        %v5912 = vshrl.u32 %v5848, 16
        %v5913 = vshrl.u32 %v5849, 16
        %v5914 = vshrl.u32 %v5850, 16
        %v5915 = vshrl.u32 %v5851, 16
        %v5916 = vshrl.u32 %v5852, 16
        %v5917 = vshrl.u32 %v5853, 16
        %v5918 = vshrl.u32 %v5854, 16
        %v5919 = vshrl.u32 %v5855, 16
        %v5920 = vshrl.u32 %v5856, 16
        %v5921 = vshrl.u32 %v5857, 16
        %v5922 = vshrl.u32 %v5858, 16
        %v5923 = vshrl.u32 %v5859, 16
        %v5924 = vshrl.u32 %v5860, 16
        %v5925 = vshrl.u32 %v5861, 16
        %v5926 = vshrl.u32 %v5862, 16
        %v5927 = vshrl.u32 %v5863, 16
        %v5928 = vshrl.u32 %v5864, 16
        %v5929 = vshrl.u32 %v5865, 16
        %v5930 = vshrl.u32 %v5866, 16
        %v5931 = vshrl.u32 %v5867, 16
        %v5932 = vshrl.u32 %v5868, 16
        %v5933 = vshrl.u32 %v5869, 16
        %v5934 = vshrl.u32 %v5870, 16
        %v5935 = vshrl.u32 %v5871, 16
        %v5936 = vshrl.u32 %v5872, 16
        %v5937 = vshrl.u32 %v5873, 16
        %v5938 = vshrl.u32 %v5874, 16
        %v5939 = vxor.u32 %v5811, %v5875
        %v5940 = vxor.u32 %v5812, %v5876
        %v5941 = vxor.u32 %v5813, %v5877
        %v5942 = vxor.u32 %v5814, %v5878
        %v5943 = vxor.u32 %v5815, %v5879
        %v5944 = vxor.u32 %v5816, %v5880
        %v5945 = vxor.u32 %v5817, %v5881
        %v5946 = vxor.u32 %v5818, %v5882
        %v5947 = vxor.u32 %v5819, %v5883
        %v5948 = vxor.u32 %v5820, %v5884
        %v5949 = vxor.u32 %v5821, %v5885
        %v5950 = vxor.u32 %v5822, %v5886
        %v5951 = vxor.u32 %v5823, %v5887
        %v5952 = vxor.u32 %v5824, %v5888
        %v5953 = vxor.u32 %v5825, %v5889
        %v5954 = vxor.u32 %v5826, %v5890
        %v5955 = vxor.u32 %v5827, %v5891
        %v5956 = vxor.u32 %v5828, %v5892
        %v5957 = vxor.u32 %v5829, %v5893
        %v5958 = vxor.u32 %v5830, %v5894
        %v5959 = vxor.u32 %v5831, %v5895
        %v5960 = vxor.u32 %v5832, %v5896
        %v5961 = vxor.u32 %v5833, %v5897
        %v5962 = vxor.u32 %v5834, %v5898
        %v5963 = vxor.u32 %v5835, %v5899
        %v5964 = vxor.u32 %v5836, %v5900
        %v5965 = vxor.u32 %v5837, %v5901
        %v5966 = vxor.u32 %v5838, %v5902
        %v5967 = vxor.u32 %v5839, %v5903
        %v5968 = vxor.u32 %v5840, %v5904
        %v5969 = vxor.u32 %v5841, %v5905
        %v5970 = vxor.u32 %v5842, %v5906
        %v5971 = vxor.u32 %v5843, %v5907
        %v5972 = vxor.u32 %v5844, %v5908
        %v5973 = vxor.u32 %v5845, %v5909
        %v5974 = vxor.u32 %v5846, %v5910
        %v5975 = vxor.u32 %v5847, %v5911
        %v5976 = vxor.u32 %v5848, %v5912
        %v5977 = vxor.u32 %v5849, %v5913
        %v5978 = vxor.u32 %v5850, %v5914
        %v5979 = vxor.u32 %v5851, %v5915
        %v5980 = vxor.u32 %v5852, %v5916
        %v5981 = vxor.u32 %v5853, %v5917
        %v5982 = vxor.u32 %v5854, %v5918
        %v5983 = vxor.u32 %v5855, %v5919
        %v5984 = vxor.u32 %v5856, %v5920
        %v5985 = vxor.u32 %v5857, %v5921
        %v5986 = vxor.u32 %v5858, %v5922
        %v5987 = vxor.u32 %v5859, %v5923
        %v5988 = vxor.u32 %v5860, %v5924
        %v5989 = vxor.u32 %v5861, %v5925
        %v5990 = vxor.u32 %v5862, %v5926
        %v5991 = vxor.u32 %v5863, %v5927
        %v5992 = vxor.u32 %v5864, %v5928
        %v5993 = vxor.u32 %v5865, %v5929
        %v5994 = vxor.u32 %v5866, %v5930
        %v5995 = vxor.u32 %v5867, %v5931
        %v5996 = vxor.u32 %v5868, %v5932
        %v5997 = vxor.u32 %v5869, %v5933
        %v5998 = vxor.u32 %v5870, %v5934
        %v5999 = vxor.u32 %v5871, %v5935
        %v6000 = vxor.u32 %v5872, %v5936
        %v6001 = vxor.u32 %v5873, %v5937
        %v6002 = vxor.u32 %v5874, %v5938
        %v6003 = vmul.u32 %v5939, 2146121005
        %v6004 = vmul.u32 %v5940, 2146121005
        %v6005 = vmul.u32 %v5941, 2146121005
        %v6006 = vmul.u32 %v5942, 2146121005
        %v6007 = vmul.u32 %v5943, 2146121005
        %v6008 = vmul.u32 %v5944, 2146121005
        %v6009 = vmul.u32 %v5945, 2146121005
        %v6010 = vmul.u32 %v5946, 2146121005
        %v6011 = vmul.u32 %v5947, 2146121005
        %v6012 = vmul.u32 %v5948, 2146121005
        %v6013 = vmul.u32 %v5949, 2146121005
        %v6014 = vmul.u32 %v5950, 2146121005
        %v6015 = vmul.u32 %v5951, 2146121005
        %v6016 = vmul.u32 %v5952, 2146121005
        %v6017 = vmul.u32 %v5953, 2146121005
        %v6018 = vmul.u32 %v5954, 2146121005
        %v6019 = vmul.u32 %v5955, 2146121005
        %v6020 = vmul.u32 %v5956, 2146121005
        %v6021 = vmul.u32 %v5957, 2146121005
        %v6022 = vmul.u32 %v5958, 2146121005
        %v6023 = vmul.u32 %v5959, 2146121005
        %v6024 = vmul.u32 %v5960, 2146121005
        %v6025 = vmul.u32 %v5961, 2146121005
        %v6026 = vmul.u32 %v5962, 2146121005
        %v6027 = vmul.u32 %v5963, 2146121005
        %v6028 = vmul.u32 %v5964, 2146121005
        %v6029 = vmul.u32 %v5965, 2146121005
        %v6030 = vmul.u32 %v5966, 2146121005
        %v6031 = vmul.u32 %v5967, 2146121005
        %v6032 = vmul.u32 %v5968, 2146121005
        %v6033 = vmul.u32 %v5969, 2146121005
        %v6034 = vmul.u32 %v5970, 2146121005
        %v6035 = vmul.u32 %v5971, 2146121005
        %v6036 = vmul.u32 %v5972, 2146121005
        %v6037 = vmul.u32 %v5973, 2146121005
        %v6038 = vmul.u32 %v5974, 2146121005
        %v6039 = vmul.u32 %v5975, 2146121005
        %v6040 = vmul.u32 %v5976, 2146121005
        %v6041 = vmul.u32 %v5977, 2146121005
        %v6042 = vmul.u32 %v5978, 2146121005
        %v6043 = vmul.u32 %v5979, 2146121005
        %v6044 = vmul.u32 %v5980, 2146121005
        %v6045 = vmul.u32 %v5981, 2146121005
        %v6046 = vmul.u32 %v5982, 2146121005
        %v6047 = vmul.u32 %v5983, 2146121005
        %v6048 = vmul.u32 %v5984, 2146121005
        %v6049 = vmul.u32 %v5985, 2146121005
        %v6050 = vmul.u32 %v5986, 2146121005
        %v6051 = vmul.u32 %v5987, 2146121005
        %v6052 = vmul.u32 %v5988, 2146121005
        %v6053 = vmul.u32 %v5989, 2146121005
        %v6054 = vmul.u32 %v5990, 2146121005
        %v6055 = vmul.u32 %v5991, 2146121005
        %v6056 = vmul.u32 %v5992, 2146121005
        %v6057 = vmul.u32 %v5993, 2146121005
        %v6058 = vmul.u32 %v5994, 2146121005
        %v6059 = vmul.u32 %v5995, 2146121005
        %v6060 = vmul.u32 %v5996, 2146121005
        %v6061 = vmul.u32 %v5997, 2146121005
        %v6062 = vmul.u32 %v5998, 2146121005
        %v6063 = vmul.u32 %v5999, 2146121005
        %v6064 = vmul.u32 %v6000, 2146121005
        %v6065 = vmul.u32 %v6001, 2146121005
        %v6066 = vmul.u32 %v6002, 2146121005
        %v6067 = vshrl.u32 %v6003, 15
        %v6068 = vshrl.u32 %v6004, 15
        %v6069 = vshrl.u32 %v6005, 15
        %v6070 = vshrl.u32 %v6006, 15
        %v6071 = vshrl.u32 %v6007, 15
        %v6072 = vshrl.u32 %v6008, 15
        %v6073 = vshrl.u32 %v6009, 15
        %v6074 = vshrl.u32 %v6010, 15
        %v6075 = vshrl.u32 %v6011, 15
        %v6076 = vshrl.u32 %v6012, 15
        %v6077 = vshrl.u32 %v6013, 15
        %v6078 = vshrl.u32 %v6014, 15
        %v6079 = vshrl.u32 %v6015, 15
        %v6080 = vshrl.u32 %v6016, 15
        %v6081 = vshrl.u32 %v6017, 15
        %v6082 = vshrl.u32 %v6018, 15
        %v6083 = vshrl.u32 %v6019, 15
        %v6084 = vshrl.u32 %v6020, 15
        %v6085 = vshrl.u32 %v6021, 15
        %v6086 = vshrl.u32 %v6022, 15
        %v6087 = vshrl.u32 %v6023, 15
        %v6088 = vshrl.u32 %v6024, 15
        %v6089 = vshrl.u32 %v6025, 15
        %v6090 = vshrl.u32 %v6026, 15
        %v6091 = vshrl.u32 %v6027, 15
        %v6092 = vshrl.u32 %v6028, 15
        %v6093 = vshrl.u32 %v6029, 15
        %v6094 = vshrl.u32 %v6030, 15
        %v6095 = vshrl.u32 %v6031, 15
        %v6096 = vshrl.u32 %v6032, 15
        %v6097 = vshrl.u32 %v6033, 15
        %v6098 = vshrl.u32 %v6034, 15
        %v6099 = vshrl.u32 %v6035, 15
        %v6100 = vshrl.u32 %v6036, 15
        %v6101 = vshrl.u32 %v6037, 15
        %v6102 = vshrl.u32 %v6038, 15
        %v6103 = vshrl.u32 %v6039, 15
        %v6104 = vshrl.u32 %v6040, 15
        %v6105 = vshrl.u32 %v6041, 15
        %v6106 = vshrl.u32 %v6042, 15
        %v6107 = vshrl.u32 %v6043, 15
        %v6108 = vshrl.u32 %v6044, 15
        %v6109 = vshrl.u32 %v6045, 15
        %v6110 = vshrl.u32 %v6046, 15
        %v6111 = vshrl.u32 %v6047, 15
        %v6112 = vshrl.u32 %v6048, 15
        %v6113 = vshrl.u32 %v6049, 15
        %v6114 = vshrl.u32 %v6050, 15
        %v6115 = vshrl.u32 %v6051, 15
        %v6116 = vshrl.u32 %v6052, 15
        %v6117 = vshrl.u32 %v6053, 15
        %v6118 = vshrl.u32 %v6054, 15
        %v6119 = vshrl.u32 %v6055, 15
        %v6120 = vshrl.u32 %v6056, 15
        %v6121 = vshrl.u32 %v6057, 15
        %v6122 = vshrl.u32 %v6058, 15
        %v6123 = vshrl.u32 %v6059, 15
        %v6124 = vshrl.u32 %v6060, 15
        %v6125 = vshrl.u32 %v6061, 15
        %v6126 = vshrl.u32 %v6062, 15
        %v6127 = vshrl.u32 %v6063, 15
        %v6128 = vshrl.u32 %v6064, 15
        %v6129 = vshrl.u32 %v6065, 15
        %v6130 = vshrl.u32 %v6066, 15
        %v6131 = vxor.u32 %v6003, %v6067
        %v6132 = vxor.u32 %v6004, %v6068
        %v6133 = vxor.u32 %v6005, %v6069
        %v6134 = vxor.u32 %v6006, %v6070
        %v6135 = vxor.u32 %v6007, %v6071
        %v6136 = vxor.u32 %v6008, %v6072
        %v6137 = vxor.u32 %v6009, %v6073
        %v6138 = vxor.u32 %v6010, %v6074
        %v6139 = vxor.u32 %v6011, %v6075
        %v6140 = vxor.u32 %v6012, %v6076
        %v6141 = vxor.u32 %v6013, %v6077
        %v6142 = vxor.u32 %v6014, %v6078
        %v6143 = vxor.u32 %v6015, %v6079
        %v6144 = vxor.u32 %v6016, %v6080
        %v6145 = vxor.u32 %v6017, %v6081
        %v6146 = vxor.u32 %v6018, %v6082
        %v6147 = vxor.u32 %v6019, %v6083
        %v6148 = vxor.u32 %v6020, %v6084
        %v6149 = vxor.u32 %v6021, %v6085
        %v6150 = vxor.u32 %v6022, %v6086
        %v6151 = vxor.u32 %v6023, %v6087
        %v6152 = vxor.u32 %v6024, %v6088
        %v6153 = vxor.u32 %v6025, %v6089
        %v6154 = vxor.u32 %v6026, %v6090
        %v6155 = vxor.u32 %v6027, %v6091
        %v6156 = vxor.u32 %v6028, %v6092
        %v6157 = vxor.u32 %v6029, %v6093
        %v6158 = vxor.u32 %v6030, %v6094
        %v6159 = vxor.u32 %v6031, %v6095
        %v6160 = vxor.u32 %v6032, %v6096
        %v6161 = vxor.u32 %v6033, %v6097
        %v6162 = vxor.u32 %v6034, %v6098
        %v6163 = vxor.u32 %v6035, %v6099
        %v6164 = vxor.u32 %v6036, %v6100
        %v6165 = vxor.u32 %v6037, %v6101
        %v6166 = vxor.u32 %v6038, %v6102
        %v6167 = vxor.u32 %v6039, %v6103
        %v6168 = vxor.u32 %v6040, %v6104
        %v6169 = vxor.u32 %v6041, %v6105
        %v6170 = vxor.u32 %v6042, %v6106
        %v6171 = vxor.u32 %v6043, %v6107
        %v6172 = vxor.u32 %v6044, %v6108
        %v6173 = vxor.u32 %v6045, %v6109
        %v6174 = vxor.u32 %v6046, %v6110
        %v6175 = vxor.u32 %v6047, %v6111
        %v6176 = vxor.u32 %v6048, %v6112
        %v6177 = vxor.u32 %v6049, %v6113
        %v6178 = vxor.u32 %v6050, %v6114
        %v6179 = vxor.u32 %v6051, %v6115
        %v6180 = vxor.u32 %v6052, %v6116
        %v6181 = vxor.u32 %v6053, %v6117
        %v6182 = vxor.u32 %v6054, %v6118
        %v6183 = vxor.u32 %v6055, %v6119
        %v6184 = vxor.u32 %v6056, %v6120
        %v6185 = vxor.u32 %v6057, %v6121
        %v6186 = vxor.u32 %v6058, %v6122
        %v6187 = vxor.u32 %v6059, %v6123
        %v6188 = vxor.u32 %v6060, %v6124
        %v6189 = vxor.u32 %v6061, %v6125
        %v6190 = vxor.u32 %v6062, %v6126
        %v6191 = vxor.u32 %v6063, %v6127
        %v6192 = vxor.u32 %v6064, %v6128
        %v6193 = vxor.u32 %v6065, %v6129
        %v6194 = vxor.u32 %v6066, %v6130
        %v6195 = vmul.u32 %v6131, 2221713035
        %v6196 = vmul.u32 %v6132, 2221713035
        %v6197 = vmul.u32 %v6133, 2221713035
        %v6198 = vmul.u32 %v6134, 2221713035
        %v6199 = vmul.u32 %v6135, 2221713035
        %v6200 = vmul.u32 %v6136, 2221713035
        %v6201 = vmul.u32 %v6137, 2221713035
        %v6202 = vmul.u32 %v6138, 2221713035
        %v6203 = vmul.u32 %v6139, 2221713035
        %v6204 = vmul.u32 %v6140, 2221713035
        %v6205 = vmul.u32 %v6141, 2221713035
        %v6206 = vmul.u32 %v6142, 2221713035
        %v6207 = vmul.u32 %v6143, 2221713035
        %v6208 = vmul.u32 %v6144, 2221713035
        %v6209 = vmul.u32 %v6145, 2221713035
        %v6210 = vmul.u32 %v6146, 2221713035
        %v6211 = vmul.u32 %v6147, 2221713035
        %v6212 = vmul.u32 %v6148, 2221713035
        %v6213 = vmul.u32 %v6149, 2221713035
        %v6214 = vmul.u32 %v6150, 2221713035
        %v6215 = vmul.u32 %v6151, 2221713035
        %v6216 = vmul.u32 %v6152, 2221713035
        %v6217 = vmul.u32 %v6153, 2221713035
        %v6218 = vmul.u32 %v6154, 2221713035
        %v6219 = vmul.u32 %v6155, 2221713035
        %v6220 = vmul.u32 %v6156, 2221713035
        %v6221 = vmul.u32 %v6157, 2221713035
        %v6222 = vmul.u32 %v6158, 2221713035
        %v6223 = vmul.u32 %v6159, 2221713035
        %v6224 = vmul.u32 %v6160, 2221713035
        %v6225 = vmul.u32 %v6161, 2221713035
        %v6226 = vmul.u32 %v6162, 2221713035
        %v6227 = vmul.u32 %v6163, 2221713035
        %v6228 = vmul.u32 %v6164, 2221713035
        %v6229 = vmul.u32 %v6165, 2221713035
        %v6230 = vmul.u32 %v6166, 2221713035
        %v6231 = vmul.u32 %v6167, 2221713035
        %v6232 = vmul.u32 %v6168, 2221713035
        %v6233 = vmul.u32 %v6169, 2221713035
        %v6234 = vmul.u32 %v6170, 2221713035
        %v6235 = vmul.u32 %v6171, 2221713035
        %v6236 = vmul.u32 %v6172, 2221713035
        %v6237 = vmul.u32 %v6173, 2221713035
        %v6238 = vmul.u32 %v6174, 2221713035
        %v6239 = vmul.u32 %v6175, 2221713035
        %v6240 = vmul.u32 %v6176, 2221713035
        %v6241 = vmul.u32 %v6177, 2221713035
        %v6242 = vmul.u32 %v6178, 2221713035
        %v6243 = vmul.u32 %v6179, 2221713035
        %v6244 = vmul.u32 %v6180, 2221713035
        %v6245 = vmul.u32 %v6181, 2221713035
        %v6246 = vmul.u32 %v6182, 2221713035
        %v6247 = vmul.u32 %v6183, 2221713035
        %v6248 = vmul.u32 %v6184, 2221713035
        %v6249 = vmul.u32 %v6185, 2221713035
        %v6250 = vmul.u32 %v6186, 2221713035
        %v6251 = vmul.u32 %v6187, 2221713035
        %v6252 = vmul.u32 %v6188, 2221713035
        %v6253 = vmul.u32 %v6189, 2221713035
        %v6254 = vmul.u32 %v6190, 2221713035
        %v6255 = vmul.u32 %v6191, 2221713035
        %v6256 = vmul.u32 %v6192, 2221713035
        %v6257 = vmul.u32 %v6193, 2221713035
        %v6258 = vmul.u32 %v6194, 2221713035
        %v6259 = vshrl.u32 %v6195, 16
        %v6260 = vshrl.u32 %v6196, 16
        %v6261 = vshrl.u32 %v6197, 16
        %v6262 = vshrl.u32 %v6198, 16
        %v6263 = vshrl.u32 %v6199, 16
        %v6264 = vshrl.u32 %v6200, 16
        %v6265 = vshrl.u32 %v6201, 16
        %v6266 = vshrl.u32 %v6202, 16
        %v6267 = vshrl.u32 %v6203, 16
        %v6268 = vshrl.u32 %v6204, 16
        %v6269 = vshrl.u32 %v6205, 16
        %v6270 = vshrl.u32 %v6206, 16
        %v6271 = vshrl.u32 %v6207, 16
        %v6272 = vshrl.u32 %v6208, 16
        %v6273 = vshrl.u32 %v6209, 16
        %v6274 = vshrl.u32 %v6210, 16
        %v6275 = vshrl.u32 %v6211, 16
        %v6276 = vshrl.u32 %v6212, 16
        %v6277 = vshrl.u32 %v6213, 16
        %v6278 = vshrl.u32 %v6214, 16
        %v6279 = vshrl.u32 %v6215, 16
        %v6280 = vshrl.u32 %v6216, 16
        %v6281 = vshrl.u32 %v6217, 16
        %v6282 = vshrl.u32 %v6218, 16
        %v6283 = vshrl.u32 %v6219, 16
        %v6284 = vshrl.u32 %v6220, 16
        %v6285 = vshrl.u32 %v6221, 16
        %v6286 = vshrl.u32 %v6222, 16
        %v6287 = vshrl.u32 %v6223, 16
        %v6288 = vshrl.u32 %v6224, 16
        %v6289 = vshrl.u32 %v6225, 16
        %v6290 = vshrl.u32 %v6226, 16
        %v6291 = vshrl.u32 %v6227, 16
        %v6292 = vshrl.u32 %v6228, 16
        %v6293 = vshrl.u32 %v6229, 16
        %v6294 = vshrl.u32 %v6230, 16
        %v6295 = vshrl.u32 %v6231, 16
        %v6296 = vshrl.u32 %v6232, 16
        %v6297 = vshrl.u32 %v6233, 16
        %v6298 = vshrl.u32 %v6234, 16
        %v6299 = vshrl.u32 %v6235, 16
        %v6300 = vshrl.u32 %v6236, 16
        %v6301 = vshrl.u32 %v6237, 16
        %v6302 = vshrl.u32 %v6238, 16
        %v6303 = vshrl.u32 %v6239, 16
        %v6304 = vshrl.u32 %v6240, 16
        %v6305 = vshrl.u32 %v6241, 16
        %v6306 = vshrl.u32 %v6242, 16
        %v6307 = vshrl.u32 %v6243, 16
        %v6308 = vshrl.u32 %v6244, 16
        %v6309 = vshrl.u32 %v6245, 16
        %v6310 = vshrl.u32 %v6246, 16
        %v6311 = vshrl.u32 %v6247, 16
        %v6312 = vshrl.u32 %v6248, 16
        %v6313 = vshrl.u32 %v6249, 16
        %v6314 = vshrl.u32 %v6250, 16
        %v6315 = vshrl.u32 %v6251, 16
        %v6316 = vshrl.u32 %v6252, 16
        %v6317 = vshrl.u32 %v6253, 16
        %v6318 = vshrl.u32 %v6254, 16
        %v6319 = vshrl.u32 %v6255, 16
        %v6320 = vshrl.u32 %v6256, 16
        %v6321 = vshrl.u32 %v6257, 16
        %v6322 = vshrl.u32 %v6258, 16
        %v6323 = vxor.u32 %v6195, %v6259
        %v6324 = vxor.u32 %v6196, %v6260
        %v6325 = vxor.u32 %v6197, %v6261
        %v6326 = vxor.u32 %v6198, %v6262
        %v6327 = vxor.u32 %v6199, %v6263
        %v6328 = vxor.u32 %v6200, %v6264
        %v6329 = vxor.u32 %v6201, %v6265
        %v6330 = vxor.u32 %v6202, %v6266
        %v6331 = vxor.u32 %v6203, %v6267
        %v6332 = vxor.u32 %v6204, %v6268
        %v6333 = vxor.u32 %v6205, %v6269
        %v6334 = vxor.u32 %v6206, %v6270
        %v6335 = vxor.u32 %v6207, %v6271
        %v6336 = vxor.u32 %v6208, %v6272
        %v6337 = vxor.u32 %v6209, %v6273
        %v6338 = vxor.u32 %v6210, %v6274
        %v6339 = vxor.u32 %v6211, %v6275
        %v6340 = vxor.u32 %v6212, %v6276
        %v6341 = vxor.u32 %v6213, %v6277
        %v6342 = vxor.u32 %v6214, %v6278
        %v6343 = vxor.u32 %v6215, %v6279
        %v6344 = vxor.u32 %v6216, %v6280
        %v6345 = vxor.u32 %v6217, %v6281
        %v6346 = vxor.u32 %v6218, %v6282
        %v6347 = vxor.u32 %v6219, %v6283
        %v6348 = vxor.u32 %v6220, %v6284
        %v6349 = vxor.u32 %v6221, %v6285
        %v6350 = vxor.u32 %v6222, %v6286
        %v6351 = vxor.u32 %v6223, %v6287
        %v6352 = vxor.u32 %v6224, %v6288
        %v6353 = vxor.u32 %v6225, %v6289
        %v6354 = vxor.u32 %v6226, %v6290
        %v6355 = vxor.u32 %v6227, %v6291
        %v6356 = vxor.u32 %v6228, %v6292
        %v6357 = vxor.u32 %v6229, %v6293
        %v6358 = vxor.u32 %v6230, %v6294
        %v6359 = vxor.u32 %v6231, %v6295
        %v6360 = vxor.u32 %v6232, %v6296
        %v6361 = vxor.u32 %v6233, %v6297
        %v6362 = vxor.u32 %v6234, %v6298
        %v6363 = vxor.u32 %v6235, %v6299
        %v6364 = vxor.u32 %v6236, %v6300
        %v6365 = vxor.u32 %v6237, %v6301
        %v6366 = vxor.u32 %v6238, %v6302
        %v6367 = vxor.u32 %v6239, %v6303
        %v6368 = vxor.u32 %v6240, %v6304
        %v6369 = vxor.u32 %v6241, %v6305
        %v6370 = vxor.u32 %v6242, %v6306
        %v6371 = vxor.u32 %v6243, %v6307
        %v6372 = vxor.u32 %v6244, %v6308
        %v6373 = vxor.u32 %v6245, %v6309
        %v6374 = vxor.u32 %v6246, %v6310
        %v6375 = vxor.u32 %v6247, %v6311
        %v6376 = vxor.u32 %v6248, %v6312
        %v6377 = vxor.u32 %v6249, %v6313
        %v6378 = vxor.u32 %v6250, %v6314
        %v6379 = vxor.u32 %v6251, %v6315
        %v6380 = vxor.u32 %v6252, %v6316
        %v6381 = vxor.u32 %v6253, %v6317
        %v6382 = vxor.u32 %v6254, %v6318
        %v6383 = vxor.u32 %v6255, %v6319
        %v6384 = vxor.u32 %v6256, %v6320
        %v6385 = vxor.u32 %v6257, %v6321
        %v6386 = vxor.u32 %v6258, %v6322
        %vm6387 = vcmp.ge.u32.totalorder %v6323, 1288490188
        %vm6388 = vcmp.ge.u32.totalorder %v6324, 1288490188
        %vm6389 = vcmp.ge.u32.totalorder %v6325, 1288490188
        %vm6390 = vcmp.ge.u32.totalorder %v6326, 1288490188
        %vm6391 = vcmp.ge.u32.totalorder %v6327, 1288490188
        %vm6392 = vcmp.ge.u32.totalorder %v6328, 1288490188
        %vm6393 = vcmp.ge.u32.totalorder %v6329, 1288490188
        %vm6394 = vcmp.ge.u32.totalorder %v6330, 1288490188
        %vm6395 = vcmp.ge.u32.totalorder %v6331, 1288490188
        %vm6396 = vcmp.ge.u32.totalorder %v6332, 1288490188
        %vm6397 = vcmp.ge.u32.totalorder %v6333, 1288490188
        %vm6398 = vcmp.ge.u32.totalorder %v6334, 1288490188
        %vm6399 = vcmp.ge.u32.totalorder %v6335, 1288490188
        %vm6400 = vcmp.ge.u32.totalorder %v6336, 1288490188
        %vm6401 = vcmp.ge.u32.totalorder %v6337, 1288490188
        %vm6402 = vcmp.ge.u32.totalorder %v6338, 1288490188
        %vm6403 = vcmp.ge.u32.totalorder %v6339, 1288490188
        %vm6404 = vcmp.ge.u32.totalorder %v6340, 1288490188
        %vm6405 = vcmp.ge.u32.totalorder %v6341, 1288490188
        %vm6406 = vcmp.ge.u32.totalorder %v6342, 1288490188
        %vm6407 = vcmp.ge.u32.totalorder %v6343, 1288490188
        %vm6408 = vcmp.ge.u32.totalorder %v6344, 1288490188
        %vm6409 = vcmp.ge.u32.totalorder %v6345, 1288490188
        %vm6410 = vcmp.ge.u32.totalorder %v6346, 1288490188
        %vm6411 = vcmp.ge.u32.totalorder %v6347, 1288490188
        %vm6412 = vcmp.ge.u32.totalorder %v6348, 1288490188
        %vm6413 = vcmp.ge.u32.totalorder %v6349, 1288490188
        %vm6414 = vcmp.ge.u32.totalorder %v6350, 1288490188
        %vm6415 = vcmp.ge.u32.totalorder %v6351, 1288490188
        %vm6416 = vcmp.ge.u32.totalorder %v6352, 1288490188
        %vm6417 = vcmp.ge.u32.totalorder %v6353, 1288490188
        %vm6418 = vcmp.ge.u32.totalorder %v6354, 1288490188
        %vm6419 = vcmp.ge.u32.totalorder %v6355, 1288490188
        %vm6420 = vcmp.ge.u32.totalorder %v6356, 1288490188
        %vm6421 = vcmp.ge.u32.totalorder %v6357, 1288490188
        %vm6422 = vcmp.ge.u32.totalorder %v6358, 1288490188
        %vm6423 = vcmp.ge.u32.totalorder %v6359, 1288490188
        %vm6424 = vcmp.ge.u32.totalorder %v6360, 1288490188
        %vm6425 = vcmp.ge.u32.totalorder %v6361, 1288490188
        %vm6426 = vcmp.ge.u32.totalorder %v6362, 1288490188
        %vm6427 = vcmp.ge.u32.totalorder %v6363, 1288490188
        %vm6428 = vcmp.ge.u32.totalorder %v6364, 1288490188
        %vm6429 = vcmp.ge.u32.totalorder %v6365, 1288490188
        %vm6430 = vcmp.ge.u32.totalorder %v6366, 1288490188
        %vm6431 = vcmp.ge.u32.totalorder %v6367, 1288490188
        %vm6432 = vcmp.ge.u32.totalorder %v6368, 1288490188
        %vm6433 = vcmp.ge.u32.totalorder %v6369, 1288490188
        %vm6434 = vcmp.ge.u32.totalorder %v6370, 1288490188
        %vm6435 = vcmp.ge.u32.totalorder %v6371, 1288490188
        %vm6436 = vcmp.ge.u32.totalorder %v6372, 1288490188
        %vm6437 = vcmp.ge.u32.totalorder %v6373, 1288490188
        %vm6438 = vcmp.ge.u32.totalorder %v6374, 1288490188
        %vm6439 = vcmp.ge.u32.totalorder %v6375, 1288490188
        %vm6440 = vcmp.ge.u32.totalorder %v6376, 1288490188
        %vm6441 = vcmp.ge.u32.totalorder %v6377, 1288490188
        %vm6442 = vcmp.ge.u32.totalorder %v6378, 1288490188
        %vm6443 = vcmp.ge.u32.totalorder %v6379, 1288490188
        %vm6444 = vcmp.ge.u32.totalorder %v6380, 1288490188
        %vm6445 = vcmp.ge.u32.totalorder %v6381, 1288490188
        %vm6446 = vcmp.ge.u32.totalorder %v6382, 1288490188
        %vm6447 = vcmp.ge.u32.totalorder %v6383, 1288490188
        %vm6448 = vcmp.ge.u32.totalorder %v6384, 1288490188
        %vm6449 = vcmp.ge.u32.totalorder %v6385, 1288490188
        %vm6450 = vcmp.ge.u32.totalorder %v6386, 1288490188
        %v6451 = vsel %vm6387, %v5729, 0.0
        %v6452 = vsel %vm6388, %v5730, 0.0
        %v6453 = vsel %vm6389, %v5731, 0.0
        %v6454 = vsel %vm6390, %v5732, 0.0
        %v6455 = vsel %vm6391, %v5733, 0.0
        %v6456 = vsel %vm6392, %v5734, 0.0
        %v6457 = vsel %vm6393, %v5735, 0.0
        %v6458 = vsel %vm6394, %v5736, 0.0
        %v6459 = vsel %vm6395, %v5737, 0.0
        %v6460 = vsel %vm6396, %v5738, 0.0
        %v6461 = vsel %vm6397, %v5739, 0.0
        %v6462 = vsel %vm6398, %v5740, 0.0
        %v6463 = vsel %vm6399, %v5741, 0.0
        %v6464 = vsel %vm6400, %v5742, 0.0
        %v6465 = vsel %vm6401, %v5743, 0.0
        %v6466 = vsel %vm6402, %v5744, 0.0
        %v6467 = vsel %vm6403, %v5745, 0.0
        %v6468 = vsel %vm6404, %v5746, 0.0
        %v6469 = vsel %vm6405, %v5747, 0.0
        %v6470 = vsel %vm6406, %v5748, 0.0
        %v6471 = vsel %vm6407, %v5749, 0.0
        %v6472 = vsel %vm6408, %v5750, 0.0
        %v6473 = vsel %vm6409, %v5751, 0.0
        %v6474 = vsel %vm6410, %v5752, 0.0
        %v6475 = vsel %vm6411, %v5753, 0.0
        %v6476 = vsel %vm6412, %v5754, 0.0
        %v6477 = vsel %vm6413, %v5755, 0.0
        %v6478 = vsel %vm6414, %v5756, 0.0
        %v6479 = vsel %vm6415, %v5757, 0.0
        %v6480 = vsel %vm6416, %v5758, 0.0
        %v6481 = vsel %vm6417, %v5759, 0.0
        %v6482 = vsel %vm6418, %v5760, 0.0
        %v6483 = vsel %vm6419, %v5761, 0.0
        %v6484 = vsel %vm6420, %v5762, 0.0
        %v6485 = vsel %vm6421, %v5763, 0.0
        %v6486 = vsel %vm6422, %v5764, 0.0
        %v6487 = vsel %vm6423, %v5765, 0.0
        %v6488 = vsel %vm6424, %v5766, 0.0
        %v6489 = vsel %vm6425, %v5767, 0.0
        %v6490 = vsel %vm6426, %v5768, 0.0
        %v6491 = vsel %vm6427, %v5769, 0.0
        %v6492 = vsel %vm6428, %v5770, 0.0
        %v6493 = vsel %vm6429, %v5771, 0.0
        %v6494 = vsel %vm6430, %v5772, 0.0
        %v6495 = vsel %vm6431, %v5773, 0.0
        %v6496 = vsel %vm6432, %v5774, 0.0
        %v6497 = vsel %vm6433, %v5775, 0.0
        %v6498 = vsel %vm6434, %v5776, 0.0
        %v6499 = vsel %vm6435, %v5777, 0.0
        %v6500 = vsel %vm6436, %v5778, 0.0
        %v6501 = vsel %vm6437, %v5779, 0.0
        %v6502 = vsel %vm6438, %v5780, 0.0
        %v6503 = vsel %vm6439, %v5781, 0.0
        %v6504 = vsel %vm6440, %v5782, 0.0
        %v6505 = vsel %vm6441, %v5783, 0.0
        %v6506 = vsel %vm6442, %v5784, 0.0
        %v6507 = vsel %vm6443, %v5785, 0.0
        %v6508 = vsel %vm6444, %v5786, 0.0
        %v6509 = vsel %vm6445, %v5787, 0.0
        %v6510 = vsel %vm6446, %v5788, 0.0
        %v6511 = vsel %vm6447, %v5789, 0.0
        %v6512 = vsel %vm6448, %v5790, 0.0
        %v6513 = vsel %vm6449, %v5791, 0.0
        %v6514 = vsel %vm6450, %v5792, 0.0
        %v6515 = vpack.c.bf16 %v6455, %v6451
        %v6516 = vpack.c.bf16 %v6456, %v6452
        %v6517 = vpack.c.bf16 %v6457, %v6453
        %v6518 = vpack.c.bf16 %v6458, %v6454
        %v6519 = vpack.c.bf16 %v6463, %v6459
        %v6520 = vpack.c.bf16 %v6464, %v6460
        %v6521 = vpack.c.bf16 %v6465, %v6461
        %v6522 = vpack.c.bf16 %v6466, %v6462
        %v6523 = vpack.c.bf16 %v6471, %v6467
        %v6524 = vpack.c.bf16 %v6472, %v6468
        %v6525 = vpack.c.bf16 %v6473, %v6469
        %v6526 = vpack.c.bf16 %v6474, %v6470
        %v6527 = vpack.c.bf16 %v6479, %v6475
        %v6528 = vpack.c.bf16 %v6480, %v6476
        %v6529 = vpack.c.bf16 %v6481, %v6477
        %v6530 = vpack.c.bf16 %v6482, %v6478
        %v6531 = vpack.c.bf16 %v6487, %v6483
        %v6532 = vpack.c.bf16 %v6488, %v6484
        %v6533 = vpack.c.bf16 %v6489, %v6485
        %v6534 = vpack.c.bf16 %v6490, %v6486
        %v6535 = vpack.c.bf16 %v6495, %v6491
        %v6536 = vpack.c.bf16 %v6496, %v6492
        %v6537 = vpack.c.bf16 %v6497, %v6493
        %v6538 = vpack.c.bf16 %v6498, %v6494
        %v6539 = vpack.c.bf16 %v6503, %v6499
        %v6540 = vpack.c.bf16 %v6504, %v6500
        %v6541 = vpack.c.bf16 %v6505, %v6501
        %v6542 = vpack.c.bf16 %v6506, %v6502
        %v6543 = vpack.c.bf16 %v6511, %v6507
        %v6544 = vpack.c.bf16 %v6512, %v6508
        %v6545 = vpack.c.bf16 %v6513, %v6509
        %v6546 = vpack.c.bf16 %v6514, %v6510
        %v6548 = vlaneseq
        %v6549 = vshrl.u32 %v6548, 7
        %v6550 = vsub.s32 0, %v6549
        %v6551 = vrot.slane %v752, %v6550
        %v6552 = vlaneseq
        %v6553 = vshrl.u32 %v6552, 7
        %v6554 = vsub.s32 1, %v6553
        %v6555 = vrot.slane %v752, %v6554
        %v6622 = vunpack.c.l.b16 %v688
        %v6623 = vunpack.c.h.b16 %v688
        %v6624 = vunpack.c.l.b16 %v689
        %v6625 = vunpack.c.h.b16 %v689
        %v6626 = vunpack.c.l.b16 %v690
        %v6627 = vunpack.c.h.b16 %v690
        %v6628 = vunpack.c.l.b16 %v691
        %v6629 = vunpack.c.h.b16 %v691
        %v6630 = vunpack.c.l.b16 %v692
        %v6631 = vunpack.c.h.b16 %v692
        %v6632 = vunpack.c.l.b16 %v693
        %v6633 = vunpack.c.h.b16 %v693
        %v6634 = vunpack.c.l.b16 %v694
        %v6635 = vunpack.c.h.b16 %v694
        %v6636 = vunpack.c.l.b16 %v695
        %v6637 = vunpack.c.h.b16 %v695
        %v6638 = vunpack.c.l.b16 %v696
        %v6639 = vunpack.c.h.b16 %v696
        %v6640 = vunpack.c.l.b16 %v697
        %v6641 = vunpack.c.h.b16 %v697
        %v6642 = vunpack.c.l.b16 %v698
        %v6643 = vunpack.c.h.b16 %v698
        %v6644 = vunpack.c.l.b16 %v699
        %v6645 = vunpack.c.h.b16 %v699
        %v6646 = vunpack.c.l.b16 %v700
        %v6647 = vunpack.c.h.b16 %v700
        %v6648 = vunpack.c.l.b16 %v701
        %v6649 = vunpack.c.h.b16 %v701
        %v6650 = vunpack.c.l.b16 %v702
        %v6651 = vunpack.c.h.b16 %v702
        %v6652 = vunpack.c.l.b16 %v703
        %v6653 = vunpack.c.h.b16 %v703
        %v6654 = vunpack.c.l.b16 %v704
        %v6655 = vunpack.c.h.b16 %v704
        %v6656 = vunpack.c.l.b16 %v705
        %v6657 = vunpack.c.h.b16 %v705
        %v6658 = vunpack.c.l.b16 %v706
        %v6659 = vunpack.c.h.b16 %v706
        %v6660 = vunpack.c.l.b16 %v707
        %v6661 = vunpack.c.h.b16 %v707
        %v6662 = vunpack.c.l.b16 %v708
        %v6663 = vunpack.c.h.b16 %v708
        %v6664 = vunpack.c.l.b16 %v709
        %v6665 = vunpack.c.h.b16 %v709
        %v6666 = vunpack.c.l.b16 %v710
        %v6667 = vunpack.c.h.b16 %v710
        %v6668 = vunpack.c.l.b16 %v711
        %v6669 = vunpack.c.h.b16 %v711
        %v6670 = vunpack.c.l.b16 %v712
        %v6671 = vunpack.c.h.b16 %v712
        %v6672 = vunpack.c.l.b16 %v713
        %v6673 = vunpack.c.h.b16 %v713
        %v6674 = vunpack.c.l.b16 %v714
        %v6675 = vunpack.c.h.b16 %v714
        %v6676 = vunpack.c.l.b16 %v715
        %v6677 = vunpack.c.h.b16 %v715
        %v6678 = vunpack.c.l.b16 %v716
        %v6679 = vunpack.c.h.b16 %v716
        %v6680 = vunpack.c.l.b16 %v717
        %v6681 = vunpack.c.h.b16 %v717
        %v6682 = vunpack.c.l.b16 %v718
        %v6683 = vunpack.c.h.b16 %v718
        %v6684 = vunpack.c.l.b16 %v719
        %v6685 = vunpack.c.h.b16 %v719
        %v6686 = vunpack.c.l.b16 %v720
        %v6687 = vunpack.c.h.b16 %v720
        %v6688 = vunpack.c.l.b16 %v721
        %v6689 = vunpack.c.h.b16 %v721
        %v6690 = vunpack.c.l.b16 %v722
        %v6691 = vunpack.c.h.b16 %v722
        %v6692 = vunpack.c.l.b16 %v723
        %v6693 = vunpack.c.h.b16 %v723
        %v6694 = vunpack.c.l.b16 %v724
        %v6695 = vunpack.c.h.b16 %v724
        %v6696 = vunpack.c.l.b16 %v725
        %v6697 = vunpack.c.h.b16 %v725
        %v6698 = vunpack.c.l.b16 %v726
        %v6699 = vunpack.c.h.b16 %v726
        %v6700 = vunpack.c.l.b16 %v727
        %v6701 = vunpack.c.h.b16 %v727
        %v6702 = vunpack.c.l.b16 %v728
        %v6703 = vunpack.c.h.b16 %v728
        %v6704 = vunpack.c.l.b16 %v729
        %v6705 = vunpack.c.h.b16 %v729
        %v6706 = vunpack.c.l.b16 %v730
        %v6707 = vunpack.c.h.b16 %v730
        %v6708 = vunpack.c.l.b16 %v731
        %v6709 = vunpack.c.h.b16 %v731
        %v6710 = vunpack.c.l.b16 %v732
        %v6711 = vunpack.c.h.b16 %v732
        %v6712 = vunpack.c.l.b16 %v733
        %v6713 = vunpack.c.h.b16 %v733
        %v6714 = vunpack.c.l.b16 %v734
        %v6715 = vunpack.c.h.b16 %v734
        %v6716 = vunpack.c.l.b16 %v735
        %v6717 = vunpack.c.h.b16 %v735
        %v6718 = vunpack.c.l.b16 %v736
        %v6719 = vunpack.c.h.b16 %v736
        %v6720 = vunpack.c.l.b16 %v737
        %v6721 = vunpack.c.h.b16 %v737
        %v6722 = vunpack.c.l.b16 %v738
        %v6723 = vunpack.c.h.b16 %v738
        %v6724 = vunpack.c.l.b16 %v739
        %v6725 = vunpack.c.h.b16 %v739
        %v6726 = vunpack.c.l.b16 %v740
        %v6727 = vunpack.c.h.b16 %v740
        %v6728 = vunpack.c.l.b16 %v741
        %v6729 = vunpack.c.h.b16 %v741
        %v6730 = vunpack.c.l.b16 %v742
        %v6731 = vunpack.c.h.b16 %v742
        %v6732 = vunpack.c.l.b16 %v743
        %v6733 = vunpack.c.h.b16 %v743
        %v6734 = vunpack.c.l.b16 %v744
        %v6735 = vunpack.c.h.b16 %v744
        %v6736 = vunpack.c.l.b16 %v745
        %v6737 = vunpack.c.h.b16 %v745
        %v6738 = vunpack.c.l.b16 %v746
        %v6739 = vunpack.c.h.b16 %v746
        %v6740 = vunpack.c.l.b16 %v747
        %v6741 = vunpack.c.h.b16 %v747
        %v6742 = vunpack.c.l.b16 %v748
        %v6743 = vunpack.c.h.b16 %v748
        %v6744 = vunpack.c.l.b16 %v749
        %v6745 = vunpack.c.h.b16 %v749
        %v6746 = vunpack.c.l.b16 %v750
        %v6747 = vunpack.c.h.b16 %v750
        %v6748 = vunpack.c.l.b16 %v751
        %v6749 = vunpack.c.h.b16 %v751
        %v6750 = vpack.c.b16 %v6624, %v6622
        %v6751 = vpack.c.b16 %v6625, %v6623
        %v6752 = vpack.c.b16 %v6628, %v6626
        %v6753 = vpack.c.b16 %v6629, %v6627
        %v6754 = vpack.c.b16 %v6632, %v6630
        %v6755 = vpack.c.b16 %v6633, %v6631
        %v6756 = vpack.c.b16 %v6636, %v6634
        %v6757 = vpack.c.b16 %v6637, %v6635
        %v6758 = vpack.c.b16 %v6640, %v6638
        %v6759 = vpack.c.b16 %v6641, %v6639
        %v6760 = vpack.c.b16 %v6644, %v6642
        %v6761 = vpack.c.b16 %v6645, %v6643
        %v6762 = vpack.c.b16 %v6648, %v6646
        %v6763 = vpack.c.b16 %v6649, %v6647
        %v6764 = vpack.c.b16 %v6652, %v6650
        %v6765 = vpack.c.b16 %v6653, %v6651
        %v6766 = vpack.c.b16 %v6656, %v6654
        %v6767 = vpack.c.b16 %v6657, %v6655
        %v6768 = vpack.c.b16 %v6660, %v6658
        %v6769 = vpack.c.b16 %v6661, %v6659
        %v6770 = vpack.c.b16 %v6664, %v6662
        %v6771 = vpack.c.b16 %v6665, %v6663
        %v6772 = vpack.c.b16 %v6668, %v6666
        %v6773 = vpack.c.b16 %v6669, %v6667
        %v6774 = vpack.c.b16 %v6672, %v6670
        %v6775 = vpack.c.b16 %v6673, %v6671
        %v6776 = vpack.c.b16 %v6676, %v6674
        %v6777 = vpack.c.b16 %v6677, %v6675
        %v6778 = vpack.c.b16 %v6680, %v6678
        %v6779 = vpack.c.b16 %v6681, %v6679
        %v6780 = vpack.c.b16 %v6684, %v6682
        %v6781 = vpack.c.b16 %v6685, %v6683
        %v6782 = vpack.c.b16 %v6688, %v6686
        %v6783 = vpack.c.b16 %v6689, %v6687
        %v6784 = vpack.c.b16 %v6692, %v6690
        %v6785 = vpack.c.b16 %v6693, %v6691
        %v6786 = vpack.c.b16 %v6696, %v6694
        %v6787 = vpack.c.b16 %v6697, %v6695
        %v6788 = vpack.c.b16 %v6700, %v6698
        %v6789 = vpack.c.b16 %v6701, %v6699
        %v6790 = vpack.c.b16 %v6704, %v6702
        %v6791 = vpack.c.b16 %v6705, %v6703
        %v6792 = vpack.c.b16 %v6708, %v6706
        %v6793 = vpack.c.b16 %v6709, %v6707
        %v6794 = vpack.c.b16 %v6712, %v6710
        %v6795 = vpack.c.b16 %v6713, %v6711
        %v6796 = vpack.c.b16 %v6716, %v6714
        %v6797 = vpack.c.b16 %v6717, %v6715
        %v6798 = vpack.c.b16 %v6720, %v6718
        %v6799 = vpack.c.b16 %v6721, %v6719
        %v6800 = vpack.c.b16 %v6724, %v6722
        %v6801 = vpack.c.b16 %v6725, %v6723
        %v6802 = vpack.c.b16 %v6728, %v6726
        %v6803 = vpack.c.b16 %v6729, %v6727
        %v6804 = vpack.c.b16 %v6732, %v6730
        %v6805 = vpack.c.b16 %v6733, %v6731
        %v6806 = vpack.c.b16 %v6736, %v6734
        %v6807 = vpack.c.b16 %v6737, %v6735
        %v6808 = vpack.c.b16 %v6740, %v6738
        %v6809 = vpack.c.b16 %v6741, %v6739
        %v6810 = vpack.c.b16 %v6744, %v6742
        %v6811 = vpack.c.b16 %v6745, %v6743
        %v6812 = vpack.c.b16 %v6748, %v6746
        %v6813 = vpack.c.b16 %v6749, %v6747
        %6878 = vmatprep.subr.bf16.mxu0 %v6765
        %6879 = vmatpush1.bf16.msra.mxu0 %v6764
        %6880 = vmatprep.subr.bf16.mxu0 %v6763
        %6881 = vmatpush1.bf16.msra.mxu0 %v6762
        %6882 = vmatprep.subr.bf16.mxu0 %v6761
        %6883 = vmatpush1.bf16.msra.mxu0 %v6760
        %6884 = vmatprep.subr.bf16.mxu0 %v6759
        %6885 = vmatpush1.bf16.msra.mxu0 %v6758
        %6886 = vmatprep.subr.bf16.mxu0 %v6757
        %6887 = vmatpush1.bf16.msra.mxu0 %v6756
        %6888 = vmatprep.subr.bf16.mxu0 %v6755
        %6889 = vmatpush1.bf16.msra.mxu0 %v6754
        %6890 = vmatprep.subr.bf16.mxu0 %v6753
        %6891 = vmatpush1.bf16.msra.mxu0 %v6752
        %6892 = vmatprep.subr.bf16.mxu0 %v6751
        %6893 = vmatpush1.bf16.msra.mxu0 %v6750
        %6894 = vmatprep.subr.bf16.mxu0 %v6781
        %6895 = vmatpush2.bf16.msra.mxu0 %v6780
        %6896 = vmatprep.subr.bf16.mxu0 %v6779
        %6897 = vmatpush2.bf16.msra.mxu0 %v6778
        %6898 = vmatprep.subr.bf16.mxu0 %v6777
        %6899 = vmatpush2.bf16.msra.mxu0 %v6776
        %6900 = vmatprep.subr.bf16.mxu0 %v6775
        %6901 = vmatpush2.bf16.msra.mxu0 %v6774
        %6902 = vmatprep.subr.bf16.mxu0 %v6773
        %6903 = vmatpush2.bf16.msra.mxu0 %v6772
        %6904 = vmatprep.subr.bf16.mxu0 %v6771
        %6905 = vmatpush2.bf16.msra.mxu0 %v6770
        %6906 = vmatprep.subr.bf16.mxu0 %v6769
        %6907 = vmatpush2.bf16.msra.mxu0 %v6768
        %6908 = vmatprep.subr.bf16.mxu0 %v6767
        %6909 = vmatpush2.bf16.msra.mxu0 %v6766
        %6910 = vmatprep.mubr.bf16.mxu0 %v6516
        %6911 = vmatmul.mubr.bf16.gmra.mxu0 %v6515
        %v6912 = vpop.f32.mrf.mxu0
        %v6913 = vadd.f32 %v6551, %v6912
        %v6914 = vpop.f32.mrf.mxu0
        %v6915 = vadd.f32 %v6555, %v6914
        %v6916 = vpop.f32.mrf.mxu0
        %v6917 = vadd.f32 %v6551, %v6916
        %v6918 = vpop.f32.mrf.mxu0
        %v6919 = vadd.f32 %v6555, %v6918
        %6920 = vmatprep.mubr.bf16.mxu0 %v6520
        %6921 = vmatmul.mubr.bf16.gmra.mxu0 %v6519
        %v6922 = vpop.f32.mrf.mxu0
        %v6923 = vadd.f32 %v6551, %v6922
        %v6924 = vpop.f32.mrf.mxu0
        %v6925 = vadd.f32 %v6555, %v6924
        %v6926 = vpop.f32.mrf.mxu0
        %v6927 = vadd.f32 %v6551, %v6926
        %v6928 = vpop.f32.mrf.mxu0
        %v6929 = vadd.f32 %v6555, %v6928
        %6930 = vmatprep.mubr.bf16.mxu0 %v6524
        %6931 = vmatmul.mubr.bf16.gmra.mxu0 %v6523
        %v6932 = vpop.f32.mrf.mxu0
        %v6933 = vadd.f32 %v6551, %v6932
        %v6934 = vpop.f32.mrf.mxu0
        %v6935 = vadd.f32 %v6555, %v6934
        %v6936 = vpop.f32.mrf.mxu0
        %v6937 = vadd.f32 %v6551, %v6936
        %v6938 = vpop.f32.mrf.mxu0
        %v6939 = vadd.f32 %v6555, %v6938
        %6940 = vmatprep.mubr.bf16.mxu0 %v6528
        %6941 = vmatmul.mubr.bf16.gmra.mxu0 %v6527
        %v6942 = vpop.f32.mrf.mxu0
        %v6943 = vadd.f32 %v6551, %v6942
        %v6944 = vpop.f32.mrf.mxu0
        %v6945 = vadd.f32 %v6555, %v6944
        %v6946 = vpop.f32.mrf.mxu0
        %v6947 = vadd.f32 %v6551, %v6946
        %v6948 = vpop.f32.mrf.mxu0
        %v6949 = vadd.f32 %v6555, %v6948
        %6950 = vmatprep.mubr.bf16.mxu0 %v6532
        %6951 = vmatmul.mubr.bf16.gmra.mxu0 %v6531
        %v6952 = vpop.f32.mrf.mxu0
        %v6953 = vadd.f32 %v6551, %v6952
        %v6954 = vpop.f32.mrf.mxu0
        %v6955 = vadd.f32 %v6555, %v6954
        %v6956 = vpop.f32.mrf.mxu0
        %v6957 = vadd.f32 %v6551, %v6956
        %v6958 = vpop.f32.mrf.mxu0
        %v6959 = vadd.f32 %v6555, %v6958
        %6960 = vmatprep.mubr.bf16.mxu0 %v6536
        %6961 = vmatmul.mubr.bf16.gmra.mxu0 %v6535
        %v6962 = vpop.f32.mrf.mxu0
        %v6963 = vadd.f32 %v6551, %v6962
        %v6964 = vpop.f32.mrf.mxu0
        %v6965 = vadd.f32 %v6555, %v6964
        %v6966 = vpop.f32.mrf.mxu0
        %v6967 = vadd.f32 %v6551, %v6966
        %v6968 = vpop.f32.mrf.mxu0
        %v6969 = vadd.f32 %v6555, %v6968
        %6970 = vmatprep.mubr.bf16.mxu0 %v6540
        %6971 = vmatmul.mubr.bf16.gmra.mxu0 %v6539
        %v6972 = vpop.f32.mrf.mxu0
        %v6973 = vadd.f32 %v6551, %v6972
        %v6974 = vpop.f32.mrf.mxu0
        %v6975 = vadd.f32 %v6555, %v6974
        %v6976 = vpop.f32.mrf.mxu0
        %v6977 = vadd.f32 %v6551, %v6976
        %v6978 = vpop.f32.mrf.mxu0
        %v6979 = vadd.f32 %v6555, %v6978
        %6980 = vmatprep.mubr.bf16.mxu0 %v6544
        %6981 = vmatmul.mubr.bf16.gmra.mxu0 %v6543
        %v6982 = vpop.f32.mrf.mxu0
        %v6983 = vadd.f32 %v6551, %v6982
        %v6984 = vpop.f32.mrf.mxu0
        %v6985 = vadd.f32 %v6555, %v6984
        %v6986 = vpop.f32.mrf.mxu0
        %v6987 = vadd.f32 %v6551, %v6986
        %v6988 = vpop.f32.mrf.mxu0
        %v6989 = vadd.f32 %v6555, %v6988
        %6990 = vdwg.mxu0
        %6991 = vmatprep.subr.bf16.mxu0 %v6797
        %6992 = vmatpush1.bf16.msra.mxu0 %v6796
        %6993 = vmatprep.subr.bf16.mxu0 %v6795
        %6994 = vmatpush1.bf16.msra.mxu0 %v6794
        %6995 = vmatprep.subr.bf16.mxu0 %v6793
        %6996 = vmatpush1.bf16.msra.mxu0 %v6792
        %6997 = vmatprep.subr.bf16.mxu0 %v6791
        %6998 = vmatpush1.bf16.msra.mxu0 %v6790
        %6999 = vmatprep.subr.bf16.mxu0 %v6789
        %7000 = vmatpush1.bf16.msra.mxu0 %v6788
        %7001 = vmatprep.subr.bf16.mxu0 %v6787
        %7002 = vmatpush1.bf16.msra.mxu0 %v6786
        %7003 = vmatprep.subr.bf16.mxu0 %v6785
        %7004 = vmatpush1.bf16.msra.mxu0 %v6784
        %7005 = vmatprep.subr.bf16.mxu0 %v6783
        %7006 = vmatpush1.bf16.msra.mxu0 %v6782
        %7007 = vmatprep.subr.bf16.mxu0 %v6813
        %7008 = vmatpush2.bf16.msra.mxu0 %v6812
        %7009 = vmatprep.subr.bf16.mxu0 %v6811
        %7010 = vmatpush2.bf16.msra.mxu0 %v6810
        %7011 = vmatprep.subr.bf16.mxu0 %v6809
        %7012 = vmatpush2.bf16.msra.mxu0 %v6808
        %7013 = vmatprep.subr.bf16.mxu0 %v6807
        %7014 = vmatpush2.bf16.msra.mxu0 %v6806
        %7015 = vmatprep.subr.bf16.mxu0 %v6805
        %7016 = vmatpush2.bf16.msra.mxu0 %v6804
        %7017 = vmatprep.subr.bf16.mxu0 %v6803
        %7018 = vmatpush2.bf16.msra.mxu0 %v6802
        %7019 = vmatprep.subr.bf16.mxu0 %v6801
        %7020 = vmatpush2.bf16.msra.mxu0 %v6800
        %7021 = vmatprep.subr.bf16.mxu0 %v6799
        %7022 = vmatpush2.bf16.msra.mxu0 %v6798
        %7023 = vmatprep.mubr.bf16.mxu0 %v6518
        %7024 = vmatmul.mubr.bf16.gmra.mxu0 %v6517
        %v7025 = vpop.f32.mrf.mxu0
        %v7026 = vadd.f32 %v6913, %v7025
        %v7027 = vpop.f32.mrf.mxu0
        %v7028 = vadd.f32 %v6915, %v7027
        %v7029 = vpop.f32.mrf.mxu0
        %v7030 = vadd.f32 %v6917, %v7029
        %v7031 = vpop.f32.mrf.mxu0
        %v7032 = vadd.f32 %v6919, %v7031
        %7033 = vmatprep.mubr.bf16.mxu0 %v6522
        %7034 = vmatmul.mubr.bf16.gmra.mxu0 %v6521
        %v7035 = vpop.f32.mrf.mxu0
        %v7036 = vadd.f32 %v6923, %v7035
        %v7037 = vpop.f32.mrf.mxu0
        %v7038 = vadd.f32 %v6925, %v7037
        %v7039 = vpop.f32.mrf.mxu0
        %v7040 = vadd.f32 %v6927, %v7039
        %v7041 = vpop.f32.mrf.mxu0
        %v7042 = vadd.f32 %v6929, %v7041
        %7043 = vmatprep.mubr.bf16.mxu0 %v6526
        %7044 = vmatmul.mubr.bf16.gmra.mxu0 %v6525
        %v7045 = vpop.f32.mrf.mxu0
        %v7046 = vadd.f32 %v6933, %v7045
        %v7047 = vpop.f32.mrf.mxu0
        %v7048 = vadd.f32 %v6935, %v7047
        %v7049 = vpop.f32.mrf.mxu0
        %v7050 = vadd.f32 %v6937, %v7049
        %v7051 = vpop.f32.mrf.mxu0
        %v7052 = vadd.f32 %v6939, %v7051
        %7053 = vmatprep.mubr.bf16.mxu0 %v6530
        %7054 = vmatmul.mubr.bf16.gmra.mxu0 %v6529
        %v7055 = vpop.f32.mrf.mxu0
        %v7056 = vadd.f32 %v6943, %v7055
        %v7057 = vpop.f32.mrf.mxu0
        %v7058 = vadd.f32 %v6945, %v7057
        %v7059 = vpop.f32.mrf.mxu0
        %v7060 = vadd.f32 %v6947, %v7059
        %v7061 = vpop.f32.mrf.mxu0
        %v7062 = vadd.f32 %v6949, %v7061
        %7063 = vmatprep.mubr.bf16.mxu0 %v6534
        %7064 = vmatmul.mubr.bf16.gmra.mxu0 %v6533
        %v7065 = vpop.f32.mrf.mxu0
        %v7066 = vadd.f32 %v6953, %v7065
        %v7067 = vpop.f32.mrf.mxu0
        %v7068 = vadd.f32 %v6955, %v7067
        %v7069 = vpop.f32.mrf.mxu0
        %v7070 = vadd.f32 %v6957, %v7069
        %v7071 = vpop.f32.mrf.mxu0
        %v7072 = vadd.f32 %v6959, %v7071
        %7073 = vmatprep.mubr.bf16.mxu0 %v6538
        %7074 = vmatmul.mubr.bf16.gmra.mxu0 %v6537
        %v7075 = vpop.f32.mrf.mxu0
        %v7076 = vadd.f32 %v6963, %v7075
        %v7077 = vpop.f32.mrf.mxu0
        %v7078 = vadd.f32 %v6965, %v7077
        %v7079 = vpop.f32.mrf.mxu0
        %v7080 = vadd.f32 %v6967, %v7079
        %v7081 = vpop.f32.mrf.mxu0
        %v7082 = vadd.f32 %v6969, %v7081
        %7083 = vmatprep.mubr.bf16.mxu0 %v6542
        %7084 = vmatmul.mubr.bf16.gmra.mxu0 %v6541
        %v7085 = vpop.f32.mrf.mxu0
        %v7086 = vadd.f32 %v6973, %v7085
        %v7087 = vpop.f32.mrf.mxu0
        %v7088 = vadd.f32 %v6975, %v7087
        %v7089 = vpop.f32.mrf.mxu0
        %v7090 = vadd.f32 %v6977, %v7089
        %v7091 = vpop.f32.mrf.mxu0
        %v7092 = vadd.f32 %v6979, %v7091
        %7093 = vmatprep.mubr.bf16.mxu0 %v6546
        %7094 = vmatmul.mubr.bf16.gmra.mxu0 %v6545
        %v7095 = vpop.f32.mrf.mxu0
        %v7096 = vadd.f32 %v6983, %v7095
        %v7097 = vpop.f32.mrf.mxu0
        %v7098 = vadd.f32 %v6985, %v7097
        %v7099 = vpop.f32.mrf.mxu0
        %v7100 = vadd.f32 %v6987, %v7099
        %v7101 = vpop.f32.mrf.mxu0
        %v7102 = vadd.f32 %v6989, %v7101
        %7103 = vdwg.mxu0
        %vm7104 = vcmp.gt.f32.partialorder %v7026, 0.0
        %vm7105 = vcmp.gt.f32.partialorder %v7028, 0.0
        %vm7106 = vcmp.gt.f32.partialorder %v7030, 0.0
        %vm7107 = vcmp.gt.f32.partialorder %v7032, 0.0
        %vm7108 = vcmp.gt.f32.partialorder %v7036, 0.0
        %vm7109 = vcmp.gt.f32.partialorder %v7038, 0.0
        %vm7110 = vcmp.gt.f32.partialorder %v7040, 0.0
        %vm7111 = vcmp.gt.f32.partialorder %v7042, 0.0
        %vm7112 = vcmp.gt.f32.partialorder %v7046, 0.0
        %vm7113 = vcmp.gt.f32.partialorder %v7048, 0.0
        %vm7114 = vcmp.gt.f32.partialorder %v7050, 0.0
        %vm7115 = vcmp.gt.f32.partialorder %v7052, 0.0
        %vm7116 = vcmp.gt.f32.partialorder %v7056, 0.0
        %vm7117 = vcmp.gt.f32.partialorder %v7058, 0.0
        %vm7118 = vcmp.gt.f32.partialorder %v7060, 0.0
        %vm7119 = vcmp.gt.f32.partialorder %v7062, 0.0
        %vm7120 = vcmp.gt.f32.partialorder %v7066, 0.0
        %vm7121 = vcmp.gt.f32.partialorder %v7068, 0.0
        %vm7122 = vcmp.gt.f32.partialorder %v7070, 0.0
        %vm7123 = vcmp.gt.f32.partialorder %v7072, 0.0
        %vm7124 = vcmp.gt.f32.partialorder %v7076, 0.0
        %vm7125 = vcmp.gt.f32.partialorder %v7078, 0.0
        %vm7126 = vcmp.gt.f32.partialorder %v7080, 0.0
        %vm7127 = vcmp.gt.f32.partialorder %v7082, 0.0
        %vm7128 = vcmp.gt.f32.partialorder %v7086, 0.0
        %vm7129 = vcmp.gt.f32.partialorder %v7088, 0.0
        %vm7130 = vcmp.gt.f32.partialorder %v7090, 0.0
        %vm7131 = vcmp.gt.f32.partialorder %v7092, 0.0
        %vm7132 = vcmp.gt.f32.partialorder %v7096, 0.0
        %vm7133 = vcmp.gt.f32.partialorder %v7098, 0.0
        %vm7134 = vcmp.gt.f32.partialorder %v7100, 0.0
        %vm7135 = vcmp.gt.f32.partialorder %v7102, 0.0
        %v7136 = vmul.f32 %v7026, 0.2
        %v7137 = vmul.f32 %v7028, 0.2
        %v7138 = vmul.f32 %v7030, 0.2
        %v7139 = vmul.f32 %v7032, 0.2
        %v7140 = vmul.f32 %v7036, 0.2
        %v7141 = vmul.f32 %v7038, 0.2
        %v7142 = vmul.f32 %v7040, 0.2
        %v7143 = vmul.f32 %v7042, 0.2
        %v7144 = vmul.f32 %v7046, 0.2
        %v7145 = vmul.f32 %v7048, 0.2
        %v7146 = vmul.f32 %v7050, 0.2
        %v7147 = vmul.f32 %v7052, 0.2
        %v7148 = vmul.f32 %v7056, 0.2
        %v7149 = vmul.f32 %v7058, 0.2
        %v7150 = vmul.f32 %v7060, 0.2
        %v7151 = vmul.f32 %v7062, 0.2
        %v7152 = vmul.f32 %v7066, 0.2
        %v7153 = vmul.f32 %v7068, 0.2
        %v7154 = vmul.f32 %v7070, 0.2
        %v7155 = vmul.f32 %v7072, 0.2
        %v7156 = vmul.f32 %v7076, 0.2
        %v7157 = vmul.f32 %v7078, 0.2
        %v7158 = vmul.f32 %v7080, 0.2
        %v7159 = vmul.f32 %v7082, 0.2
        %v7160 = vmul.f32 %v7086, 0.2
        %v7161 = vmul.f32 %v7088, 0.2
        %v7162 = vmul.f32 %v7090, 0.2
        %v7163 = vmul.f32 %v7092, 0.2
        %v7164 = vmul.f32 %v7096, 0.2
        %v7165 = vmul.f32 %v7098, 0.2
        %v7166 = vmul.f32 %v7100, 0.2
        %v7167 = vmul.f32 %v7102, 0.2
        %v7168 = vsel %vm7104, %v7026, %v7136
        %v7169 = vsel %vm7105, %v7028, %v7137
        %v7170 = vsel %vm7106, %v7030, %v7138
        %v7171 = vsel %vm7107, %v7032, %v7139
        %v7172 = vsel %vm7108, %v7036, %v7140
        %v7173 = vsel %vm7109, %v7038, %v7141
        %v7174 = vsel %vm7110, %v7040, %v7142
        %v7175 = vsel %vm7111, %v7042, %v7143
        %v7176 = vsel %vm7112, %v7046, %v7144
        %v7177 = vsel %vm7113, %v7048, %v7145
        %v7178 = vsel %vm7114, %v7050, %v7146
        %v7179 = vsel %vm7115, %v7052, %v7147
        %v7180 = vsel %vm7116, %v7056, %v7148
        %v7181 = vsel %vm7117, %v7058, %v7149
        %v7182 = vsel %vm7118, %v7060, %v7150
        %v7183 = vsel %vm7119, %v7062, %v7151
        %v7184 = vsel %vm7120, %v7066, %v7152
        %v7185 = vsel %vm7121, %v7068, %v7153
        %v7186 = vsel %vm7122, %v7070, %v7154
        %v7187 = vsel %vm7123, %v7072, %v7155
        %v7188 = vsel %vm7124, %v7076, %v7156
        %v7189 = vsel %vm7125, %v7078, %v7157
        %v7190 = vsel %vm7126, %v7080, %v7158
        %v7191 = vsel %vm7127, %v7082, %v7159
        %v7192 = vsel %vm7128, %v7086, %v7160
        %v7193 = vsel %vm7129, %v7088, %v7161
        %v7194 = vsel %vm7130, %v7090, %v7162
        %v7195 = vsel %vm7131, %v7092, %v7163
        %v7196 = vsel %vm7132, %v7096, %v7164
        %v7197 = vsel %vm7133, %v7098, %v7165
        %v7198 = vsel %vm7134, %v7100, %v7166
        %v7199 = vsel %vm7135, %v7102, %v7167
        %s7200 = sadd.s32 %s381, 3
        %v7201 = vstv %s7200
        %v7202 = vadd.s32 %v7201, %v1883
        %v7203 = vadd.s32 %v7201, %v1884
        %v7204 = vadd.s32 %v7201, %v1885
        %v7205 = vadd.s32 %v7201, %v1886
        %v7206 = vadd.s32 %v7201, %v1887
        %v7207 = vadd.s32 %v7201, %v1888
        %v7208 = vadd.s32 %v7201, %v1889
        %v7209 = vadd.s32 %v7201, %v1890
        %v7210 = vadd.s32 %v7201, %v1891
        %v7211 = vadd.s32 %v7201, %v1892
        %v7212 = vadd.s32 %v7201, %v1893
        %v7213 = vadd.s32 %v7201, %v1894
        %v7214 = vadd.s32 %v7201, %v1895
        %v7215 = vadd.s32 %v7201, %v1896
        %v7216 = vadd.s32 %v7201, %v1897
        %v7217 = vadd.s32 %v7201, %v1898
        %v7218 = vadd.s32 %v7202, %v1916
        %v7219 = vadd.s32 %v7202, %v1917
        %v7220 = vadd.s32 %v7203, %v1916
        %v7221 = vadd.s32 %v7203, %v1917
        %v7222 = vadd.s32 %v7204, %v1916
        %v7223 = vadd.s32 %v7204, %v1917
        %v7224 = vadd.s32 %v7205, %v1916
        %v7225 = vadd.s32 %v7205, %v1917
        %v7226 = vadd.s32 %v7206, %v1916
        %v7227 = vadd.s32 %v7206, %v1917
        %v7228 = vadd.s32 %v7207, %v1916
        %v7229 = vadd.s32 %v7207, %v1917
        %v7230 = vadd.s32 %v7208, %v1916
        %v7231 = vadd.s32 %v7208, %v1917
        %v7232 = vadd.s32 %v7209, %v1916
        %v7233 = vadd.s32 %v7209, %v1917
        %v7234 = vadd.s32 %v7210, %v1916
        %v7235 = vadd.s32 %v7210, %v1917
        %v7236 = vadd.s32 %v7211, %v1916
        %v7237 = vadd.s32 %v7211, %v1917
        %v7238 = vadd.s32 %v7212, %v1916
        %v7239 = vadd.s32 %v7212, %v1917
        %v7240 = vadd.s32 %v7213, %v1916
        %v7241 = vadd.s32 %v7213, %v1917
        %v7242 = vadd.s32 %v7214, %v1916
        %v7243 = vadd.s32 %v7214, %v1917
        %v7244 = vadd.s32 %v7215, %v1916
        %v7245 = vadd.s32 %v7215, %v1917
        %v7246 = vadd.s32 %v7216, %v1916
        %v7247 = vadd.s32 %v7216, %v1917
        %v7248 = vadd.s32 %v7217, %v1916
        %v7249 = vadd.s32 %v7217, %v1917
        %v7250 = vshrl.u32 %v7218, 16
        %v7251 = vshrl.u32 %v7219, 16
        %v7252 = vshrl.u32 %v7220, 16
        %v7253 = vshrl.u32 %v7221, 16
        %v7254 = vshrl.u32 %v7222, 16
        %v7255 = vshrl.u32 %v7223, 16
        %v7256 = vshrl.u32 %v7224, 16
        %v7257 = vshrl.u32 %v7225, 16
        %v7258 = vshrl.u32 %v7226, 16
        %v7259 = vshrl.u32 %v7227, 16
        %v7260 = vshrl.u32 %v7228, 16
        %v7261 = vshrl.u32 %v7229, 16
        %v7262 = vshrl.u32 %v7230, 16
        %v7263 = vshrl.u32 %v7231, 16
        %v7264 = vshrl.u32 %v7232, 16
        %v7265 = vshrl.u32 %v7233, 16
        %v7266 = vshrl.u32 %v7234, 16
        %v7267 = vshrl.u32 %v7235, 16
        %v7268 = vshrl.u32 %v7236, 16
        %v7269 = vshrl.u32 %v7237, 16
        %v7270 = vshrl.u32 %v7238, 16
        %v7271 = vshrl.u32 %v7239, 16
        %v7272 = vshrl.u32 %v7240, 16
        %v7273 = vshrl.u32 %v7241, 16
        %v7274 = vshrl.u32 %v7242, 16
        %v7275 = vshrl.u32 %v7243, 16
        %v7276 = vshrl.u32 %v7244, 16
        %v7277 = vshrl.u32 %v7245, 16
        %v7278 = vshrl.u32 %v7246, 16
        %v7279 = vshrl.u32 %v7247, 16
        %v7280 = vshrl.u32 %v7248, 16
        %v7281 = vshrl.u32 %v7249, 16
        %v7282 = vxor.u32 %v7218, %v7250
        %v7283 = vxor.u32 %v7219, %v7251
        %v7284 = vxor.u32 %v7220, %v7252
        %v7285 = vxor.u32 %v7221, %v7253
        %v7286 = vxor.u32 %v7222, %v7254
        %v7287 = vxor.u32 %v7223, %v7255
        %v7288 = vxor.u32 %v7224, %v7256
        %v7289 = vxor.u32 %v7225, %v7257
        %v7290 = vxor.u32 %v7226, %v7258
        %v7291 = vxor.u32 %v7227, %v7259
        %v7292 = vxor.u32 %v7228, %v7260
        %v7293 = vxor.u32 %v7229, %v7261
        %v7294 = vxor.u32 %v7230, %v7262
        %v7295 = vxor.u32 %v7231, %v7263
        %v7296 = vxor.u32 %v7232, %v7264
        %v7297 = vxor.u32 %v7233, %v7265
        %v7298 = vxor.u32 %v7234, %v7266
        %v7299 = vxor.u32 %v7235, %v7267
        %v7300 = vxor.u32 %v7236, %v7268
        %v7301 = vxor.u32 %v7237, %v7269
        %v7302 = vxor.u32 %v7238, %v7270
        %v7303 = vxor.u32 %v7239, %v7271
        %v7304 = vxor.u32 %v7240, %v7272
        %v7305 = vxor.u32 %v7241, %v7273
        %v7306 = vxor.u32 %v7242, %v7274
        %v7307 = vxor.u32 %v7243, %v7275
        %v7308 = vxor.u32 %v7244, %v7276
        %v7309 = vxor.u32 %v7245, %v7277
        %v7310 = vxor.u32 %v7246, %v7278
        %v7311 = vxor.u32 %v7247, %v7279
        %v7312 = vxor.u32 %v7248, %v7280
        %v7313 = vxor.u32 %v7249, %v7281
        %v7314 = vmul.u32 %v7282, 2146121005
        %v7315 = vmul.u32 %v7283, 2146121005
        %v7316 = vmul.u32 %v7284, 2146121005
        %v7317 = vmul.u32 %v7285, 2146121005
        %v7318 = vmul.u32 %v7286, 2146121005
        %v7319 = vmul.u32 %v7287, 2146121005
        %v7320 = vmul.u32 %v7288, 2146121005
        %v7321 = vmul.u32 %v7289, 2146121005
        %v7322 = vmul.u32 %v7290, 2146121005
        %v7323 = vmul.u32 %v7291, 2146121005
        %v7324 = vmul.u32 %v7292, 2146121005
        %v7325 = vmul.u32 %v7293, 2146121005
        %v7326 = vmul.u32 %v7294, 2146121005
        %v7327 = vmul.u32 %v7295, 2146121005
        %v7328 = vmul.u32 %v7296, 2146121005
        %v7329 = vmul.u32 %v7297, 2146121005
        %v7330 = vmul.u32 %v7298, 2146121005
        %v7331 = vmul.u32 %v7299, 2146121005
        %v7332 = vmul.u32 %v7300, 2146121005
        %v7333 = vmul.u32 %v7301, 2146121005
        %v7334 = vmul.u32 %v7302, 2146121005
        %v7335 = vmul.u32 %v7303, 2146121005
        %v7336 = vmul.u32 %v7304, 2146121005
        %v7337 = vmul.u32 %v7305, 2146121005
        %v7338 = vmul.u32 %v7306, 2146121005
        %v7339 = vmul.u32 %v7307, 2146121005
        %v7340 = vmul.u32 %v7308, 2146121005
        %v7341 = vmul.u32 %v7309, 2146121005
        %v7342 = vmul.u32 %v7310, 2146121005
        %v7343 = vmul.u32 %v7311, 2146121005
        %v7344 = vmul.u32 %v7312, 2146121005
        %v7345 = vmul.u32 %v7313, 2146121005
        %v7346 = vshrl.u32 %v7314, 15
        %v7347 = vshrl.u32 %v7315, 15
        %v7348 = vshrl.u32 %v7316, 15
        %v7349 = vshrl.u32 %v7317, 15
        %v7350 = vshrl.u32 %v7318, 15
        %v7351 = vshrl.u32 %v7319, 15
        %v7352 = vshrl.u32 %v7320, 15
        %v7353 = vshrl.u32 %v7321, 15
        %v7354 = vshrl.u32 %v7322, 15
        %v7355 = vshrl.u32 %v7323, 15
        %v7356 = vshrl.u32 %v7324, 15
        %v7357 = vshrl.u32 %v7325, 15
        %v7358 = vshrl.u32 %v7326, 15
        %v7359 = vshrl.u32 %v7327, 15
        %v7360 = vshrl.u32 %v7328, 15
        %v7361 = vshrl.u32 %v7329, 15
        %v7362 = vshrl.u32 %v7330, 15
        %v7363 = vshrl.u32 %v7331, 15
        %v7364 = vshrl.u32 %v7332, 15
        %v7365 = vshrl.u32 %v7333, 15
        %v7366 = vshrl.u32 %v7334, 15
        %v7367 = vshrl.u32 %v7335, 15
        %v7368 = vshrl.u32 %v7336, 15
        %v7369 = vshrl.u32 %v7337, 15
        %v7370 = vshrl.u32 %v7338, 15
        %v7371 = vshrl.u32 %v7339, 15
        %v7372 = vshrl.u32 %v7340, 15
        %v7373 = vshrl.u32 %v7341, 15
        %v7374 = vshrl.u32 %v7342, 15
        %v7375 = vshrl.u32 %v7343, 15
        %v7376 = vshrl.u32 %v7344, 15
        %v7377 = vshrl.u32 %v7345, 15
        %v7378 = vxor.u32 %v7314, %v7346
        %v7379 = vxor.u32 %v7315, %v7347
        %v7380 = vxor.u32 %v7316, %v7348
        %v7381 = vxor.u32 %v7317, %v7349
        %v7382 = vxor.u32 %v7318, %v7350
        %v7383 = vxor.u32 %v7319, %v7351
        %v7384 = vxor.u32 %v7320, %v7352
        %v7385 = vxor.u32 %v7321, %v7353
        %v7386 = vxor.u32 %v7322, %v7354
        %v7387 = vxor.u32 %v7323, %v7355
        %v7388 = vxor.u32 %v7324, %v7356
        %v7389 = vxor.u32 %v7325, %v7357
        %v7390 = vxor.u32 %v7326, %v7358
        %v7391 = vxor.u32 %v7327, %v7359
        %v7392 = vxor.u32 %v7328, %v7360
        %v7393 = vxor.u32 %v7329, %v7361
        %v7394 = vxor.u32 %v7330, %v7362
        %v7395 = vxor.u32 %v7331, %v7363
        %v7396 = vxor.u32 %v7332, %v7364
        %v7397 = vxor.u32 %v7333, %v7365
        %v7398 = vxor.u32 %v7334, %v7366
        %v7399 = vxor.u32 %v7335, %v7367
        %v7400 = vxor.u32 %v7336, %v7368
        %v7401 = vxor.u32 %v7337, %v7369
        %v7402 = vxor.u32 %v7338, %v7370
        %v7403 = vxor.u32 %v7339, %v7371
        %v7404 = vxor.u32 %v7340, %v7372
        %v7405 = vxor.u32 %v7341, %v7373
        %v7406 = vxor.u32 %v7342, %v7374
        %v7407 = vxor.u32 %v7343, %v7375
        %v7408 = vxor.u32 %v7344, %v7376
        %v7409 = vxor.u32 %v7345, %v7377
        %v7410 = vmul.u32 %v7378, 2221713035
        %v7411 = vmul.u32 %v7379, 2221713035
        %v7412 = vmul.u32 %v7380, 2221713035
        %v7413 = vmul.u32 %v7381, 2221713035
        %v7414 = vmul.u32 %v7382, 2221713035
        %v7415 = vmul.u32 %v7383, 2221713035
        %v7416 = vmul.u32 %v7384, 2221713035
        %v7417 = vmul.u32 %v7385, 2221713035
        %v7418 = vmul.u32 %v7386, 2221713035
        %v7419 = vmul.u32 %v7387, 2221713035
        %v7420 = vmul.u32 %v7388, 2221713035
        %v7421 = vmul.u32 %v7389, 2221713035
        %v7422 = vmul.u32 %v7390, 2221713035
        %v7423 = vmul.u32 %v7391, 2221713035
        %v7424 = vmul.u32 %v7392, 2221713035
        %v7425 = vmul.u32 %v7393, 2221713035
        %v7426 = vmul.u32 %v7394, 2221713035
        %v7427 = vmul.u32 %v7395, 2221713035
        %v7428 = vmul.u32 %v7396, 2221713035
        %v7429 = vmul.u32 %v7397, 2221713035
        %v7430 = vmul.u32 %v7398, 2221713035
        %v7431 = vmul.u32 %v7399, 2221713035
        %v7432 = vmul.u32 %v7400, 2221713035
        %v7433 = vmul.u32 %v7401, 2221713035
        %v7434 = vmul.u32 %v7402, 2221713035
        %v7435 = vmul.u32 %v7403, 2221713035
        %v7436 = vmul.u32 %v7404, 2221713035
        %v7437 = vmul.u32 %v7405, 2221713035
        %v7438 = vmul.u32 %v7406, 2221713035
        %v7439 = vmul.u32 %v7407, 2221713035
        %v7440 = vmul.u32 %v7408, 2221713035
        %v7441 = vmul.u32 %v7409, 2221713035
        %v7442 = vshrl.u32 %v7410, 16
        %v7443 = vshrl.u32 %v7411, 16
        %v7444 = vshrl.u32 %v7412, 16
        %v7445 = vshrl.u32 %v7413, 16
        %v7446 = vshrl.u32 %v7414, 16
        %v7447 = vshrl.u32 %v7415, 16
        %v7448 = vshrl.u32 %v7416, 16
        %v7449 = vshrl.u32 %v7417, 16
        %v7450 = vshrl.u32 %v7418, 16
        %v7451 = vshrl.u32 %v7419, 16
        %v7452 = vshrl.u32 %v7420, 16
        %v7453 = vshrl.u32 %v7421, 16
        %v7454 = vshrl.u32 %v7422, 16
        %v7455 = vshrl.u32 %v7423, 16
        %v7456 = vshrl.u32 %v7424, 16
        %v7457 = vshrl.u32 %v7425, 16
        %v7458 = vshrl.u32 %v7426, 16
        %v7459 = vshrl.u32 %v7427, 16
        %v7460 = vshrl.u32 %v7428, 16
        %v7461 = vshrl.u32 %v7429, 16
        %v7462 = vshrl.u32 %v7430, 16
        %v7463 = vshrl.u32 %v7431, 16
        %v7464 = vshrl.u32 %v7432, 16
        %v7465 = vshrl.u32 %v7433, 16
        %v7466 = vshrl.u32 %v7434, 16
        %v7467 = vshrl.u32 %v7435, 16
        %v7468 = vshrl.u32 %v7436, 16
        %v7469 = vshrl.u32 %v7437, 16
        %v7470 = vshrl.u32 %v7438, 16
        %v7471 = vshrl.u32 %v7439, 16
        %v7472 = vshrl.u32 %v7440, 16
        %v7473 = vshrl.u32 %v7441, 16
        %v7474 = vxor.u32 %v7410, %v7442
        %v7475 = vxor.u32 %v7411, %v7443
        %v7476 = vxor.u32 %v7412, %v7444
        %v7477 = vxor.u32 %v7413, %v7445
        %v7478 = vxor.u32 %v7414, %v7446
        %v7479 = vxor.u32 %v7415, %v7447
        %v7480 = vxor.u32 %v7416, %v7448
        %v7481 = vxor.u32 %v7417, %v7449
        %v7482 = vxor.u32 %v7418, %v7450
        %v7483 = vxor.u32 %v7419, %v7451
        %v7484 = vxor.u32 %v7420, %v7452
        %v7485 = vxor.u32 %v7421, %v7453
        %v7486 = vxor.u32 %v7422, %v7454
        %v7487 = vxor.u32 %v7423, %v7455
        %v7488 = vxor.u32 %v7424, %v7456
        %v7489 = vxor.u32 %v7425, %v7457
        %v7490 = vxor.u32 %v7426, %v7458
        %v7491 = vxor.u32 %v7427, %v7459
        %v7492 = vxor.u32 %v7428, %v7460
        %v7493 = vxor.u32 %v7429, %v7461
        %v7494 = vxor.u32 %v7430, %v7462
        %v7495 = vxor.u32 %v7431, %v7463
        %v7496 = vxor.u32 %v7432, %v7464
        %v7497 = vxor.u32 %v7433, %v7465
        %v7498 = vxor.u32 %v7434, %v7466
        %v7499 = vxor.u32 %v7435, %v7467
        %v7500 = vxor.u32 %v7436, %v7468
        %v7501 = vxor.u32 %v7437, %v7469
        %v7502 = vxor.u32 %v7438, %v7470
        %v7503 = vxor.u32 %v7439, %v7471
        %v7504 = vxor.u32 %v7440, %v7472
        %v7505 = vxor.u32 %v7441, %v7473
        %vm7506 = vcmp.ge.u32.totalorder %v7474, 1288490188
        %vm7507 = vcmp.ge.u32.totalorder %v7475, 1288490188
        %vm7508 = vcmp.ge.u32.totalorder %v7476, 1288490188
        %vm7509 = vcmp.ge.u32.totalorder %v7477, 1288490188
        %vm7510 = vcmp.ge.u32.totalorder %v7478, 1288490188
        %vm7511 = vcmp.ge.u32.totalorder %v7479, 1288490188
        %vm7512 = vcmp.ge.u32.totalorder %v7480, 1288490188
        %vm7513 = vcmp.ge.u32.totalorder %v7481, 1288490188
        %vm7514 = vcmp.ge.u32.totalorder %v7482, 1288490188
        %vm7515 = vcmp.ge.u32.totalorder %v7483, 1288490188
        %vm7516 = vcmp.ge.u32.totalorder %v7484, 1288490188
        %vm7517 = vcmp.ge.u32.totalorder %v7485, 1288490188
        %vm7518 = vcmp.ge.u32.totalorder %v7486, 1288490188
        %vm7519 = vcmp.ge.u32.totalorder %v7487, 1288490188
        %vm7520 = vcmp.ge.u32.totalorder %v7488, 1288490188
        %vm7521 = vcmp.ge.u32.totalorder %v7489, 1288490188
        %vm7522 = vcmp.ge.u32.totalorder %v7490, 1288490188
        %vm7523 = vcmp.ge.u32.totalorder %v7491, 1288490188
        %vm7524 = vcmp.ge.u32.totalorder %v7492, 1288490188
        %vm7525 = vcmp.ge.u32.totalorder %v7493, 1288490188
        %vm7526 = vcmp.ge.u32.totalorder %v7494, 1288490188
        %vm7527 = vcmp.ge.u32.totalorder %v7495, 1288490188
        %vm7528 = vcmp.ge.u32.totalorder %v7496, 1288490188
        %vm7529 = vcmp.ge.u32.totalorder %v7497, 1288490188
        %vm7530 = vcmp.ge.u32.totalorder %v7498, 1288490188
        %vm7531 = vcmp.ge.u32.totalorder %v7499, 1288490188
        %vm7532 = vcmp.ge.u32.totalorder %v7500, 1288490188
        %vm7533 = vcmp.ge.u32.totalorder %v7501, 1288490188
        %vm7534 = vcmp.ge.u32.totalorder %v7502, 1288490188
        %vm7535 = vcmp.ge.u32.totalorder %v7503, 1288490188
        %vm7536 = vcmp.ge.u32.totalorder %v7504, 1288490188
        %vm7537 = vcmp.ge.u32.totalorder %v7505, 1288490188
        %v7538 = vsel %vm7506, %v7168, 0.0
        %v7539 = vsel %vm7507, %v7169, 0.0
        %v7540 = vsel %vm7508, %v7170, 0.0
        %v7541 = vsel %vm7509, %v7171, 0.0
        %v7542 = vsel %vm7510, %v7172, 0.0
        %v7543 = vsel %vm7511, %v7173, 0.0
        %v7544 = vsel %vm7512, %v7174, 0.0
        %v7545 = vsel %vm7513, %v7175, 0.0
        %v7546 = vsel %vm7514, %v7176, 0.0
        %v7547 = vsel %vm7515, %v7177, 0.0
        %v7548 = vsel %vm7516, %v7178, 0.0
        %v7549 = vsel %vm7517, %v7179, 0.0
        %v7550 = vsel %vm7518, %v7180, 0.0
        %v7551 = vsel %vm7519, %v7181, 0.0
        %v7552 = vsel %vm7520, %v7182, 0.0
        %v7553 = vsel %vm7521, %v7183, 0.0
        %v7554 = vsel %vm7522, %v7184, 0.0
        %v7555 = vsel %vm7523, %v7185, 0.0
        %v7556 = vsel %vm7524, %v7186, 0.0
        %v7557 = vsel %vm7525, %v7187, 0.0
        %v7558 = vsel %vm7526, %v7188, 0.0
        %v7559 = vsel %vm7527, %v7189, 0.0
        %v7560 = vsel %vm7528, %v7190, 0.0
        %v7561 = vsel %vm7529, %v7191, 0.0
        %v7562 = vsel %vm7530, %v7192, 0.0
        %v7563 = vsel %vm7531, %v7193, 0.0
        %v7564 = vsel %vm7532, %v7194, 0.0
        %v7565 = vsel %vm7533, %v7195, 0.0
        %v7566 = vsel %vm7534, %v7196, 0.0
        %v7567 = vsel %vm7535, %v7197, 0.0
        %v7568 = vsel %vm7536, %v7198, 0.0
        %v7569 = vsel %vm7537, %v7199, 0.0
        %v7570 = vpack.c.bf16 %v7540, %v7538
        %v7571 = vpack.c.bf16 %v7541, %v7539
        %v7572 = vpack.c.bf16 %v7544, %v7542
        %v7573 = vpack.c.bf16 %v7545, %v7543
        %v7574 = vpack.c.bf16 %v7548, %v7546
        %v7575 = vpack.c.bf16 %v7549, %v7547
        %v7576 = vpack.c.bf16 %v7552, %v7550
        %v7577 = vpack.c.bf16 %v7553, %v7551
        %v7578 = vpack.c.bf16 %v7556, %v7554
        %v7579 = vpack.c.bf16 %v7557, %v7555
        %v7580 = vpack.c.bf16 %v7560, %v7558
        %v7581 = vpack.c.bf16 %v7561, %v7559
        %v7582 = vpack.c.bf16 %v7564, %v7562
        %v7583 = vpack.c.bf16 %v7565, %v7563
        %v7584 = vpack.c.bf16 %v7568, %v7566
        %v7585 = vpack.c.bf16 %v7569, %v7567
        %v7587 = vlaneseq
        %v7588 = vshrl.u32 %v7587, 7
        %v7589 = vsub.s32 0, %v7588
        %v7590 = vrot.slane %v785, %v7589
        %v7624 = vunpack.c.l.b16 %v753
        %v7625 = vunpack.c.l.b16 %v754
        %v7626 = vunpack.c.l.b16 %v755
        %v7627 = vunpack.c.l.b16 %v756
        %v7628 = vunpack.c.l.b16 %v757
        %v7629 = vunpack.c.l.b16 %v758
        %v7630 = vunpack.c.l.b16 %v759
        %v7631 = vunpack.c.l.b16 %v760
        %v7632 = vunpack.c.l.b16 %v761
        %v7633 = vunpack.c.l.b16 %v762
        %v7634 = vunpack.c.l.b16 %v763
        %v7635 = vunpack.c.l.b16 %v764
        %v7636 = vunpack.c.l.b16 %v765
        %v7637 = vunpack.c.l.b16 %v766
        %v7638 = vunpack.c.l.b16 %v767
        %v7639 = vunpack.c.l.b16 %v768
        %v7640 = vunpack.c.l.b16 %v769
        %v7641 = vunpack.c.l.b16 %v770
        %v7642 = vunpack.c.l.b16 %v771
        %v7643 = vunpack.c.l.b16 %v772
        %v7644 = vunpack.c.l.b16 %v773
        %v7645 = vunpack.c.l.b16 %v774
        %v7646 = vunpack.c.l.b16 %v775
        %v7647 = vunpack.c.l.b16 %v776
        %v7648 = vunpack.c.l.b16 %v777
        %v7649 = vunpack.c.l.b16 %v778
        %v7650 = vunpack.c.l.b16 %v779
        %v7651 = vunpack.c.l.b16 %v780
        %v7652 = vunpack.c.l.b16 %v781
        %v7653 = vunpack.c.l.b16 %v782
        %v7654 = vunpack.c.l.b16 %v783
        %v7655 = vunpack.c.l.b16 %v784
        %v7656 = vpack.c.b16 %v7625, %v7624
        %v7657 = vpack.c.b16 %v7627, %v7626
        %v7658 = vpack.c.b16 %v7629, %v7628
        %v7659 = vpack.c.b16 %v7631, %v7630
        %v7660 = vpack.c.b16 %v7633, %v7632
        %v7661 = vpack.c.b16 %v7635, %v7634
        %v7662 = vpack.c.b16 %v7637, %v7636
        %v7663 = vpack.c.b16 %v7639, %v7638
        %v7664 = vpack.c.b16 %v7641, %v7640
        %v7665 = vpack.c.b16 %v7643, %v7642
        %v7666 = vpack.c.b16 %v7645, %v7644
        %v7667 = vpack.c.b16 %v7647, %v7646
        %v7668 = vpack.c.b16 %v7649, %v7648
        %v7669 = vpack.c.b16 %v7651, %v7650
        %v7670 = vpack.c.b16 %v7653, %v7652
        %v7671 = vpack.c.b16 %v7655, %v7654
        %7688 = vmatprep.subr.bf16.mxu0 0
        %7689 = vmatpush1.bf16.msra.mxu0 %v7663
        %7690 = vmatprep.subr.bf16.mxu0 0
        %7691 = vmatpush1.bf16.msra.mxu0 %v7662
        %7692 = vmatprep.subr.bf16.mxu0 0
        %7693 = vmatpush1.bf16.msra.mxu0 %v7661
        %7694 = vmatprep.subr.bf16.mxu0 0
        %7695 = vmatpush1.bf16.msra.mxu0 %v7660
        %7696 = vmatprep.subr.bf16.mxu0 0
        %7697 = vmatpush1.bf16.msra.mxu0 %v7659
        %7698 = vmatprep.subr.bf16.mxu0 0
        %7699 = vmatpush1.bf16.msra.mxu0 %v7658
        %7700 = vmatprep.subr.bf16.mxu0 0
        %7701 = vmatpush1.bf16.msra.mxu0 %v7657
        %7702 = vmatprep.subr.bf16.mxu0 0
        %7703 = vmatpush1.bf16.msra.mxu0 %v7656
        %7704 = vmatprep.subr.bf16.mxu0 0
        %7705 = vmatpush2.bf16.msra.mxu0 %v7671
        %7706 = vmatprep.subr.bf16.mxu0 0
        %7707 = vmatpush2.bf16.msra.mxu0 %v7670
        %7708 = vmatprep.subr.bf16.mxu0 0
        %7709 = vmatpush2.bf16.msra.mxu0 %v7669
        %7710 = vmatprep.subr.bf16.mxu0 0
        %7711 = vmatpush2.bf16.msra.mxu0 %v7668
        %7712 = vmatprep.subr.bf16.mxu0 0
        %7713 = vmatpush2.bf16.msra.mxu0 %v7667
        %7714 = vmatprep.subr.bf16.mxu0 0
        %7715 = vmatpush2.bf16.msra.mxu0 %v7666
        %7716 = vmatprep.subr.bf16.mxu0 0
        %7717 = vmatpush2.bf16.msra.mxu0 %v7665
        %7718 = vmatprep.subr.bf16.mxu0 0
        %7719 = vmatpush2.bf16.msra.mxu0 %v7664
        %7720 = vmatprep.mubr.bf16.mxu0 %v7571
        %7721 = vmatmul.mubr.bf16.gmra.mxu0 %v7570
        %v7722 = vpop.f32.mrf.mxu0
        %v7723 = vadd.f32 %v7590, %v7722
        %v7724 = vpop.f32.mrf.mxu0
        %v7725 = vpop.f32.mrf.mxu0
        %v7726 = vadd.f32 %v7590, %v7725
        %v7727 = vpop.f32.mrf.mxu0
        %7728 = vmatprep.mubr.bf16.mxu0 %v7573
        %7729 = vmatmul.mubr.bf16.gmra.mxu0 %v7572
        %v7730 = vpop.f32.mrf.mxu0
        %v7731 = vadd.f32 %v7590, %v7730
        %v7732 = vpop.f32.mrf.mxu0
        %v7733 = vpop.f32.mrf.mxu0
        %v7734 = vadd.f32 %v7590, %v7733
        %v7735 = vpop.f32.mrf.mxu0
        %7736 = vmatprep.mubr.bf16.mxu0 %v7575
        %7737 = vmatmul.mubr.bf16.gmra.mxu0 %v7574
        %v7738 = vpop.f32.mrf.mxu0
        %v7739 = vadd.f32 %v7590, %v7738
        %v7740 = vpop.f32.mrf.mxu0
        %v7741 = vpop.f32.mrf.mxu0
        %v7742 = vadd.f32 %v7590, %v7741
        %v7743 = vpop.f32.mrf.mxu0
        %7744 = vmatprep.mubr.bf16.mxu0 %v7577
        %7745 = vmatmul.mubr.bf16.gmra.mxu0 %v7576
        %v7746 = vpop.f32.mrf.mxu0
        %v7747 = vadd.f32 %v7590, %v7746
        %v7748 = vpop.f32.mrf.mxu0
        %v7749 = vpop.f32.mrf.mxu0
        %v7750 = vadd.f32 %v7590, %v7749
        %v7751 = vpop.f32.mrf.mxu0
        %7752 = vmatprep.mubr.bf16.mxu0 %v7579
        %7753 = vmatmul.mubr.bf16.gmra.mxu0 %v7578
        %v7754 = vpop.f32.mrf.mxu0
        %v7755 = vadd.f32 %v7590, %v7754
        %v7756 = vpop.f32.mrf.mxu0
        %v7757 = vpop.f32.mrf.mxu0
        %v7758 = vadd.f32 %v7590, %v7757
        %v7759 = vpop.f32.mrf.mxu0
        %7760 = vmatprep.mubr.bf16.mxu0 %v7581
        %7761 = vmatmul.mubr.bf16.gmra.mxu0 %v7580
        %v7762 = vpop.f32.mrf.mxu0
        %v7763 = vadd.f32 %v7590, %v7762
        %v7764 = vpop.f32.mrf.mxu0
        %v7765 = vpop.f32.mrf.mxu0
        %v7766 = vadd.f32 %v7590, %v7765
        %v7767 = vpop.f32.mrf.mxu0
        %7768 = vmatprep.mubr.bf16.mxu0 %v7583
        %7769 = vmatmul.mubr.bf16.gmra.mxu0 %v7582
        %v7770 = vpop.f32.mrf.mxu0
        %v7771 = vadd.f32 %v7590, %v7770
        %v7772 = vpop.f32.mrf.mxu0
        %v7773 = vpop.f32.mrf.mxu0
        %v7774 = vadd.f32 %v7590, %v7773
        %v7775 = vpop.f32.mrf.mxu0
        %7776 = vmatprep.mubr.bf16.mxu0 %v7585
        %7777 = vmatmul.mubr.bf16.gmra.mxu0 %v7584
        %v7778 = vpop.f32.mrf.mxu0
        %v7779 = vadd.f32 %v7590, %v7778
        %v7780 = vpop.f32.mrf.mxu0
        %v7781 = vpop.f32.mrf.mxu0
        %v7782 = vadd.f32 %v7590, %v7781
        %v7783 = vpop.f32.mrf.mxu0
        %7784 = vdwg.mxu0
        %v7785 = vxor.u32 %v7723, 2147483648
        %v7786 = vxor.u32 %v7726, 2147483648
        %v7787 = vxor.u32 %v7731, 2147483648
        %v7788 = vxor.u32 %v7734, 2147483648
        %v7789 = vxor.u32 %v7739, 2147483648
        %v7790 = vxor.u32 %v7742, 2147483648
        %v7791 = vxor.u32 %v7747, 2147483648
        %v7792 = vxor.u32 %v7750, 2147483648
        %v7793 = vxor.u32 %v7755, 2147483648
        %v7794 = vxor.u32 %v7758, 2147483648
        %v7795 = vxor.u32 %v7763, 2147483648
        %v7796 = vxor.u32 %v7766, 2147483648
        %v7797 = vxor.u32 %v7771, 2147483648
        %v7798 = vxor.u32 %v7774, 2147483648
        %v7799 = vxor.u32 %v7779, 2147483648
        %v7800 = vxor.u32 %v7782, 2147483648
        %v7801 = vmul.f32 %v7785, 1.442695
        %v7802 = vpow.pop %v7801
        %v7803 = vmul.f32 %v7786, 1.442695
        %v7804 = vpow.pop %v7803
        %v7805 = vmul.f32 %v7787, 1.442695
        %v7806 = vpow.pop %v7805
        %v7807 = vmul.f32 %v7788, 1.442695
        %v7808 = vpow.pop %v7807
        %v7809 = vmul.f32 %v7789, 1.442695
        %v7810 = vpow.pop %v7809
        %v7811 = vmul.f32 %v7790, 1.442695
        %v7812 = vpow.pop %v7811
        %v7813 = vmul.f32 %v7791, 1.442695
        %v7814 = vpow.pop %v7813
        %v7815 = vmul.f32 %v7792, 1.442695
        %v7816 = vpow.pop %v7815
        %v7817 = vmul.f32 %v7793, 1.442695
        %v7818 = vpow.pop %v7817
        %v7819 = vmul.f32 %v7794, 1.442695
        %v7820 = vpow.pop %v7819
        %v7821 = vmul.f32 %v7795, 1.442695
        %v7822 = vpow.pop %v7821
        %v7823 = vmul.f32 %v7796, 1.442695
        %v7824 = vpow.pop %v7823
        %v7825 = vmul.f32 %v7797, 1.442695
        %v7826 = vpow.pop %v7825
        %v7827 = vmul.f32 %v7798, 1.442695
        %v7828 = vpow.pop %v7827
        %v7829 = vmul.f32 %v7799, 1.442695
        %v7830 = vpow.pop %v7829
        %v7831 = vmul.f32 %v7800, 1.442695
        %v7832 = vpow.pop %v7831
        %v7833 = vadd.f32 %v7802, 1.0
        %v7834 = vadd.f32 %v7804, 1.0
        %v7835 = vadd.f32 %v7806, 1.0
        %v7836 = vadd.f32 %v7808, 1.0
        %v7837 = vadd.f32 %v7810, 1.0
        %v7838 = vadd.f32 %v7812, 1.0
        %v7839 = vadd.f32 %v7814, 1.0
        %v7840 = vadd.f32 %v7816, 1.0
        %v7841 = vadd.f32 %v7818, 1.0
        %v7842 = vadd.f32 %v7820, 1.0
        %v7843 = vadd.f32 %v7822, 1.0
        %v7844 = vadd.f32 %v7824, 1.0
        %v7845 = vadd.f32 %v7826, 1.0
        %v7846 = vadd.f32 %v7828, 1.0
        %v7847 = vadd.f32 %v7830, 1.0
        %v7848 = vadd.f32 %v7832, 1.0
        %v7849 = vrcp.pop %v7833
        %v7850 = vmul.f32 1.0, %v7849
        %v7851 = vrcp.pop %v7834
        %v7852 = vmul.f32 1.0, %v7851
        %v7853 = vrcp.pop %v7835
        %v7854 = vmul.f32 1.0, %v7853
        %v7855 = vrcp.pop %v7836
        %v7856 = vmul.f32 1.0, %v7855
        %v7857 = vrcp.pop %v7837
        %v7858 = vmul.f32 1.0, %v7857
        %v7859 = vrcp.pop %v7838
        %v7860 = vmul.f32 1.0, %v7859
        %v7861 = vrcp.pop %v7839
        %v7862 = vmul.f32 1.0, %v7861
        %v7863 = vrcp.pop %v7840
        %v7864 = vmul.f32 1.0, %v7863
        %v7865 = vrcp.pop %v7841
        %v7866 = vmul.f32 1.0, %v7865
        %v7867 = vrcp.pop %v7842
        %v7868 = vmul.f32 1.0, %v7867
        %v7869 = vrcp.pop %v7843
        %v7870 = vmul.f32 1.0, %v7869
        %v7871 = vrcp.pop %v7844
        %v7872 = vmul.f32 1.0, %v7871
        %v7873 = vrcp.pop %v7845
        %v7874 = vmul.f32 1.0, %v7873
        %v7875 = vrcp.pop %v7846
        %v7876 = vmul.f32 1.0, %v7875
        %v7877 = vrcp.pop %v7847
        %v7878 = vmul.f32 1.0, %v7877
        %v7879 = vrcp.pop %v7848
        %v7880 = vmul.f32 1.0, %v7879
        %7881 = vst [vmem:[%s370] sm:$0xff] %v7850
        %7882 = vst [vmem:[%s370 + $0x8] sm:$0xff] %v7852
        %7883 = vst [vmem:[%s370 + $0x10] sm:$0xff] %v7854
        %7884 = vst [vmem:[%s370 + $0x18] sm:$0xff] %v7856
        %7885 = vst [vmem:[%s370 + $0x20] sm:$0xff] %v7858
        %7886 = vst [vmem:[%s370 + $0x28] sm:$0xff] %v7860
        %7887 = vst [vmem:[%s370 + $0x30] sm:$0xff] %v7862
        %7888 = vst [vmem:[%s370 + $0x38] sm:$0xff] %v7864
        %7889 = vst [vmem:[%s370 + $0x40] sm:$0xff] %v7866
        %7890 = vst [vmem:[%s370 + $0x48] sm:$0xff] %v7868
        %7891 = vst [vmem:[%s370 + $0x50] sm:$0xff] %v7870
        %7892 = vst [vmem:[%s370 + $0x58] sm:$0xff] %v7872
        %7893 = vst [vmem:[%s370 + $0x60] sm:$0xff] %v7874
        %7894 = vst [vmem:[%s370 + $0x68] sm:$0xff] %v7876
        %7895 = vst [vmem:[%s370 + $0x70] sm:$0xff] %v7878
        %7896 = vst [vmem:[%s370 + $0x78] sm:$0xff] %v7880
        %s7897 = sand.u32 %s229, 1
        %s7898 = scalar_lea.sflag [#allocation6], %s7897
        %s7899 = sand.u32 %s229, 1
        %s7900 = smul.addr %s7899, 128
        %s7901 = scalar_lea.vmem [#allocation10], %s7900
        // Predicated region
        $region69: #{tpu_custom_call.1} parent=55 // pred_check
          %p7902 = pneg %p239
        $region70: #{tpu_custom_call.1} parent=55 // pred_check_branch
          %7904 = sbr.rel (%p7902) target = $region72
        $region71: #{tpu_custom_call.1} parent=55 // pred_region
          %s7905 = smul.u32 16, %s27
          %s7907 = ssub.s32 2048, 2048
          %7908 = vsyncadd %s7898, %s7907
          %s7909 = smul.addr %s7905, 128
          %s7910 = scalar_lea.hbm %s10, %s7909
          %s7911 = sshll.u32 %s7901, 4
          %s7912 = int_to_ptr.vmem [resolvable:$true] %s7911
          %7917 = dma.vmem_to_hbm [thread:$0]  %s7912, 2048, %s7910, %s7898, 128, 128, 8
        $region72: #{tpu_custom_call.1} parent=55 // pred_fallthru
          _
      $region56: #{tpu_custom_call.1} parent=5 // pred_fallthru
        _
      %p7918 = scmp.le.s32.totalorder 2, %s22
      // Predicated region
      $region73: #{tpu_custom_call.1} parent=5 // pred_check
        %p7919 = pneg %p7918
      $region74: #{tpu_custom_call.1} parent=5 // pred_check_branch
        %7921 = sbr.rel (%p7919) target = $region76
      $region75: #{tpu_custom_call.1} parent=5 // pred_region
        %s7922 = ssub.s32 %s22, 2
        // Predicated region
        $region77: #{tpu_custom_call.1} parent=75 // pred_check
          %p7923 = pneg %p245
        $region78: #{tpu_custom_call.1} parent=75 // pred_check_branch
          %7925 = sbr.rel (%p7923) target = $region80
        $region79: #{tpu_custom_call.1} parent=75 // pred_region
          %s7926 = sand.u32 %s230, 1
          %s7927 = scalar_lea.sflag [#allocation6], %s7926
          %s7928 = sand.u32 %s230, 1
          %s7929 = smul.addr %s7928, 128
          %s7930 = scalar_lea.vmem [#allocation10], %s7929
          %7931 = dma.done %s7927, 2048
        $region80: #{tpu_custom_call.1} parent=75 // pred_fallthru
          _
      $region76: #{tpu_custom_call.1} parent=5 // pred_fallthru
        _
    $region6: #{tpu_custom_call.1} parent=1 // loop_footer
      %s26 = sadd.s32 1, %s22
    $region7: #{tpu_custom_call.1} parent=1 // loop_footer_branch
      %21 = sbr.rel target = $region3
    $region8: #{tpu_custom_call.1} parent=1 // loop_exit
      _
    %7932 = vsyncpa [#allocation5], 1
    %s7933 = scalar_lea.sflag [#allocation5], 1
    %7934 = vsyncpa %s7933, 1
    %7935 = vsyncpa [#allocation8], 1
    %7936 = vsyncpa [#allocation6], 1
    %s7937 = scalar_lea.sflag [#allocation6], 1
    %7938 = vsyncpa %s7937, 1

</llo_original>
